<compile_context>
chip_gen: v7x
topology: tpu7x:2x2x1
jax: 0.10.0
libtpu: 0.0.40
codegen_flags: <defaults>
</compile_context>

<pallas_src>
import functools

import jax
import jax.numpy as jnp
from jax import lax
from jax.experimental import pallas as pl
from jax.experimental.pallas import tpu as pltpu

NEG_SLOPE = 0.1  # LeakyReLU negative slope


# ----------------------------------------------------------------------------
# Pallas kernels
# ----------------------------------------------------------------------------
def _conv9_kernel(*refs, cins, M, offsets, masks, w_mod, act, sig_start):
    """9-tap 3x3 conv for one batch element (whole image per grid step).

    refs = (x_ref_0, ..., x_ref_{n-1}, w_ref, b_ref, o_ref, patch_ref)
      x_ref_i   : (cin_i, L)  flattened padded input plane
      w_ref     : (Cout, 9*sum(cin_i)) folded weight (per-input tap-major blocks)
      b_ref     : (Cout, 1)
      o_ref     : (Cout, M)   output plane (M = Ho*Wo, or Ho*(Wo+1) junk-column
                              layout for the stride-2 path)
      patch_ref : VMEM scratch (9*sum(cin_i), M) -- im2col patches

    Each tap is a static lane-offset slice of the input *ref* (never the full
    (Cin, L) value), stored into the VMEM patches scratch; one MXU contraction
    with K = 9*sum(cin_i) then produces the whole conv for this image.
    """
    n_in = len(cins)
    x_refs = refs[:n_in]
    w_ref, b_ref, o_ref, patch_ref = refs[n_in:n_in + 4]

    need_mask = any(m is not None for m in masks)
    if need_mask:
        col = lax.broadcasted_iota(jnp.int32, (1, M), 1) % w_mod
        left_ok = col != 0
        right_ok = col != (w_mod - 1)

    row = 0
    for x_ref, cin in zip(x_refs, cins):
        for off, m in zip(offsets, masks):
            sl = x_ref[:, off:off + M]               # (cin, M) ref slice load
            if m == 'l':                             # zero wrap-around border cols
                sl = jnp.where(left_ok, sl, 0.0)
            elif m == 'r':
                sl = jnp.where(right_ok, sl, 0.0)
            patch_ref[row:row + cin, :] = sl
            row += cin

    acc = jnp.dot(w_ref[...], patch_ref[...],
                  preferred_element_type=jnp.float32)      # (Cout, M), K = 9*Cin
    acc = acc + b_ref[...]                                 # (Cout, 1) broadcast

    if act == "lrelu":
        acc = jnp.where(acc >= 0, acc, acc * NEG_SLOPE)
        o_ref[...] = acc.astype(o_ref.dtype)
    elif act == "offset_mask":
        # DCNv2 conv_offset: sigmoid only the mask rows (static 8-aligned
        # sublane slice) -> ~3x less EUP work, no iota/select.
        o_ref[:sig_start, :] = acc[:sig_start, :].astype(o_ref.dtype)
        o_ref[sig_start:, :] = jax.nn.sigmoid(acc[sig_start:, :]).astype(o_ref.dtype)
    else:
        o_ref[...] = acc.astype(o_ref.dtype)


def _dense_kernel(p_ref, w_ref, b_ref, o_ref, *, act):
    """DCN im2col contraction for one batch element.

    p_ref: (Kin, M)  pre-gathered modulated patches ((g, k, c) row order)
    w_ref: (Cout, Kin) permuted DCN weight;  b_ref: (Cout, 1);  o_ref: (Cout, M)
    """
    acc = jnp.dot(w_ref[...], p_ref[...], preferred_element_type=jnp.float32)
    acc = acc + b_ref[...]
    if act:
        acc = jnp.where(acc >= 0, acc, acc * NEG_SLOPE)
    o_ref[...] = acc.astype(o_ref.dtype)


# ----------------------------------------------------------------------------
# Pallas wrappers
# ----------------------------------------------------------------------------
def conv3x3(xs, w, b, *, stride=1, act="lrelu", sig_start=None):
    """3x3 conv, pad 1, stride 1 or 2, with fused activation.

    xs: one (N, Cin, H, W) array, or a list of them representing a logical
        channel concat (the concat is fused into the kernel, not built in HBM).
    w:  (3, 3, sum(Cin_i), Cout) HWIO;  b: (Cout,).  Returns (N, Cout, Ho, Wo).
    """
    if not isinstance(xs, (list, tuple)):
        xs = [xs]
    N, _, H, W = xs[0].shape
    cins = tuple(int(x.shape[1]) for x in xs)
    cin_tot = sum(cins)
    cout = int(w.shape[-1])

    # One-time fold of the weight to (Cout, 9*cin_tot): a tap-major /
    # channel-minor block per input, concatenated along K in input order.
    pieces, c0 = [], 0
    for ci in cins:
        wi = w[:, :, c0:c0 + ci, :]
        pieces.append(jnp.transpose(wi, (3, 0, 1, 2)).reshape(cout, 9 * ci))
        c0 += ci
    w_l = jnp.concatenate(pieces, axis=1) if len(pieces) > 1 else pieces[0]

    if stride == 1:
        Ho, Wo = H, W
        M = Ho * Wo                               # whole image per grid step
        L = (H + 2) * W + 2
        flats = []
        for x in xs:
            xp = jnp.pad(x, ((0, 0), (0, 0), (1, 1), (0, 0)))      # row halo
            xf = xp.reshape(N, x.shape[1], (H + 2) * W)
            flats.append(jnp.pad(xf, ((0, 0), (0, 0), (1, 1))))    # flat 1-elem halo
        offsets = tuple(ky * W + kx for ky in range(3) for kx in range(3))
        masks = tuple('l' if kx == 0 else ('r' if kx == 2 else None)
                      for ky in range(3) for kx in range(3))
        w_mod, out_cols = W, M
    else:  # stride == 2: space-to-depth so only the needed outputs are computed
        assert len(xs) == 1, "stride-2 path takes a single input"
        assert H % 2 == 0 and W % 2 == 0, "stride-2 path assumes even H, W"
        x = xs[0]
        Ho, Wo = H // 2, W // 2
        Wp = Wo + 1                               # one junk column per output row
        M = Ho * Wp
        xp = jnp.pad(x, ((0, 0), (0, 0), (1, 1), (1, 1)))
        s2d = (xp.reshape(N, cin_tot, (H + 2) // 2, 2, (W + 2) // 2, 2)
                 .transpose(0, 1, 3, 5, 2, 4))    # (N, C, p, q, Ho+1, Wo+1)
        flats = [s2d.reshape(N, cin_tot, 4 * (Ho + 1) * Wp)]
        L = 4 * (Ho + 1) * Wp
        A = (Ho + 1) * Wp
        # Junk-column outputs (x == Wo) read wrapped positions inside the same
        # buffer; all slices stay in-bounds and the column is dropped below.
        offsets = tuple((2 * (ky % 2) + (kx % 2)) * A + (ky // 2) * Wp + (kx // 2)
                        for ky in range(3) for kx in range(3))
        masks = (None,) * 9                       # zero borders come from the pad
        w_mod, out_cols = Wp, M

    kern = functools.partial(
        _conv9_kernel, cins=cins, M=M, offsets=offsets, masks=masks,
        w_mod=w_mod, act=act, sig_start=sig_start)

    in_specs = [pl.BlockSpec((None, ci, L), lambda n: (n, 0, 0)) for ci in cins]
    in_specs += [pl.BlockSpec((cout, 9 * cin_tot), lambda n: (0, 0)),
                 pl.BlockSpec((cout, 1), lambda n: (0, 0))]

    y = pl.pallas_call(
        kern,
        out_shape=jax.ShapeDtypeStruct((N, cout, out_cols), xs[0].dtype),
        grid_spec=pltpu.PrefetchScalarGridSpec(
            num_scalar_prefetch=0,
            grid=(N,),                            # N>=2 -> both v7x TCs get work
            in_specs=in_specs,
            out_specs=pl.BlockSpec((None, cout, M), lambda n: (n, 0, 0)),
            scratch_shapes=[pltpu.VMEM((9 * cin_tot, M), jnp.float32)],
        ),
        compiler_params=pltpu.CompilerParams(
            dimension_semantics=("parallel",),
            # Tiny blocks: double-buffers comfortably, well under v7x's 64 MiB.
            vmem_limit_bytes=32 * 1024 * 1024),
    )(*flats, w_l, b.reshape(cout, 1))

    if stride == 1:
        return y.reshape(N, cout, Ho, Wo)
    # TODO(synk): consume the (Ho, Wo+1) junk-column layout directly in the next
    # conv's tap offsets instead of slicing (negligible at these shapes).
    return y.reshape(N, cout, Ho, Wo + 1)[..., :Wo]


def dense_bias_act(p, w, b, *, H, W, act=True):
    """p: (N, Kin, H*W) patches, w: (Cout, Kin), b: (Cout,) -> (N, Cout, H, W)."""
    N, kin, L = p.shape
    cout = int(w.shape[0])
    M = L                                          # whole image per grid step
    out = pl.pallas_call(
        functools.partial(_dense_kernel, act=act),
        out_shape=jax.ShapeDtypeStruct((N, cout, L), p.dtype),
        grid_spec=pltpu.PrefetchScalarGridSpec(
            num_scalar_prefetch=0,
            grid=(N,),
            in_specs=[pl.BlockSpec((None, kin, M), lambda n: (n, 0, 0)),
                      pl.BlockSpec((cout, kin), lambda n: (0, 0)),
                      pl.BlockSpec((cout, 1), lambda n: (0, 0))],
            out_specs=pl.BlockSpec((None, cout, M), lambda n: (n, 0, 0)),
        ),
        compiler_params=pltpu.CompilerParams(
            dimension_semantics=("parallel",),
            vmem_limit_bytes=32 * 1024 * 1024),
    )(p, w, b.reshape(cout, 1))
    return out.reshape(N, cout, H, W)


# ----------------------------------------------------------------------------
# JAX glue: bilinear 2x upsample (PyTorch align_corners=False semantics), NCHW
# ----------------------------------------------------------------------------
def upsample2x(x):
    """x: (N,C,H,W) -> (N,C,2H,2W). Matches nn.Upsample(2,'bilinear',False)."""
    def up_axis(a, axis):
        n = a.shape[axis]
        first = lax.slice_in_dim(a, 0, 1, axis=axis)
        last = lax.slice_in_dim(a, n - 1, n, axis=axis)
        prev = jnp.concatenate([first, lax.slice_in_dim(a, 0, n - 1, axis=axis)],
                               axis=axis)
        nxt = jnp.concatenate([lax.slice_in_dim(a, 1, n, axis=axis), last],
                              axis=axis)
        even = 0.25 * prev + 0.75 * a       # out[2j]
        odd = 0.75 * a + 0.25 * nxt         # out[2j+1]
        stacked = jnp.stack([even, odd], axis=axis + 1)
        new_shape = list(a.shape)
        new_shape[axis] = 2 * n
        return stacked.reshape(new_shape)

    return up_axis(up_axis(x, 2), 3)


# ----------------------------------------------------------------------------
# JAX glue: DCNv2 modulated deformable sampling (gather) -> (g, k, c) patches
# ----------------------------------------------------------------------------
def dcn_v2_patches(x, conv_off_out, dg):
    """x: (N,C,H,W); conv_off_out: (N, 3*dg*9, H, W) with the mask sigmoid
    ALREADY applied in the conv_offset Pallas kernel.

    Returns (N, 9*C, H*W) patches in (group, k, channel) row order, matching a
    DCN weight permuted to (Cout, dg, 3, 3, cpg) -> (Cout, 9*C).
    """
    N, C, H, W = x.shape
    K = 9
    cpg = C // dg

    # mmcv layout: offset channels = g*2K + 2k + {0: dy, 1: dx}; mask = 2dgK + gK + k.
    off = conv_off_out[:, :2 * dg * K].reshape(N, dg, K, 2, H, W)
    off_y = off[:, :, :, 0]                                # (N, dg, K, H, W)
    off_x = off[:, :, :, 1]
    mask = conv_off_out[:, 2 * dg * K:].reshape(N, dg, K, H, W)
    # Note: the torch module only *logs* when mean(|offset|) > 50; no compute effect.

    kk = jnp.arange(K)
    ky = (kk // 3 - 1).astype(jnp.float32)
    kx = (kk % 3 - 1).astype(jnp.float32)
    base_y = (jnp.arange(H, dtype=jnp.float32)[None, None, None, :, None]
              + ky[None, None, :, None, None])
    base_x = (jnp.arange(W, dtype=jnp.float32)[None, None, None, None, :]
              + kx[None, None, :, None, None])
    sy = base_y + off_y                                    # (N, dg, K, H, W)
    sx = base_x + off_x

    y0 = jnp.floor(sy)
    x0 = jnp.floor(sx)
    fy = sy - y0
    fx = sx - x0
    y0i = y0.astype(jnp.int32)
    x0i = x0.astype(jnp.int32)
    y1i = y0i + 1
    x1i = x0i + 1

    xg = x.reshape(N, dg, cpg, H, W)
    n_idx = jnp.arange(N).reshape(N, 1, 1, 1, 1, 1)
    g_idx = jnp.arange(dg).reshape(1, dg, 1, 1, 1, 1)
    c_idx = jnp.arange(cpg).reshape(1, 1, 1, cpg, 1, 1)

    # TODO(synk): data-dependent bilinear gather stays in XLA (no clean Pallas
    # equivalent for arbitrary per-pixel addresses on TPU).
    def corner(yi, xi, wy, wx):
        valid = (yi >= 0) & (yi <= H - 1) & (xi >= 0) & (xi <= W - 1)
        yc = jnp.clip(yi, 0, H - 1)
        xc = jnp.clip(xi, 0, W - 1)
        v = xg[n_idx, g_idx, c_idx, yc[:, :, :, None], xc[:, :, :, None]]
        wgt = (wy * wx * valid.astype(jnp.float32))[:, :, :, None]
        return v * wgt                                     # (N, dg, K, cpg, H, W)

    val = (corner(y0i, x0i, (1 - fy), (1 - fx))
           + corner(y0i, x1i, (1 - fy), fx)
           + corner(y1i, x0i, fy, (1 - fx))
           + corner(y1i, x1i, fy, fx))
    val = val * mask[:, :, :, None]                        # modulation
    # (N, dg, K, cpg, H, W) -> (N, 9*C, H*W), no HBM transpose needed.
    return val.reshape(N, K * C, H * W)


# ----------------------------------------------------------------------------
# Full Alignment forward (NCHW)
# ----------------------------------------------------------------------------
def alignment_forward(nbr_feat, ref_feat, params, *, dg):
    # torch.cat([nbr, ref], 1) followed by conv1_1: concat fused into the kernel.
    offset1_1 = conv3x3([nbr_feat, ref_feat], *params["c1_1"], act="lrelu")
    offset2_1 = conv3x3(offset1_1, *params["c2_1"], stride=2, act="lrelu")
    offset2_1 = conv3x3(offset2_1, *params["c2_2"], act="lrelu")
    offset3_1 = conv3x3(offset2_1, *params["c3_1"], stride=2, act="lrelu")
    offset3_1 = conv3x3(offset3_1, *params["c3_2"], act="lrelu")
    up3 = upsample2x(offset3_1)
    offset2_2 = conv3x3([offset2_1, up3], *params["c2_3"], act="lrelu")
    up2 = upsample2x(offset2_2)
    offset = conv3x3([offset1_1, up2], *params["c1_2"], act="lrelu")

    # DCNv2Pack: conv_offset applied to the offset feature (mask sigmoid fused
    # into the kernel); the deformable conv samples nbr_feat.
    K = 9
    conv_off_out = conv3x3(offset, *params["dcn_offset"],
                           act="offset_mask", sig_start=2 * dg * K)
    patches = dcn_v2_patches(nbr_feat, conv_off_out, dg)

    N, C, H, W = nbr_feat.shape
    cout = params["dcn_w"].shape[-1]
    cpg = C // dg
    # Permute the DCN weight once to match the (g, k, c) patch row order.
    w_d = (params["dcn_w"].reshape(3, 3, dg, cpg, cout)
           .transpose(4, 2, 0, 1, 3).reshape(cout, K * C))
    # DCN conv (im2col matmul) + bias + the module's final LeakyReLU, fused.
    feat = dense_bias_act(patches, w_d, params["dcn_b"], H=H, W=W, act=True)
    return feat


# ----------------------------------------------------------------------------
# Deterministic synthetic parameters (HWIO conv weights)
# ----------------------------------------------------------------------------
def init_params(key, num_feat, dg, scale=0.05):
    keys = jax.random.split(key, 10)

    def conv_p(k, cin, cout):
        kw, kb = jax.random.split(k)
        w = scale * jax.random.normal(kw, (3, 3, cin, cout), jnp.float32)
        b = scale * jax.random.normal(kb, (cout,), jnp.float32)
        return w, b

    nf = num_feat
    kdw, kdb = jax.random.split(keys[9])
    return {
        "c1_1": conv_p(keys[0], 2 * nf, nf),
        "c2_1": conv_p(keys[1], nf, nf),
        "c2_2": conv_p(keys[2], nf, nf),
        "c3_1": conv_p(keys[3], nf, nf),
        "c3_2": conv_p(keys[4], nf, nf),
        "c2_3": conv_p(keys[5], 2 * nf, nf),
        "c1_2": conv_p(keys[6], 2 * nf, nf),
        # dcn.conv_offset: nf -> dg*3*9 channels (offsets then mask).
        "dcn_offset": conv_p(keys[7], nf, 3 * dg * 9),
        # dcn main conv weight (HWIO) + bias.
        "dcn_w": scale * jax.random.normal(kdw, (3, 3, nf, nf), jnp.float32),
        "dcn_b": scale * jax.random.normal(kdb, (nf,), jnp.float32),
    }


# ----------------------------------------------------------------------------
if __name__ == "__main__":
    N, NF, H, W = 2, 16, 16, 16          # batch, num_feat, spatial
    DG = 8                               # deformable groups (divides NF)

    key = jax.random.PRNGKey(0)
    k_nbr, k_ref, k_par = jax.random.split(key, 3)
    nbr = jax.random.normal(k_nbr, (N, NF, H, W), jnp.float32)
    ref = jax.random.normal(k_ref, (N, NF, H, W), jnp.float32)
    params = init_params(k_par, NF, DG)

    fwd = jax.jit(functools.partial(alignment_forward, dg=DG))
    out = fwd(nbr, ref, params)
    jax.block_until_ready(out)
    assert out.shape == (N, NF, H, W)
    print("KERNEL_OK")
</pallas_src>

<mosaic_0001>
module attributes {stable_mosaic.version = 11 : i64} {
  func.func @_conv9_kernel(%arg0: i32, %arg1: memref<1x16x290xf32, #tpu.memory_space<vmem>>, %arg2: memref<1x16x290xf32, #tpu.memory_space<vmem>>, %arg3: memref<16x288xf32, #tpu.memory_space<vmem>>, %arg4: memref<16x1xf32, #tpu.memory_space<vmem>>, %arg5: memref<1x16x256xf32, #tpu.memory_space<vmem>>, %arg6: memref<288x256xf32, #tpu.memory_space<vmem>>) attributes {dimension_semantics = [#tpu.dimension_semantics<parallel>], iteration_bounds = array<i64: 2>, scalar_prefetch = 0 : i64, scratch_operands = 1 : i64, tpu.core_type = #tpu.core_type<tc>, window_params = [{transform_indices = @transform_0, window_bounds = array<i64: 1, 16, 290>}, {transform_indices = @transform_1, window_bounds = array<i64: 1, 16, 290>}, {pipeline_mode = #tpu.pipeline_mode<synchronous>, transform_indices = @transform_2, window_bounds = array<i64: 16, 288>}, {pipeline_mode = #tpu.pipeline_mode<synchronous>, transform_indices = @transform_3, window_bounds = array<i64: 16, 1>}, {transform_indices = @transform_4, window_bounds = array<i64: 1, 16, 256>}]} {
    %0 = tpu.iota {dimensions = array<i32: 1>} : vector<1x256xi32>
    %c16_i32 = arith.constant 16 : i32
    %c0_i32 = arith.constant 0 : i32
    %1 = arith.cmpi eq, %c16_i32, %c0_i32 : i32
    %c1_i32 = arith.constant 1 : i32
    %2 = arith.select %1, %c1_i32, %c16_i32 : i32
    %3 = vector.broadcast %2 : i32 to vector<1x256xi32>
    %4 = arith.remsi %0, %3 : vector<1x256xi32>
    %c0_i32_0 = arith.constant 0 : i32
    %5 = vector.broadcast %c0_i32_0 : i32 to vector<1x256xi32>
    %6 = arith.cmpi ne, %4, %5 : vector<1x256xi32>
    %c0_i32_1 = arith.constant 0 : i32
    %7 = vector.broadcast %c0_i32_1 : i32 to vector<1x256xi32>
    %8 = arith.cmpi slt, %4, %7 : vector<1x256xi32>
    %c0_i32_2 = arith.constant 0 : i32
    %9 = arith.cmpi slt, %2, %c0_i32_2 : i32
    %10 = vector.broadcast %9 : i1 to vector<1x256xi1>
    %11 = vector.broadcast %10 : vector<1x256xi1> to vector<1x256xi1>
    %12 = arith.xori %8, %11 : vector<1x256xi1>
    %13 = arith.andi %12, %6 : vector<1x256xi1>
    %14 = vector.broadcast %2 : i32 to vector<1x256xi32>
    %15 = arith.addi %4, %14 : vector<1x256xi32>
    %16 = arith.select %13, %15, %4 : vector<1x256xi1>, vector<1x256xi32>
    %c0_i32_3 = arith.constant 0 : i32
    %17 = vector.broadcast %c0_i32_3 : i32 to vector<1x256xi32>
    %18 = arith.cmpi ne, %16, %17 : vector<1x256xi32>
    %c15_i32 = arith.constant 15 : i32
    %19 = vector.broadcast %c15_i32 : i32 to vector<1x256xi32>
    %20 = arith.cmpi ne, %16, %19 : vector<1x256xi32>
    %c0 = arith.constant 0 : index
    %c0_4 = arith.constant 0 : index
    %c0_5 = arith.constant 0 : index
    %21 = vector.load %arg1[%c0, %c0_4, %c0_5] : memref<1x16x290xf32, #tpu.memory_space<vmem>>, vector<1x16x256xf32>
    %22 = vector.shape_cast %21 : vector<1x16x256xf32> to vector<16x256xf32>
    %cst = arith.constant 0.000000e+00 : f32
    %23 = vector.shape_cast %18 : vector<1x256xi1> to vector<1x256xi1>
    %24 = vector.broadcast %23 : vector<1x256xi1> to vector<16x256xi1>
    %25 = vector.broadcast %cst : f32 to vector<16x256xf32>
    %26 = arith.select %24, %22, %25 : vector<16x256xi1>, vector<16x256xf32>
    %c0_6 = arith.constant 0 : index
    %c0_7 = arith.constant 0 : index
    %27 = vector.load %arg6[%c0_6, %c0_7] : memref<288x256xf32, #tpu.memory_space<vmem>>, vector<16x256xf32>
    tpu.vector_store %arg6[%c0_6, %c0_7], %26 {strides = array<i32>} : memref<288x256xf32, #tpu.memory_space<vmem>>, vector<16x256xf32>,
    %c0_8 = arith.constant 0 : index
    %c0_9 = arith.constant 0 : index
    %c1 = arith.constant 1 : index
    %28 = vector.load %arg1[%c0_8, %c0_9, %c1] : memref<1x16x290xf32, #tpu.memory_space<vmem>>, vector<1x16x256xf32>
    %29 = vector.shape_cast %28 : vector<1x16x256xf32> to vector<16x256xf32>
    %c16 = arith.constant 16 : index
    %c0_10 = arith.constant 0 : index
    %30 = vector.load %arg6[%c16, %c0_10] : memref<288x256xf32, #tpu.memory_space<vmem>>, vector<16x256xf32>
    tpu.vector_store %arg6[%c16, %c0_10], %29 {strides = array<i32>} : memref<288x256xf32, #tpu.memory_space<vmem>>, vector<16x256xf32>,
    %c0_11 = arith.constant 0 : index
    %c0_12 = arith.constant 0 : index
    %c2 = arith.constant 2 : index
    %31 = vector.load %arg1[%c0_11, %c0_12, %c2] : memref<1x16x290xf32, #tpu.memory_space<vmem>>, vector<1x16x256xf32>
    %32 = vector.shape_cast %31 : vector<1x16x256xf32> to vector<16x256xf32>
    %cst_13 = arith.constant 0.000000e+00 : f32
    %33 = vector.shape_cast %20 : vector<1x256xi1> to vector<1x256xi1>
    %34 = vector.broadcast %33 : vector<1x256xi1> to vector<16x256xi1>
    %35 = vector.broadcast %cst_13 : f32 to vector<16x256xf32>
    %36 = arith.select %34, %32, %35 : vector<16x256xi1>, vector<16x256xf32>
    %c32 = arith.constant 32 : index
    %c0_14 = arith.constant 0 : index
    %37 = vector.load %arg6[%c32, %c0_14] : memref<288x256xf32, #tpu.memory_space<vmem>>, vector<16x256xf32>
    tpu.vector_store %arg6[%c32, %c0_14], %36 {strides = array<i32>} : memref<288x256xf32, #tpu.memory_space<vmem>>, vector<16x256xf32>,
    %c0_15 = arith.constant 0 : index
    %c0_16 = arith.constant 0 : index
    %c16_17 = arith.constant 16 : index
    %38 = vector.load %arg1[%c0_15, %c0_16, %c16_17] : memref<1x16x290xf32, #tpu.memory_space<vmem>>, vector<1x16x256xf32>
    %39 = vector.shape_cast %38 : vector<1x16x256xf32> to vector<16x256xf32>
    %cst_18 = arith.constant 0.000000e+00 : f32
    %40 = vector.shape_cast %18 : vector<1x256xi1> to vector<1x256xi1>
    %41 = vector.broadcast %40 : vector<1x256xi1> to vector<16x256xi1>
    %42 = vector.broadcast %cst_18 : f32 to vector<16x256xf32>
    %43 = arith.select %41, %39, %42 : vector<16x256xi1>, vector<16x256xf32>
    %c48 = arith.constant 48 : index
    %c0_19 = arith.constant 0 : index
    %44 = vector.load %arg6[%c48, %c0_19] : memref<288x256xf32, #tpu.memory_space<vmem>>, vector<16x256xf32>
    tpu.vector_store %arg6[%c48, %c0_19], %43 {strides = array<i32>} : memref<288x256xf32, #tpu.memory_space<vmem>>, vector<16x256xf32>,
    %c0_20 = arith.constant 0 : index
    %c0_21 = arith.constant 0 : index
    %c17 = arith.constant 17 : index
    %45 = vector.load %arg1[%c0_20, %c0_21, %c17] : memref<1x16x290xf32, #tpu.memory_space<vmem>>, vector<1x16x256xf32>
    %46 = vector.shape_cast %45 : vector<1x16x256xf32> to vector<16x256xf32>
    %c64 = arith.constant 64 : index
    %c0_22 = arith.constant 0 : index
    %47 = vector.load %arg6[%c64, %c0_22] : memref<288x256xf32, #tpu.memory_space<vmem>>, vector<16x256xf32>
    tpu.vector_store %arg6[%c64, %c0_22], %46 {strides = array<i32>} : memref<288x256xf32, #tpu.memory_space<vmem>>, vector<16x256xf32>,
    %c0_23 = arith.constant 0 : index
    %c0_24 = arith.constant 0 : index
    %c18 = arith.constant 18 : index
    %48 = vector.load %arg1[%c0_23, %c0_24, %c18] : memref<1x16x290xf32, #tpu.memory_space<vmem>>, vector<1x16x256xf32>
    %49 = vector.shape_cast %48 : vector<1x16x256xf32> to vector<16x256xf32>
    %cst_25 = arith.constant 0.000000e+00 : f32
    %50 = vector.shape_cast %20 : vector<1x256xi1> to vector<1x256xi1>
    %51 = vector.broadcast %50 : vector<1x256xi1> to vector<16x256xi1>
    %52 = vector.broadcast %cst_25 : f32 to vector<16x256xf32>
    %53 = arith.select %51, %49, %52 : vector<16x256xi1>, vector<16x256xf32>
    %c80 = arith.constant 80 : index
    %c0_26 = arith.constant 0 : index
    %54 = vector.load %arg6[%c80, %c0_26] : memref<288x256xf32, #tpu.memory_space<vmem>>, vector<16x256xf32>
    tpu.vector_store %arg6[%c80, %c0_26], %53 {strides = array<i32>} : memref<288x256xf32, #tpu.memory_space<vmem>>, vector<16x256xf32>,
    %c0_27 = arith.constant 0 : index
    %c0_28 = arith.constant 0 : index
    %c32_29 = arith.constant 32 : index
    %55 = vector.load %arg1[%c0_27, %c0_28, %c32_29] : memref<1x16x290xf32, #tpu.memory_space<vmem>>, vector<1x16x256xf32>
    %56 = vector.shape_cast %55 : vector<1x16x256xf32> to vector<16x256xf32>
    %cst_30 = arith.constant 0.000000e+00 : f32
    %57 = vector.shape_cast %18 : vector<1x256xi1> to vector<1x256xi1>
    %58 = vector.broadcast %57 : vector<1x256xi1> to vector<16x256xi1>
    %59 = vector.broadcast %cst_30 : f32 to vector<16x256xf32>
    %60 = arith.select %58, %56, %59 : vector<16x256xi1>, vector<16x256xf32>
    %c96 = arith.constant 96 : index
    %c0_31 = arith.constant 0 : index
    %61 = vector.load %arg6[%c96, %c0_31] : memref<288x256xf32, #tpu.memory_space<vmem>>, vector<16x256xf32>
    tpu.vector_store %arg6[%c96, %c0_31], %60 {strides = array<i32>} : memref<288x256xf32, #tpu.memory_space<vmem>>, vector<16x256xf32>,
    %c0_32 = arith.constant 0 : index
    %c0_33 = arith.constant 0 : index
    %c33 = arith.constant 33 : index
    %62 = vector.load %arg1[%c0_32, %c0_33, %c33] : memref<1x16x290xf32, #tpu.memory_space<vmem>>, vector<1x16x256xf32>
    %63 = vector.shape_cast %62 : vector<1x16x256xf32> to vector<16x256xf32>
    %c112 = arith.constant 112 : index
    %c0_34 = arith.constant 0 : index
    %64 = vector.load %arg6[%c112, %c0_34] : memref<288x256xf32, #tpu.memory_space<vmem>>, vector<16x256xf32>
    tpu.vector_store %arg6[%c112, %c0_34], %63 {strides = array<i32>} : memref<288x256xf32, #tpu.memory_space<vmem>>, vector<16x256xf32>,
    %c0_35 = arith.constant 0 : index
    %c0_36 = arith.constant 0 : index
    %c34 = arith.constant 34 : index
    %65 = vector.load %arg1[%c0_35, %c0_36, %c34] : memref<1x16x290xf32, #tpu.memory_space<vmem>>, vector<1x16x256xf32>
    %66 = vector.shape_cast %65 : vector<1x16x256xf32> to vector<16x256xf32>
    %cst_37 = arith.constant 0.000000e+00 : f32
    %67 = vector.shape_cast %20 : vector<1x256xi1> to vector<1x256xi1>
    %68 = vector.broadcast %67 : vector<1x256xi1> to vector<16x256xi1>
    %69 = vector.broadcast %cst_37 : f32 to vector<16x256xf32>
    %70 = arith.select %68, %66, %69 : vector<16x256xi1>, vector<16x256xf32>
    %c128 = arith.constant 128 : index
    %c0_38 = arith.constant 0 : index
    %71 = vector.load %arg6[%c128, %c0_38] : memref<288x256xf32, #tpu.memory_space<vmem>>, vector<16x256xf32>
    tpu.vector_store %arg6[%c128, %c0_38], %70 {strides = array<i32>} : memref<288x256xf32, #tpu.memory_space<vmem>>, vector<16x256xf32>,
    %c0_39 = arith.constant 0 : index
    %c0_40 = arith.constant 0 : index
    %c0_41 = arith.constant 0 : index
    %72 = vector.load %arg2[%c0_39, %c0_40, %c0_41] : memref<1x16x290xf32, #tpu.memory_space<vmem>>, vector<1x16x256xf32>
    %73 = vector.shape_cast %72 : vector<1x16x256xf32> to vector<16x256xf32>
    %cst_42 = arith.constant 0.000000e+00 : f32
    %74 = vector.shape_cast %18 : vector<1x256xi1> to vector<1x256xi1>
    %75 = vector.broadcast %74 : vector<1x256xi1> to vector<16x256xi1>
    %76 = vector.broadcast %cst_42 : f32 to vector<16x256xf32>
    %77 = arith.select %75, %73, %76 : vector<16x256xi1>, vector<16x256xf32>
    %c144 = arith.constant 144 : index
    %c0_43 = arith.constant 0 : index
    %78 = vector.load %arg6[%c144, %c0_43] : memref<288x256xf32, #tpu.memory_space<vmem>>, vector<16x256xf32>
    tpu.vector_store %arg6[%c144, %c0_43], %77 {strides = array<i32>} : memref<288x256xf32, #tpu.memory_space<vmem>>, vector<16x256xf32>,
    %c0_44 = arith.constant 0 : index
    %c0_45 = arith.constant 0 : index
    %c1_46 = arith.constant 1 : index
    %79 = vector.load %arg2[%c0_44, %c0_45, %c1_46] : memref<1x16x290xf32, #tpu.memory_space<vmem>>, vector<1x16x256xf32>
    %80 = vector.shape_cast %79 : vector<1x16x256xf32> to vector<16x256xf32>
    %c160 = arith.constant 160 : index
    %c0_47 = arith.constant 0 : index
    %81 = vector.load %arg6[%c160, %c0_47] : memref<288x256xf32, #tpu.memory_space<vmem>>, vector<16x256xf32>
    tpu.vector_store %arg6[%c160, %c0_47], %80 {strides = array<i32>} : memref<288x256xf32, #tpu.memory_space<vmem>>, vector<16x256xf32>,
    %c0_48 = arith.constant 0 : index
    %c0_49 = arith.constant 0 : index
    %c2_50 = arith.constant 2 : index
    %82 = vector.load %arg2[%c0_48, %c0_49, %c2_50] : memref<1x16x290xf32, #tpu.memory_space<vmem>>, vector<1x16x256xf32>
    %83 = vector.shape_cast %82 : vector<1x16x256xf32> to vector<16x256xf32>
    %cst_51 = arith.constant 0.000000e+00 : f32
    %84 = vector.shape_cast %20 : vector<1x256xi1> to vector<1x256xi1>
    %85 = vector.broadcast %84 : vector<1x256xi1> to vector<16x256xi1>
    %86 = vector.broadcast %cst_51 : f32 to vector<16x256xf32>
    %87 = arith.select %85, %83, %86 : vector<16x256xi1>, vector<16x256xf32>
    %c176 = arith.constant 176 : index
    %c0_52 = arith.constant 0 : index
    %88 = vector.load %arg6[%c176, %c0_52] : memref<288x256xf32, #tpu.memory_space<vmem>>, vector<16x256xf32>
    tpu.vector_store %arg6[%c176, %c0_52], %87 {strides = array<i32>} : memref<288x256xf32, #tpu.memory_space<vmem>>, vector<16x256xf32>,
    %c0_53 = arith.constant 0 : index
    %c0_54 = arith.constant 0 : index
    %c16_55 = arith.constant 16 : index
    %89 = vector.load %arg2[%c0_53, %c0_54, %c16_55] : memref<1x16x290xf32, #tpu.memory_space<vmem>>, vector<1x16x256xf32>
    %90 = vector.shape_cast %89 : vector<1x16x256xf32> to vector<16x256xf32>
    %cst_56 = arith.constant 0.000000e+00 : f32
    %91 = vector.shape_cast %18 : vector<1x256xi1> to vector<1x256xi1>
    %92 = vector.broadcast %91 : vector<1x256xi1> to vector<16x256xi1>
    %93 = vector.broadcast %cst_56 : f32 to vector<16x256xf32>
    %94 = arith.select %92, %90, %93 : vector<16x256xi1>, vector<16x256xf32>
    %c192 = arith.constant 192 : index
    %c0_57 = arith.constant 0 : index
    %95 = vector.load %arg6[%c192, %c0_57] : memref<288x256xf32, #tpu.memory_space<vmem>>, vector<16x256xf32>
    tpu.vector_store %arg6[%c192, %c0_57], %94 {strides = array<i32>} : memref<288x256xf32, #tpu.memory_space<vmem>>, vector<16x256xf32>,
    %c0_58 = arith.constant 0 : index
    %c0_59 = arith.constant 0 : index
    %c17_60 = arith.constant 17 : index
    %96 = vector.load %arg2[%c0_58, %c0_59, %c17_60] : memref<1x16x290xf32, #tpu.memory_space<vmem>>, vector<1x16x256xf32>
    %97 = vector.shape_cast %96 : vector<1x16x256xf32> to vector<16x256xf32>
    %c208 = arith.constant 208 : index
    %c0_61 = arith.constant 0 : index
    %98 = vector.load %arg6[%c208, %c0_61] : memref<288x256xf32, #tpu.memory_space<vmem>>, vector<16x256xf32>
    tpu.vector_store %arg6[%c208, %c0_61], %97 {strides = array<i32>} : memref<288x256xf32, #tpu.memory_space<vmem>>, vector<16x256xf32>,
    %c0_62 = arith.constant 0 : index
    %c0_63 = arith.constant 0 : index
    %c18_64 = arith.constant 18 : index
    %99 = vector.load %arg2[%c0_62, %c0_63, %c18_64] : memref<1x16x290xf32, #tpu.memory_space<vmem>>, vector<1x16x256xf32>
    %100 = vector.shape_cast %99 : vector<1x16x256xf32> to vector<16x256xf32>
    %cst_65 = arith.constant 0.000000e+00 : f32
    %101 = vector.shape_cast %20 : vector<1x256xi1> to vector<1x256xi1>
    %102 = vector.broadcast %101 : vector<1x256xi1> to vector<16x256xi1>
    %103 = vector.broadcast %cst_65 : f32 to vector<16x256xf32>
    %104 = arith.select %102, %100, %103 : vector<16x256xi1>, vector<16x256xf32>
    %c224 = arith.constant 224 : index
    %c0_66 = arith.constant 0 : index
    %105 = vector.load %arg6[%c224, %c0_66] : memref<288x256xf32, #tpu.memory_space<vmem>>, vector<16x256xf32>
    tpu.vector_store %arg6[%c224, %c0_66], %104 {strides = array<i32>} : memref<288x256xf32, #tpu.memory_space<vmem>>, vector<16x256xf32>,
    %c0_67 = arith.constant 0 : index
    %c0_68 = arith.constant 0 : index
    %c32_69 = arith.constant 32 : index
    %106 = vector.load %arg2[%c0_67, %c0_68, %c32_69] : memref<1x16x290xf32, #tpu.memory_space<vmem>>, vector<1x16x256xf32>
    %107 = vector.shape_cast %106 : vector<1x16x256xf32> to vector<16x256xf32>
    %cst_70 = arith.constant 0.000000e+00 : f32
    %108 = vector.shape_cast %18 : vector<1x256xi1> to vector<1x256xi1>
    %109 = vector.broadcast %108 : vector<1x256xi1> to vector<16x256xi1>
    %110 = vector.broadcast %cst_70 : f32 to vector<16x256xf32>
    %111 = arith.select %109, %107, %110 : vector<16x256xi1>, vector<16x256xf32>
    %c240 = arith.constant 240 : index
    %c0_71 = arith.constant 0 : index
    %112 = vector.load %arg6[%c240, %c0_71] : memref<288x256xf32, #tpu.memory_space<vmem>>, vector<16x256xf32>
    tpu.vector_store %arg6[%c240, %c0_71], %111 {strides = array<i32>} : memref<288x256xf32, #tpu.memory_space<vmem>>, vector<16x256xf32>,
    %c0_72 = arith.constant 0 : index
    %c0_73 = arith.constant 0 : index
    %c33_74 = arith.constant 33 : index
    %113 = vector.load %arg2[%c0_72, %c0_73, %c33_74] : memref<1x16x290xf32, #tpu.memory_space<vmem>>, vector<1x16x256xf32>
    %114 = vector.shape_cast %113 : vector<1x16x256xf32> to vector<16x256xf32>
    %c256 = arith.constant 256 : index
    %c0_75 = arith.constant 0 : index
    %115 = vector.load %arg6[%c256, %c0_75] : memref<288x256xf32, #tpu.memory_space<vmem>>, vector<16x256xf32>
    tpu.vector_store %arg6[%c256, %c0_75], %114 {strides = array<i32>} : memref<288x256xf32, #tpu.memory_space<vmem>>, vector<16x256xf32>,
    %c0_76 = arith.constant 0 : index
    %c0_77 = arith.constant 0 : index
    %c34_78 = arith.constant 34 : index
    %116 = vector.load %arg2[%c0_76, %c0_77, %c34_78] : memref<1x16x290xf32, #tpu.memory_space<vmem>>, vector<1x16x256xf32>
    %117 = vector.shape_cast %116 : vector<1x16x256xf32> to vector<16x256xf32>
    %cst_79 = arith.constant 0.000000e+00 : f32
    %118 = vector.shape_cast %20 : vector<1x256xi1> to vector<1x256xi1>
    %119 = vector.broadcast %118 : vector<1x256xi1> to vector<16x256xi1>
    %120 = vector.broadcast %cst_79 : f32 to vector<16x256xf32>
    %121 = arith.select %119, %117, %120 : vector<16x256xi1>, vector<16x256xf32>
    %c272 = arith.constant 272 : index
    %c0_80 = arith.constant 0 : index
    %122 = vector.load %arg6[%c272, %c0_80] : memref<288x256xf32, #tpu.memory_space<vmem>>, vector<16x256xf32>
    tpu.vector_store %arg6[%c272, %c0_80], %121 {strides = array<i32>} : memref<288x256xf32, #tpu.memory_space<vmem>>, vector<16x256xf32>,
    %c0_81 = arith.constant 0 : index
    %c0_82 = arith.constant 0 : index
    %123 = vector.load %arg3[%c0_81, %c0_82] : memref<16x288xf32, #tpu.memory_space<vmem>>, vector<16x288xf32>
    %c0_83 = arith.constant 0 : index
    %c0_84 = arith.constant 0 : index
    %124 = vector.load %arg6[%c0_83, %c0_84] : memref<288x256xf32, #tpu.memory_space<vmem>>, vector<288x256xf32>
    %cst_85 = arith.constant dense<0.000000e+00> : vector<16x256xf32>
    %125 = tpu.matmul %123, %124, %cst_85 {dimension_numbers = #tpu.dot_dimension_numbers<[1], [0], [0], [1], [0, 0, 1, 1], [], []>} : vector<16x288xf32>, vector<288x256xf32>, vector<16x256xf32> -> vector<16x256xf32>
    %c0_86 = arith.constant 0 : index
    %c0_87 = arith.constant 0 : index
    %126 = vector.load %arg4[%c0_86, %c0_87] : memref<16x1xf32, #tpu.memory_space<vmem>>, vector<16x1xf32>
    %127 = vector.broadcast %126 : vector<16x1xf32> to vector<16x256xf32>
    %128 = arith.addf %125, %127 : vector<16x256xf32>
    %cst_88 = arith.constant 0.000000e+00 : f32
    %129 = vector.broadcast %cst_88 : f32 to vector<16x256xf32>
    %130 = arith.cmpf oge, %128, %129 : vector<16x256xf32>
    %cst_89 = arith.constant 1.000000e-01 : f32
    %131 = vector.broadcast %cst_89 : f32 to vector<16x256xf32>
    %132 = arith.mulf %128, %131 : vector<16x256xf32>
    %133 = arith.select %130, %128, %132 : vector<16x256xi1>, vector<16x256xf32>
    %c0_90 = arith.constant 0 : index
    %c0_91 = arith.constant 0 : index
    %c0_92 = arith.constant 0 : index
    %134 = vector.load %arg5[%c0_90, %c0_91, %c0_92] : memref<1x16x256xf32, #tpu.memory_space<vmem>>, vector<1x16x256xf32>
    %135 = vector.shape_cast %134 : vector<1x16x256xf32> to vector<16x256xf32>
    %136 = vector.shape_cast %133 : vector<16x256xf32> to vector<1x16x256xf32>
    tpu.vector_store %arg5[%c0_90, %c0_91, %c0_92], %136 {strides = array<i32>} : memref<1x16x256xf32, #tpu.memory_space<vmem>>, vector<1x16x256xf32>,
    return
  }
  func.func @transform_0(%arg0: i32) -> (i32, i32, i32) {
    %c0_i32 = arith.constant 0 : i32
    %c0_i32_0 = arith.constant 0 : i32
    %c0_i32_1 = arith.constant 0 : i32
    return %arg0, %c0_i32, %c0_i32_0 : i32, i32, i32
  }
  func.func @transform_1(%arg0: i32) -> (i32, i32, i32) {
    %c0_i32 = arith.constant 0 : i32
    %c0_i32_0 = arith.constant 0 : i32
    %c0_i32_1 = arith.constant 0 : i32
    return %arg0, %c0_i32, %c0_i32_0 : i32, i32, i32
  }
  func.func @transform_2(%arg0: i32) -> (i32, i32) {
    %c0_i32 = arith.constant 0 : i32
    %c0_i32_0 = arith.constant 0 : i32
    %c0_i32_1 = arith.constant 0 : i32
    return %c0_i32, %c0_i32_0 : i32, i32
  }
  func.func @transform_3(%arg0: i32) -> (i32, i32) {
    %c0_i32 = arith.constant 0 : i32
    %c0_i32_0 = arith.constant 0 : i32
    %c0_i32_1 = arith.constant 0 : i32
    return %c0_i32, %c0_i32_0 : i32, i32
  }
  func.func @transform_4(%arg0: i32) -> (i32, i32, i32) {
    %c0_i32 = arith.constant 0 : i32
    %c0_i32_0 = arith.constant 0 : i32
    %c0_i32_1 = arith.constant 0 : i32
    return %arg0, %c0_i32, %c0_i32_0 : i32, i32, i32
  }
}

module attributes {stable_mosaic.version = 11 : i64} {
  func.func @_conv9_kernel(%arg0: i32, %arg1: memref<1x16x324xf32, #tpu.memory_space<vmem>>, %arg2: memref<16x144xf32, #tpu.memory_space<vmem>>, %arg3: memref<16x1xf32, #tpu.memory_space<vmem>>, %arg4: memref<1x16x72xf32, #tpu.memory_space<vmem>>, %arg5: memref<144x72xf32, #tpu.memory_space<vmem>>) attributes {dimension_semantics = [#tpu.dimension_semantics<parallel>], iteration_bounds = array<i64: 2>, scalar_prefetch = 0 : i64, scratch_operands = 1 : i64, tpu.core_type = #tpu.core_type<tc>, window_params = [{transform_indices = @transform_0, window_bounds = array<i64: 1, 16, 324>}, {pipeline_mode = #tpu.pipeline_mode<synchronous>, transform_indices = @transform_1, window_bounds = array<i64: 16, 144>}, {pipeline_mode = #tpu.pipeline_mode<synchronous>, transform_indices = @transform_2, window_bounds = array<i64: 16, 1>}, {transform_indices = @transform_3, window_bounds = array<i64: 1, 16, 72>}]} {
    %c0 = arith.constant 0 : index
    %c0_0 = arith.constant 0 : index
    %c0_1 = arith.constant 0 : index
    %0 = vector.load %arg1[%c0, %c0_0, %c0_1] : memref<1x16x324xf32, #tpu.memory_space<vmem>>, vector<1x16x72xf32>
    %1 = vector.shape_cast %0 : vector<1x16x72xf32> to vector<16x72xf32>
    %c0_2 = arith.constant 0 : index
    %c0_3 = arith.constant 0 : index
    %2 = vector.load %arg5[%c0_2, %c0_3] : memref<144x72xf32, #tpu.memory_space<vmem>>, vector<16x72xf32>
    tpu.vector_store %arg5[%c0_2, %c0_3], %1 {strides = array<i32>} : memref<144x72xf32, #tpu.memory_space<vmem>>, vector<16x72xf32>,
    %c0_4 = arith.constant 0 : index
    %c0_5 = arith.constant 0 : index
    %c81 = arith.constant 81 : index
    %3 = vector.load %arg1[%c0_4, %c0_5, %c81] : memref<1x16x324xf32, #tpu.memory_space<vmem>>, vector<1x16x72xf32>
    %4 = vector.shape_cast %3 : vector<1x16x72xf32> to vector<16x72xf32>
    %c16 = arith.constant 16 : index
    %c0_6 = arith.constant 0 : index
    %5 = vector.load %arg5[%c16, %c0_6] : memref<144x72xf32, #tpu.memory_space<vmem>>, vector<16x72xf32>
    tpu.vector_store %arg5[%c16, %c0_6], %4 {strides = array<i32>} : memref<144x72xf32, #tpu.memory_space<vmem>>, vector<16x72xf32>,
    %c0_7 = arith.constant 0 : index
    %c0_8 = arith.constant 0 : index
    %c1 = arith.constant 1 : index
    %6 = vector.load %arg1[%c0_7, %c0_8, %c1] : memref<1x16x324xf32, #tpu.memory_space<vmem>>, vector<1x16x72xf32>
    %7 = vector.shape_cast %6 : vector<1x16x72xf32> to vector<16x72xf32>
    %c32 = arith.constant 32 : index
    %c0_9 = arith.constant 0 : index
    %8 = vector.load %arg5[%c32, %c0_9] : memref<144x72xf32, #tpu.memory_space<vmem>>, vector<16x72xf32>
    tpu.vector_store %arg5[%c32, %c0_9], %7 {strides = array<i32>} : memref<144x72xf32, #tpu.memory_space<vmem>>, vector<16x72xf32>,
    %c0_10 = arith.constant 0 : index
    %c0_11 = arith.constant 0 : index
    %c162 = arith.constant 162 : index
    %9 = vector.load %arg1[%c0_10, %c0_11, %c162] : memref<1x16x324xf32, #tpu.memory_space<vmem>>, vector<1x16x72xf32>
    %10 = vector.shape_cast %9 : vector<1x16x72xf32> to vector<16x72xf32>
    %c48 = arith.constant 48 : index
    %c0_12 = arith.constant 0 : index
    %11 = vector.load %arg5[%c48, %c0_12] : memref<144x72xf32, #tpu.memory_space<vmem>>, vector<16x72xf32>
    tpu.vector_store %arg5[%c48, %c0_12], %10 {strides = array<i32>} : memref<144x72xf32, #tpu.memory_space<vmem>>, vector<16x72xf32>,
    %c0_13 = arith.constant 0 : index
    %c0_14 = arith.constant 0 : index
    %c243 = arith.constant 243 : index
    %12 = vector.load %arg1[%c0_13, %c0_14, %c243] : memref<1x16x324xf32, #tpu.memory_space<vmem>>, vector<1x16x72xf32>
    %13 = vector.shape_cast %12 : vector<1x16x72xf32> to vector<16x72xf32>
    %c64 = arith.constant 64 : index
    %c0_15 = arith.constant 0 : index
    %14 = vector.load %arg5[%c64, %c0_15] : memref<144x72xf32, #tpu.memory_space<vmem>>, vector<16x72xf32>
    tpu.vector_store %arg5[%c64, %c0_15], %13 {strides = array<i32>} : memref<144x72xf32, #tpu.memory_space<vmem>>, vector<16x72xf32>,
    %c0_16 = arith.constant 0 : index
    %c0_17 = arith.constant 0 : index
    %c163 = arith.constant 163 : index
    %15 = vector.load %arg1[%c0_16, %c0_17, %c163] : memref<1x16x324xf32, #tpu.memory_space<vmem>>, vector<1x16x72xf32>
    %16 = vector.shape_cast %15 : vector<1x16x72xf32> to vector<16x72xf32>
    %c80 = arith.constant 80 : index
    %c0_18 = arith.constant 0 : index
    %17 = vector.load %arg5[%c80, %c0_18] : memref<144x72xf32, #tpu.memory_space<vmem>>, vector<16x72xf32>
    tpu.vector_store %arg5[%c80, %c0_18], %16 {strides = array<i32>} : memref<144x72xf32, #tpu.memory_space<vmem>>, vector<16x72xf32>,
    %c0_19 = arith.constant 0 : index
    %c0_20 = arith.constant 0 : index
    %c9 = arith.constant 9 : index
    %18 = vector.load %arg1[%c0_19, %c0_20, %c9] : memref<1x16x324xf32, #tpu.memory_space<vmem>>, vector<1x16x72xf32>
    %19 = vector.shape_cast %18 : vector<1x16x72xf32> to vector<16x72xf32>
    %c96 = arith.constant 96 : index
    %c0_21 = arith.constant 0 : index
    %20 = vector.load %arg5[%c96, %c0_21] : memref<144x72xf32, #tpu.memory_space<vmem>>, vector<16x72xf32>
    tpu.vector_store %arg5[%c96, %c0_21], %19 {strides = array<i32>} : memref<144x72xf32, #tpu.memory_space<vmem>>, vector<16x72xf32>,
    %c0_22 = arith.constant 0 : index
    %c0_23 = arith.constant 0 : index
    %c90 = arith.constant 90 : index
    %21 = vector.load %arg1[%c0_22, %c0_23, %c90] : memref<1x16x324xf32, #tpu.memory_space<vmem>>, vector<1x16x72xf32>
    %22 = vector.shape_cast %21 : vector<1x16x72xf32> to vector<16x72xf32>
    %c112 = arith.constant 112 : index
    %c0_24 = arith.constant 0 : index
    %23 = vector.load %arg5[%c112, %c0_24] : memref<144x72xf32, #tpu.memory_space<vmem>>, vector<16x72xf32>
    tpu.vector_store %arg5[%c112, %c0_24], %22 {strides = array<i32>} : memref<144x72xf32, #tpu.memory_space<vmem>>, vector<16x72xf32>,
    %c0_25 = arith.constant 0 : index
    %c0_26 = arith.constant 0 : index
    %c10 = arith.constant 10 : index
    %24 = vector.load %arg1[%c0_25, %c0_26, %c10] : memref<1x16x324xf32, #tpu.memory_space<vmem>>, vector<1x16x72xf32>
    %25 = vector.shape_cast %24 : vector<1x16x72xf32> to vector<16x72xf32>
    %c128 = arith.constant 128 : index
    %c0_27 = arith.constant 0 : index
    %26 = vector.load %arg5[%c128, %c0_27] : memref<144x72xf32, #tpu.memory_space<vmem>>, vector<16x72xf32>
    tpu.vector_store %arg5[%c128, %c0_27], %25 {strides = array<i32>} : memref<144x72xf32, #tpu.memory_space<vmem>>, vector<16x72xf32>,
    %c0_28 = arith.constant 0 : index
    %c0_29 = arith.constant 0 : index
    %27 = vector.load %arg2[%c0_28, %c0_29] : memref<16x144xf32, #tpu.memory_space<vmem>>, vector<16x144xf32>
    %c0_30 = arith.constant 0 : index
    %c0_31 = arith.constant 0 : index
    %28 = vector.load %arg5[%c0_30, %c0_31] : memref<144x72xf32, #tpu.memory_space<vmem>>, vector<144x72xf32>
    %cst = arith.constant dense<0.000000e+00> : vector<16x72xf32>
    %29 = tpu.matmul %27, %28, %cst {dimension_numbers = #tpu.dot_dimension_numbers<[1], [0], [0], [1], [0, 0, 1, 1], [], []>} : vector<16x144xf32>, vector<144x72xf32>, vector<16x72xf32> -> vector<16x72xf32>
    %c0_32 = arith.constant 0 : index
    %c0_33 = arith.constant 0 : index
    %30 = vector.load %arg3[%c0_32, %c0_33] : memref<16x1xf32, #tpu.memory_space<vmem>>, vector<16x1xf32>
    %31 = vector.broadcast %30 : vector<16x1xf32> to vector<16x72xf32>
    %32 = arith.addf %29, %31 : vector<16x72xf32>
    %cst_34 = arith.constant 0.000000e+00 : f32
    %33 = vector.broadcast %cst_34 : f32 to vector<16x72xf32>
    %34 = arith.cmpf oge, %32, %33 : vector<16x72xf32>
    %cst_35 = arith.constant 1.000000e-01 : f32
    %35 = vector.broadcast %cst_35 : f32 to vector<16x72xf32>
    %36 = arith.mulf %32, %35 : vector<16x72xf32>
    %37 = arith.select %34, %32, %36 : vector<16x72xi1>, vector<16x72xf32>
    %c0_36 = arith.constant 0 : index
    %c0_37 = arith.constant 0 : index
    %c0_38 = arith.constant 0 : index
    %38 = vector.load %arg4[%c0_36, %c0_37, %c0_38] : memref<1x16x72xf32, #tpu.memory_space<vmem>>, vector<1x16x72xf32>
    %39 = vector.shape_cast %38 : vector<1x16x72xf32> to vector<16x72xf32>
    %40 = vector.shape_cast %37 : vector<16x72xf32> to vector<1x16x72xf32>
    tpu.vector_store %arg4[%c0_36, %c0_37, %c0_38], %40 {strides = array<i32>} : memref<1x16x72xf32, #tpu.memory_space<vmem>>, vector<1x16x72xf32>,
    return
  }
  func.func @transform_0(%arg0: i32) -> (i32, i32, i32) {
    %c0_i32 = arith.constant 0 : i32
    %c0_i32_0 = arith.constant 0 : i32
    %c0_i32_1 = arith.constant 0 : i32
    return %arg0, %c0_i32, %c0_i32_0 : i32, i32, i32
  }
  func.func @transform_1(%arg0: i32) -> (i32, i32) {
    %c0_i32 = arith.constant 0 : i32
    %c0_i32_0 = arith.constant 0 : i32
    %c0_i32_1 = arith.constant 0 : i32
    return %c0_i32, %c0_i32_0 : i32, i32
  }
  func.func @transform_2(%arg0: i32) -> (i32, i32) {
    %c0_i32 = arith.constant 0 : i32
    %c0_i32_0 = arith.constant 0 : i32
    %c0_i32_1 = arith.constant 0 : i32
    return %c0_i32, %c0_i32_0 : i32, i32
  }
  func.func @transform_3(%arg0: i32) -> (i32, i32, i32) {
    %c0_i32 = arith.constant 0 : i32
    %c0_i32_0 = arith.constant 0 : i32
    %c0_i32_1 = arith.constant 0 : i32
    return %arg0, %c0_i32, %c0_i32_0 : i32, i32, i32
  }
}

module attributes {stable_mosaic.version = 11 : i64} {
  func.func @_conv9_kernel(%arg0: i32, %arg1: memref<1x16x82xf32, #tpu.memory_space<vmem>>, %arg2: memref<16x144xf32, #tpu.memory_space<vmem>>, %arg3: memref<16x1xf32, #tpu.memory_space<vmem>>, %arg4: memref<1x16x64xf32, #tpu.memory_space<vmem>>, %arg5: memref<144x64xf32, #tpu.memory_space<vmem>>) attributes {dimension_semantics = [#tpu.dimension_semantics<parallel>], iteration_bounds = array<i64: 2>, scalar_prefetch = 0 : i64, scratch_operands = 1 : i64, tpu.core_type = #tpu.core_type<tc>, window_params = [{transform_indices = @transform_0, window_bounds = array<i64: 1, 16, 82>}, {pipeline_mode = #tpu.pipeline_mode<synchronous>, transform_indices = @transform_1, window_bounds = array<i64: 16, 144>}, {pipeline_mode = #tpu.pipeline_mode<synchronous>, transform_indices = @transform_2, window_bounds = array<i64: 16, 1>}, {transform_indices = @transform_3, window_bounds = array<i64: 1, 16, 64>}]} {
    %0 = tpu.iota {dimensions = array<i32: 1>} : vector<1x64xi32>
    %c8_i32 = arith.constant 8 : i32
    %c0_i32 = arith.constant 0 : i32
    %1 = arith.cmpi eq, %c8_i32, %c0_i32 : i32
    %c1_i32 = arith.constant 1 : i32
    %2 = arith.select %1, %c1_i32, %c8_i32 : i32
    %3 = vector.broadcast %2 : i32 to vector<1x64xi32>
    %4 = arith.remsi %0, %3 : vector<1x64xi32>
    %c0_i32_0 = arith.constant 0 : i32
    %5 = vector.broadcast %c0_i32_0 : i32 to vector<1x64xi32>
    %6 = arith.cmpi ne, %4, %5 : vector<1x64xi32>
    %c0_i32_1 = arith.constant 0 : i32
    %7 = vector.broadcast %c0_i32_1 : i32 to vector<1x64xi32>
    %8 = arith.cmpi slt, %4, %7 : vector<1x64xi32>
    %c0_i32_2 = arith.constant 0 : i32
    %9 = arith.cmpi slt, %2, %c0_i32_2 : i32
    %10 = vector.broadcast %9 : i1 to vector<1x64xi1>
    %11 = vector.broadcast %10 : vector<1x64xi1> to vector<1x64xi1>
    %12 = arith.xori %8, %11 : vector<1x64xi1>
    %13 = arith.andi %12, %6 : vector<1x64xi1>
    %14 = vector.broadcast %2 : i32 to vector<1x64xi32>
    %15 = arith.addi %4, %14 : vector<1x64xi32>
    %16 = arith.select %13, %15, %4 : vector<1x64xi1>, vector<1x64xi32>
    %c0_i32_3 = arith.constant 0 : i32
    %17 = vector.broadcast %c0_i32_3 : i32 to vector<1x64xi32>
    %18 = arith.cmpi ne, %16, %17 : vector<1x64xi32>
    %c7_i32 = arith.constant 7 : i32
    %19 = vector.broadcast %c7_i32 : i32 to vector<1x64xi32>
    %20 = arith.cmpi ne, %16, %19 : vector<1x64xi32>
    %c0 = arith.constant 0 : index
    %c0_4 = arith.constant 0 : index
    %c0_5 = arith.constant 0 : index
    %21 = vector.load %arg1[%c0, %c0_4, %c0_5] : memref<1x16x82xf32, #tpu.memory_space<vmem>>, vector<1x16x64xf32>
    %22 = vector.shape_cast %21 : vector<1x16x64xf32> to vector<16x64xf32>
    %cst = arith.constant 0.000000e+00 : f32
    %23 = vector.shape_cast %18 : vector<1x64xi1> to vector<1x64xi1>
    %24 = vector.broadcast %23 : vector<1x64xi1> to vector<16x64xi1>
    %25 = vector.broadcast %cst : f32 to vector<16x64xf32>
    %26 = arith.select %24, %22, %25 : vector<16x64xi1>, vector<16x64xf32>
    %c0_6 = arith.constant 0 : index
    %c0_7 = arith.constant 0 : index
    %27 = vector.load %arg5[%c0_6, %c0_7] : memref<144x64xf32, #tpu.memory_space<vmem>>, vector<16x64xf32>
    tpu.vector_store %arg5[%c0_6, %c0_7], %26 {strides = array<i32>} : memref<144x64xf32, #tpu.memory_space<vmem>>, vector<16x64xf32>,
    %c0_8 = arith.constant 0 : index
    %c0_9 = arith.constant 0 : index
    %c1 = arith.constant 1 : index
    %28 = vector.load %arg1[%c0_8, %c0_9, %c1] : memref<1x16x82xf32, #tpu.memory_space<vmem>>, vector<1x16x64xf32>
    %29 = vector.shape_cast %28 : vector<1x16x64xf32> to vector<16x64xf32>
    %c16 = arith.constant 16 : index
    %c0_10 = arith.constant 0 : index
    %30 = vector.load %arg5[%c16, %c0_10] : memref<144x64xf32, #tpu.memory_space<vmem>>, vector<16x64xf32>
    tpu.vector_store %arg5[%c16, %c0_10], %29 {strides = array<i32>} : memref<144x64xf32, #tpu.memory_space<vmem>>, vector<16x64xf32>,
    %c0_11 = arith.constant 0 : index
    %c0_12 = arith.constant 0 : index
    %c2 = arith.constant 2 : index
    %31 = vector.load %arg1[%c0_11, %c0_12, %c2] : memref<1x16x82xf32, #tpu.memory_space<vmem>>, vector<1x16x64xf32>
    %32 = vector.shape_cast %31 : vector<1x16x64xf32> to vector<16x64xf32>
    %cst_13 = arith.constant 0.000000e+00 : f32
    %33 = vector.shape_cast %20 : vector<1x64xi1> to vector<1x64xi1>
    %34 = vector.broadcast %33 : vector<1x64xi1> to vector<16x64xi1>
    %35 = vector.broadcast %cst_13 : f32 to vector<16x64xf32>
    %36 = arith.select %34, %32, %35 : vector<16x64xi1>, vector<16x64xf32>
    %c32 = arith.constant 32 : index
    %c0_14 = arith.constant 0 : index
    %37 = vector.load %arg5[%c32, %c0_14] : memref<144x64xf32, #tpu.memory_space<vmem>>, vector<16x64xf32>
    tpu.vector_store %arg5[%c32, %c0_14], %36 {strides = array<i32>} : memref<144x64xf32, #tpu.memory_space<vmem>>, vector<16x64xf32>,
    %c0_15 = arith.constant 0 : index
    %c0_16 = arith.constant 0 : index
    %c8 = arith.constant 8 : index
    %38 = vector.load %arg1[%c0_15, %c0_16, %c8] : memref<1x16x82xf32, #tpu.memory_space<vmem>>, vector<1x16x64xf32>
    %39 = vector.shape_cast %38 : vector<1x16x64xf32> to vector<16x64xf32>
    %cst_17 = arith.constant 0.000000e+00 : f32
    %40 = vector.shape_cast %18 : vector<1x64xi1> to vector<1x64xi1>
    %41 = vector.broadcast %40 : vector<1x64xi1> to vector<16x64xi1>
    %42 = vector.broadcast %cst_17 : f32 to vector<16x64xf32>
    %43 = arith.select %41, %39, %42 : vector<16x64xi1>, vector<16x64xf32>
    %c48 = arith.constant 48 : index
    %c0_18 = arith.constant 0 : index
    %44 = vector.load %arg5[%c48, %c0_18] : memref<144x64xf32, #tpu.memory_space<vmem>>, vector<16x64xf32>
    tpu.vector_store %arg5[%c48, %c0_18], %43 {strides = array<i32>} : memref<144x64xf32, #tpu.memory_space<vmem>>, vector<16x64xf32>,
    %c0_19 = arith.constant 0 : index
    %c0_20 = arith.constant 0 : index
    %c9 = arith.constant 9 : index
    %45 = vector.load %arg1[%c0_19, %c0_20, %c9] : memref<1x16x82xf32, #tpu.memory_space<vmem>>, vector<1x16x64xf32>
    %46 = vector.shape_cast %45 : vector<1x16x64xf32> to vector<16x64xf32>
    %c64 = arith.constant 64 : index
    %c0_21 = arith.constant 0 : index
    %47 = vector.load %arg5[%c64, %c0_21] : memref<144x64xf32, #tpu.memory_space<vmem>>, vector<16x64xf32>
    tpu.vector_store %arg5[%c64, %c0_21], %46 {strides = array<i32>} : memref<144x64xf32, #tpu.memory_space<vmem>>, vector<16x64xf32>,
    %c0_22 = arith.constant 0 : index
    %c0_23 = arith.constant 0 : index
    %c10 = arith.constant 10 : index
    %48 = vector.load %arg1[%c0_22, %c0_23, %c10] : memref<1x16x82xf32, #tpu.memory_space<vmem>>, vector<1x16x64xf32>
    %49 = vector.shape_cast %48 : vector<1x16x64xf32> to vector<16x64xf32>
    %cst_24 = arith.constant 0.000000e+00 : f32
    %50 = vector.shape_cast %20 : vector<1x64xi1> to vector<1x64xi1>
    %51 = vector.broadcast %50 : vector<1x64xi1> to vector<16x64xi1>
    %52 = vector.broadcast %cst_24 : f32 to vector<16x64xf32>
    %53 = arith.select %51, %49, %52 : vector<16x64xi1>, vector<16x64xf32>
    %c80 = arith.constant 80 : index
    %c0_25 = arith.constant 0 : index
    %54 = vector.load %arg5[%c80, %c0_25] : memref<144x64xf32, #tpu.memory_space<vmem>>, vector<16x64xf32>
    tpu.vector_store %arg5[%c80, %c0_25], %53 {strides = array<i32>} : memref<144x64xf32, #tpu.memory_space<vmem>>, vector<16x64xf32>,
    %c0_26 = arith.constant 0 : index
    %c0_27 = arith.constant 0 : index
    %c16_28 = arith.constant 16 : index
    %55 = vector.load %arg1[%c0_26, %c0_27, %c16_28] : memref<1x16x82xf32, #tpu.memory_space<vmem>>, vector<1x16x64xf32>
    %56 = vector.shape_cast %55 : vector<1x16x64xf32> to vector<16x64xf32>
    %cst_29 = arith.constant 0.000000e+00 : f32
    %57 = vector.shape_cast %18 : vector<1x64xi1> to vector<1x64xi1>
    %58 = vector.broadcast %57 : vector<1x64xi1> to vector<16x64xi1>
    %59 = vector.broadcast %cst_29 : f32 to vector<16x64xf32>
    %60 = arith.select %58, %56, %59 : vector<16x64xi1>, vector<16x64xf32>
    %c96 = arith.constant 96 : index
    %c0_30 = arith.constant 0 : index
    %61 = vector.load %arg5[%c96, %c0_30] : memref<144x64xf32, #tpu.memory_space<vmem>>, vector<16x64xf32>
    tpu.vector_store %arg5[%c96, %c0_30], %60 {strides = array<i32>} : memref<144x64xf32, #tpu.memory_space<vmem>>, vector<16x64xf32>,
    %c0_31 = arith.constant 0 : index
    %c0_32 = arith.constant 0 : index
    %c17 = arith.constant 17 : index
    %62 = vector.load %arg1[%c0_31, %c0_32, %c17] : memref<1x16x82xf32, #tpu.memory_space<vmem>>, vector<1x16x64xf32>
    %63 = vector.shape_cast %62 : vector<1x16x64xf32> to vector<16x64xf32>
    %c112 = arith.constant 112 : index
    %c0_33 = arith.constant 0 : index
    %64 = vector.load %arg5[%c112, %c0_33] : memref<144x64xf32, #tpu.memory_space<vmem>>, vector<16x64xf32>
    tpu.vector_store %arg5[%c112, %c0_33], %63 {strides = array<i32>} : memref<144x64xf32, #tpu.memory_space<vmem>>, vector<16x64xf32>,
    %c0_34 = arith.constant 0 : index
    %c0_35 = arith.constant 0 : index
    %c18 = arith.constant 18 : index
    %65 = vector.load %arg1[%c0_34, %c0_35, %c18] : memref<1x16x82xf32, #tpu.memory_space<vmem>>, vector<1x16x64xf32>
    %66 = vector.shape_cast %65 : vector<1x16x64xf32> to vector<16x64xf32>
    %cst_36 = arith.constant 0.000000e+00 : f32
    %67 = vector.shape_cast %20 : vector<1x64xi1> to vector<1x64xi1>
    %68 = vector.broadcast %67 : vector<1x64xi1> to vector<16x64xi1>
    %69 = vector.broadcast %cst_36 : f32 to vector<16x64xf32>
    %70 = arith.select %68, %66, %69 : vector<16x64xi1>, vector<16x64xf32>
    %c128 = arith.constant 128 : index
    %c0_37 = arith.constant 0 : index
    %71 = vector.load %arg5[%c128, %c0_37] : memref<144x64xf32, #tpu.memory_space<vmem>>, vector<16x64xf32>
    tpu.vector_store %arg5[%c128, %c0_37], %70 {strides = array<i32>} : memref<144x64xf32, #tpu.memory_space<vmem>>, vector<16x64xf32>,
    %c0_38 = arith.constant 0 : index
    %c0_39 = arith.constant 0 : index
    %72 = vector.load %arg2[%c0_38, %c0_39] : memref<16x144xf32, #tpu.memory_space<vmem>>, vector<16x144xf32>
    %c0_40 = arith.constant 0 : index
    %c0_41 = arith.constant 0 : index
    %73 = vector.load %arg5[%c0_40, %c0_41] : memref<144x64xf32, #tpu.memory_space<vmem>>, vector<144x64xf32>
    %cst_42 = arith.constant dense<0.000000e+00> : vector<16x64xf32>
    %74 = tpu.matmul %72, %73, %cst_42 {dimension_numbers = #tpu.dot_dimension_numbers<[1], [0], [0], [1], [0, 0, 1, 1], [], []>} : vector<16x144xf32>, vector<144x64xf32>, vector<16x64xf32> -> vector<16x64xf32>
    %c0_43 = arith.constant 0 : index
    %c0_44 = arith.constant 0 : index
    %75 = vector.load %arg3[%c0_43, %c0_44] : memref<16x1xf32, #tpu.memory_space<vmem>>, vector<16x1xf32>
    %76 = vector.broadcast %75 : vector<16x1xf32> to vector<16x64xf32>
    %77 = arith.addf %74, %76 : vector<16x64xf32>
    %cst_45 = arith.constant 0.000000e+00 : f32
    %78 = vector.broadcast %cst_45 : f32 to vector<16x64xf32>
    %79 = arith.cmpf oge, %77, %78 : vector<16x64xf32>
    %cst_46 = arith.constant 1.000000e-01 : f32
    %80 = vector.broadcast %cst_46 : f32 to vector<16x64xf32>
    %81 = arith.mulf %77, %80 : vector<16x64xf32>
    %82 = arith.select %79, %77, %81 : vector<16x64xi1>, vector<16x64xf32>
    %c0_47 = arith.constant 0 : index
    %c0_48 = arith.constant 0 : index
    %c0_49 = arith.constant 0 : index
    %83 = vector.load %arg4[%c0_47, %c0_48, %c0_49] : memref<1x16x64xf32, #tpu.memory_space<vmem>>, vector<1x16x64xf32>
    %84 = vector.shape_cast %83 : vector<1x16x64xf32> to vector<16x64xf32>
    %85 = vector.shape_cast %82 : vector<16x64xf32> to vector<1x16x64xf32>
    tpu.vector_store %arg4[%c0_47, %c0_48, %c0_49], %85 {strides = array<i32>} : memref<1x16x64xf32, #tpu.memory_space<vmem>>, vector<1x16x64xf32>,
    return
  }
  func.func @transform_0(%arg0: i32) -> (i32, i32, i32) {
    %c0_i32 = arith.constant 0 : i32
    %c0_i32_0 = arith.constant 0 : i32
    %c0_i32_1 = arith.constant 0 : i32
    return %arg0, %c0_i32, %c0_i32_0 : i32, i32, i32
  }
  func.func @transform_1(%arg0: i32) -> (i32, i32) {
    %c0_i32 = arith.constant 0 : i32
    %c0_i32_0 = arith.constant 0 : i32
    %c0_i32_1 = arith.constant 0 : i32
    return %c0_i32, %c0_i32_0 : i32, i32
  }
  func.func @transform_2(%arg0: i32) -> (i32, i32) {
    %c0_i32 = arith.constant 0 : i32
    %c0_i32_0 = arith.constant 0 : i32
    %c0_i32_1 = arith.constant 0 : i32
    return %c0_i32, %c0_i32_0 : i32, i32
  }
  func.func @transform_3(%arg0: i32) -> (i32, i32, i32) {
    %c0_i32 = arith.constant 0 : i32
    %c0_i32_0 = arith.constant 0 : i32
    %c0_i32_1 = arith.constant 0 : i32
    return %arg0, %c0_i32, %c0_i32_0 : i32, i32, i32
  }
}

module attributes {stable_mosaic.version = 11 : i64} {
  func.func @_conv9_kernel(%arg0: i32, %arg1: memref<1x16x100xf32, #tpu.memory_space<vmem>>, %arg2: memref<16x144xf32, #tpu.memory_space<vmem>>, %arg3: memref<16x1xf32, #tpu.memory_space<vmem>>, %arg4: memref<1x16x20xf32, #tpu.memory_space<vmem>>, %arg5: memref<144x20xf32, #tpu.memory_space<vmem>>) attributes {dimension_semantics = [#tpu.dimension_semantics<parallel>], iteration_bounds = array<i64: 2>, scalar_prefetch = 0 : i64, scratch_operands = 1 : i64, tpu.core_type = #tpu.core_type<tc>, window_params = [{transform_indices = @transform_0, window_bounds = array<i64: 1, 16, 100>}, {pipeline_mode = #tpu.pipeline_mode<synchronous>, transform_indices = @transform_1, window_bounds = array<i64: 16, 144>}, {pipeline_mode = #tpu.pipeline_mode<synchronous>, transform_indices = @transform_2, window_bounds = array<i64: 16, 1>}, {transform_indices = @transform_3, window_bounds = array<i64: 1, 16, 20>}]} {
    %c0 = arith.constant 0 : index
    %c0_0 = arith.constant 0 : index
    %c0_1 = arith.constant 0 : index
    %0 = vector.load %arg1[%c0, %c0_0, %c0_1] : memref<1x16x100xf32, #tpu.memory_space<vmem>>, vector<1x16x20xf32>
    %1 = vector.shape_cast %0 : vector<1x16x20xf32> to vector<16x20xf32>
    %c0_2 = arith.constant 0 : index
    %c0_3 = arith.constant 0 : index
    %2 = vector.load %arg5[%c0_2, %c0_3] : memref<144x20xf32, #tpu.memory_space<vmem>>, vector<16x20xf32>
    tpu.vector_store %arg5[%c0_2, %c0_3], %1 {strides = array<i32>} : memref<144x20xf32, #tpu.memory_space<vmem>>, vector<16x20xf32>,
    %c0_4 = arith.constant 0 : index
    %c0_5 = arith.constant 0 : index
    %c25 = arith.constant 25 : index
    %3 = vector.load %arg1[%c0_4, %c0_5, %c25] : memref<1x16x100xf32, #tpu.memory_space<vmem>>, vector<1x16x20xf32>
    %4 = vector.shape_cast %3 : vector<1x16x20xf32> to vector<16x20xf32>
    %c16 = arith.constant 16 : index
    %c0_6 = arith.constant 0 : index
    %5 = vector.load %arg5[%c16, %c0_6] : memref<144x20xf32, #tpu.memory_space<vmem>>, vector<16x20xf32>
    tpu.vector_store %arg5[%c16, %c0_6], %4 {strides = array<i32>} : memref<144x20xf32, #tpu.memory_space<vmem>>, vector<16x20xf32>,
    %c0_7 = arith.constant 0 : index
    %c0_8 = arith.constant 0 : index
    %c1 = arith.constant 1 : index
    %6 = vector.load %arg1[%c0_7, %c0_8, %c1] : memref<1x16x100xf32, #tpu.memory_space<vmem>>, vector<1x16x20xf32>
    %7 = vector.shape_cast %6 : vector<1x16x20xf32> to vector<16x20xf32>
    %c32 = arith.constant 32 : index
    %c0_9 = arith.constant 0 : index
    %8 = vector.load %arg5[%c32, %c0_9] : memref<144x20xf32, #tpu.memory_space<vmem>>, vector<16x20xf32>
    tpu.vector_store %arg5[%c32, %c0_9], %7 {strides = array<i32>} : memref<144x20xf32, #tpu.memory_space<vmem>>, vector<16x20xf32>,
    %c0_10 = arith.constant 0 : index
    %c0_11 = arith.constant 0 : index
    %c50 = arith.constant 50 : index
    %9 = vector.load %arg1[%c0_10, %c0_11, %c50] : memref<1x16x100xf32, #tpu.memory_space<vmem>>, vector<1x16x20xf32>
    %10 = vector.shape_cast %9 : vector<1x16x20xf32> to vector<16x20xf32>
    %c48 = arith.constant 48 : index
    %c0_12 = arith.constant 0 : index
    %11 = vector.load %arg5[%c48, %c0_12] : memref<144x20xf32, #tpu.memory_space<vmem>>, vector<16x20xf32>
    tpu.vector_store %arg5[%c48, %c0_12], %10 {strides = array<i32>} : memref<144x20xf32, #tpu.memory_space<vmem>>, vector<16x20xf32>,
    %c0_13 = arith.constant 0 : index
    %c0_14 = arith.constant 0 : index
    %c75 = arith.constant 75 : index
    %12 = vector.load %arg1[%c0_13, %c0_14, %c75] : memref<1x16x100xf32, #tpu.memory_space<vmem>>, vector<1x16x20xf32>
    %13 = vector.shape_cast %12 : vector<1x16x20xf32> to vector<16x20xf32>
    %c64 = arith.constant 64 : index
    %c0_15 = arith.constant 0 : index
    %14 = vector.load %arg5[%c64, %c0_15] : memref<144x20xf32, #tpu.memory_space<vmem>>, vector<16x20xf32>
    tpu.vector_store %arg5[%c64, %c0_15], %13 {strides = array<i32>} : memref<144x20xf32, #tpu.memory_space<vmem>>, vector<16x20xf32>,
    %c0_16 = arith.constant 0 : index
    %c0_17 = arith.constant 0 : index
    %c51 = arith.constant 51 : index
    %15 = vector.load %arg1[%c0_16, %c0_17, %c51] : memref<1x16x100xf32, #tpu.memory_space<vmem>>, vector<1x16x20xf32>
    %16 = vector.shape_cast %15 : vector<1x16x20xf32> to vector<16x20xf32>
    %c80 = arith.constant 80 : index
    %c0_18 = arith.constant 0 : index
    %17 = vector.load %arg5[%c80, %c0_18] : memref<144x20xf32, #tpu.memory_space<vmem>>, vector<16x20xf32>
    tpu.vector_store %arg5[%c80, %c0_18], %16 {strides = array<i32>} : memref<144x20xf32, #tpu.memory_space<vmem>>, vector<16x20xf32>,
    %c0_19 = arith.constant 0 : index
    %c0_20 = arith.constant 0 : index
    %c5 = arith.constant 5 : index
    %18 = vector.load %arg1[%c0_19, %c0_20, %c5] : memref<1x16x100xf32, #tpu.memory_space<vmem>>, vector<1x16x20xf32>
    %19 = vector.shape_cast %18 : vector<1x16x20xf32> to vector<16x20xf32>
    %c96 = arith.constant 96 : index
    %c0_21 = arith.constant 0 : index
    %20 = vector.load %arg5[%c96, %c0_21] : memref<144x20xf32, #tpu.memory_space<vmem>>, vector<16x20xf32>
    tpu.vector_store %arg5[%c96, %c0_21], %19 {strides = array<i32>} : memref<144x20xf32, #tpu.memory_space<vmem>>, vector<16x20xf32>,
    %c0_22 = arith.constant 0 : index
    %c0_23 = arith.constant 0 : index
    %c30 = arith.constant 30 : index
    %21 = vector.load %arg1[%c0_22, %c0_23, %c30] : memref<1x16x100xf32, #tpu.memory_space<vmem>>, vector<1x16x20xf32>
    %22 = vector.shape_cast %21 : vector<1x16x20xf32> to vector<16x20xf32>
    %c112 = arith.constant 112 : index
    %c0_24 = arith.constant 0 : index
    %23 = vector.load %arg5[%c112, %c0_24] : memref<144x20xf32, #tpu.memory_space<vmem>>, vector<16x20xf32>
    tpu.vector_store %arg5[%c112, %c0_24], %22 {strides = array<i32>} : memref<144x20xf32, #tpu.memory_space<vmem>>, vector<16x20xf32>,
    %c0_25 = arith.constant 0 : index
    %c0_26 = arith.constant 0 : index
    %c6 = arith.constant 6 : index
    %24 = vector.load %arg1[%c0_25, %c0_26, %c6] : memref<1x16x100xf32, #tpu.memory_space<vmem>>, vector<1x16x20xf32>
    %25 = vector.shape_cast %24 : vector<1x16x20xf32> to vector<16x20xf32>
    %c128 = arith.constant 128 : index
    %c0_27 = arith.constant 0 : index
    %26 = vector.load %arg5[%c128, %c0_27] : memref<144x20xf32, #tpu.memory_space<vmem>>, vector<16x20xf32>
    tpu.vector_store %arg5[%c128, %c0_27], %25 {strides = array<i32>} : memref<144x20xf32, #tpu.memory_space<vmem>>, vector<16x20xf32>,
    %c0_28 = arith.constant 0 : index
    %c0_29 = arith.constant 0 : index
    %27 = vector.load %arg2[%c0_28, %c0_29] : memref<16x144xf32, #tpu.memory_space<vmem>>, vector<16x144xf32>
    %c0_30 = arith.constant 0 : index
    %c0_31 = arith.constant 0 : index
    %28 = vector.load %arg5[%c0_30, %c0_31] : memref<144x20xf32, #tpu.memory_space<vmem>>, vector<144x20xf32>
    %cst = arith.constant dense<0.000000e+00> : vector<16x20xf32>
    %29 = tpu.matmul %27, %28, %cst {dimension_numbers = #tpu.dot_dimension_numbers<[1], [0], [0], [1], [0, 0, 1, 1], [], []>} : vector<16x144xf32>, vector<144x20xf32>, vector<16x20xf32> -> vector<16x20xf32>
    %c0_32 = arith.constant 0 : index
    %c0_33 = arith.constant 0 : index
    %30 = vector.load %arg3[%c0_32, %c0_33] : memref<16x1xf32, #tpu.memory_space<vmem>>, vector<16x1xf32>
    %31 = vector.broadcast %30 : vector<16x1xf32> to vector<16x20xf32>
    %32 = arith.addf %29, %31 : vector<16x20xf32>
    %cst_34 = arith.constant 0.000000e+00 : f32
    %33 = vector.broadcast %cst_34 : f32 to vector<16x20xf32>
    %34 = arith.cmpf oge, %32, %33 : vector<16x20xf32>
    %cst_35 = arith.constant 1.000000e-01 : f32
    %35 = vector.broadcast %cst_35 : f32 to vector<16x20xf32>
    %36 = arith.mulf %32, %35 : vector<16x20xf32>
    %37 = arith.select %34, %32, %36 : vector<16x20xi1>, vector<16x20xf32>
    %c0_36 = arith.constant 0 : index
    %c0_37 = arith.constant 0 : index
    %c0_38 = arith.constant 0 : index
    %38 = vector.load %arg4[%c0_36, %c0_37, %c0_38] : memref<1x16x20xf32, #tpu.memory_space<vmem>>, vector<1x16x20xf32>
    %39 = vector.shape_cast %38 : vector<1x16x20xf32> to vector<16x20xf32>
    %40 = vector.shape_cast %37 : vector<16x20xf32> to vector<1x16x20xf32>
    tpu.vector_store %arg4[%c0_36, %c0_37, %c0_38], %40 {strides = array<i32>} : memref<1x16x20xf32, #tpu.memory_space<vmem>>, vector<1x16x20xf32>,
    return
  }
  func.func @transform_0(%arg0: i32) -> (i32, i32, i32) {
    %c0_i32 = arith.constant 0 : i32
    %c0_i32_0 = arith.constant 0 : i32
    %c0_i32_1 = arith.constant 0 : i32
    return %arg0, %c0_i32, %c0_i32_0 : i32, i32, i32
  }
  func.func @transform_1(%arg0: i32) -> (i32, i32) {
    %c0_i32 = arith.constant 0 : i32
    %c0_i32_0 = arith.constant 0 : i32
    %c0_i32_1 = arith.constant 0 : i32
    return %c0_i32, %c0_i32_0 : i32, i32
  }
  func.func @transform_2(%arg0: i32) -> (i32, i32) {
    %c0_i32 = arith.constant 0 : i32
    %c0_i32_0 = arith.constant 0 : i32
    %c0_i32_1 = arith.constant 0 : i32
    return %c0_i32, %c0_i32_0 : i32, i32
  }
  func.func @transform_3(%arg0: i32) -> (i32, i32, i32) {
    %c0_i32 = arith.constant 0 : i32
    %c0_i32_0 = arith.constant 0 : i32
    %c0_i32_1 = arith.constant 0 : i32
    return %arg0, %c0_i32, %c0_i32_0 : i32, i32, i32
  }
}

module attributes {stable_mosaic.version = 11 : i64} {
  func.func @_conv9_kernel(%arg0: i32, %arg1: memref<1x16x26xf32, #tpu.memory_space<vmem>>, %arg2: memref<16x144xf32, #tpu.memory_space<vmem>>, %arg3: memref<16x1xf32, #tpu.memory_space<vmem>>, %arg4: memref<1x16x16xf32, #tpu.memory_space<vmem>>, %arg5: memref<144x16xf32, #tpu.memory_space<vmem>>) attributes {dimension_semantics = [#tpu.dimension_semantics<parallel>], iteration_bounds = array<i64: 2>, scalar_prefetch = 0 : i64, scratch_operands = 1 : i64, tpu.core_type = #tpu.core_type<tc>, window_params = [{transform_indices = @transform_0, window_bounds = array<i64: 1, 16, 26>}, {pipeline_mode = #tpu.pipeline_mode<synchronous>, transform_indices = @transform_1, window_bounds = array<i64: 16, 144>}, {pipeline_mode = #tpu.pipeline_mode<synchronous>, transform_indices = @transform_2, window_bounds = array<i64: 16, 1>}, {transform_indices = @transform_3, window_bounds = array<i64: 1, 16, 16>}]} {
    %0 = tpu.iota {dimensions = array<i32: 1>} : vector<1x16xi32>
    %c4_i32 = arith.constant 4 : i32
    %c0_i32 = arith.constant 0 : i32
    %1 = arith.cmpi eq, %c4_i32, %c0_i32 : i32
    %c1_i32 = arith.constant 1 : i32
    %2 = arith.select %1, %c1_i32, %c4_i32 : i32
    %3 = vector.broadcast %2 : i32 to vector<1x16xi32>
    %4 = arith.remsi %0, %3 : vector<1x16xi32>
    %c0_i32_0 = arith.constant 0 : i32
    %5 = vector.broadcast %c0_i32_0 : i32 to vector<1x16xi32>
    %6 = arith.cmpi ne, %4, %5 : vector<1x16xi32>
    %c0_i32_1 = arith.constant 0 : i32
    %7 = vector.broadcast %c0_i32_1 : i32 to vector<1x16xi32>
    %8 = arith.cmpi slt, %4, %7 : vector<1x16xi32>
    %c0_i32_2 = arith.constant 0 : i32
    %9 = arith.cmpi slt, %2, %c0_i32_2 : i32
    %10 = vector.broadcast %9 : i1 to vector<1x16xi1>
    %11 = vector.broadcast %10 : vector<1x16xi1> to vector<1x16xi1>
    %12 = arith.xori %8, %11 : vector<1x16xi1>
    %13 = arith.andi %12, %6 : vector<1x16xi1>
    %14 = vector.broadcast %2 : i32 to vector<1x16xi32>
    %15 = arith.addi %4, %14 : vector<1x16xi32>
    %16 = arith.select %13, %15, %4 : vector<1x16xi1>, vector<1x16xi32>
    %c0_i32_3 = arith.constant 0 : i32
    %17 = vector.broadcast %c0_i32_3 : i32 to vector<1x16xi32>
    %18 = arith.cmpi ne, %16, %17 : vector<1x16xi32>
    %c3_i32 = arith.constant 3 : i32
    %19 = vector.broadcast %c3_i32 : i32 to vector<1x16xi32>
    %20 = arith.cmpi ne, %16, %19 : vector<1x16xi32>
    %c0 = arith.constant 0 : index
    %c0_4 = arith.constant 0 : index
    %c0_5 = arith.constant 0 : index
    %21 = vector.load %arg1[%c0, %c0_4, %c0_5] : memref<1x16x26xf32, #tpu.memory_space<vmem>>, vector<1x16x16xf32>
    %22 = vector.shape_cast %21 : vector<1x16x16xf32> to vector<16x16xf32>
    %cst = arith.constant 0.000000e+00 : f32
    %23 = vector.shape_cast %18 : vector<1x16xi1> to vector<1x16xi1>
    %24 = vector.broadcast %23 : vector<1x16xi1> to vector<16x16xi1>
    %25 = vector.broadcast %cst : f32 to vector<16x16xf32>
    %26 = arith.select %24, %22, %25 : vector<16x16xi1>, vector<16x16xf32>
    %c0_6 = arith.constant 0 : index
    %c0_7 = arith.constant 0 : index
    %27 = vector.load %arg5[%c0_6, %c0_7] : memref<144x16xf32, #tpu.memory_space<vmem>>, vector<16x16xf32>
    tpu.vector_store %arg5[%c0_6, %c0_7], %26 {strides = array<i32>} : memref<144x16xf32, #tpu.memory_space<vmem>>, vector<16x16xf32>,
    %c0_8 = arith.constant 0 : index
    %c0_9 = arith.constant 0 : index
    %c1 = arith.constant 1 : index
    %28 = vector.load %arg1[%c0_8, %c0_9, %c1] : memref<1x16x26xf32, #tpu.memory_space<vmem>>, vector<1x16x16xf32>
    %29 = vector.shape_cast %28 : vector<1x16x16xf32> to vector<16x16xf32>
    %c16 = arith.constant 16 : index
    %c0_10 = arith.constant 0 : index
    %30 = vector.load %arg5[%c16, %c0_10] : memref<144x16xf32, #tpu.memory_space<vmem>>, vector<16x16xf32>
    tpu.vector_store %arg5[%c16, %c0_10], %29 {strides = array<i32>} : memref<144x16xf32, #tpu.memory_space<vmem>>, vector<16x16xf32>,
    %c0_11 = arith.constant 0 : index
    %c0_12 = arith.constant 0 : index
    %c2 = arith.constant 2 : index
    %31 = vector.load %arg1[%c0_11, %c0_12, %c2] : memref<1x16x26xf32, #tpu.memory_space<vmem>>, vector<1x16x16xf32>
    %32 = vector.shape_cast %31 : vector<1x16x16xf32> to vector<16x16xf32>
    %cst_13 = arith.constant 0.000000e+00 : f32
    %33 = vector.shape_cast %20 : vector<1x16xi1> to vector<1x16xi1>
    %34 = vector.broadcast %33 : vector<1x16xi1> to vector<16x16xi1>
    %35 = vector.broadcast %cst_13 : f32 to vector<16x16xf32>
    %36 = arith.select %34, %32, %35 : vector<16x16xi1>, vector<16x16xf32>
    %c32 = arith.constant 32 : index
    %c0_14 = arith.constant 0 : index
    %37 = vector.load %arg5[%c32, %c0_14] : memref<144x16xf32, #tpu.memory_space<vmem>>, vector<16x16xf32>
    tpu.vector_store %arg5[%c32, %c0_14], %36 {strides = array<i32>} : memref<144x16xf32, #tpu.memory_space<vmem>>, vector<16x16xf32>,
    %c0_15 = arith.constant 0 : index
    %c0_16 = arith.constant 0 : index
    %c4 = arith.constant 4 : index
    %38 = vector.load %arg1[%c0_15, %c0_16, %c4] : memref<1x16x26xf32, #tpu.memory_space<vmem>>, vector<1x16x16xf32>
    %39 = vector.shape_cast %38 : vector<1x16x16xf32> to vector<16x16xf32>
    %cst_17 = arith.constant 0.000000e+00 : f32
    %40 = vector.shape_cast %18 : vector<1x16xi1> to vector<1x16xi1>
    %41 = vector.broadcast %40 : vector<1x16xi1> to vector<16x16xi1>
    %42 = vector.broadcast %cst_17 : f32 to vector<16x16xf32>
    %43 = arith.select %41, %39, %42 : vector<16x16xi1>, vector<16x16xf32>
    %c48 = arith.constant 48 : index
    %c0_18 = arith.constant 0 : index
    %44 = vector.load %arg5[%c48, %c0_18] : memref<144x16xf32, #tpu.memory_space<vmem>>, vector<16x16xf32>
    tpu.vector_store %arg5[%c48, %c0_18], %43 {strides = array<i32>} : memref<144x16xf32, #tpu.memory_space<vmem>>, vector<16x16xf32>,
    %c0_19 = arith.constant 0 : index
    %c0_20 = arith.constant 0 : index
    %c5 = arith.constant 5 : index
    %45 = vector.load %arg1[%c0_19, %c0_20, %c5] : memref<1x16x26xf32, #tpu.memory_space<vmem>>, vector<1x16x16xf32>
    %46 = vector.shape_cast %45 : vector<1x16x16xf32> to vector<16x16xf32>
    %c64 = arith.constant 64 : index
    %c0_21 = arith.constant 0 : index
    %47 = vector.load %arg5[%c64, %c0_21] : memref<144x16xf32, #tpu.memory_space<vmem>>, vector<16x16xf32>
    tpu.vector_store %arg5[%c64, %c0_21], %46 {strides = array<i32>} : memref<144x16xf32, #tpu.memory_space<vmem>>, vector<16x16xf32>,
    %c0_22 = arith.constant 0 : index
    %c0_23 = arith.constant 0 : index
    %c6 = arith.constant 6 : index
    %48 = vector.load %arg1[%c0_22, %c0_23, %c6] : memref<1x16x26xf32, #tpu.memory_space<vmem>>, vector<1x16x16xf32>
    %49 = vector.shape_cast %48 : vector<1x16x16xf32> to vector<16x16xf32>
    %cst_24 = arith.constant 0.000000e+00 : f32
    %50 = vector.shape_cast %20 : vector<1x16xi1> to vector<1x16xi1>
    %51 = vector.broadcast %50 : vector<1x16xi1> to vector<16x16xi1>
    %52 = vector.broadcast %cst_24 : f32 to vector<16x16xf32>
    %53 = arith.select %51, %49, %52 : vector<16x16xi1>, vector<16x16xf32>
    %c80 = arith.constant 80 : index
    %c0_25 = arith.constant 0 : index
    %54 = vector.load %arg5[%c80, %c0_25] : memref<144x16xf32, #tpu.memory_space<vmem>>, vector<16x16xf32>
    tpu.vector_store %arg5[%c80, %c0_25], %53 {strides = array<i32>} : memref<144x16xf32, #tpu.memory_space<vmem>>, vector<16x16xf32>,
    %c0_26 = arith.constant 0 : index
    %c0_27 = arith.constant 0 : index
    %c8 = arith.constant 8 : index
    %55 = vector.load %arg1[%c0_26, %c0_27, %c8] : memref<1x16x26xf32, #tpu.memory_space<vmem>>, vector<1x16x16xf32>
    %56 = vector.shape_cast %55 : vector<1x16x16xf32> to vector<16x16xf32>
    %cst_28 = arith.constant 0.000000e+00 : f32
    %57 = vector.shape_cast %18 : vector<1x16xi1> to vector<1x16xi1>
    %58 = vector.broadcast %57 : vector<1x16xi1> to vector<16x16xi1>
    %59 = vector.broadcast %cst_28 : f32 to vector<16x16xf32>
    %60 = arith.select %58, %56, %59 : vector<16x16xi1>, vector<16x16xf32>
    %c96 = arith.constant 96 : index
    %c0_29 = arith.constant 0 : index
    %61 = vector.load %arg5[%c96, %c0_29] : memref<144x16xf32, #tpu.memory_space<vmem>>, vector<16x16xf32>
    tpu.vector_store %arg5[%c96, %c0_29], %60 {strides = array<i32>} : memref<144x16xf32, #tpu.memory_space<vmem>>, vector<16x16xf32>,
    %c0_30 = arith.constant 0 : index
    %c0_31 = arith.constant 0 : index
    %c9 = arith.constant 9 : index
    %62 = vector.load %arg1[%c0_30, %c0_31, %c9] : memref<1x16x26xf32, #tpu.memory_space<vmem>>, vector<1x16x16xf32>
    %63 = vector.shape_cast %62 : vector<1x16x16xf32> to vector<16x16xf32>
    %c112 = arith.constant 112 : index
    %c0_32 = arith.constant 0 : index
    %64 = vector.load %arg5[%c112, %c0_32] : memref<144x16xf32, #tpu.memory_space<vmem>>, vector<16x16xf32>
    tpu.vector_store %arg5[%c112, %c0_32], %63 {strides = array<i32>} : memref<144x16xf32, #tpu.memory_space<vmem>>, vector<16x16xf32>,
    %c0_33 = arith.constant 0 : index
    %c0_34 = arith.constant 0 : index
    %c10 = arith.constant 10 : index
    %65 = vector.load %arg1[%c0_33, %c0_34, %c10] : memref<1x16x26xf32, #tpu.memory_space<vmem>>, vector<1x16x16xf32>
    %66 = vector.shape_cast %65 : vector<1x16x16xf32> to vector<16x16xf32>
    %cst_35 = arith.constant 0.000000e+00 : f32
    %67 = vector.shape_cast %20 : vector<1x16xi1> to vector<1x16xi1>
    %68 = vector.broadcast %67 : vector<1x16xi1> to vector<16x16xi1>
    %69 = vector.broadcast %cst_35 : f32 to vector<16x16xf32>
    %70 = arith.select %68, %66, %69 : vector<16x16xi1>, vector<16x16xf32>
    %c128 = arith.constant 128 : index
    %c0_36 = arith.constant 0 : index
    %71 = vector.load %arg5[%c128, %c0_36] : memref<144x16xf32, #tpu.memory_space<vmem>>, vector<16x16xf32>
    tpu.vector_store %arg5[%c128, %c0_36], %70 {strides = array<i32>} : memref<144x16xf32, #tpu.memory_space<vmem>>, vector<16x16xf32>,
    %c0_37 = arith.constant 0 : index
    %c0_38 = arith.constant 0 : index
    %72 = vector.load %arg2[%c0_37, %c0_38] : memref<16x144xf32, #tpu.memory_space<vmem>>, vector<16x144xf32>
    %c0_39 = arith.constant 0 : index
    %c0_40 = arith.constant 0 : index
    %73 = vector.load %arg5[%c0_39, %c0_40] : memref<144x16xf32, #tpu.memory_space<vmem>>, vector<144x16xf32>
    %cst_41 = arith.constant dense<0.000000e+00> : vector<16x16xf32>
    %74 = tpu.matmul %72, %73, %cst_41 {dimension_numbers = #tpu.dot_dimension_numbers<[1], [0], [0], [1], [0, 0, 1, 1], [], []>} : vector<16x144xf32>, vector<144x16xf32>, vector<16x16xf32> -> vector<16x16xf32>
    %c0_42 = arith.constant 0 : index
    %c0_43 = arith.constant 0 : index
    %75 = vector.load %arg3[%c0_42, %c0_43] : memref<16x1xf32, #tpu.memory_space<vmem>>, vector<16x1xf32>
    %76 = vector.broadcast %75 : vector<16x1xf32> to vector<16x16xf32>
    %77 = arith.addf %74, %76 : vector<16x16xf32>
    %cst_44 = arith.constant 0.000000e+00 : f32
    %78 = vector.broadcast %cst_44 : f32 to vector<16x16xf32>
    %79 = arith.cmpf oge, %77, %78 : vector<16x16xf32>
    %cst_45 = arith.constant 1.000000e-01 : f32
    %80 = vector.broadcast %cst_45 : f32 to vector<16x16xf32>
    %81 = arith.mulf %77, %80 : vector<16x16xf32>
    %82 = arith.select %79, %77, %81 : vector<16x16xi1>, vector<16x16xf32>
    %c0_46 = arith.constant 0 : index
    %c0_47 = arith.constant 0 : index
    %c0_48 = arith.constant 0 : index
    %83 = vector.load %arg4[%c0_46, %c0_47, %c0_48] : memref<1x16x16xf32, #tpu.memory_space<vmem>>, vector<1x16x16xf32>
    %84 = vector.shape_cast %83 : vector<1x16x16xf32> to vector<16x16xf32>
    %85 = vector.shape_cast %82 : vector<16x16xf32> to vector<1x16x16xf32>
    tpu.vector_store %arg4[%c0_46, %c0_47, %c0_48], %85 {strides = array<i32>} : memref<1x16x16xf32, #tpu.memory_space<vmem>>, vector<1x16x16xf32>,
    return
  }
  func.func @transform_0(%arg0: i32) -> (i32, i32, i32) {
    %c0_i32 = arith.constant 0 : i32
    %c0_i32_0 = arith.constant 0 : i32
    %c0_i32_1 = arith.constant 0 : i32
    return %arg0, %c0_i32, %c0_i32_0 : i32, i32, i32
  }
  func.func @transform_1(%arg0: i32) -> (i32, i32) {
    %c0_i32 = arith.constant 0 : i32
    %c0_i32_0 = arith.constant 0 : i32
    %c0_i32_1 = arith.constant 0 : i32
    return %c0_i32, %c0_i32_0 : i32, i32
  }
  func.func @transform_2(%arg0: i32) -> (i32, i32) {
    %c0_i32 = arith.constant 0 : i32
    %c0_i32_0 = arith.constant 0 : i32
    %c0_i32_1 = arith.constant 0 : i32
    return %c0_i32, %c0_i32_0 : i32, i32
  }
  func.func @transform_3(%arg0: i32) -> (i32, i32, i32) {
    %c0_i32 = arith.constant 0 : i32
    %c0_i32_0 = arith.constant 0 : i32
    %c0_i32_1 = arith.constant 0 : i32
    return %arg0, %c0_i32, %c0_i32_0 : i32, i32, i32
  }
}

module attributes {stable_mosaic.version = 11 : i64} {
  func.func @_conv9_kernel(%arg0: i32, %arg1: memref<1x16x82xf32, #tpu.memory_space<vmem>>, %arg2: memref<1x16x82xf32, #tpu.memory_space<vmem>>, %arg3: memref<16x288xf32, #tpu.memory_space<vmem>>, %arg4: memref<16x1xf32, #tpu.memory_space<vmem>>, %arg5: memref<1x16x64xf32, #tpu.memory_space<vmem>>, %arg6: memref<288x64xf32, #tpu.memory_space<vmem>>) attributes {dimension_semantics = [#tpu.dimension_semantics<parallel>], iteration_bounds = array<i64: 2>, scalar_prefetch = 0 : i64, scratch_operands = 1 : i64, tpu.core_type = #tpu.core_type<tc>, window_params = [{transform_indices = @transform_0, window_bounds = array<i64: 1, 16, 82>}, {transform_indices = @transform_1, window_bounds = array<i64: 1, 16, 82>}, {pipeline_mode = #tpu.pipeline_mode<synchronous>, transform_indices = @transform_2, window_bounds = array<i64: 16, 288>}, {pipeline_mode = #tpu.pipeline_mode<synchronous>, transform_indices = @transform_3, window_bounds = array<i64: 16, 1>}, {transform_indices = @transform_4, window_bounds = array<i64: 1, 16, 64>}]} {
    %0 = tpu.iota {dimensions = array<i32: 1>} : vector<1x64xi32>
    %c8_i32 = arith.constant 8 : i32
    %c0_i32 = arith.constant 0 : i32
    %1 = arith.cmpi eq, %c8_i32, %c0_i32 : i32
    %c1_i32 = arith.constant 1 : i32
    %2 = arith.select %1, %c1_i32, %c8_i32 : i32
    %3 = vector.broadcast %2 : i32 to vector<1x64xi32>
    %4 = arith.remsi %0, %3 : vector<1x64xi32>
    %c0_i32_0 = arith.constant 0 : i32
    %5 = vector.broadcast %c0_i32_0 : i32 to vector<1x64xi32>
    %6 = arith.cmpi ne, %4, %5 : vector<1x64xi32>
    %c0_i32_1 = arith.constant 0 : i32
    %7 = vector.broadcast %c0_i32_1 : i32 to vector<1x64xi32>
    %8 = arith.cmpi slt, %4, %7 : vector<1x64xi32>
    %c0_i32_2 = arith.constant 0 : i32
    %9 = arith.cmpi slt, %2, %c0_i32_2 : i32
    %10 = vector.broadcast %9 : i1 to vector<1x64xi1>
    %11 = vector.broadcast %10 : vector<1x64xi1> to vector<1x64xi1>
    %12 = arith.xori %8, %11 : vector<1x64xi1>
    %13 = arith.andi %12, %6 : vector<1x64xi1>
    %14 = vector.broadcast %2 : i32 to vector<1x64xi32>
    %15 = arith.addi %4, %14 : vector<1x64xi32>
    %16 = arith.select %13, %15, %4 : vector<1x64xi1>, vector<1x64xi32>
    %c0_i32_3 = arith.constant 0 : i32
    %17 = vector.broadcast %c0_i32_3 : i32 to vector<1x64xi32>
    %18 = arith.cmpi ne, %16, %17 : vector<1x64xi32>
    %c7_i32 = arith.constant 7 : i32
    %19 = vector.broadcast %c7_i32 : i32 to vector<1x64xi32>
    %20 = arith.cmpi ne, %16, %19 : vector<1x64xi32>
    %c0 = arith.constant 0 : index
    %c0_4 = arith.constant 0 : index
    %c0_5 = arith.constant 0 : index
    %21 = vector.load %arg1[%c0, %c0_4, %c0_5] : memref<1x16x82xf32, #tpu.memory_space<vmem>>, vector<1x16x64xf32>
    %22 = vector.shape_cast %21 : vector<1x16x64xf32> to vector<16x64xf32>
    %cst = arith.constant 0.000000e+00 : f32
    %23 = vector.shape_cast %18 : vector<1x64xi1> to vector<1x64xi1>
    %24 = vector.broadcast %23 : vector<1x64xi1> to vector<16x64xi1>
    %25 = vector.broadcast %cst : f32 to vector<16x64xf32>
    %26 = arith.select %24, %22, %25 : vector<16x64xi1>, vector<16x64xf32>
    %c0_6 = arith.constant 0 : index
    %c0_7 = arith.constant 0 : index
    %27 = vector.load %arg6[%c0_6, %c0_7] : memref<288x64xf32, #tpu.memory_space<vmem>>, vector<16x64xf32>
    tpu.vector_store %arg6[%c0_6, %c0_7], %26 {strides = array<i32>} : memref<288x64xf32, #tpu.memory_space<vmem>>, vector<16x64xf32>,
    %c0_8 = arith.constant 0 : index
    %c0_9 = arith.constant 0 : index
    %c1 = arith.constant 1 : index
    %28 = vector.load %arg1[%c0_8, %c0_9, %c1] : memref<1x16x82xf32, #tpu.memory_space<vmem>>, vector<1x16x64xf32>
    %29 = vector.shape_cast %28 : vector<1x16x64xf32> to vector<16x64xf32>
    %c16 = arith.constant 16 : index
    %c0_10 = arith.constant 0 : index
    %30 = vector.load %arg6[%c16, %c0_10] : memref<288x64xf32, #tpu.memory_space<vmem>>, vector<16x64xf32>
    tpu.vector_store %arg6[%c16, %c0_10], %29 {strides = array<i32>} : memref<288x64xf32, #tpu.memory_space<vmem>>, vector<16x64xf32>,
    %c0_11 = arith.constant 0 : index
    %c0_12 = arith.constant 0 : index
    %c2 = arith.constant 2 : index
    %31 = vector.load %arg1[%c0_11, %c0_12, %c2] : memref<1x16x82xf32, #tpu.memory_space<vmem>>, vector<1x16x64xf32>
    %32 = vector.shape_cast %31 : vector<1x16x64xf32> to vector<16x64xf32>
    %cst_13 = arith.constant 0.000000e+00 : f32
    %33 = vector.shape_cast %20 : vector<1x64xi1> to vector<1x64xi1>
    %34 = vector.broadcast %33 : vector<1x64xi1> to vector<16x64xi1>
    %35 = vector.broadcast %cst_13 : f32 to vector<16x64xf32>
    %36 = arith.select %34, %32, %35 : vector<16x64xi1>, vector<16x64xf32>
    %c32 = arith.constant 32 : index
    %c0_14 = arith.constant 0 : index
    %37 = vector.load %arg6[%c32, %c0_14] : memref<288x64xf32, #tpu.memory_space<vmem>>, vector<16x64xf32>
    tpu.vector_store %arg6[%c32, %c0_14], %36 {strides = array<i32>} : memref<288x64xf32, #tpu.memory_space<vmem>>, vector<16x64xf32>,
    %c0_15 = arith.constant 0 : index
    %c0_16 = arith.constant 0 : index
    %c8 = arith.constant 8 : index
    %38 = vector.load %arg1[%c0_15, %c0_16, %c8] : memref<1x16x82xf32, #tpu.memory_space<vmem>>, vector<1x16x64xf32>
    %39 = vector.shape_cast %38 : vector<1x16x64xf32> to vector<16x64xf32>
    %cst_17 = arith.constant 0.000000e+00 : f32
    %40 = vector.shape_cast %18 : vector<1x64xi1> to vector<1x64xi1>
    %41 = vector.broadcast %40 : vector<1x64xi1> to vector<16x64xi1>
    %42 = vector.broadcast %cst_17 : f32 to vector<16x64xf32>
    %43 = arith.select %41, %39, %42 : vector<16x64xi1>, vector<16x64xf32>
    %c48 = arith.constant 48 : index
    %c0_18 = arith.constant 0 : index
    %44 = vector.load %arg6[%c48, %c0_18] : memref<288x64xf32, #tpu.memory_space<vmem>>, vector<16x64xf32>
    tpu.vector_store %arg6[%c48, %c0_18], %43 {strides = array<i32>} : memref<288x64xf32, #tpu.memory_space<vmem>>, vector<16x64xf32>,
    %c0_19 = arith.constant 0 : index
    %c0_20 = arith.constant 0 : index
    %c9 = arith.constant 9 : index
    %45 = vector.load %arg1[%c0_19, %c0_20, %c9] : memref<1x16x82xf32, #tpu.memory_space<vmem>>, vector<1x16x64xf32>
    %46 = vector.shape_cast %45 : vector<1x16x64xf32> to vector<16x64xf32>
    %c64 = arith.constant 64 : index
    %c0_21 = arith.constant 0 : index
    %47 = vector.load %arg6[%c64, %c0_21] : memref<288x64xf32, #tpu.memory_space<vmem>>, vector<16x64xf32>
    tpu.vector_store %arg6[%c64, %c0_21], %46 {strides = array<i32>} : memref<288x64xf32, #tpu.memory_space<vmem>>, vector<16x64xf32>,
    %c0_22 = arith.constant 0 : index
    %c0_23 = arith.constant 0 : index
    %c10 = arith.constant 10 : index
    %48 = vector.load %arg1[%c0_22, %c0_23, %c10] : memref<1x16x82xf32, #tpu.memory_space<vmem>>, vector<1x16x64xf32>
    %49 = vector.shape_cast %48 : vector<1x16x64xf32> to vector<16x64xf32>
    %cst_24 = arith.constant 0.000000e+00 : f32
    %50 = vector.shape_cast %20 : vector<1x64xi1> to vector<1x64xi1>
    %51 = vector.broadcast %50 : vector<1x64xi1> to vector<16x64xi1>
    %52 = vector.broadcast %cst_24 : f32 to vector<16x64xf32>
    %53 = arith.select %51, %49, %52 : vector<16x64xi1>, vector<16x64xf32>
    %c80 = arith.constant 80 : index
    %c0_25 = arith.constant 0 : index
    %54 = vector.load %arg6[%c80, %c0_25] : memref<288x64xf32, #tpu.memory_space<vmem>>, vector<16x64xf32>
    tpu.vector_store %arg6[%c80, %c0_25], %53 {strides = array<i32>} : memref<288x64xf32, #tpu.memory_space<vmem>>, vector<16x64xf32>,
    %c0_26 = arith.constant 0 : index
    %c0_27 = arith.constant 0 : index
    %c16_28 = arith.constant 16 : index
    %55 = vector.load %arg1[%c0_26, %c0_27, %c16_28] : memref<1x16x82xf32, #tpu.memory_space<vmem>>, vector<1x16x64xf32>
    %56 = vector.shape_cast %55 : vector<1x16x64xf32> to vector<16x64xf32>
    %cst_29 = arith.constant 0.000000e+00 : f32
    %57 = vector.shape_cast %18 : vector<1x64xi1> to vector<1x64xi1>
    %58 = vector.broadcast %57 : vector<1x64xi1> to vector<16x64xi1>
    %59 = vector.broadcast %cst_29 : f32 to vector<16x64xf32>
    %60 = arith.select %58, %56, %59 : vector<16x64xi1>, vector<16x64xf32>
    %c96 = arith.constant 96 : index
    %c0_30 = arith.constant 0 : index
    %61 = vector.load %arg6[%c96, %c0_30] : memref<288x64xf32, #tpu.memory_space<vmem>>, vector<16x64xf32>
    tpu.vector_store %arg6[%c96, %c0_30], %60 {strides = array<i32>} : memref<288x64xf32, #tpu.memory_space<vmem>>, vector<16x64xf32>,
    %c0_31 = arith.constant 0 : index
    %c0_32 = arith.constant 0 : index
    %c17 = arith.constant 17 : index
    %62 = vector.load %arg1[%c0_31, %c0_32, %c17] : memref<1x16x82xf32, #tpu.memory_space<vmem>>, vector<1x16x64xf32>
    %63 = vector.shape_cast %62 : vector<1x16x64xf32> to vector<16x64xf32>
    %c112 = arith.constant 112 : index
    %c0_33 = arith.constant 0 : index
    %64 = vector.load %arg6[%c112, %c0_33] : memref<288x64xf32, #tpu.memory_space<vmem>>, vector<16x64xf32>
    tpu.vector_store %arg6[%c112, %c0_33], %63 {strides = array<i32>} : memref<288x64xf32, #tpu.memory_space<vmem>>, vector<16x64xf32>,
    %c0_34 = arith.constant 0 : index
    %c0_35 = arith.constant 0 : index
    %c18 = arith.constant 18 : index
    %65 = vector.load %arg1[%c0_34, %c0_35, %c18] : memref<1x16x82xf32, #tpu.memory_space<vmem>>, vector<1x16x64xf32>
    %66 = vector.shape_cast %65 : vector<1x16x64xf32> to vector<16x64xf32>
    %cst_36 = arith.constant 0.000000e+00 : f32
    %67 = vector.shape_cast %20 : vector<1x64xi1> to vector<1x64xi1>
    %68 = vector.broadcast %67 : vector<1x64xi1> to vector<16x64xi1>
    %69 = vector.broadcast %cst_36 : f32 to vector<16x64xf32>
    %70 = arith.select %68, %66, %69 : vector<16x64xi1>, vector<16x64xf32>
    %c128 = arith.constant 128 : index
    %c0_37 = arith.constant 0 : index
    %71 = vector.load %arg6[%c128, %c0_37] : memref<288x64xf32, #tpu.memory_space<vmem>>, vector<16x64xf32>
    tpu.vector_store %arg6[%c128, %c0_37], %70 {strides = array<i32>} : memref<288x64xf32, #tpu.memory_space<vmem>>, vector<16x64xf32>,
    %c0_38 = arith.constant 0 : index
    %c0_39 = arith.constant 0 : index
    %c0_40 = arith.constant 0 : index
    %72 = vector.load %arg2[%c0_38, %c0_39, %c0_40] : memref<1x16x82xf32, #tpu.memory_space<vmem>>, vector<1x16x64xf32>
    %73 = vector.shape_cast %72 : vector<1x16x64xf32> to vector<16x64xf32>
    %cst_41 = arith.constant 0.000000e+00 : f32
    %74 = vector.shape_cast %18 : vector<1x64xi1> to vector<1x64xi1>
    %75 = vector.broadcast %74 : vector<1x64xi1> to vector<16x64xi1>
    %76 = vector.broadcast %cst_41 : f32 to vector<16x64xf32>
    %77 = arith.select %75, %73, %76 : vector<16x64xi1>, vector<16x64xf32>
    %c144 = arith.constant 144 : index
    %c0_42 = arith.constant 0 : index
    %78 = vector.load %arg6[%c144, %c0_42] : memref<288x64xf32, #tpu.memory_space<vmem>>, vector<16x64xf32>
    tpu.vector_store %arg6[%c144, %c0_42], %77 {strides = array<i32>} : memref<288x64xf32, #tpu.memory_space<vmem>>, vector<16x64xf32>,
    %c0_43 = arith.constant 0 : index
    %c0_44 = arith.constant 0 : index
    %c1_45 = arith.constant 1 : index
    %79 = vector.load %arg2[%c0_43, %c0_44, %c1_45] : memref<1x16x82xf32, #tpu.memory_space<vmem>>, vector<1x16x64xf32>
    %80 = vector.shape_cast %79 : vector<1x16x64xf32> to vector<16x64xf32>
    %c160 = arith.constant 160 : index
    %c0_46 = arith.constant 0 : index
    %81 = vector.load %arg6[%c160, %c0_46] : memref<288x64xf32, #tpu.memory_space<vmem>>, vector<16x64xf32>
    tpu.vector_store %arg6[%c160, %c0_46], %80 {strides = array<i32>} : memref<288x64xf32, #tpu.memory_space<vmem>>, vector<16x64xf32>,
    %c0_47 = arith.constant 0 : index
    %c0_48 = arith.constant 0 : index
    %c2_49 = arith.constant 2 : index
    %82 = vector.load %arg2[%c0_47, %c0_48, %c2_49] : memref<1x16x82xf32, #tpu.memory_space<vmem>>, vector<1x16x64xf32>
    %83 = vector.shape_cast %82 : vector<1x16x64xf32> to vector<16x64xf32>
    %cst_50 = arith.constant 0.000000e+00 : f32
    %84 = vector.shape_cast %20 : vector<1x64xi1> to vector<1x64xi1>
    %85 = vector.broadcast %84 : vector<1x64xi1> to vector<16x64xi1>
    %86 = vector.broadcast %cst_50 : f32 to vector<16x64xf32>
    %87 = arith.select %85, %83, %86 : vector<16x64xi1>, vector<16x64xf32>
    %c176 = arith.constant 176 : index
    %c0_51 = arith.constant 0 : index
    %88 = vector.load %arg6[%c176, %c0_51] : memref<288x64xf32, #tpu.memory_space<vmem>>, vector<16x64xf32>
    tpu.vector_store %arg6[%c176, %c0_51], %87 {strides = array<i32>} : memref<288x64xf32, #tpu.memory_space<vmem>>, vector<16x64xf32>,
    %c0_52 = arith.constant 0 : index
    %c0_53 = arith.constant 0 : index
    %c8_54 = arith.constant 8 : index
    %89 = vector.load %arg2[%c0_52, %c0_53, %c8_54] : memref<1x16x82xf32, #tpu.memory_space<vmem>>, vector<1x16x64xf32>
    %90 = vector.shape_cast %89 : vector<1x16x64xf32> to vector<16x64xf32>
    %cst_55 = arith.constant 0.000000e+00 : f32
    %91 = vector.shape_cast %18 : vector<1x64xi1> to vector<1x64xi1>
    %92 = vector.broadcast %91 : vector<1x64xi1> to vector<16x64xi1>
    %93 = vector.broadcast %cst_55 : f32 to vector<16x64xf32>
    %94 = arith.select %92, %90, %93 : vector<16x64xi1>, vector<16x64xf32>
    %c192 = arith.constant 192 : index
    %c0_56 = arith.constant 0 : index
    %95 = vector.load %arg6[%c192, %c0_56] : memref<288x64xf32, #tpu.memory_space<vmem>>, vector<16x64xf32>
    tpu.vector_store %arg6[%c192, %c0_56], %94 {strides = array<i32>} : memref<288x64xf32, #tpu.memory_space<vmem>>, vector<16x64xf32>,
    %c0_57 = arith.constant 0 : index
    %c0_58 = arith.constant 0 : index
    %c9_59 = arith.constant 9 : index
    %96 = vector.load %arg2[%c0_57, %c0_58, %c9_59] : memref<1x16x82xf32, #tpu.memory_space<vmem>>, vector<1x16x64xf32>
    %97 = vector.shape_cast %96 : vector<1x16x64xf32> to vector<16x64xf32>
    %c208 = arith.constant 208 : index
    %c0_60 = arith.constant 0 : index
    %98 = vector.load %arg6[%c208, %c0_60] : memref<288x64xf32, #tpu.memory_space<vmem>>, vector<16x64xf32>
    tpu.vector_store %arg6[%c208, %c0_60], %97 {strides = array<i32>} : memref<288x64xf32, #tpu.memory_space<vmem>>, vector<16x64xf32>,
    %c0_61 = arith.constant 0 : index
    %c0_62 = arith.constant 0 : index
    %c10_63 = arith.constant 10 : index
    %99 = vector.load %arg2[%c0_61, %c0_62, %c10_63] : memref<1x16x82xf32, #tpu.memory_space<vmem>>, vector<1x16x64xf32>
    %100 = vector.shape_cast %99 : vector<1x16x64xf32> to vector<16x64xf32>
    %cst_64 = arith.constant 0.000000e+00 : f32
    %101 = vector.shape_cast %20 : vector<1x64xi1> to vector<1x64xi1>
    %102 = vector.broadcast %101 : vector<1x64xi1> to vector<16x64xi1>
    %103 = vector.broadcast %cst_64 : f32 to vector<16x64xf32>
    %104 = arith.select %102, %100, %103 : vector<16x64xi1>, vector<16x64xf32>
    %c224 = arith.constant 224 : index
    %c0_65 = arith.constant 0 : index
    %105 = vector.load %arg6[%c224, %c0_65] : memref<288x64xf32, #tpu.memory_space<vmem>>, vector<16x64xf32>
    tpu.vector_store %arg6[%c224, %c0_65], %104 {strides = array<i32>} : memref<288x64xf32, #tpu.memory_space<vmem>>, vector<16x64xf32>,
    %c0_66 = arith.constant 0 : index
    %c0_67 = arith.constant 0 : index
    %c16_68 = arith.constant 16 : index
    %106 = vector.load %arg2[%c0_66, %c0_67, %c16_68] : memref<1x16x82xf32, #tpu.memory_space<vmem>>, vector<1x16x64xf32>
    %107 = vector.shape_cast %106 : vector<1x16x64xf32> to vector<16x64xf32>
    %cst_69 = arith.constant 0.000000e+00 : f32
    %108 = vector.shape_cast %18 : vector<1x64xi1> to vector<1x64xi1>
    %109 = vector.broadcast %108 : vector<1x64xi1> to vector<16x64xi1>
    %110 = vector.broadcast %cst_69 : f32 to vector<16x64xf32>
    %111 = arith.select %109, %107, %110 : vector<16x64xi1>, vector<16x64xf32>
    %c240 = arith.constant 240 : index
    %c0_70 = arith.constant 0 : index
    %112 = vector.load %arg6[%c240, %c0_70] : memref<288x64xf32, #tpu.memory_space<vmem>>, vector<16x64xf32>
    tpu.vector_store %arg6[%c240, %c0_70], %111 {strides = array<i32>} : memref<288x64xf32, #tpu.memory_space<vmem>>, vector<16x64xf32>,
    %c0_71 = arith.constant 0 : index
    %c0_72 = arith.constant 0 : index
    %c17_73 = arith.constant 17 : index
    %113 = vector.load %arg2[%c0_71, %c0_72, %c17_73] : memref<1x16x82xf32, #tpu.memory_space<vmem>>, vector<1x16x64xf32>
    %114 = vector.shape_cast %113 : vector<1x16x64xf32> to vector<16x64xf32>
    %c256 = arith.constant 256 : index
    %c0_74 = arith.constant 0 : index
    %115 = vector.load %arg6[%c256, %c0_74] : memref<288x64xf32, #tpu.memory_space<vmem>>, vector<16x64xf32>
    tpu.vector_store %arg6[%c256, %c0_74], %114 {strides = array<i32>} : memref<288x64xf32, #tpu.memory_space<vmem>>, vector<16x64xf32>,
    %c0_75 = arith.constant 0 : index
    %c0_76 = arith.constant 0 : index
    %c18_77 = arith.constant 18 : index
    %116 = vector.load %arg2[%c0_75, %c0_76, %c18_77] : memref<1x16x82xf32, #tpu.memory_space<vmem>>, vector<1x16x64xf32>
    %117 = vector.shape_cast %116 : vector<1x16x64xf32> to vector<16x64xf32>
    %cst_78 = arith.constant 0.000000e+00 : f32
    %118 = vector.shape_cast %20 : vector<1x64xi1> to vector<1x64xi1>
    %119 = vector.broadcast %118 : vector<1x64xi1> to vector<16x64xi1>
    %120 = vector.broadcast %cst_78 : f32 to vector<16x64xf32>
    %121 = arith.select %119, %117, %120 : vector<16x64xi1>, vector<16x64xf32>
    %c272 = arith.constant 272 : index
    %c0_79 = arith.constant 0 : index
    %122 = vector.load %arg6[%c272, %c0_79] : memref<288x64xf32, #tpu.memory_space<vmem>>, vector<16x64xf32>
    tpu.vector_store %arg6[%c272, %c0_79], %121 {strides = array<i32>} : memref<288x64xf32, #tpu.memory_space<vmem>>, vector<16x64xf32>,
    %c0_80 = arith.constant 0 : index
    %c0_81 = arith.constant 0 : index
    %123 = vector.load %arg3[%c0_80, %c0_81] : memref<16x288xf32, #tpu.memory_space<vmem>>, vector<16x288xf32>
    %c0_82 = arith.constant 0 : index
    %c0_83 = arith.constant 0 : index
    %124 = vector.load %arg6[%c0_82, %c0_83] : memref<288x64xf32, #tpu.memory_space<vmem>>, vector<288x64xf32>
    %cst_84 = arith.constant dense<0.000000e+00> : vector<16x64xf32>
    %125 = tpu.matmul %123, %124, %cst_84 {dimension_numbers = #tpu.dot_dimension_numbers<[1], [0], [0], [1], [0, 0, 1, 1], [], []>} : vector<16x288xf32>, vector<288x64xf32>, vector<16x64xf32> -> vector<16x64xf32>
    %c0_85 = arith.constant 0 : index
    %c0_86 = arith.constant 0 : index
    %126 = vector.load %arg4[%c0_85, %c0_86] : memref<16x1xf32, #tpu.memory_space<vmem>>, vector<16x1xf32>
    %127 = vector.broadcast %126 : vector<16x1xf32> to vector<16x64xf32>
    %128 = arith.addf %125, %127 : vector<16x64xf32>
    %cst_87 = arith.constant 0.000000e+00 : f32
    %129 = vector.broadcast %cst_87 : f32 to vector<16x64xf32>
    %130 = arith.cmpf oge, %128, %129 : vector<16x64xf32>
    %cst_88 = arith.constant 1.000000e-01 : f32
    %131 = vector.broadcast %cst_88 : f32 to vector<16x64xf32>
    %132 = arith.mulf %128, %131 : vector<16x64xf32>
    %133 = arith.select %130, %128, %132 : vector<16x64xi1>, vector<16x64xf32>
    %c0_89 = arith.constant 0 : index
    %c0_90 = arith.constant 0 : index
    %c0_91 = arith.constant 0 : index
    %134 = vector.load %arg5[%c0_89, %c0_90, %c0_91] : memref<1x16x64xf32, #tpu.memory_space<vmem>>, vector<1x16x64xf32>
    %135 = vector.shape_cast %134 : vector<1x16x64xf32> to vector<16x64xf32>
    %136 = vector.shape_cast %133 : vector<16x64xf32> to vector<1x16x64xf32>
    tpu.vector_store %arg5[%c0_89, %c0_90, %c0_91], %136 {strides = array<i32>} : memref<1x16x64xf32, #tpu.memory_space<vmem>>, vector<1x16x64xf32>,
    return
  }
  func.func @transform_0(%arg0: i32) -> (i32, i32, i32) {
    %c0_i32 = arith.constant 0 : i32
    %c0_i32_0 = arith.constant 0 : i32
    %c0_i32_1 = arith.constant 0 : i32
    return %arg0, %c0_i32, %c0_i32_0 : i32, i32, i32
  }
  func.func @transform_1(%arg0: i32) -> (i32, i32, i32) {
    %c0_i32 = arith.constant 0 : i32
    %c0_i32_0 = arith.constant 0 : i32
    %c0_i32_1 = arith.constant 0 : i32
    return %arg0, %c0_i32, %c0_i32_0 : i32, i32, i32
  }
  func.func @transform_2(%arg0: i32) -> (i32, i32) {
    %c0_i32 = arith.constant 0 : i32
    %c0_i32_0 = arith.constant 0 : i32
    %c0_i32_1 = arith.constant 0 : i32
    return %c0_i32, %c0_i32_0 : i32, i32
  }
  func.func @transform_3(%arg0: i32) -> (i32, i32) {
    %c0_i32 = arith.constant 0 : i32
    %c0_i32_0 = arith.constant 0 : i32
    %c0_i32_1 = arith.constant 0 : i32
    return %c0_i32, %c0_i32_0 : i32, i32
  }
  func.func @transform_4(%arg0: i32) -> (i32, i32, i32) {
    %c0_i32 = arith.constant 0 : i32
    %c0_i32_0 = arith.constant 0 : i32
    %c0_i32_1 = arith.constant 0 : i32
    return %arg0, %c0_i32, %c0_i32_0 : i32, i32, i32
  }
}

module attributes {stable_mosaic.version = 11 : i64} {
  func.func @_conv9_kernel(%arg0: i32, %arg1: memref<1x16x290xf32, #tpu.memory_space<vmem>>, %arg2: memref<216x144xf32, #tpu.memory_space<vmem>>, %arg3: memref<216x1xf32, #tpu.memory_space<vmem>>, %arg4: memref<1x216x256xf32, #tpu.memory_space<vmem>>, %arg5: memref<144x256xf32, #tpu.memory_space<vmem>>) attributes {dimension_semantics = [#tpu.dimension_semantics<parallel>], iteration_bounds = array<i64: 2>, scalar_prefetch = 0 : i64, scratch_operands = 1 : i64, tpu.core_type = #tpu.core_type<tc>, window_params = [{transform_indices = @transform_0, window_bounds = array<i64: 1, 16, 290>}, {pipeline_mode = #tpu.pipeline_mode<synchronous>, transform_indices = @transform_1, window_bounds = array<i64: 216, 144>}, {pipeline_mode = #tpu.pipeline_mode<synchronous>, transform_indices = @transform_2, window_bounds = array<i64: 216, 1>}, {transform_indices = @transform_3, window_bounds = array<i64: 1, 216, 256>}]} {
    %0 = tpu.iota {dimensions = array<i32: 1>} : vector<1x256xi32>
    %c16_i32 = arith.constant 16 : i32
    %c0_i32 = arith.constant 0 : i32
    %1 = arith.cmpi eq, %c16_i32, %c0_i32 : i32
    %c1_i32 = arith.constant 1 : i32
    %2 = arith.select %1, %c1_i32, %c16_i32 : i32
    %3 = vector.broadcast %2 : i32 to vector<1x256xi32>
    %4 = arith.remsi %0, %3 : vector<1x256xi32>
    %c0_i32_0 = arith.constant 0 : i32
    %5 = vector.broadcast %c0_i32_0 : i32 to vector<1x256xi32>
    %6 = arith.cmpi ne, %4, %5 : vector<1x256xi32>
    %c0_i32_1 = arith.constant 0 : i32
    %7 = vector.broadcast %c0_i32_1 : i32 to vector<1x256xi32>
    %8 = arith.cmpi slt, %4, %7 : vector<1x256xi32>
    %c0_i32_2 = arith.constant 0 : i32
    %9 = arith.cmpi slt, %2, %c0_i32_2 : i32
    %10 = vector.broadcast %9 : i1 to vector<1x256xi1>
    %11 = vector.broadcast %10 : vector<1x256xi1> to vector<1x256xi1>
    %12 = arith.xori %8, %11 : vector<1x256xi1>
    %13 = arith.andi %12, %6 : vector<1x256xi1>
    %14 = vector.broadcast %2 : i32 to vector<1x256xi32>
    %15 = arith.addi %4, %14 : vector<1x256xi32>
    %16 = arith.select %13, %15, %4 : vector<1x256xi1>, vector<1x256xi32>
    %c0_i32_3 = arith.constant 0 : i32
    %17 = vector.broadcast %c0_i32_3 : i32 to vector<1x256xi32>
    %18 = arith.cmpi ne, %16, %17 : vector<1x256xi32>
    %c15_i32 = arith.constant 15 : i32
    %19 = vector.broadcast %c15_i32 : i32 to vector<1x256xi32>
    %20 = arith.cmpi ne, %16, %19 : vector<1x256xi32>
    %c0 = arith.constant 0 : index
    %c0_4 = arith.constant 0 : index
    %c0_5 = arith.constant 0 : index
    %21 = vector.load %arg1[%c0, %c0_4, %c0_5] : memref<1x16x290xf32, #tpu.memory_space<vmem>>, vector<1x16x256xf32>
    %22 = vector.shape_cast %21 : vector<1x16x256xf32> to vector<16x256xf32>
    %cst = arith.constant 0.000000e+00 : f32
    %23 = vector.shape_cast %18 : vector<1x256xi1> to vector<1x256xi1>
    %24 = vector.broadcast %23 : vector<1x256xi1> to vector<16x256xi1>
    %25 = vector.broadcast %cst : f32 to vector<16x256xf32>
    %26 = arith.select %24, %22, %25 : vector<16x256xi1>, vector<16x256xf32>
    %c0_6 = arith.constant 0 : index
    %c0_7 = arith.constant 0 : index
    %27 = vector.load %arg5[%c0_6, %c0_7] : memref<144x256xf32, #tpu.memory_space<vmem>>, vector<16x256xf32>
    tpu.vector_store %arg5[%c0_6, %c0_7], %26 {strides = array<i32>} : memref<144x256xf32, #tpu.memory_space<vmem>>, vector<16x256xf32>,
    %c0_8 = arith.constant 0 : index
    %c0_9 = arith.constant 0 : index
    %c1 = arith.constant 1 : index
    %28 = vector.load %arg1[%c0_8, %c0_9, %c1] : memref<1x16x290xf32, #tpu.memory_space<vmem>>, vector<1x16x256xf32>
    %29 = vector.shape_cast %28 : vector<1x16x256xf32> to vector<16x256xf32>
    %c16 = arith.constant 16 : index
    %c0_10 = arith.constant 0 : index
    %30 = vector.load %arg5[%c16, %c0_10] : memref<144x256xf32, #tpu.memory_space<vmem>>, vector<16x256xf32>
    tpu.vector_store %arg5[%c16, %c0_10], %29 {strides = array<i32>} : memref<144x256xf32, #tpu.memory_space<vmem>>, vector<16x256xf32>,
    %c0_11 = arith.constant 0 : index
    %c0_12 = arith.constant 0 : index
    %c2 = arith.constant 2 : index
    %31 = vector.load %arg1[%c0_11, %c0_12, %c2] : memref<1x16x290xf32, #tpu.memory_space<vmem>>, vector<1x16x256xf32>
    %32 = vector.shape_cast %31 : vector<1x16x256xf32> to vector<16x256xf32>
    %cst_13 = arith.constant 0.000000e+00 : f32
    %33 = vector.shape_cast %20 : vector<1x256xi1> to vector<1x256xi1>
    %34 = vector.broadcast %33 : vector<1x256xi1> to vector<16x256xi1>
    %35 = vector.broadcast %cst_13 : f32 to vector<16x256xf32>
    %36 = arith.select %34, %32, %35 : vector<16x256xi1>, vector<16x256xf32>
    %c32 = arith.constant 32 : index
    %c0_14 = arith.constant 0 : index
    %37 = vector.load %arg5[%c32, %c0_14] : memref<144x256xf32, #tpu.memory_space<vmem>>, vector<16x256xf32>
    tpu.vector_store %arg5[%c32, %c0_14], %36 {strides = array<i32>} : memref<144x256xf32, #tpu.memory_space<vmem>>, vector<16x256xf32>,
    %c0_15 = arith.constant 0 : index
    %c0_16 = arith.constant 0 : index
    %c16_17 = arith.constant 16 : index
    %38 = vector.load %arg1[%c0_15, %c0_16, %c16_17] : memref<1x16x290xf32, #tpu.memory_space<vmem>>, vector<1x16x256xf32>
    %39 = vector.shape_cast %38 : vector<1x16x256xf32> to vector<16x256xf32>
    %cst_18 = arith.constant 0.000000e+00 : f32
    %40 = vector.shape_cast %18 : vector<1x256xi1> to vector<1x256xi1>
    %41 = vector.broadcast %40 : vector<1x256xi1> to vector<16x256xi1>
    %42 = vector.broadcast %cst_18 : f32 to vector<16x256xf32>
    %43 = arith.select %41, %39, %42 : vector<16x256xi1>, vector<16x256xf32>
    %c48 = arith.constant 48 : index
    %c0_19 = arith.constant 0 : index
    %44 = vector.load %arg5[%c48, %c0_19] : memref<144x256xf32, #tpu.memory_space<vmem>>, vector<16x256xf32>
    tpu.vector_store %arg5[%c48, %c0_19], %43 {strides = array<i32>} : memref<144x256xf32, #tpu.memory_space<vmem>>, vector<16x256xf32>,
    %c0_20 = arith.constant 0 : index
    %c0_21 = arith.constant 0 : index
    %c17 = arith.constant 17 : index
    %45 = vector.load %arg1[%c0_20, %c0_21, %c17] : memref<1x16x290xf32, #tpu.memory_space<vmem>>, vector<1x16x256xf32>
    %46 = vector.shape_cast %45 : vector<1x16x256xf32> to vector<16x256xf32>
    %c64 = arith.constant 64 : index
    %c0_22 = arith.constant 0 : index
    %47 = vector.load %arg5[%c64, %c0_22] : memref<144x256xf32, #tpu.memory_space<vmem>>, vector<16x256xf32>
    tpu.vector_store %arg5[%c64, %c0_22], %46 {strides = array<i32>} : memref<144x256xf32, #tpu.memory_space<vmem>>, vector<16x256xf32>,
    %c0_23 = arith.constant 0 : index
    %c0_24 = arith.constant 0 : index
    %c18 = arith.constant 18 : index
    %48 = vector.load %arg1[%c0_23, %c0_24, %c18] : memref<1x16x290xf32, #tpu.memory_space<vmem>>, vector<1x16x256xf32>
    %49 = vector.shape_cast %48 : vector<1x16x256xf32> to vector<16x256xf32>
    %cst_25 = arith.constant 0.000000e+00 : f32
    %50 = vector.shape_cast %20 : vector<1x256xi1> to vector<1x256xi1>
    %51 = vector.broadcast %50 : vector<1x256xi1> to vector<16x256xi1>
    %52 = vector.broadcast %cst_25 : f32 to vector<16x256xf32>
    %53 = arith.select %51, %49, %52 : vector<16x256xi1>, vector<16x256xf32>
    %c80 = arith.constant 80 : index
    %c0_26 = arith.constant 0 : index
    %54 = vector.load %arg5[%c80, %c0_26] : memref<144x256xf32, #tpu.memory_space<vmem>>, vector<16x256xf32>
    tpu.vector_store %arg5[%c80, %c0_26], %53 {strides = array<i32>} : memref<144x256xf32, #tpu.memory_space<vmem>>, vector<16x256xf32>,
    %c0_27 = arith.constant 0 : index
    %c0_28 = arith.constant 0 : index
    %c32_29 = arith.constant 32 : index
    %55 = vector.load %arg1[%c0_27, %c0_28, %c32_29] : memref<1x16x290xf32, #tpu.memory_space<vmem>>, vector<1x16x256xf32>
    %56 = vector.shape_cast %55 : vector<1x16x256xf32> to vector<16x256xf32>
    %cst_30 = arith.constant 0.000000e+00 : f32
    %57 = vector.shape_cast %18 : vector<1x256xi1> to vector<1x256xi1>
    %58 = vector.broadcast %57 : vector<1x256xi1> to vector<16x256xi1>
    %59 = vector.broadcast %cst_30 : f32 to vector<16x256xf32>
    %60 = arith.select %58, %56, %59 : vector<16x256xi1>, vector<16x256xf32>
    %c96 = arith.constant 96 : index
    %c0_31 = arith.constant 0 : index
    %61 = vector.load %arg5[%c96, %c0_31] : memref<144x256xf32, #tpu.memory_space<vmem>>, vector<16x256xf32>
    tpu.vector_store %arg5[%c96, %c0_31], %60 {strides = array<i32>} : memref<144x256xf32, #tpu.memory_space<vmem>>, vector<16x256xf32>,
    %c0_32 = arith.constant 0 : index
    %c0_33 = arith.constant 0 : index
    %c33 = arith.constant 33 : index
    %62 = vector.load %arg1[%c0_32, %c0_33, %c33] : memref<1x16x290xf32, #tpu.memory_space<vmem>>, vector<1x16x256xf32>
    %63 = vector.shape_cast %62 : vector<1x16x256xf32> to vector<16x256xf32>
    %c112 = arith.constant 112 : index
    %c0_34 = arith.constant 0 : index
    %64 = vector.load %arg5[%c112, %c0_34] : memref<144x256xf32, #tpu.memory_space<vmem>>, vector<16x256xf32>
    tpu.vector_store %arg5[%c112, %c0_34], %63 {strides = array<i32>} : memref<144x256xf32, #tpu.memory_space<vmem>>, vector<16x256xf32>,
    %c0_35 = arith.constant 0 : index
    %c0_36 = arith.constant 0 : index
    %c34 = arith.constant 34 : index
    %65 = vector.load %arg1[%c0_35, %c0_36, %c34] : memref<1x16x290xf32, #tpu.memory_space<vmem>>, vector<1x16x256xf32>
    %66 = vector.shape_cast %65 : vector<1x16x256xf32> to vector<16x256xf32>
    %cst_37 = arith.constant 0.000000e+00 : f32
    %67 = vector.shape_cast %20 : vector<1x256xi1> to vector<1x256xi1>
    %68 = vector.broadcast %67 : vector<1x256xi1> to vector<16x256xi1>
    %69 = vector.broadcast %cst_37 : f32 to vector<16x256xf32>
    %70 = arith.select %68, %66, %69 : vector<16x256xi1>, vector<16x256xf32>
    %c128 = arith.constant 128 : index
    %c0_38 = arith.constant 0 : index
    %71 = vector.load %arg5[%c128, %c0_38] : memref<144x256xf32, #tpu.memory_space<vmem>>, vector<16x256xf32>
    tpu.vector_store %arg5[%c128, %c0_38], %70 {strides = array<i32>} : memref<144x256xf32, #tpu.memory_space<vmem>>, vector<16x256xf32>,
    %c0_39 = arith.constant 0 : index
    %c0_40 = arith.constant 0 : index
    %72 = vector.load %arg2[%c0_39, %c0_40] : memref<216x144xf32, #tpu.memory_space<vmem>>, vector<216x144xf32>
    %c0_41 = arith.constant 0 : index
    %c0_42 = arith.constant 0 : index
    %73 = vector.load %arg5[%c0_41, %c0_42] : memref<144x256xf32, #tpu.memory_space<vmem>>, vector<144x256xf32>
    %cst_43 = arith.constant dense<0.000000e+00> : vector<216x256xf32>
    %74 = tpu.matmul %72, %73, %cst_43 {dimension_numbers = #tpu.dot_dimension_numbers<[1], [0], [0], [1], [0, 0, 1, 1], [], []>} : vector<216x144xf32>, vector<144x256xf32>, vector<216x256xf32> -> vector<216x256xf32>
    %c0_44 = arith.constant 0 : index
    %c0_45 = arith.constant 0 : index
    %75 = vector.load %arg3[%c0_44, %c0_45] : memref<216x1xf32, #tpu.memory_space<vmem>>, vector<216x1xf32>
    %76 = vector.broadcast %75 : vector<216x1xf32> to vector<216x256xf32>
    %77 = arith.addf %74, %76 : vector<216x256xf32>
    %78 = vector.extract_strided_slice %77 {offsets = [0, 0], sizes = [144, 256], strides = [1, 1]} : vector<216x256xf32> to vector<144x256xf32>
    %c0_46 = arith.constant 0 : index
    %c0_47 = arith.constant 0 : index
    %c0_48 = arith.constant 0 : index
    %79 = vector.load %arg4[%c0_46, %c0_47, %c0_48] : memref<1x216x256xf32, #tpu.memory_space<vmem>>, vector<1x144x256xf32>
    %80 = vector.shape_cast %79 : vector<1x144x256xf32> to vector<144x256xf32>
    %81 = vector.shape_cast %78 : vector<144x256xf32> to vector<1x144x256xf32>
    tpu.vector_store %arg4[%c0_46, %c0_47, %c0_48], %81 {strides = array<i32>} : memref<1x216x256xf32, #tpu.memory_space<vmem>>, vector<1x144x256xf32>,
    %82 = vector.extract_strided_slice %77 {offsets = [144, 0], sizes = [72, 256], strides = [1, 1]} : vector<216x256xf32> to vector<72x256xf32>
    %83 = arith.negf %82 : vector<72x256xf32>
    %84 = math.exp %83 : vector<72x256xf32>
    %cst_49 = arith.constant 1.000000e+00 : f32
    %85 = vector.broadcast %cst_49 : f32 to vector<72x256xf32>
    %86 = arith.addf %85, %84 : vector<72x256xf32>
    %87 = arith.divf %85, %86 : vector<72x256xf32>
    %c0_50 = arith.constant 0 : index
    %c144 = arith.constant 144 : index
    %c0_51 = arith.constant 0 : index
    %88 = vector.load %arg4[%c0_50, %c144, %c0_51] : memref<1x216x256xf32, #tpu.memory_space<vmem>>, vector<1x72x256xf32>
    %89 = vector.shape_cast %88 : vector<1x72x256xf32> to vector<72x256xf32>
    %90 = vector.shape_cast %87 : vector<72x256xf32> to vector<1x72x256xf32>
    tpu.vector_store %arg4[%c0_50, %c144, %c0_51], %90 {strides = array<i32>} : memref<1x216x256xf32, #tpu.memory_space<vmem>>, vector<1x72x256xf32>,
    return
  }
  func.func @transform_0(%arg0: i32) -> (i32, i32, i32) {
    %c0_i32 = arith.constant 0 : i32
    %c0_i32_0 = arith.constant 0 : i32
    %c0_i32_1 = arith.constant 0 : i32
    return %arg0, %c0_i32, %c0_i32_0 : i32, i32, i32
  }
  func.func @transform_1(%arg0: i32) -> (i32, i32) {
    %c0_i32 = arith.constant 0 : i32
    %c0_i32_0 = arith.constant 0 : i32
    %c0_i32_1 = arith.constant 0 : i32
    return %c0_i32, %c0_i32_0 : i32, i32
  }
  func.func @transform_2(%arg0: i32) -> (i32, i32) {
    %c0_i32 = arith.constant 0 : i32
    %c0_i32_0 = arith.constant 0 : i32
    %c0_i32_1 = arith.constant 0 : i32
    return %c0_i32, %c0_i32_0 : i32, i32
  }
  func.func @transform_3(%arg0: i32) -> (i32, i32, i32) {
    %c0_i32 = arith.constant 0 : i32
    %c0_i32_0 = arith.constant 0 : i32
    %c0_i32_1 = arith.constant 0 : i32
    return %arg0, %c0_i32, %c0_i32_0 : i32, i32, i32
  }
}

module attributes {stable_mosaic.version = 11 : i64} {
  func.func @_dense_kernel(%arg0: i32, %arg1: memref<1x144x256xf32, #tpu.memory_space<vmem>>, %arg2: memref<16x144xf32, #tpu.memory_space<vmem>>, %arg3: memref<16x1xf32, #tpu.memory_space<vmem>>, %arg4: memref<1x16x256xf32, #tpu.memory_space<vmem>>) attributes {dimension_semantics = [#tpu.dimension_semantics<parallel>], iteration_bounds = array<i64: 2>, scalar_prefetch = 0 : i64, scratch_operands = 0 : i64, tpu.core_type = #tpu.core_type<tc>, window_params = [{transform_indices = @transform_0, window_bounds = array<i64: 1, 144, 256>}, {pipeline_mode = #tpu.pipeline_mode<synchronous>, transform_indices = @transform_1, window_bounds = array<i64: 16, 144>}, {pipeline_mode = #tpu.pipeline_mode<synchronous>, transform_indices = @transform_2, window_bounds = array<i64: 16, 1>}, {transform_indices = @transform_3, window_bounds = array<i64: 1, 16, 256>}]} {
    %c0 = arith.constant 0 : index
    %c0_0 = arith.constant 0 : index
    %0 = vector.load %arg2[%c0, %c0_0] : memref<16x144xf32, #tpu.memory_space<vmem>>, vector<16x144xf32>
    %c0_1 = arith.constant 0 : index
    %c0_2 = arith.constant 0 : index
    %c0_3 = arith.constant 0 : index
    %1 = vector.load %arg1[%c0_1, %c0_2, %c0_3] : memref<1x144x256xf32, #tpu.memory_space<vmem>>, vector<1x144x256xf32>
    %2 = vector.shape_cast %1 : vector<1x144x256xf32> to vector<144x256xf32>
    %cst = arith.constant dense<0.000000e+00> : vector<16x256xf32>
    %3 = tpu.matmul %0, %2, %cst {dimension_numbers = #tpu.dot_dimension_numbers<[1], [0], [0], [1], [0, 0, 1, 1], [], []>} : vector<16x144xf32>, vector<144x256xf32>, vector<16x256xf32> -> vector<16x256xf32>
    %c0_4 = arith.constant 0 : index
    %c0_5 = arith.constant 0 : index
    %4 = vector.load %arg3[%c0_4, %c0_5] : memref<16x1xf32, #tpu.memory_space<vmem>>, vector<16x1xf32>
    %5 = vector.broadcast %4 : vector<16x1xf32> to vector<16x256xf32>
    %6 = arith.addf %3, %5 : vector<16x256xf32>
    %cst_6 = arith.constant 0.000000e+00 : f32
    %7 = vector.broadcast %cst_6 : f32 to vector<16x256xf32>
    %8 = arith.cmpf oge, %6, %7 : vector<16x256xf32>
    %cst_7 = arith.constant 1.000000e-01 : f32
    %9 = vector.broadcast %cst_7 : f32 to vector<16x256xf32>
    %10 = arith.mulf %6, %9 : vector<16x256xf32>
    %11 = arith.select %8, %6, %10 : vector<16x256xi1>, vector<16x256xf32>
    %c0_8 = arith.constant 0 : index
    %c0_9 = arith.constant 0 : index
    %c0_10 = arith.constant 0 : index
    %12 = vector.load %arg4[%c0_8, %c0_9, %c0_10] : memref<1x16x256xf32, #tpu.memory_space<vmem>>, vector<1x16x256xf32>
    %13 = vector.shape_cast %12 : vector<1x16x256xf32> to vector<16x256xf32>
    %14 = vector.shape_cast %11 : vector<16x256xf32> to vector<1x16x256xf32>
    tpu.vector_store %arg4[%c0_8, %c0_9, %c0_10], %14 {strides = array<i32>} : memref<1x16x256xf32, #tpu.memory_space<vmem>>, vector<1x16x256xf32>,
    return
  }
  func.func @transform_0(%arg0: i32) -> (i32, i32, i32) {
    %c0_i32 = arith.constant 0 : i32
    %c0_i32_0 = arith.constant 0 : i32
    %c0_i32_1 = arith.constant 0 : i32
    return %arg0, %c0_i32, %c0_i32_0 : i32, i32, i32
  }
  func.func @transform_1(%arg0: i32) -> (i32, i32) {
    %c0_i32 = arith.constant 0 : i32
    %c0_i32_0 = arith.constant 0 : i32
    %c0_i32_1 = arith.constant 0 : i32
    return %c0_i32, %c0_i32_0 : i32, i32
  }
  func.func @transform_2(%arg0: i32) -> (i32, i32) {
    %c0_i32 = arith.constant 0 : i32
    %c0_i32_0 = arith.constant 0 : i32
    %c0_i32_1 = arith.constant 0 : i32
    return %c0_i32, %c0_i32_0 : i32, i32
  }
  func.func @transform_3(%arg0: i32) -> (i32, i32, i32) {
    %c0_i32 = arith.constant 0 : i32
    %c0_i32_0 = arith.constant 0 : i32
    %c0_i32_1 = arith.constant 0 : i32
    return %arg0, %c0_i32, %c0_i32_0 : i32, i32, i32
  }
}

</mosaic_0001>

<llo_original>
// kernel: alignment_forward.9
$region0: #{alignment_forward.9}
  #allocation0 [shape = 'u32[]', space=smem, size = 0x4, offset = 0x4, fixed_abs, tag = 'smem constant byte address 0x4 - core index']
  #allocation1 [shape = 'u32[144,128]{1,0:T(1,128)}', space=vmem, size = 0x12000, scoped, tag = 'internal scratch']
  #allocation2 [shape = 'f32[288,256]{1,0:T(8,128)}', space=vmem, size = 0x48000, scoped, tag = 'scratch operand']
  %s0 = inlined_call_operand.vmem [shape: f32[2,16,290], index: 0, kind: input, shape index: {}]
  %s1 = inlined_call_operand.vmem [shape: f32[2,16,290], index: 1, kind: input, shape index: {}]
  %s2 = inlined_call_operand.vmem [shape: f32[16,288], index: 2, kind: input, shape index: {}]
  %s3 = inlined_call_operand.vmem [shape: f32[16,1], index: 3, kind: input, shape index: {}]
  %s4 = inlined_call_operand.vmem [shape: f32[2,16,256], index: 4, kind: output, shape index: {}]
  %s5 = sld [smem:[#allocation0]]
  $region49: #{alignment_forward.9} parent=0
    _
  %s7 = ssub.s32 1, %s5
  %s8 = scalar_select 0, %s7, %s5
  loop: start=0, step=1, limit=4
  $region2: #{alignment_forward.9} parent=0 // loop_pre_header
    _
  $region3: #{alignment_forward.9} parent=0 // loop_header
    %s10 = sphi 0, %s14
    %p11 = scmp.ge.s32.totalorder %s10, 4
    %s20 = sphi 0, %s22
    %s23 = sphi 0, %s20
    %s24 = sphi 0, %s23
    %s40 = sphi 0, %s24
    %s46 = sphi 0, %s48
    %s49 = sphi 0, %s46
    %s50 = sphi 0, %s49
    %s66 = sphi 0, %s50
    %s70 = sphi 0, %s70
    %s72 = sphi 0, %s70
    %s73 = sphi 0, %s72
    %s87 = sphi 0, %s73
    %s91 = sphi 0, %s91
    %s93 = sphi 0, %s91
    %s94 = sphi 0, %s93
    %s108 = sphi 0, %s94
    %s114 = sphi 0, %s116
    %s117 = sphi 0, %s114
    %s118 = sphi 0, %s117
    %s134 = sphi 0, %s118
  $region4: #{alignment_forward.9} parent=0 // loop_header_branch
    %13 = sbr.rel (%p11) target = $region8
  $region5: #{alignment_forward.9} parent=0 // loop_body
    %s15 = ssub.s32 %s10, 1
    %s16 = ssub.s32 %s10, 2
    %s17 = sadd.s32 %s10, 1
    %s18 = ssub.s32 %s10, %s17
    %p19 = scmp.eq.s32.totalorder %s18, 0
    %s21 = sadd.s32 %s20, 1
    %s22 = scalar_select %p19, %s20, %s21
    %p25 = pneg %p19
    %p26 = scmp.eq.s32.totalorder %s10, 1
    %p27 = por %p25, %p26
    %p28 = scmp.ne.s32.totalorder %s20, %s23
    %p29 = scmp.eq.s32.totalorder %s10, 0
    %p30 = por %p28, %p29
    %p31 = scmp.ne.s32.totalorder %s20, %s23
    %p32 = scmp.eq.s32.totalorder %s15, 1
    %p33 = por %p31, %p32
    %p34 = scmp.ne.s32.totalorder %s23, %s24
    %p35 = scmp.eq.s32.totalorder %s15, 0
    %p36 = por %p34, %p35
    %p37 = scmp.ne.s32.totalorder %s23, %s24
    %p38 = scmp.eq.s32.totalorder %s16, 1
    %p39 = por %p37, %p38
    %p41 = scmp.ne.s32.totalorder %s24, %s40
    %p42 = scmp.eq.s32.totalorder %s16, 0
    %p43 = por %p41, %p42
    %s44 = ssub.s32 %s10, %s17
    %p45 = scmp.eq.s32.totalorder %s44, 0
    %s47 = sadd.s32 %s46, 1
    %s48 = scalar_select %p45, %s46, %s47
    %p51 = pneg %p45
    %p52 = scmp.eq.s32.totalorder %s10, 1
    %p53 = por %p51, %p52
    %p54 = scmp.ne.s32.totalorder %s46, %s49
    %p55 = scmp.eq.s32.totalorder %s10, 0
    %p56 = por %p54, %p55
    %p57 = scmp.ne.s32.totalorder %s46, %s49
    %p58 = scmp.eq.s32.totalorder %s15, 1
    %p59 = por %p57, %p58
    %p60 = scmp.ne.s32.totalorder %s49, %s50
    %p61 = scmp.eq.s32.totalorder %s15, 0
    %p62 = por %p60, %p61
    %p63 = scmp.ne.s32.totalorder %s49, %s50
    %p64 = scmp.eq.s32.totalorder %s16, 1
    %p65 = por %p63, %p64
    %p67 = scmp.ne.s32.totalorder %s50, %s66
    %p68 = scmp.eq.s32.totalorder %s16, 0
    %p69 = por %p67, %p68
    %s71 = sadd.s32 %s70, 1
    %p74 = scmp.eq.s32.totalorder %s10, 1
    %p75 = scmp.ne.s32.totalorder %s70, %s72
    %p76 = scmp.eq.s32.totalorder %s10, 0
    %p77 = por %p75, %p76
    %p78 = scmp.ne.s32.totalorder %s70, %s72
    %p79 = scmp.eq.s32.totalorder %s15, 1
    %p80 = por %p78, %p79
    %p81 = scmp.ne.s32.totalorder %s72, %s73
    %p82 = scmp.eq.s32.totalorder %s15, 0
    %p83 = por %p81, %p82
    %p84 = scmp.ne.s32.totalorder %s72, %s73
    %p85 = scmp.eq.s32.totalorder %s16, 1
    %p86 = por %p84, %p85
    %p88 = scmp.ne.s32.totalorder %s73, %s87
    %p89 = scmp.eq.s32.totalorder %s16, 0
    %p90 = por %p88, %p89
    %s92 = sadd.s32 %s91, 1
    %p95 = scmp.eq.s32.totalorder %s10, 1
    %p96 = scmp.ne.s32.totalorder %s91, %s93
    %p97 = scmp.eq.s32.totalorder %s10, 0
    %p98 = por %p96, %p97
    %p99 = scmp.ne.s32.totalorder %s91, %s93
    %p100 = scmp.eq.s32.totalorder %s15, 1
    %p101 = por %p99, %p100
    %p102 = scmp.ne.s32.totalorder %s93, %s94
    %p103 = scmp.eq.s32.totalorder %s15, 0
    %p104 = por %p102, %p103
    %p105 = scmp.ne.s32.totalorder %s93, %s94
    %p106 = scmp.eq.s32.totalorder %s16, 1
    %p107 = por %p105, %p106
    %p109 = scmp.ne.s32.totalorder %s94, %s108
    %p110 = scmp.eq.s32.totalorder %s16, 0
    %p111 = por %p109, %p110
    %s112 = ssub.s32 %s10, %s17
    %p113 = scmp.eq.s32.totalorder %s112, 0
    %s115 = sadd.s32 %s114, 1
    %s116 = scalar_select %p113, %s114, %s115
    %p119 = pneg %p113
    %p120 = scmp.eq.s32.totalorder %s10, 1
    %p121 = por %p119, %p120
    %p122 = scmp.ne.s32.totalorder %s114, %s117
    %p123 = scmp.eq.s32.totalorder %s10, 0
    %p124 = por %p122, %p123
    %p125 = scmp.ne.s32.totalorder %s114, %s117
    %p126 = scmp.eq.s32.totalorder %s15, 1
    %p127 = por %p125, %p126
    %p128 = scmp.ne.s32.totalorder %s117, %s118
    %p129 = scmp.eq.s32.totalorder %s15, 0
    %p130 = por %p128, %p129
    %p131 = scmp.ne.s32.totalorder %s117, %s118
    %p132 = scmp.eq.s32.totalorder %s16, 1
    %p133 = por %p131, %p132
    %p135 = scmp.ne.s32.totalorder %s118, %s134
    %p136 = scmp.eq.s32.totalorder %s16, 0
    %p137 = por %p135, %p136
    %p138 = scmp.le.s32.totalorder 1, %s10
    %p139 = scmp.lt.s32.totalorder %s10, 3
    %p140 = pnand %p138, %p139
    %p141 = pneg %p140
    // Predicated region
    $region9: #{alignment_forward.9} parent=5 // pred_check
      _
    $region10: #{alignment_forward.9} parent=5 // pred_check_branch
      %143 = sbr.rel (%p140) target = $region12
    $region11: #{alignment_forward.9} parent=5 // pred_region
      %s144 = ssub.s32 %s10, 1
      // Predicated region
      $region13: #{alignment_forward.9} parent=11 // pred_check
        %p145 = pneg %p83
      $region14: #{alignment_forward.9} parent=11 // pred_check_branch
        %147 = sbr.rel (%p145) target = $region16
      $region15: #{alignment_forward.9} parent=11 // pred_region
        _
      $region16: #{alignment_forward.9} parent=11 // pred_fallthru
        _
      // Predicated region
      $region17: #{alignment_forward.9} parent=11 // pred_check
        %p148 = pneg %p104
      $region18: #{alignment_forward.9} parent=11 // pred_check_branch
        %150 = sbr.rel (%p148) target = $region20
      $region19: #{alignment_forward.9} parent=11 // pred_region
        _
      $region20: #{alignment_forward.9} parent=11 // pred_fallthru
        _
    $region12: #{alignment_forward.9} parent=5 // pred_fallthru
      _
    %p151 = scmp.lt.s32.totalorder %s10, 2
    // Predicated region
    $region21: #{alignment_forward.9} parent=5 // pred_check
      %p152 = pneg %p151
    $region22: #{alignment_forward.9} parent=5 // pred_check_branch
      %154 = sbr.rel (%p152) target = $region24
    $region23: #{alignment_forward.9} parent=5 // pred_region
      // Predicated region
      $region25: #{alignment_forward.9} parent=23 // pred_check
        %p155 = pneg %p30
      $region26: #{alignment_forward.9} parent=23 // pred_check_branch
        %157 = sbr.rel (%p155) target = $region28
      $region27: #{alignment_forward.9} parent=23 // pred_region
        %p158 = scmp.lt.s32.totalorder %s10, 1
        %s159 = scalar_select %p158, %s10, 1
        %s160 = smul.addr %s159, 6
        %s161 = smul.addr %s160, 8
        %s162 = scalar_lea.vmem %s0, %s161
      $region28: #{alignment_forward.9} parent=23 // pred_fallthru
        _
      // Predicated region
      $region29: #{alignment_forward.9} parent=23 // pred_check
        %p163 = pneg %p56
      $region30: #{alignment_forward.9} parent=23 // pred_check_branch
        %165 = sbr.rel (%p163) target = $region32
      $region31: #{alignment_forward.9} parent=23 // pred_region
        %p166 = scmp.lt.s32.totalorder %s10, 1
        %s167 = scalar_select %p166, %s10, 1
        %s168 = smul.addr %s167, 6
        %s169 = smul.addr %s168, 8
        %s170 = scalar_lea.vmem %s1, %s169
      $region32: #{alignment_forward.9} parent=23 // pred_fallthru
        _
    $region24: #{alignment_forward.9} parent=5 // pred_fallthru
      _
    %p171 = scmp.le.s32.totalorder 1, %s10
    %p172 = scmp.lt.s32.totalorder %s10, 3
    %p173 = pnand %p171, %p172
    %p174 = pneg %p173
    // Predicated region
    $region33: #{alignment_forward.9} parent=5 // pred_check
      _
    $region34: #{alignment_forward.9} parent=5 // pred_check_branch
      %176 = sbr.rel (%p173) target = $region36
    $region35: #{alignment_forward.9} parent=5 // pred_region
      %s177 = ssub.s32 %s10, 1
      %p178 = scmp.lt.s32.totalorder %s15, 1
      %s179 = scalar_select %p178, %s15, 1
      %s180 = smul.addr %s179, 6
      %s181 = smul.addr %s180, 8
      %s182 = scalar_lea.vmem %s0, %s181
      %p183 = pneg %p36
      %p184 = pneg %p33
      %p185 = scmp.lt.s32.totalorder %s15, 1
      %s186 = scalar_select %p185, %s15, 1
      %s187 = smul.addr %s186, 6
      %s188 = smul.addr %s187, 8
      %s189 = scalar_lea.vmem %s1, %s188
      %p190 = pneg %p62
      %p191 = pneg %p59
      %p192 = pneg %p83
      %p193 = pneg %p80
      %p194 = pneg %p104
      %p195 = pneg %p101
      %p196 = pneg %p130
      %p197 = pneg %p127
      %p198 = scmp.lt.s32.totalorder %s15, 1
      %s199 = scalar_select %p198, %s15, 1
      %s200 = smul.addr %s199, 4
      %s201 = smul.addr %s200, 8
      %s202 = scalar_lea.vmem %s4, %s201
      %p203 = scmp.lt.s32.totalorder %s15, 1
      %s204 = scalar_select %p203, %s15, 1
      %s205 = smul.addr %s204, 6
      %s206 = smul.addr %s205, 8
      %s207 = scalar_lea.vmem %s0, %s206
      %p208 = scmp.lt.s32.totalorder %s15, 1
      %s209 = scalar_select %p208, %s15, 1
      %s210 = smul.addr %s209, 6
      %s211 = smul.addr %s210, 8
      %s212 = scalar_lea.vmem %s1, %s211
      %p213 = scmp.lt.s32.totalorder %s15, 1
      %s214 = scalar_select %p213, %s15, 1
      %s215 = smul.addr %s214, 4
      %s216 = smul.addr %s215, 8
      %s217 = scalar_lea.vmem %s4, %s216
      %v218 = vlaneseq
      %v219 = vand.u32 %v218, 127
      %v220 = vadd.s32 %v219, 128
      %vm221 = vcmp.lt.s32.totalorder %v219, 0
      %v222 = vsub.s32 0, %v219
      %v223 = vsel %vm221, %v222, %v219
      %v224 = vshrl.u32 %v223, 4
      %v225 = vand.u32 %v223, 15
      %v226 = vsub.s32 0, %v225
      %v227 = vsel %vm221, %v226, %v225
      %vm228 = vcmp.lt.s32.totalorder %v220, 0
      %v229 = vsub.s32 0, %v220
      %v230 = vsel %vm228, %v229, %v220
      %v231 = vshrl.u32 %v230, 4
      %v232 = vand.u32 %v230, 15
      %v233 = vsub.s32 0, %v232
      %v234 = vsel %vm228, %v233, %v232
      %vm235 = vcmp.ne.s32.totalorder %v227, 0
      %vm236 = vcmp.ne.s32.totalorder %v234, 0
      %vm237 = vcmp.lt.s32.totalorder %v227, 0
      %vm238 = vcmp.lt.s32.totalorder %v234, 0
      %vm239 = vmand %vm237, %vm235
      %vm240 = vmand %vm238, %vm236
      %v241 = vadd.s32 %v227, 16
      %v242 = vadd.s32 %v234, 16
      %v243 = vsel %vm239, %v241, %v227
      %v244 = vsel %vm240, %v242, %v234
      %vm245 = vcmp.ne.s32.totalorder %v243, 0
      %vm246 = vcmp.ne.s32.totalorder %v244, 0
      %vm247 = vcmp.ne.s32.totalorder %v243, 15
      %vm248 = vcmp.ne.s32.totalorder %v244, 15
      %v249 = vld [vmem:[%s207] sm:$0xff]
      %v250 = vld [vmem:[%s207 + $0x8] sm:$0xff]
      %v251 = vld [vmem:[%s207 + $0x18] sm:$0xff]
      %v252 = vld [vmem:[%s207 + $0x20] sm:$0xff]
      %v253 = vsel %vm245, 1, 0
      %v254 = vsel %vm246, 1, 0
      %vm255 = vcmp.eq.s32.totalorder %v253, 1
      %vm256 = vcmp.eq.s32.totalorder %v254, 1
      %v257 = vsel %vm255, %v249, 0.0
      %v258 = vsel %vm256, %v250, 0.0
      %v259 = vsel %vm255, %v251, 0.0
      %v260 = vsel %vm256, %v252, 0.0
      %261 = vst [vmem:[#allocation2] sm:$0xff] %v257
      %262 = vst [vmem:[#allocation2 + $0x8] sm:$0xff] %v258
      %263 = vst [vmem:[#allocation2 + $0x10] sm:$0xff] %v259
      %264 = vst [vmem:[#allocation2 + $0x18] sm:$0xff] %v260
      %v265 = vld [vmem:[%s207] sm:$0xff]
      %v266 = vld [vmem:[%s207 + $0x8] sm:$0xff]
      %v267 = vld [vmem:[%s207 + $0x10] sm:$0xff]
      %v268 = vld [vmem:[%s207 + $0x18] sm:$0xff]
      %v269 = vld [vmem:[%s207 + $0x20] sm:$0xff]
      %v270 = vld [vmem:[%s207 + $0x28] sm:$0xff]
      %277 = vrot.lane.b32.xlu0 %v265, 127
      %v278 = vpop.permute.xlu0 %277
      %279 = vrot.lane.b32.xlu0 %v266, 127
      %v280 = vpop.permute.xlu0 %279
      %281 = vrot.lane.b32.xlu0 %v267, 127
      %v282 = vpop.permute.xlu0 %281
      %283 = vrot.lane.b32.xlu0 %v268, 127
      %v284 = vpop.permute.xlu0 %283
      %285 = vrot.lane.b32.xlu0 %v269, 127
      %v286 = vpop.permute.xlu0 %285
      %287 = vrot.lane.b32.xlu0 %v270, 127
      %v288 = vpop.permute.xlu0 %287
      %vm289 = vcmask 1039360
      %v290 = vsel %vm289, %v278, %v280
      %v291 = vsel %vm289, %v280, %v282
      %v292 = vsel %vm289, %v284, %v286
      %v293 = vsel %vm289, %v286, %v288
      %298 = vst [vmem:[#allocation2 + $0x20] sm:$0xff] %v290
      %299 = vst [vmem:[#allocation2 + $0x28] sm:$0xff] %v291
      %300 = vst [vmem:[#allocation2 + $0x30] sm:$0xff] %v292
      %301 = vst [vmem:[#allocation2 + $0x38] sm:$0xff] %v293
      %v302 = vld [vmem:[%s207] sm:$0xff]
      %v303 = vld [vmem:[%s207 + $0x8] sm:$0xff]
      %v304 = vld [vmem:[%s207 + $0x10] sm:$0xff]
      %v305 = vld [vmem:[%s207 + $0x18] sm:$0xff]
      %v306 = vld [vmem:[%s207 + $0x20] sm:$0xff]
      %v307 = vld [vmem:[%s207 + $0x28] sm:$0xff]
      %v308 = vsel %vm247, 1, 0
      %v309 = vsel %vm248, 1, 0
      %vm310 = vcmp.eq.s32.totalorder %v308, 1
      %vm311 = vcmp.eq.s32.totalorder %v309, 1
      %318 = vrot.lane.b32.xlu0 %v302, 126
      %v319 = vpop.permute.xlu0 %318
      %320 = vrot.lane.b32.xlu0 %v303, 126
      %v321 = vpop.permute.xlu0 %320
      %322 = vrot.lane.b32.xlu0 %v304, 126
      %v323 = vpop.permute.xlu0 %322
      %324 = vrot.lane.b32.xlu0 %v305, 126
      %v325 = vpop.permute.xlu0 %324
      %326 = vrot.lane.b32.xlu0 %v306, 126
      %v327 = vpop.permute.xlu0 %326
      %328 = vrot.lane.b32.xlu0 %v307, 126
      %v329 = vpop.permute.xlu0 %328
      %vm330 = vcmask 1031168
      %v331 = vsel %vm330, %v319, %v321
      %v332 = vsel %vm330, %v321, %v323
      %v333 = vsel %vm330, %v325, %v327
      %v334 = vsel %vm330, %v327, %v329
      %v339 = vsel %vm310, %v331, 0.0
      %v340 = vsel %vm311, %v332, 0.0
      %v341 = vsel %vm310, %v333, 0.0
      %v342 = vsel %vm311, %v334, 0.0
      %343 = vst [vmem:[#allocation2 + $0x40] sm:$0xff] %v339
      %344 = vst [vmem:[#allocation2 + $0x48] sm:$0xff] %v340
      %345 = vst [vmem:[#allocation2 + $0x50] sm:$0xff] %v341
      %346 = vst [vmem:[#allocation2 + $0x58] sm:$0xff] %v342
      %v347 = vld [vmem:[%s207] sm:$0xff]
      %v348 = vld [vmem:[%s207 + $0x8] sm:$0xff]
      %v349 = vld [vmem:[%s207 + $0x10] sm:$0xff]
      %v350 = vld [vmem:[%s207 + $0x18] sm:$0xff]
      %v351 = vld [vmem:[%s207 + $0x20] sm:$0xff]
      %v352 = vld [vmem:[%s207 + $0x28] sm:$0xff]
      %359 = vrot.lane.b32.xlu0 %v347, 112
      %v360 = vpop.permute.xlu0 %359
      %361 = vrot.lane.b32.xlu0 %v348, 112
      %v362 = vpop.permute.xlu0 %361
      %363 = vrot.lane.b32.xlu0 %v349, 112
      %v364 = vpop.permute.xlu0 %363
      %365 = vrot.lane.b32.xlu0 %v350, 112
      %v366 = vpop.permute.xlu0 %365
      %367 = vrot.lane.b32.xlu0 %v351, 112
      %v368 = vpop.permute.xlu0 %367
      %369 = vrot.lane.b32.xlu0 %v352, 112
      %v370 = vpop.permute.xlu0 %369
      %vm371 = vcmask 916480
      %v372 = vsel %vm371, %v360, %v362
      %v373 = vsel %vm371, %v362, %v364
      %v374 = vsel %vm371, %v366, %v368
      %v375 = vsel %vm371, %v368, %v370
      %v380 = vsel %vm255, %v372, 0.0
      %v381 = vsel %vm256, %v373, 0.0
      %v382 = vsel %vm255, %v374, 0.0
      %v383 = vsel %vm256, %v375, 0.0
      %384 = vst [vmem:[#allocation2 + $0x60] sm:$0xff] %v380
      %385 = vst [vmem:[#allocation2 + $0x68] sm:$0xff] %v381
      %386 = vst [vmem:[#allocation2 + $0x70] sm:$0xff] %v382
      %387 = vst [vmem:[#allocation2 + $0x78] sm:$0xff] %v383
      %v388 = vld [vmem:[%s207] sm:$0xff]
      %v389 = vld [vmem:[%s207 + $0x8] sm:$0xff]
      %v390 = vld [vmem:[%s207 + $0x10] sm:$0xff]
      %v391 = vld [vmem:[%s207 + $0x18] sm:$0xff]
      %v392 = vld [vmem:[%s207 + $0x20] sm:$0xff]
      %v393 = vld [vmem:[%s207 + $0x28] sm:$0xff]
      %400 = vrot.lane.b32.xlu0 %v388, 111
      %v401 = vpop.permute.xlu0 %400
      %402 = vrot.lane.b32.xlu0 %v389, 111
      %v403 = vpop.permute.xlu0 %402
      %404 = vrot.lane.b32.xlu0 %v390, 111
      %v405 = vpop.permute.xlu0 %404
      %406 = vrot.lane.b32.xlu0 %v391, 111
      %v407 = vpop.permute.xlu0 %406
      %408 = vrot.lane.b32.xlu0 %v392, 111
      %v409 = vpop.permute.xlu0 %408
      %410 = vrot.lane.b32.xlu0 %v393, 111
      %v411 = vpop.permute.xlu0 %410
      %vm412 = vcmask 908288
      %v413 = vsel %vm412, %v401, %v403
      %v414 = vsel %vm412, %v403, %v405
      %v415 = vsel %vm412, %v407, %v409
      %v416 = vsel %vm412, %v409, %v411
      %421 = vst [vmem:[#allocation2 + $0x80] sm:$0xff] %v413
      %422 = vst [vmem:[#allocation2 + $0x88] sm:$0xff] %v414
      %423 = vst [vmem:[#allocation2 + $0x90] sm:$0xff] %v415
      %424 = vst [vmem:[#allocation2 + $0x98] sm:$0xff] %v416
      %v425 = vld [vmem:[%s207] sm:$0xff]
      %v426 = vld [vmem:[%s207 + $0x8] sm:$0xff]
      %v427 = vld [vmem:[%s207 + $0x10] sm:$0xff]
      %v428 = vld [vmem:[%s207 + $0x18] sm:$0xff]
      %v429 = vld [vmem:[%s207 + $0x20] sm:$0xff]
      %v430 = vld [vmem:[%s207 + $0x28] sm:$0xff]
      %437 = vrot.lane.b32.xlu0 %v425, 110
      %v438 = vpop.permute.xlu0 %437
      %439 = vrot.lane.b32.xlu0 %v426, 110
      %v440 = vpop.permute.xlu0 %439
      %441 = vrot.lane.b32.xlu0 %v427, 110
      %v442 = vpop.permute.xlu0 %441
      %443 = vrot.lane.b32.xlu0 %v428, 110
      %v444 = vpop.permute.xlu0 %443
      %445 = vrot.lane.b32.xlu0 %v429, 110
      %v446 = vpop.permute.xlu0 %445
      %447 = vrot.lane.b32.xlu0 %v430, 110
      %v448 = vpop.permute.xlu0 %447
      %vm449 = vcmask 900096
      %v450 = vsel %vm449, %v438, %v440
      %v451 = vsel %vm449, %v440, %v442
      %v452 = vsel %vm449, %v444, %v446
      %v453 = vsel %vm449, %v446, %v448
      %v458 = vsel %vm310, %v450, 0.0
      %v459 = vsel %vm311, %v451, 0.0
      %v460 = vsel %vm310, %v452, 0.0
      %v461 = vsel %vm311, %v453, 0.0
      %462 = vst [vmem:[#allocation2 + $0xa0] sm:$0xff] %v458
      %463 = vst [vmem:[#allocation2 + $0xa8] sm:$0xff] %v459
      %464 = vst [vmem:[#allocation2 + $0xb0] sm:$0xff] %v460
      %465 = vst [vmem:[#allocation2 + $0xb8] sm:$0xff] %v461
      %v466 = vld [vmem:[%s207] sm:$0xff]
      %v467 = vld [vmem:[%s207 + $0x8] sm:$0xff]
      %v468 = vld [vmem:[%s207 + $0x10] sm:$0xff]
      %v469 = vld [vmem:[%s207 + $0x18] sm:$0xff]
      %v470 = vld [vmem:[%s207 + $0x20] sm:$0xff]
      %v471 = vld [vmem:[%s207 + $0x28] sm:$0xff]
      %478 = vrot.lane.b32.xlu0 %v466, 96
      %v479 = vpop.permute.xlu0 %478
      %480 = vrot.lane.b32.xlu0 %v467, 96
      %v481 = vpop.permute.xlu0 %480
      %482 = vrot.lane.b32.xlu0 %v468, 96
      %v483 = vpop.permute.xlu0 %482
      %484 = vrot.lane.b32.xlu0 %v469, 96
      %v485 = vpop.permute.xlu0 %484
      %486 = vrot.lane.b32.xlu0 %v470, 96
      %v487 = vpop.permute.xlu0 %486
      %488 = vrot.lane.b32.xlu0 %v471, 96
      %v489 = vpop.permute.xlu0 %488
      %vm490 = vcmask 785408
      %v491 = vsel %vm490, %v479, %v481
      %v492 = vsel %vm490, %v481, %v483
      %v493 = vsel %vm490, %v485, %v487
      %v494 = vsel %vm490, %v487, %v489
      %v499 = vsel %vm255, %v491, 0.0
      %v500 = vsel %vm256, %v492, 0.0
      %v501 = vsel %vm255, %v493, 0.0
      %v502 = vsel %vm256, %v494, 0.0
      %503 = vst [vmem:[#allocation2 + $0xc0] sm:$0xff] %v499
      %504 = vst [vmem:[#allocation2 + $0xc8] sm:$0xff] %v500
      %505 = vst [vmem:[#allocation2 + $0xd0] sm:$0xff] %v501
      %506 = vst [vmem:[#allocation2 + $0xd8] sm:$0xff] %v502
      %v507 = vld [vmem:[%s207] sm:$0xff]
      %v508 = vld [vmem:[%s207 + $0x8] sm:$0xff]
      %v509 = vld [vmem:[%s207 + $0x10] sm:$0xff]
      %v510 = vld [vmem:[%s207 + $0x18] sm:$0xff]
      %v511 = vld [vmem:[%s207 + $0x20] sm:$0xff]
      %v512 = vld [vmem:[%s207 + $0x28] sm:$0xff]
      %519 = vrot.lane.b32.xlu0 %v507, 95
      %v520 = vpop.permute.xlu0 %519
      %521 = vrot.lane.b32.xlu0 %v508, 95
      %v522 = vpop.permute.xlu0 %521
      %523 = vrot.lane.b32.xlu0 %v509, 95
      %v524 = vpop.permute.xlu0 %523
      %525 = vrot.lane.b32.xlu0 %v510, 95
      %v526 = vpop.permute.xlu0 %525
      %527 = vrot.lane.b32.xlu0 %v511, 95
      %v528 = vpop.permute.xlu0 %527
      %529 = vrot.lane.b32.xlu0 %v512, 95
      %v530 = vpop.permute.xlu0 %529
      %vm531 = vcmask 777216
      %v532 = vsel %vm531, %v520, %v522
      %v533 = vsel %vm531, %v522, %v524
      %v534 = vsel %vm531, %v526, %v528
      %v535 = vsel %vm531, %v528, %v530
      %540 = vst [vmem:[#allocation2 + $0xe0] sm:$0xff] %v532
      %541 = vst [vmem:[#allocation2 + $0xe8] sm:$0xff] %v533
      %542 = vst [vmem:[#allocation2 + $0xf0] sm:$0xff] %v534
      %543 = vst [vmem:[#allocation2 + $0xf8] sm:$0xff] %v535
      %v544 = vld [vmem:[%s207] sm:$0xff]
      %v545 = vld [vmem:[%s207 + $0x8] sm:$0xff]
      %v546 = vld [vmem:[%s207 + $0x10] sm:$0xff]
      %v547 = vld [vmem:[%s207 + $0x18] sm:$0xff]
      %v548 = vld [vmem:[%s207 + $0x20] sm:$0xff]
      %v549 = vld [vmem:[%s207 + $0x28] sm:$0xff]
      %556 = vrot.lane.b32.xlu0 %v544, 94
      %v557 = vpop.permute.xlu0 %556
      %558 = vrot.lane.b32.xlu0 %v545, 94
      %v559 = vpop.permute.xlu0 %558
      %560 = vrot.lane.b32.xlu0 %v546, 94
      %v561 = vpop.permute.xlu0 %560
      %562 = vrot.lane.b32.xlu0 %v547, 94
      %v563 = vpop.permute.xlu0 %562
      %564 = vrot.lane.b32.xlu0 %v548, 94
      %v565 = vpop.permute.xlu0 %564
      %566 = vrot.lane.b32.xlu0 %v549, 94
      %v567 = vpop.permute.xlu0 %566
      %vm568 = vcmask 769024
      %v569 = vsel %vm568, %v557, %v559
      %v570 = vsel %vm568, %v559, %v561
      %v571 = vsel %vm568, %v563, %v565
      %v572 = vsel %vm568, %v565, %v567
      %v577 = vsel %vm310, %v569, 0.0
      %v578 = vsel %vm311, %v570, 0.0
      %v579 = vsel %vm310, %v571, 0.0
      %v580 = vsel %vm311, %v572, 0.0
      %581 = vst [vmem:[#allocation2 + $0x100] sm:$0xff] %v577
      %582 = vst [vmem:[#allocation2 + $0x108] sm:$0xff] %v578
      %583 = vst [vmem:[#allocation2 + $0x110] sm:$0xff] %v579
      %584 = vst [vmem:[#allocation2 + $0x118] sm:$0xff] %v580
      %v585 = vld [vmem:[%s212] sm:$0xff]
      %v586 = vld [vmem:[%s212 + $0x8] sm:$0xff]
      %v587 = vld [vmem:[%s212 + $0x18] sm:$0xff]
      %v588 = vld [vmem:[%s212 + $0x20] sm:$0xff]
      %v589 = vsel %vm255, %v585, 0.0
      %v590 = vsel %vm256, %v586, 0.0
      %v591 = vsel %vm255, %v587, 0.0
      %v592 = vsel %vm256, %v588, 0.0
      %593 = vst [vmem:[#allocation2 + $0x120] sm:$0xff] %v589
      %594 = vst [vmem:[#allocation2 + $0x128] sm:$0xff] %v590
      %595 = vst [vmem:[#allocation2 + $0x130] sm:$0xff] %v591
      %596 = vst [vmem:[#allocation2 + $0x138] sm:$0xff] %v592
      %v597 = vld [vmem:[%s212] sm:$0xff]
      %v598 = vld [vmem:[%s212 + $0x8] sm:$0xff]
      %v599 = vld [vmem:[%s212 + $0x10] sm:$0xff]
      %v600 = vld [vmem:[%s212 + $0x18] sm:$0xff]
      %v601 = vld [vmem:[%s212 + $0x20] sm:$0xff]
      %v602 = vld [vmem:[%s212 + $0x28] sm:$0xff]
      %609 = vrot.lane.b32.xlu0 %v597, 127
      %v610 = vpop.permute.xlu0 %609
      %611 = vrot.lane.b32.xlu0 %v598, 127
      %v612 = vpop.permute.xlu0 %611
      %613 = vrot.lane.b32.xlu0 %v599, 127
      %v614 = vpop.permute.xlu0 %613
      %615 = vrot.lane.b32.xlu0 %v600, 127
      %v616 = vpop.permute.xlu0 %615
      %617 = vrot.lane.b32.xlu0 %v601, 127
      %v618 = vpop.permute.xlu0 %617
      %619 = vrot.lane.b32.xlu0 %v602, 127
      %v620 = vpop.permute.xlu0 %619
      %v621 = vsel %vm289, %v610, %v612
      %v622 = vsel %vm289, %v612, %v614
      %v623 = vsel %vm289, %v616, %v618
      %v624 = vsel %vm289, %v618, %v620
      %629 = vst [vmem:[#allocation2 + $0x140] sm:$0xff] %v621
      %630 = vst [vmem:[#allocation2 + $0x148] sm:$0xff] %v622
      %631 = vst [vmem:[#allocation2 + $0x150] sm:$0xff] %v623
      %632 = vst [vmem:[#allocation2 + $0x158] sm:$0xff] %v624
      %v633 = vld [vmem:[%s212] sm:$0xff]
      %v634 = vld [vmem:[%s212 + $0x8] sm:$0xff]
      %v635 = vld [vmem:[%s212 + $0x10] sm:$0xff]
      %v636 = vld [vmem:[%s212 + $0x18] sm:$0xff]
      %v637 = vld [vmem:[%s212 + $0x20] sm:$0xff]
      %v638 = vld [vmem:[%s212 + $0x28] sm:$0xff]
      %645 = vrot.lane.b32.xlu0 %v633, 126
      %v646 = vpop.permute.xlu0 %645
      %647 = vrot.lane.b32.xlu0 %v634, 126
      %v648 = vpop.permute.xlu0 %647
      %649 = vrot.lane.b32.xlu0 %v635, 126
      %v650 = vpop.permute.xlu0 %649
      %651 = vrot.lane.b32.xlu0 %v636, 126
      %v652 = vpop.permute.xlu0 %651
      %653 = vrot.lane.b32.xlu0 %v637, 126
      %v654 = vpop.permute.xlu0 %653
      %655 = vrot.lane.b32.xlu0 %v638, 126
      %v656 = vpop.permute.xlu0 %655
      %v657 = vsel %vm330, %v646, %v648
      %v658 = vsel %vm330, %v648, %v650
      %v659 = vsel %vm330, %v652, %v654
      %v660 = vsel %vm330, %v654, %v656
      %v665 = vsel %vm310, %v657, 0.0
      %v666 = vsel %vm311, %v658, 0.0
      %v667 = vsel %vm310, %v659, 0.0
      %v668 = vsel %vm311, %v660, 0.0
      %669 = vst [vmem:[#allocation2 + $0x160] sm:$0xff] %v665
      %670 = vst [vmem:[#allocation2 + $0x168] sm:$0xff] %v666
      %671 = vst [vmem:[#allocation2 + $0x170] sm:$0xff] %v667
      %672 = vst [vmem:[#allocation2 + $0x178] sm:$0xff] %v668
      %v673 = vld [vmem:[%s212] sm:$0xff]
      %v674 = vld [vmem:[%s212 + $0x8] sm:$0xff]
      %v675 = vld [vmem:[%s212 + $0x10] sm:$0xff]
      %v676 = vld [vmem:[%s212 + $0x18] sm:$0xff]
      %v677 = vld [vmem:[%s212 + $0x20] sm:$0xff]
      %v678 = vld [vmem:[%s212 + $0x28] sm:$0xff]
      %685 = vrot.lane.b32.xlu0 %v673, 112
      %v686 = vpop.permute.xlu0 %685
      %687 = vrot.lane.b32.xlu0 %v674, 112
      %v688 = vpop.permute.xlu0 %687
      %689 = vrot.lane.b32.xlu0 %v675, 112
      %v690 = vpop.permute.xlu0 %689
      %691 = vrot.lane.b32.xlu0 %v676, 112
      %v692 = vpop.permute.xlu0 %691
      %693 = vrot.lane.b32.xlu0 %v677, 112
      %v694 = vpop.permute.xlu0 %693
      %695 = vrot.lane.b32.xlu0 %v678, 112
      %v696 = vpop.permute.xlu0 %695
      %v697 = vsel %vm371, %v686, %v688
      %v698 = vsel %vm371, %v688, %v690
      %v699 = vsel %vm371, %v692, %v694
      %v700 = vsel %vm371, %v694, %v696
      %v705 = vsel %vm255, %v697, 0.0
      %v706 = vsel %vm256, %v698, 0.0
      %v707 = vsel %vm255, %v699, 0.0
      %v708 = vsel %vm256, %v700, 0.0
      %709 = vst [vmem:[#allocation2 + $0x180] sm:$0xff] %v705
      %710 = vst [vmem:[#allocation2 + $0x188] sm:$0xff] %v706
      %711 = vst [vmem:[#allocation2 + $0x190] sm:$0xff] %v707
      %712 = vst [vmem:[#allocation2 + $0x198] sm:$0xff] %v708
      %v713 = vld [vmem:[%s212] sm:$0xff]
      %v714 = vld [vmem:[%s212 + $0x8] sm:$0xff]
      %v715 = vld [vmem:[%s212 + $0x10] sm:$0xff]
      %v716 = vld [vmem:[%s212 + $0x18] sm:$0xff]
      %v717 = vld [vmem:[%s212 + $0x20] sm:$0xff]
      %v718 = vld [vmem:[%s212 + $0x28] sm:$0xff]
      %725 = vrot.lane.b32.xlu0 %v713, 111
      %v726 = vpop.permute.xlu0 %725
      %727 = vrot.lane.b32.xlu0 %v714, 111
      %v728 = vpop.permute.xlu0 %727
      %729 = vrot.lane.b32.xlu0 %v715, 111
      %v730 = vpop.permute.xlu0 %729
      %731 = vrot.lane.b32.xlu0 %v716, 111
      %v732 = vpop.permute.xlu0 %731
      %733 = vrot.lane.b32.xlu0 %v717, 111
      %v734 = vpop.permute.xlu0 %733
      %735 = vrot.lane.b32.xlu0 %v718, 111
      %v736 = vpop.permute.xlu0 %735
      %v737 = vsel %vm412, %v726, %v728
      %v738 = vsel %vm412, %v728, %v730
      %v739 = vsel %vm412, %v732, %v734
      %v740 = vsel %vm412, %v734, %v736
      %745 = vst [vmem:[#allocation2 + $0x1a0] sm:$0xff] %v737
      %746 = vst [vmem:[#allocation2 + $0x1a8] sm:$0xff] %v738
      %747 = vst [vmem:[#allocation2 + $0x1b0] sm:$0xff] %v739
      %748 = vst [vmem:[#allocation2 + $0x1b8] sm:$0xff] %v740
      %v749 = vld [vmem:[%s212] sm:$0xff]
      %v750 = vld [vmem:[%s212 + $0x8] sm:$0xff]
      %v751 = vld [vmem:[%s212 + $0x10] sm:$0xff]
      %v752 = vld [vmem:[%s212 + $0x18] sm:$0xff]
      %v753 = vld [vmem:[%s212 + $0x20] sm:$0xff]
      %v754 = vld [vmem:[%s212 + $0x28] sm:$0xff]
      %761 = vrot.lane.b32.xlu0 %v749, 110
      %v762 = vpop.permute.xlu0 %761
      %763 = vrot.lane.b32.xlu0 %v750, 110
      %v764 = vpop.permute.xlu0 %763
      %765 = vrot.lane.b32.xlu0 %v751, 110
      %v766 = vpop.permute.xlu0 %765
      %767 = vrot.lane.b32.xlu0 %v752, 110
      %v768 = vpop.permute.xlu0 %767
      %769 = vrot.lane.b32.xlu0 %v753, 110
      %v770 = vpop.permute.xlu0 %769
      %771 = vrot.lane.b32.xlu0 %v754, 110
      %v772 = vpop.permute.xlu0 %771
      %v773 = vsel %vm449, %v762, %v764
      %v774 = vsel %vm449, %v764, %v766
      %v775 = vsel %vm449, %v768, %v770
      %v776 = vsel %vm449, %v770, %v772
      %v781 = vsel %vm310, %v773, 0.0
      %v782 = vsel %vm311, %v774, 0.0
      %v783 = vsel %vm310, %v775, 0.0
      %v784 = vsel %vm311, %v776, 0.0
      %785 = vst [vmem:[#allocation2 + $0x1c0] sm:$0xff] %v781
      %786 = vst [vmem:[#allocation2 + $0x1c8] sm:$0xff] %v782
      %787 = vst [vmem:[#allocation2 + $0x1d0] sm:$0xff] %v783
      %788 = vst [vmem:[#allocation2 + $0x1d8] sm:$0xff] %v784
      %v789 = vld [vmem:[%s212] sm:$0xff]
      %v790 = vld [vmem:[%s212 + $0x8] sm:$0xff]
      %v791 = vld [vmem:[%s212 + $0x10] sm:$0xff]
      %v792 = vld [vmem:[%s212 + $0x18] sm:$0xff]
      %v793 = vld [vmem:[%s212 + $0x20] sm:$0xff]
      %v794 = vld [vmem:[%s212 + $0x28] sm:$0xff]
      %801 = vrot.lane.b32.xlu0 %v789, 96
      %v802 = vpop.permute.xlu0 %801
      %803 = vrot.lane.b32.xlu0 %v790, 96
      %v804 = vpop.permute.xlu0 %803
      %805 = vrot.lane.b32.xlu0 %v791, 96
      %v806 = vpop.permute.xlu0 %805
      %807 = vrot.lane.b32.xlu0 %v792, 96
      %v808 = vpop.permute.xlu0 %807
      %809 = vrot.lane.b32.xlu0 %v793, 96
      %v810 = vpop.permute.xlu0 %809
      %811 = vrot.lane.b32.xlu0 %v794, 96
      %v812 = vpop.permute.xlu0 %811
      %v813 = vsel %vm490, %v802, %v804
      %v814 = vsel %vm490, %v804, %v806
      %v815 = vsel %vm490, %v808, %v810
      %v816 = vsel %vm490, %v810, %v812
      %v821 = vsel %vm255, %v813, 0.0
      %v822 = vsel %vm256, %v814, 0.0
      %v823 = vsel %vm255, %v815, 0.0
      %v824 = vsel %vm256, %v816, 0.0
      %825 = vst [vmem:[#allocation2 + $0x1e0] sm:$0xff] %v821
      %826 = vst [vmem:[#allocation2 + $0x1e8] sm:$0xff] %v822
      %827 = vst [vmem:[#allocation2 + $0x1f0] sm:$0xff] %v823
      %828 = vst [vmem:[#allocation2 + $0x1f8] sm:$0xff] %v824
      %v829 = vld [vmem:[%s212] sm:$0xff]
      %v830 = vld [vmem:[%s212 + $0x8] sm:$0xff]
      %v831 = vld [vmem:[%s212 + $0x10] sm:$0xff]
      %v832 = vld [vmem:[%s212 + $0x18] sm:$0xff]
      %v833 = vld [vmem:[%s212 + $0x20] sm:$0xff]
      %v834 = vld [vmem:[%s212 + $0x28] sm:$0xff]
      %841 = vrot.lane.b32.xlu0 %v829, 95
      %v842 = vpop.permute.xlu0 %841
      %843 = vrot.lane.b32.xlu0 %v830, 95
      %v844 = vpop.permute.xlu0 %843
      %845 = vrot.lane.b32.xlu0 %v831, 95
      %v846 = vpop.permute.xlu0 %845
      %847 = vrot.lane.b32.xlu0 %v832, 95
      %v848 = vpop.permute.xlu0 %847
      %849 = vrot.lane.b32.xlu0 %v833, 95
      %v850 = vpop.permute.xlu0 %849
      %851 = vrot.lane.b32.xlu0 %v834, 95
      %v852 = vpop.permute.xlu0 %851
      %v853 = vsel %vm531, %v842, %v844
      %v854 = vsel %vm531, %v844, %v846
      %v855 = vsel %vm531, %v848, %v850
      %v856 = vsel %vm531, %v850, %v852
      %861 = vst [vmem:[#allocation2 + $0x200] sm:$0xff] %v853
      %862 = vst [vmem:[#allocation2 + $0x208] sm:$0xff] %v854
      %863 = vst [vmem:[#allocation2 + $0x210] sm:$0xff] %v855
      %864 = vst [vmem:[#allocation2 + $0x218] sm:$0xff] %v856
      %v865 = vld [vmem:[%s212] sm:$0xff]
      %v866 = vld [vmem:[%s212 + $0x8] sm:$0xff]
      %v867 = vld [vmem:[%s212 + $0x10] sm:$0xff]
      %v868 = vld [vmem:[%s212 + $0x18] sm:$0xff]
      %v869 = vld [vmem:[%s212 + $0x20] sm:$0xff]
      %v870 = vld [vmem:[%s212 + $0x28] sm:$0xff]
      %877 = vrot.lane.b32.xlu0 %v865, 94
      %v878 = vpop.permute.xlu0 %877
      %879 = vrot.lane.b32.xlu0 %v866, 94
      %v880 = vpop.permute.xlu0 %879
      %881 = vrot.lane.b32.xlu0 %v867, 94
      %v882 = vpop.permute.xlu0 %881
      %883 = vrot.lane.b32.xlu0 %v868, 94
      %v884 = vpop.permute.xlu0 %883
      %885 = vrot.lane.b32.xlu0 %v869, 94
      %v886 = vpop.permute.xlu0 %885
      %887 = vrot.lane.b32.xlu0 %v870, 94
      %v888 = vpop.permute.xlu0 %887
      %v889 = vsel %vm568, %v878, %v880
      %v890 = vsel %vm568, %v880, %v882
      %v891 = vsel %vm568, %v884, %v886
      %v892 = vsel %vm568, %v886, %v888
      %v897 = vsel %vm310, %v889, 0.0
      %v898 = vsel %vm311, %v890, 0.0
      %v899 = vsel %vm310, %v891, 0.0
      %v900 = vsel %vm311, %v892, 0.0
      %901 = vst [vmem:[#allocation2 + $0x220] sm:$0xff] %v897
      %902 = vst [vmem:[#allocation2 + $0x228] sm:$0xff] %v898
      %903 = vst [vmem:[#allocation2 + $0x230] sm:$0xff] %v899
      %904 = vst [vmem:[#allocation2 + $0x238] sm:$0xff] %v900
      %v905 = vld [vmem:[%s2] sm:$0xff]
      %v906 = vld [vmem:[%s2 + $0x8] sm:$0xff]
      %v907 = vld [vmem:[%s2 + $0x10] sm:$0xff]
      %v908 = vld [vmem:[%s2 + $0x18] sm:$0xff]
      %v909 = vld [vmem:[%s2 + $0x20] sm:$0xff]
      %v910 = vld [vmem:[%s2 + $0x28] sm:$0xff]
      %v911 = vld [vmem:[#allocation2] sm:$0xff]
      %v912 = vld [vmem:[#allocation2 + $0x8] sm:$0xff]
      %v913 = vld [vmem:[#allocation2 + $0x10] sm:$0xff]
      %v914 = vld [vmem:[#allocation2 + $0x18] sm:$0xff]
      %v915 = vld [vmem:[#allocation2 + $0x20] sm:$0xff]
      %v916 = vld [vmem:[#allocation2 + $0x28] sm:$0xff]
      %v917 = vld [vmem:[#allocation2 + $0x30] sm:$0xff]
      %v918 = vld [vmem:[#allocation2 + $0x38] sm:$0xff]
      %v919 = vld [vmem:[#allocation2 + $0x40] sm:$0xff]
      %v920 = vld [vmem:[#allocation2 + $0x48] sm:$0xff]
      %v921 = vld [vmem:[#allocation2 + $0x50] sm:$0xff]
      %v922 = vld [vmem:[#allocation2 + $0x58] sm:$0xff]
      %v923 = vld [vmem:[#allocation2 + $0x60] sm:$0xff]
      %v924 = vld [vmem:[#allocation2 + $0x68] sm:$0xff]
      %v925 = vld [vmem:[#allocation2 + $0x70] sm:$0xff]
      %v926 = vld [vmem:[#allocation2 + $0x78] sm:$0xff]
      %v927 = vld [vmem:[#allocation2 + $0x80] sm:$0xff]
      %v928 = vld [vmem:[#allocation2 + $0x88] sm:$0xff]
      %v929 = vld [vmem:[#allocation2 + $0x90] sm:$0xff]
      %v930 = vld [vmem:[#allocation2 + $0x98] sm:$0xff]
      %v931 = vld [vmem:[#allocation2 + $0xa0] sm:$0xff]
      %v932 = vld [vmem:[#allocation2 + $0xa8] sm:$0xff]
      %v933 = vld [vmem:[#allocation2 + $0xb0] sm:$0xff]
      %v934 = vld [vmem:[#allocation2 + $0xb8] sm:$0xff]
      %v935 = vld [vmem:[#allocation2 + $0xc0] sm:$0xff]
      %v936 = vld [vmem:[#allocation2 + $0xc8] sm:$0xff]
      %v937 = vld [vmem:[#allocation2 + $0xd0] sm:$0xff]
      %v938 = vld [vmem:[#allocation2 + $0xd8] sm:$0xff]
      %v939 = vld [vmem:[#allocation2 + $0xe0] sm:$0xff]
      %v940 = vld [vmem:[#allocation2 + $0xe8] sm:$0xff]
      %v941 = vld [vmem:[#allocation2 + $0xf0] sm:$0xff]
      %v942 = vld [vmem:[#allocation2 + $0xf8] sm:$0xff]
      %v943 = vld [vmem:[#allocation2 + $0x100] sm:$0xff]
      %v944 = vld [vmem:[#allocation2 + $0x108] sm:$0xff]
      %v945 = vld [vmem:[#allocation2 + $0x110] sm:$0xff]
      %v946 = vld [vmem:[#allocation2 + $0x118] sm:$0xff]
      %v947 = vld [vmem:[#allocation2 + $0x120] sm:$0xff]
      %v948 = vld [vmem:[#allocation2 + $0x128] sm:$0xff]
      %v949 = vld [vmem:[#allocation2 + $0x130] sm:$0xff]
      %v950 = vld [vmem:[#allocation2 + $0x138] sm:$0xff]
      %v951 = vld [vmem:[#allocation2 + $0x140] sm:$0xff]
      %v952 = vld [vmem:[#allocation2 + $0x148] sm:$0xff]
      %v953 = vld [vmem:[#allocation2 + $0x150] sm:$0xff]
      %v954 = vld [vmem:[#allocation2 + $0x158] sm:$0xff]
      %v955 = vld [vmem:[#allocation2 + $0x160] sm:$0xff]
      %v956 = vld [vmem:[#allocation2 + $0x168] sm:$0xff]
      %v957 = vld [vmem:[#allocation2 + $0x170] sm:$0xff]
      %v958 = vld [vmem:[#allocation2 + $0x178] sm:$0xff]
      %v959 = vld [vmem:[#allocation2 + $0x180] sm:$0xff]
      %v960 = vld [vmem:[#allocation2 + $0x188] sm:$0xff]
      %v961 = vld [vmem:[#allocation2 + $0x190] sm:$0xff]
      %v962 = vld [vmem:[#allocation2 + $0x198] sm:$0xff]
      %v963 = vld [vmem:[#allocation2 + $0x1a0] sm:$0xff]
      %v964 = vld [vmem:[#allocation2 + $0x1a8] sm:$0xff]
      %v965 = vld [vmem:[#allocation2 + $0x1b0] sm:$0xff]
      %v966 = vld [vmem:[#allocation2 + $0x1b8] sm:$0xff]
      %v967 = vld [vmem:[#allocation2 + $0x1c0] sm:$0xff]
      %v968 = vld [vmem:[#allocation2 + $0x1c8] sm:$0xff]
      %v969 = vld [vmem:[#allocation2 + $0x1d0] sm:$0xff]
      %v970 = vld [vmem:[#allocation2 + $0x1d8] sm:$0xff]
      %v971 = vld [vmem:[#allocation2 + $0x1e0] sm:$0xff]
      %v972 = vld [vmem:[#allocation2 + $0x1e8] sm:$0xff]
      %v973 = vld [vmem:[#allocation2 + $0x1f0] sm:$0xff]
      %v974 = vld [vmem:[#allocation2 + $0x1f8] sm:$0xff]
      %v975 = vld [vmem:[#allocation2 + $0x200] sm:$0xff]
      %v976 = vld [vmem:[#allocation2 + $0x208] sm:$0xff]
      %v977 = vld [vmem:[#allocation2 + $0x210] sm:$0xff]
      %v978 = vld [vmem:[#allocation2 + $0x218] sm:$0xff]
      %v979 = vld [vmem:[#allocation2 + $0x220] sm:$0xff]
      %v980 = vld [vmem:[#allocation2 + $0x228] sm:$0xff]
      %v981 = vld [vmem:[#allocation2 + $0x230] sm:$0xff]
      %v982 = vld [vmem:[#allocation2 + $0x238] sm:$0xff]
      %v983 = vld [vmem:[%s3] sm:$0xff]
      %v984 = vld [vmem:[%s3 + $0x8] sm:$0xff]
      %986 = vset.pattern.permute.xlu0 0
      %987 = vperm.xlu0 %986, %v983
      %v988 = vpop.permute.xlu0 %987
      %991 = vset.pattern.permute.xlu0 0
      %992 = vperm.xlu0 %991, %v984
      %v993 = vpop.permute.xlu0 %992
      %vm995 = vcmask 261120
      %v997 = vsel %vm995, %v907, 0
      %v1000 = vsel %vm995, %v910, 0
      %1002 = vmatprep.subr.mxu0 %v912
      %1003 = vmatpush1.msra.mxu0 %v911
      %1004 = vmatprep.subr.mxu0 %v914
      %1005 = vmatpush1.msra.mxu0 %v913
      %1006 = vmatprep.subr.mxu0 %v916
      %1007 = vmatpush1.msra.mxu0 %v915
      %1008 = vmatprep.subr.mxu0 %v918
      %1009 = vmatpush1.msra.mxu0 %v917
      %1010 = vmatprep.subr.mxu0 %v920
      %1011 = vmatpush1.msra.mxu0 %v919
      %1012 = vmatprep.subr.mxu0 %v922
      %1013 = vmatpush1.msra.mxu0 %v921
      %1014 = vmatprep.subr.mxu0 %v924
      %1015 = vmatpush1.msra.mxu0 %v923
      %1016 = vmatprep.subr.mxu0 %v926
      %1017 = vmatpush1.msra.mxu0 %v925
      %1018 = vmatprep.subr.mxu0 %v928
      %1019 = vmatpush1.msra.mxu0 %v927
      %1020 = vmatprep.subr.mxu0 %v930
      %1021 = vmatpush1.msra.mxu0 %v929
      %1022 = vmatprep.subr.mxu0 %v932
      %1023 = vmatpush1.msra.mxu0 %v931
      %1024 = vmatprep.subr.mxu0 %v934
      %1025 = vmatpush1.msra.mxu0 %v933
      %1026 = vmatprep.subr.mxu0 %v936
      %1027 = vmatpush1.msra.mxu0 %v935
      %1028 = vmatprep.subr.mxu0 %v938
      %1029 = vmatpush1.msra.mxu0 %v937
      %1030 = vmatprep.subr.mxu0 %v940
      %1031 = vmatpush1.msra.mxu0 %v939
      %1032 = vmatprep.subr.mxu0 %v942
      %1033 = vmatpush1.msra.mxu0 %v941
      %1034 = vmatprep.subr.mxu0 %v944
      %1035 = vmatpush1.msra.mxu0 %v943
      %1036 = vmatprep.subr.mxu0 %v946
      %1037 = vmatpush1.msra.mxu0 %v945
      %1038 = vmatprep.subr.mxu0 %v948
      %1039 = vmatpush1.msra.mxu0 %v947
      %1040 = vmatprep.subr.mxu0 %v950
      %1041 = vmatpush1.msra.mxu0 %v949
      %1042 = vmatprep.subr.mxu0 %v952
      %1043 = vmatpush1.msra.mxu0 %v951
      %1044 = vmatprep.subr.mxu0 %v954
      %1045 = vmatpush1.msra.mxu0 %v953
      %1046 = vmatprep.subr.mxu0 %v956
      %1047 = vmatpush1.msra.mxu0 %v955
      %1048 = vmatprep.subr.mxu0 %v958
      %1049 = vmatpush1.msra.mxu0 %v957
      %1050 = vmatprep.subr.mxu0 %v960
      %1051 = vmatpush1.msra.mxu0 %v959
      %1052 = vmatprep.subr.mxu0 %v962
      %1053 = vmatpush1.msra.mxu0 %v961
      %1054 = vmatprep.subr.mxu0 %v964
      %1055 = vmatpush1.msra.mxu0 %v963
      %1056 = vmatprep.subr.mxu0 %v966
      %1057 = vmatpush1.msra.mxu0 %v965
      %1058 = vmatprep.subr.mxu0 %v968
      %1059 = vmatpush1.msra.mxu0 %v967
      %1060 = vmatprep.subr.mxu0 %v970
      %1061 = vmatpush1.msra.mxu0 %v969
      %1062 = vmatprep.subr.mxu0 %v972
      %1063 = vmatpush1.msra.mxu0 %v971
      %1064 = vmatprep.subr.mxu0 %v974
      %1065 = vmatpush1.msra.mxu0 %v973
      %1066 = vmatprep.mubr.f32.mxu0 %v906
      %1067 = vmatmul.mubr.f32.gmra.mrb[0].mxu0 %v905
      %v1068 = vpop.f32.mrb[0].mxu0
      %v1069 = vadd.f32 %v988, %v1068
      %v1070 = vpop.f32.mrb[0].mxu0
      %v1071 = vadd.f32 %v988, %v1070
      %1072 = vmatprep.mubr.f32.mxu0 %v909
      %1073 = vmatmul.mubr.f32.gmra.mrb[0].mxu0 %v908
      %v1074 = vpop.f32.mrb[0].mxu0
      %v1075 = vadd.f32 %v993, %v1074
      %v1076 = vpop.f32.mrb[0].mxu0
      %v1077 = vadd.f32 %v993, %v1076
      %1078 = vdwg.mxu0
      %1079 = vmatprep.subr.mxu0 %v976
      %1080 = vmatpush1.msra.mxu0 %v975
      %1081 = vmatprep.subr.mxu0 %v978
      %1082 = vmatpush1.msra.mxu0 %v977
      %1083 = vmatprep.subr.mxu0 %v980
      %1084 = vmatpush1.msra.mxu0 %v979
      %1085 = vmatprep.subr.mxu0 %v982
      %1086 = vmatpush1.msra.mxu0 %v981
      %1087 = vmatprep.subr.mxu0 0.0
      %1088 = vmatpush1.msra.mxu0 0.0
      %1089 = vmatprep.subr.mxu0 0.0
      %1090 = vmatpush1.msra.mxu0 0.0
      %1091 = vmatprep.subr.mxu0 0.0
      %1092 = vmatpush1.msra.mxu0 0.0
      %1093 = vmatprep.subr.mxu0 0.0
      %1094 = vmatpush1.msra.mxu0 0.0
      %1095 = vmatprep.subr.mxu0 0.0
      %1096 = vmatpush1.msra.mxu0 0.0
      %1097 = vmatprep.subr.mxu0 0.0
      %1098 = vmatpush1.msra.mxu0 0.0
      %1099 = vmatprep.subr.mxu0 0.0
      %1100 = vmatpush1.msra.mxu0 0.0
      %1101 = vmatprep.subr.mxu0 0.0
      %1102 = vmatpush1.msra.mxu0 0.0
      %1103 = vmatprep.subr.mxu0 0.0
      %1104 = vmatpush1.msra.mxu0 0.0
      %1105 = vmatprep.subr.mxu0 0.0
      %1106 = vmatpush1.msra.mxu0 0.0
      %1107 = vmatprep.subr.mxu0 0.0
      %1108 = vmatpush1.msra.mxu0 0.0
      %1109 = vmatprep.subr.mxu0 0.0
      %1110 = vmatpush1.msra.mxu0 0.0
      %1111 = vmatprep.subr.mxu0 0.0
      %1112 = vmatpush1.msra.mxu0 0.0
      %1113 = vmatprep.subr.mxu0 0.0
      %1114 = vmatpush1.msra.mxu0 0.0
      %1115 = vmatprep.subr.mxu0 0.0
      %1116 = vmatpush1.msra.mxu0 0.0
      %1117 = vmatprep.subr.mxu0 0.0
      %1118 = vmatpush1.msra.mxu0 0.0
      %1119 = vmatprep.subr.mxu0 0.0
      %1120 = vmatpush1.msra.mxu0 0.0
      %1121 = vmatprep.subr.mxu0 0.0
      %1122 = vmatpush1.msra.mxu0 0.0
      %1123 = vmatprep.subr.mxu0 0.0
      %1124 = vmatpush1.msra.mxu0 0.0
      %1125 = vmatprep.subr.mxu0 0.0
      %1126 = vmatpush1.msra.mxu0 0.0
      %1127 = vmatprep.subr.mxu0 0.0
      %1128 = vmatpush1.msra.mxu0 0.0
      %1129 = vmatprep.subr.mxu0 0.0
      %1130 = vmatpush1.msra.mxu0 0.0
      %1131 = vmatprep.subr.mxu0 0.0
      %1132 = vmatpush1.msra.mxu0 0.0
      %1133 = vmatprep.subr.mxu0 0.0
      %1134 = vmatpush1.msra.mxu0 0.0
      %1135 = vmatprep.subr.mxu0 0.0
      %1136 = vmatpush1.msra.mxu0 0.0
      %1137 = vmatprep.subr.mxu0 0.0
      %1138 = vmatpush1.msra.mxu0 0.0
      %1139 = vmatprep.subr.mxu0 0.0
      %1140 = vmatpush1.msra.mxu0 0.0
      %1141 = vmatprep.subr.mxu0 0.0
      %1142 = vmatpush1.msra.mxu0 0.0
      %1143 = vmatprep.mubr.f32.mxu0 0.0
      %1144 = vmatmul.mubr.f32.gmra.mrb[0].mxu0 %v997
      %v1145 = vpop.f32.mrb[0].mxu0
      %v1146 = vadd.f32 %v1069, %v1145
      %v1147 = vpop.f32.mrb[0].mxu0
      %v1148 = vadd.f32 %v1071, %v1147
      %1149 = vmatprep.mubr.f32.mxu0 0.0
      %1150 = vmatmul.mubr.f32.gmra.mrb[0].mxu0 %v1000
      %v1151 = vpop.f32.mrb[0].mxu0
      %v1152 = vadd.f32 %v1075, %v1151
      %v1153 = vpop.f32.mrb[0].mxu0
      %v1154 = vadd.f32 %v1077, %v1153
      %1155 = vdwg.mxu0
      %vm1156 = vcmp.ge.f32.partialorder %v1146, 0.0
      %vm1157 = vcmp.ge.f32.partialorder %v1148, 0.0
      %vm1158 = vcmp.ge.f32.partialorder %v1152, 0.0
      %vm1159 = vcmp.ge.f32.partialorder %v1154, 0.0
      %v1160 = vmul.f32 %v1146, 0.1
      %v1161 = vmul.f32 %v1148, 0.1
      %v1162 = vmul.f32 %v1152, 0.1
      %v1163 = vmul.f32 %v1154, 0.1
      %v1164 = vsel %vm1156, %v1146, %v1160
      %v1165 = vsel %vm1157, %v1148, %v1161
      %v1166 = vsel %vm1158, %v1152, %v1162
      %v1167 = vsel %vm1159, %v1154, %v1163
      %1168 = vst [vmem:[%s217] sm:$0xff] %v1164
      %1169 = vst [vmem:[%s217 + $0x8] sm:$0xff] %v1165
      %1170 = vst [vmem:[%s217 + $0x10] sm:$0xff] %v1166
      %1171 = vst [vmem:[%s217 + $0x18] sm:$0xff] %v1167
      %p1172 = scmp.lt.s32.totalorder %s15, 1
      %s1173 = scalar_select %p1172, %s15, 1
      %s1174 = smul.addr %s1173, 4
      %s1175 = smul.addr %s1174, 8
      %s1176 = scalar_lea.vmem %s4, %s1175
      // Predicated region
      $region37: #{alignment_forward.9} parent=35 // pred_check
        %p1177 = pneg %p127
      $region38: #{alignment_forward.9} parent=35 // pred_check_branch
        %1179 = sbr.rel (%p1177) target = $region40
      $region39: #{alignment_forward.9} parent=35 // pred_region
        _
      $region40: #{alignment_forward.9} parent=35 // pred_fallthru
        _
    $region36: #{alignment_forward.9} parent=5 // pred_fallthru
      _
    %p1180 = scmp.le.s32.totalorder 2, %s10
    // Predicated region
    $region41: #{alignment_forward.9} parent=5 // pred_check
      %p1181 = pneg %p1180
    $region42: #{alignment_forward.9} parent=5 // pred_check_branch
      %1183 = sbr.rel (%p1181) target = $region44
    $region43: #{alignment_forward.9} parent=5 // pred_region
      %s1184 = ssub.s32 %s10, 2
      // Predicated region
      $region45: #{alignment_forward.9} parent=43 // pred_check
        %p1185 = pneg %p133
      $region46: #{alignment_forward.9} parent=43 // pred_check_branch
        %1187 = sbr.rel (%p1185) target = $region48
      $region47: #{alignment_forward.9} parent=43 // pred_region
        %p1188 = scmp.lt.s32.totalorder %s16, 1
        %s1189 = scalar_select %p1188, %s16, 1
        %s1190 = smul.addr %s1189, 4
        %s1191 = smul.addr %s1190, 8
        %s1192 = scalar_lea.vmem %s4, %s1191
      $region48: #{alignment_forward.9} parent=43 // pred_fallthru
        _
    $region44: #{alignment_forward.9} parent=5 // pred_fallthru
      _
  $region6: #{alignment_forward.9} parent=0 // loop_footer
    %s14 = sadd.s32 1, %s10
  $region7: #{alignment_forward.9} parent=0 // loop_footer_branch
    %9 = sbr.rel target = $region3
  $region8: #{alignment_forward.9} parent=0 // loop_exit
    _

// kernel: alignment_forward.10
$region0: #{alignment_forward.10}
  #allocation0 [shape = 'u32[]', space=smem, size = 0x4, offset = 0x4, fixed_abs, tag = 'smem constant byte address 0x4 - core index']
  #allocation1 [shape = 'u32[144,128]{1,0:T(1,128)}', space=vmem, size = 0x12000, scoped, tag = 'internal scratch']
  #allocation2 [shape = 'f32[144,72]{1,0:T(8,128)}', space=vmem, size = 0x12000, scoped, tag = 'scratch operand']
  %s0 = inlined_call_operand.vmem [shape: f32[2,16,324], index: 0, kind: input, shape index: {}]
  %s1 = inlined_call_operand.vmem [shape: f32[16,144], index: 1, kind: input, shape index: {}]
  %s2 = inlined_call_operand.vmem [shape: f32[16,1], index: 2, kind: input, shape index: {}]
  %s3 = inlined_call_operand.vmem [shape: f32[2,16,72], index: 3, kind: output, shape index: {}]
  %s4 = sld [smem:[#allocation0]]
  $region45: #{alignment_forward.10} parent=0
    _
  %s6 = ssub.s32 1, %s4
  %s7 = scalar_select 0, %s6, %s4
  loop: start=0, step=1, limit=4
  $region2: #{alignment_forward.10} parent=0 // loop_pre_header
    _
  $region3: #{alignment_forward.10} parent=0 // loop_header
    %s9 = sphi 0, %s13
    %p10 = scmp.ge.s32.totalorder %s9, 4
    %s19 = sphi 0, %s21
    %s22 = sphi 0, %s19
    %s23 = sphi 0, %s22
    %s39 = sphi 0, %s23
    %s43 = sphi 0, %s43
    %s45 = sphi 0, %s43
    %s46 = sphi 0, %s45
    %s60 = sphi 0, %s46
    %s64 = sphi 0, %s64
    %s66 = sphi 0, %s64
    %s67 = sphi 0, %s66
    %s81 = sphi 0, %s67
    %s87 = sphi 0, %s89
    %s90 = sphi 0, %s87
    %s91 = sphi 0, %s90
    %s107 = sphi 0, %s91
  $region4: #{alignment_forward.10} parent=0 // loop_header_branch
    %12 = sbr.rel (%p10) target = $region8
  $region5: #{alignment_forward.10} parent=0 // loop_body
    %s14 = ssub.s32 %s9, 1
    %s15 = ssub.s32 %s9, 2
    %s16 = sadd.s32 %s9, 1
    %s17 = ssub.s32 %s9, %s16
    %p18 = scmp.eq.s32.totalorder %s17, 0
    %s20 = sadd.s32 %s19, 1
    %s21 = scalar_select %p18, %s19, %s20
    %p24 = pneg %p18
    %p25 = scmp.eq.s32.totalorder %s9, 1
    %p26 = por %p24, %p25
    %p27 = scmp.ne.s32.totalorder %s19, %s22
    %p28 = scmp.eq.s32.totalorder %s9, 0
    %p29 = por %p27, %p28
    %p30 = scmp.ne.s32.totalorder %s19, %s22
    %p31 = scmp.eq.s32.totalorder %s14, 1
    %p32 = por %p30, %p31
    %p33 = scmp.ne.s32.totalorder %s22, %s23
    %p34 = scmp.eq.s32.totalorder %s14, 0
    %p35 = por %p33, %p34
    %p36 = scmp.ne.s32.totalorder %s22, %s23
    %p37 = scmp.eq.s32.totalorder %s15, 1
    %p38 = por %p36, %p37
    %p40 = scmp.ne.s32.totalorder %s23, %s39
    %p41 = scmp.eq.s32.totalorder %s15, 0
    %p42 = por %p40, %p41
    %s44 = sadd.s32 %s43, 1
    %p47 = scmp.eq.s32.totalorder %s9, 1
    %p48 = scmp.ne.s32.totalorder %s43, %s45
    %p49 = scmp.eq.s32.totalorder %s9, 0
    %p50 = por %p48, %p49
    %p51 = scmp.ne.s32.totalorder %s43, %s45
    %p52 = scmp.eq.s32.totalorder %s14, 1
    %p53 = por %p51, %p52
    %p54 = scmp.ne.s32.totalorder %s45, %s46
    %p55 = scmp.eq.s32.totalorder %s14, 0
    %p56 = por %p54, %p55
    %p57 = scmp.ne.s32.totalorder %s45, %s46
    %p58 = scmp.eq.s32.totalorder %s15, 1
    %p59 = por %p57, %p58
    %p61 = scmp.ne.s32.totalorder %s46, %s60
    %p62 = scmp.eq.s32.totalorder %s15, 0
    %p63 = por %p61, %p62
    %s65 = sadd.s32 %s64, 1
    %p68 = scmp.eq.s32.totalorder %s9, 1
    %p69 = scmp.ne.s32.totalorder %s64, %s66
    %p70 = scmp.eq.s32.totalorder %s9, 0
    %p71 = por %p69, %p70
    %p72 = scmp.ne.s32.totalorder %s64, %s66
    %p73 = scmp.eq.s32.totalorder %s14, 1
    %p74 = por %p72, %p73
    %p75 = scmp.ne.s32.totalorder %s66, %s67
    %p76 = scmp.eq.s32.totalorder %s14, 0
    %p77 = por %p75, %p76
    %p78 = scmp.ne.s32.totalorder %s66, %s67
    %p79 = scmp.eq.s32.totalorder %s15, 1
    %p80 = por %p78, %p79
    %p82 = scmp.ne.s32.totalorder %s67, %s81
    %p83 = scmp.eq.s32.totalorder %s15, 0
    %p84 = por %p82, %p83
    %s85 = ssub.s32 %s9, %s16
    %p86 = scmp.eq.s32.totalorder %s85, 0
    %s88 = sadd.s32 %s87, 1
    %s89 = scalar_select %p86, %s87, %s88
    %p92 = pneg %p86
    %p93 = scmp.eq.s32.totalorder %s9, 1
    %p94 = por %p92, %p93
    %p95 = scmp.ne.s32.totalorder %s87, %s90
    %p96 = scmp.eq.s32.totalorder %s9, 0
    %p97 = por %p95, %p96
    %p98 = scmp.ne.s32.totalorder %s87, %s90
    %p99 = scmp.eq.s32.totalorder %s14, 1
    %p100 = por %p98, %p99
    %p101 = scmp.ne.s32.totalorder %s90, %s91
    %p102 = scmp.eq.s32.totalorder %s14, 0
    %p103 = por %p101, %p102
    %p104 = scmp.ne.s32.totalorder %s90, %s91
    %p105 = scmp.eq.s32.totalorder %s15, 1
    %p106 = por %p104, %p105
    %p108 = scmp.ne.s32.totalorder %s91, %s107
    %p109 = scmp.eq.s32.totalorder %s15, 0
    %p110 = por %p108, %p109
    %p111 = scmp.le.s32.totalorder 1, %s9
    %p112 = scmp.lt.s32.totalorder %s9, 3
    %p113 = pnand %p111, %p112
    %p114 = pneg %p113
    // Predicated region
    $region9: #{alignment_forward.10} parent=5 // pred_check
      _
    $region10: #{alignment_forward.10} parent=5 // pred_check_branch
      %116 = sbr.rel (%p113) target = $region12
    $region11: #{alignment_forward.10} parent=5 // pred_region
      %s117 = ssub.s32 %s9, 1
      // Predicated region
      $region13: #{alignment_forward.10} parent=11 // pred_check
        %p118 = pneg %p56
      $region14: #{alignment_forward.10} parent=11 // pred_check_branch
        %120 = sbr.rel (%p118) target = $region16
      $region15: #{alignment_forward.10} parent=11 // pred_region
        _
      $region16: #{alignment_forward.10} parent=11 // pred_fallthru
        _
      // Predicated region
      $region17: #{alignment_forward.10} parent=11 // pred_check
        %p121 = pneg %p77
      $region18: #{alignment_forward.10} parent=11 // pred_check_branch
        %123 = sbr.rel (%p121) target = $region20
      $region19: #{alignment_forward.10} parent=11 // pred_region
        _
      $region20: #{alignment_forward.10} parent=11 // pred_fallthru
        _
    $region12: #{alignment_forward.10} parent=5 // pred_fallthru
      _
    %p124 = scmp.lt.s32.totalorder %s9, 2
    // Predicated region
    $region21: #{alignment_forward.10} parent=5 // pred_check
      %p125 = pneg %p124
    $region22: #{alignment_forward.10} parent=5 // pred_check_branch
      %127 = sbr.rel (%p125) target = $region24
    $region23: #{alignment_forward.10} parent=5 // pred_region
      // Predicated region
      $region25: #{alignment_forward.10} parent=23 // pred_check
        %p128 = pneg %p29
      $region26: #{alignment_forward.10} parent=23 // pred_check_branch
        %130 = sbr.rel (%p128) target = $region28
      $region27: #{alignment_forward.10} parent=23 // pred_region
        %p131 = scmp.lt.s32.totalorder %s9, 1
        %s132 = scalar_select %p131, %s9, 1
        %s133 = smul.addr %s132, 6
        %s134 = smul.addr %s133, 8
        %s135 = scalar_lea.vmem %s0, %s134
      $region28: #{alignment_forward.10} parent=23 // pred_fallthru
        _
    $region24: #{alignment_forward.10} parent=5 // pred_fallthru
      _
    %p136 = scmp.le.s32.totalorder 1, %s9
    %p137 = scmp.lt.s32.totalorder %s9, 3
    %p138 = pnand %p136, %p137
    %p139 = pneg %p138
    // Predicated region
    $region29: #{alignment_forward.10} parent=5 // pred_check
      _
    $region30: #{alignment_forward.10} parent=5 // pred_check_branch
      %141 = sbr.rel (%p138) target = $region32
    $region31: #{alignment_forward.10} parent=5 // pred_region
      %s142 = ssub.s32 %s9, 1
      %p143 = scmp.lt.s32.totalorder %s14, 1
      %s144 = scalar_select %p143, %s14, 1
      %s145 = smul.addr %s144, 6
      %s146 = smul.addr %s145, 8
      %s147 = scalar_lea.vmem %s0, %s146
      %p148 = pneg %p35
      %p149 = pneg %p32
      %p150 = pneg %p56
      %p151 = pneg %p53
      %p152 = pneg %p77
      %p153 = pneg %p74
      %p154 = pneg %p103
      %p155 = pneg %p100
      %p156 = scmp.lt.s32.totalorder %s14, 1
      %s157 = scalar_select %p156, %s14, 1
      %s158 = smul.addr %s157, 2
      %s159 = smul.addr %s158, 8
      %s160 = scalar_lea.vmem %s3, %s159
      %p161 = scmp.lt.s32.totalorder %s14, 1
      %s162 = scalar_select %p161, %s14, 1
      %s163 = smul.addr %s162, 6
      %s164 = smul.addr %s163, 8
      %s165 = scalar_lea.vmem %s0, %s164
      %p166 = scmp.lt.s32.totalorder %s14, 1
      %s167 = scalar_select %p166, %s14, 1
      %s168 = smul.addr %s167, 2
      %s169 = smul.addr %s168, 8
      %s170 = scalar_lea.vmem %s3, %s169
      %v171 = vld [vmem:[%s165] sm:$0xff]
      %v172 = vld [vmem:[%s165 + $0x18] sm:$0xff]
      %vm173 = vcmask 588800
      %174 = vst.msk [vmem:[#allocation2] sm:$0xff] %vm173, %v171
      %175 = vst.msk [vmem:[#allocation2 + $0x8] sm:$0xff] %vm173, %v172
      %v176 = vld [vmem:[%s165] sm:$0xff]
      %v177 = vld [vmem:[%s165 + $0x8] sm:$0xff]
      %v178 = vld [vmem:[%s165 + $0x18] sm:$0xff]
      %v179 = vld [vmem:[%s165 + $0x20] sm:$0xff]
      %184 = vrot.lane.b32.xlu0 %v176, 47
      %v185 = vpop.permute.xlu0 %184
      %186 = vrot.lane.b32.xlu0 %v177, 47
      %v187 = vpop.permute.xlu0 %186
      %188 = vrot.lane.b32.xlu0 %v178, 47
      %v189 = vpop.permute.xlu0 %188
      %190 = vrot.lane.b32.xlu0 %v179, 47
      %v191 = vpop.permute.xlu0 %190
      %vm192 = vcmask 384000
      %v193 = vsel %vm192, %v185, %v187
      %v194 = vsel %vm192, %v189, %v191
      %197 = vst.msk [vmem:[#allocation2 + $0x10] sm:$0xff] %vm173, %v193
      %198 = vst.msk [vmem:[#allocation2 + $0x18] sm:$0xff] %vm173, %v194
      %v199 = vld [vmem:[%s165] sm:$0xff]
      %v200 = vld [vmem:[%s165 + $0x18] sm:$0xff]
      %203 = vrot.lane.b32.xlu0 %v199, 127
      %v204 = vpop.permute.xlu0 %203
      %205 = vrot.lane.b32.xlu0 %v200, 127
      %v206 = vpop.permute.xlu0 %205
      %209 = vst.msk [vmem:[#allocation2 + $0x20] sm:$0xff] %vm173, %v204
      %210 = vst.msk [vmem:[#allocation2 + $0x28] sm:$0xff] %vm173, %v206
      %v211 = vld [vmem:[%s165 + $0x8] sm:$0xff]
      %v212 = vld [vmem:[%s165 + $0x20] sm:$0xff]
      %215 = vrot.lane.b32.xlu0 %v211, 94
      %v216 = vpop.permute.xlu0 %215
      %217 = vrot.lane.b32.xlu0 %v212, 94
      %v218 = vpop.permute.xlu0 %217
      %221 = vst.msk [vmem:[#allocation2 + $0x30] sm:$0xff] %vm173, %v216
      %222 = vst.msk [vmem:[#allocation2 + $0x38] sm:$0xff] %vm173, %v218
      %v223 = vld [vmem:[%s165 + $0x8] sm:$0xff]
      %v224 = vld [vmem:[%s165 + $0x10] sm:$0xff]
      %v225 = vld [vmem:[%s165 + $0x20] sm:$0xff]
      %v226 = vld [vmem:[%s165 + $0x28] sm:$0xff]
      %231 = vrot.lane.b32.xlu0 %v223, 13
      %v232 = vpop.permute.xlu0 %231
      %233 = vrot.lane.b32.xlu0 %v224, 13
      %v234 = vpop.permute.xlu0 %233
      %235 = vrot.lane.b32.xlu0 %v225, 13
      %v236 = vpop.permute.xlu0 %235
      %237 = vrot.lane.b32.xlu0 %v226, 13
      %v238 = vpop.permute.xlu0 %237
      %vm239 = vcmask 105472
      %v240 = vsel %vm239, %v232, %v234
      %v241 = vsel %vm239, %v236, %v238
      %244 = vst.msk [vmem:[#allocation2 + $0x40] sm:$0xff] %vm173, %v240
      %245 = vst.msk [vmem:[#allocation2 + $0x48] sm:$0xff] %vm173, %v241
      %v246 = vld [vmem:[%s165 + $0x8] sm:$0xff]
      %v247 = vld [vmem:[%s165 + $0x20] sm:$0xff]
      %250 = vrot.lane.b32.xlu0 %v246, 93
      %v251 = vpop.permute.xlu0 %250
      %252 = vrot.lane.b32.xlu0 %v247, 93
      %v253 = vpop.permute.xlu0 %252
      %256 = vst.msk [vmem:[#allocation2 + $0x50] sm:$0xff] %vm173, %v251
      %257 = vst.msk [vmem:[#allocation2 + $0x58] sm:$0xff] %vm173, %v253
      %v258 = vld [vmem:[%s165] sm:$0xff]
      %v259 = vld [vmem:[%s165 + $0x18] sm:$0xff]
      %262 = vrot.lane.b32.xlu0 %v258, 119
      %v263 = vpop.permute.xlu0 %262
      %264 = vrot.lane.b32.xlu0 %v259, 119
      %v265 = vpop.permute.xlu0 %264
      %268 = vst.msk [vmem:[#allocation2 + $0x60] sm:$0xff] %vm173, %v263
      %269 = vst.msk [vmem:[#allocation2 + $0x68] sm:$0xff] %vm173, %v265
      %v270 = vld [vmem:[%s165] sm:$0xff]
      %v271 = vld [vmem:[%s165 + $0x8] sm:$0xff]
      %v272 = vld [vmem:[%s165 + $0x18] sm:$0xff]
      %v273 = vld [vmem:[%s165 + $0x20] sm:$0xff]
      %278 = vrot.lane.b32.xlu0 %v270, 38
      %v279 = vpop.permute.xlu0 %278
      %280 = vrot.lane.b32.xlu0 %v271, 38
      %v281 = vpop.permute.xlu0 %280
      %282 = vrot.lane.b32.xlu0 %v272, 38
      %v283 = vpop.permute.xlu0 %282
      %284 = vrot.lane.b32.xlu0 %v273, 38
      %v285 = vpop.permute.xlu0 %284
      %vm286 = vcmask 310272
      %v287 = vsel %vm286, %v279, %v281
      %v288 = vsel %vm286, %v283, %v285
      %291 = vst.msk [vmem:[#allocation2 + $0x70] sm:$0xff] %vm173, %v287
      %292 = vst.msk [vmem:[#allocation2 + $0x78] sm:$0xff] %vm173, %v288
      %v293 = vld [vmem:[%s165] sm:$0xff]
      %v294 = vld [vmem:[%s165 + $0x18] sm:$0xff]
      %297 = vrot.lane.b32.xlu0 %v293, 118
      %v298 = vpop.permute.xlu0 %297
      %299 = vrot.lane.b32.xlu0 %v294, 118
      %v300 = vpop.permute.xlu0 %299
      %303 = vst.msk [vmem:[#allocation2 + $0x80] sm:$0xff] %vm173, %v298
      %304 = vst.msk [vmem:[#allocation2 + $0x88] sm:$0xff] %vm173, %v300
      %v305 = vld [vmem:[%s1] sm:$0xff]
      %v306 = vld [vmem:[%s1 + $0x8] sm:$0xff]
      %v307 = vld [vmem:[%s1 + $0x10] sm:$0xff]
      %v308 = vld [vmem:[%s1 + $0x18] sm:$0xff]
      %v309 = vld [vmem:[#allocation2] sm:$0xff]
      %v310 = vld [vmem:[#allocation2 + $0x8] sm:$0xff]
      %v311 = vld [vmem:[#allocation2 + $0x10] sm:$0xff]
      %v312 = vld [vmem:[#allocation2 + $0x18] sm:$0xff]
      %v313 = vld [vmem:[#allocation2 + $0x20] sm:$0xff]
      %v314 = vld [vmem:[#allocation2 + $0x28] sm:$0xff]
      %v315 = vld [vmem:[#allocation2 + $0x30] sm:$0xff]
      %v316 = vld [vmem:[#allocation2 + $0x38] sm:$0xff]
      %v317 = vld [vmem:[#allocation2 + $0x40] sm:$0xff]
      %v318 = vld [vmem:[#allocation2 + $0x48] sm:$0xff]
      %v319 = vld [vmem:[#allocation2 + $0x50] sm:$0xff]
      %v320 = vld [vmem:[#allocation2 + $0x58] sm:$0xff]
      %v321 = vld [vmem:[#allocation2 + $0x60] sm:$0xff]
      %v322 = vld [vmem:[#allocation2 + $0x68] sm:$0xff]
      %v323 = vld [vmem:[#allocation2 + $0x70] sm:$0xff]
      %v324 = vld [vmem:[#allocation2 + $0x78] sm:$0xff]
      %v325 = vld [vmem:[#allocation2 + $0x80] sm:$0xff]
      %v326 = vld [vmem:[#allocation2 + $0x88] sm:$0xff]
      %v327 = vld [vmem:[%s2] sm:$0xff]
      %v328 = vld [vmem:[%s2 + $0x8] sm:$0xff]
      %330 = vset.pattern.permute.xlu0 0
      %331 = vperm.xlu0 %330, %v327
      %v332 = vpop.permute.xlu0 %331
      %335 = vset.pattern.permute.xlu0 0
      %336 = vperm.xlu0 %335, %v328
      %v337 = vpop.permute.xlu0 %336
      %vm339 = vcmask 130048
      %v341 = vsel %vm339, %v306, 0
      %v344 = vsel %vm339, %v308, 0
      %346 = vmatprep.subr.mxu0 0.0
      %347 = vmatpush1.msra.mxu0 %v309
      %348 = vmatprep.subr.mxu0 0.0
      %349 = vmatpush1.msra.mxu0 %v310
      %350 = vmatprep.subr.mxu0 0.0
      %351 = vmatpush1.msra.mxu0 %v311
      %352 = vmatprep.subr.mxu0 0.0
      %353 = vmatpush1.msra.mxu0 %v312
      %354 = vmatprep.subr.mxu0 0.0
      %355 = vmatpush1.msra.mxu0 %v313
      %356 = vmatprep.subr.mxu0 0.0
      %357 = vmatpush1.msra.mxu0 %v314
      %358 = vmatprep.subr.mxu0 0.0
      %359 = vmatpush1.msra.mxu0 %v315
      %360 = vmatprep.subr.mxu0 0.0
      %361 = vmatpush1.msra.mxu0 %v316
      %362 = vmatprep.subr.mxu0 0.0
      %363 = vmatpush1.msra.mxu0 %v317
      %364 = vmatprep.subr.mxu0 0.0
      %365 = vmatpush1.msra.mxu0 %v318
      %366 = vmatprep.subr.mxu0 0.0
      %367 = vmatpush1.msra.mxu0 %v319
      %368 = vmatprep.subr.mxu0 0.0
      %369 = vmatpush1.msra.mxu0 %v320
      %370 = vmatprep.subr.mxu0 0.0
      %371 = vmatpush1.msra.mxu0 %v321
      %372 = vmatprep.subr.mxu0 0.0
      %373 = vmatpush1.msra.mxu0 %v322
      %374 = vmatprep.subr.mxu0 0.0
      %375 = vmatpush1.msra.mxu0 %v323
      %376 = vmatprep.subr.mxu0 0.0
      %377 = vmatpush1.msra.mxu0 %v324
      %378 = vmatprep.subr.mxu0 0.0
      %379 = vmatpush1.msra.mxu0 %v325
      %380 = vmatprep.subr.mxu0 0.0
      %381 = vmatpush1.msra.mxu0 %v326
      %382 = vmatprep.subr.mxu0 0.0
      %383 = vmatpush1.msra.mxu0 0.0
      %384 = vmatprep.subr.mxu0 0.0
      %385 = vmatpush1.msra.mxu0 0.0
      %386 = vmatprep.subr.mxu0 0.0
      %387 = vmatpush1.msra.mxu0 0.0
      %388 = vmatprep.subr.mxu0 0.0
      %389 = vmatpush1.msra.mxu0 0.0
      %390 = vmatprep.subr.mxu0 0.0
      %391 = vmatpush1.msra.mxu0 0.0
      %392 = vmatprep.subr.mxu0 0.0
      %393 = vmatpush1.msra.mxu0 0.0
      %394 = vmatprep.subr.mxu0 0.0
      %395 = vmatpush1.msra.mxu0 0.0
      %396 = vmatprep.subr.mxu0 0.0
      %397 = vmatpush1.msra.mxu0 0.0
      %398 = vmatprep.subr.mxu0 0.0
      %399 = vmatpush1.msra.mxu0 0.0
      %400 = vmatprep.subr.mxu0 0.0
      %401 = vmatpush1.msra.mxu0 0.0
      %402 = vmatprep.subr.mxu0 0.0
      %403 = vmatpush1.msra.mxu0 0.0
      %404 = vmatprep.subr.mxu0 0.0
      %405 = vmatpush1.msra.mxu0 0.0
      %406 = vmatprep.subr.mxu0 0.0
      %407 = vmatpush1.msra.mxu0 0.0
      %408 = vmatprep.subr.mxu0 0.0
      %409 = vmatpush1.msra.mxu0 0.0
      %410 = vmatprep.mubr.f32.mxu0 %v341
      %411 = vmatmul.mubr.f32.gmra.mrb[0].mxu0 %v305
      %v412 = vpop.f32.mrb[0].mxu0
      %v413 = vadd.f32 %v332, %v412
      %v414 = vpop.f32.mrb[0].mxu0
      %415 = vmatprep.mubr.f32.mxu0 %v344
      %416 = vmatmul.mubr.f32.gmra.mrb[0].mxu0 %v307
      %v417 = vpop.f32.mrb[0].mxu0
      %v418 = vadd.f32 %v337, %v417
      %v419 = vpop.f32.mrb[0].mxu0
      %420 = vdwg.mxu0
      %vm421 = vcmp.ge.f32.partialorder %v413, 0.0
      %vm422 = vcmp.ge.f32.partialorder %v418, 0.0
      %v423 = vmul.f32 %v413, 0.1
      %v424 = vmul.f32 %v418, 0.1
      %v425 = vsel %vm421, %v413, %v423
      %v426 = vsel %vm422, %v418, %v424
      %427 = vst.msk [vmem:[%s170] sm:$0xff] %vm173, %v425
      %428 = vst.msk [vmem:[%s170 + $0x8] sm:$0xff] %vm173, %v426
      %p429 = scmp.lt.s32.totalorder %s14, 1
      %s430 = scalar_select %p429, %s14, 1
      %s431 = smul.addr %s430, 2
      %s432 = smul.addr %s431, 8
      %s433 = scalar_lea.vmem %s3, %s432
      // Predicated region
      $region33: #{alignment_forward.10} parent=31 // pred_check
        %p434 = pneg %p100
      $region34: #{alignment_forward.10} parent=31 // pred_check_branch
        %436 = sbr.rel (%p434) target = $region36
      $region35: #{alignment_forward.10} parent=31 // pred_region
        _
      $region36: #{alignment_forward.10} parent=31 // pred_fallthru
        _
    $region32: #{alignment_forward.10} parent=5 // pred_fallthru
      _
    %p437 = scmp.le.s32.totalorder 2, %s9
    // Predicated region
    $region37: #{alignment_forward.10} parent=5 // pred_check
      %p438 = pneg %p437
    $region38: #{alignment_forward.10} parent=5 // pred_check_branch
      %440 = sbr.rel (%p438) target = $region40
    $region39: #{alignment_forward.10} parent=5 // pred_region
      %s441 = ssub.s32 %s9, 2
      // Predicated region
      $region41: #{alignment_forward.10} parent=39 // pred_check
        %p442 = pneg %p106
      $region42: #{alignment_forward.10} parent=39 // pred_check_branch
        %444 = sbr.rel (%p442) target = $region44
      $region43: #{alignment_forward.10} parent=39 // pred_region
        %p445 = scmp.lt.s32.totalorder %s15, 1
        %s446 = scalar_select %p445, %s15, 1
        %s447 = smul.addr %s446, 2
        %s448 = smul.addr %s447, 8
        %s449 = scalar_lea.vmem %s3, %s448
      $region44: #{alignment_forward.10} parent=39 // pred_fallthru
        _
    $region40: #{alignment_forward.10} parent=5 // pred_fallthru
      _
  $region6: #{alignment_forward.10} parent=0 // loop_footer
    %s13 = sadd.s32 1, %s9
  $region7: #{alignment_forward.10} parent=0 // loop_footer_branch
    %8 = sbr.rel target = $region3
  $region8: #{alignment_forward.10} parent=0 // loop_exit
    _

// kernel: alignment_forward.11
$region0: #{alignment_forward.11}
  #allocation0 [shape = 'u32[]', space=smem, size = 0x4, offset = 0x4, fixed_abs, tag = 'smem constant byte address 0x4 - core index']
  #allocation1 [shape = 'u32[144,128]{1,0:T(1,128)}', space=vmem, size = 0x12000, scoped, tag = 'internal scratch']
  #allocation2 [shape = 'f32[144,64]{1,0:T(8,128)}', space=vmem, size = 0x12000, scoped, tag = 'scratch operand']
  %s0 = inlined_call_operand.vmem [shape: f32[2,16,82], index: 0, kind: input, shape index: {}]
  %s1 = inlined_call_operand.vmem [shape: f32[16,144], index: 1, kind: input, shape index: {}]
  %s2 = inlined_call_operand.vmem [shape: f32[16,1], index: 2, kind: input, shape index: {}]
  %s3 = inlined_call_operand.vmem [shape: f32[2,16,64], index: 3, kind: output, shape index: {}]
  %s4 = sld [smem:[#allocation0]]
  $region45: #{alignment_forward.11} parent=0
    _
  %s6 = ssub.s32 1, %s4
  %s7 = scalar_select 0, %s6, %s4
  loop: start=0, step=1, limit=4
  $region2: #{alignment_forward.11} parent=0 // loop_pre_header
    _
  $region3: #{alignment_forward.11} parent=0 // loop_header
    %s9 = sphi 0, %s13
    %p10 = scmp.ge.s32.totalorder %s9, 4
    %s19 = sphi 0, %s21
    %s22 = sphi 0, %s19
    %s23 = sphi 0, %s22
    %s39 = sphi 0, %s23
    %s43 = sphi 0, %s43
    %s45 = sphi 0, %s43
    %s46 = sphi 0, %s45
    %s60 = sphi 0, %s46
    %s64 = sphi 0, %s64
    %s66 = sphi 0, %s64
    %s67 = sphi 0, %s66
    %s81 = sphi 0, %s67
    %s87 = sphi 0, %s89
    %s90 = sphi 0, %s87
    %s91 = sphi 0, %s90
    %s107 = sphi 0, %s91
  $region4: #{alignment_forward.11} parent=0 // loop_header_branch
    %12 = sbr.rel (%p10) target = $region8
  $region5: #{alignment_forward.11} parent=0 // loop_body
    %s14 = ssub.s32 %s9, 1
    %s15 = ssub.s32 %s9, 2
    %s16 = sadd.s32 %s9, 1
    %s17 = ssub.s32 %s9, %s16
    %p18 = scmp.eq.s32.totalorder %s17, 0
    %s20 = sadd.s32 %s19, 1
    %s21 = scalar_select %p18, %s19, %s20
    %p24 = pneg %p18
    %p25 = scmp.eq.s32.totalorder %s9, 1
    %p26 = por %p24, %p25
    %p27 = scmp.ne.s32.totalorder %s19, %s22
    %p28 = scmp.eq.s32.totalorder %s9, 0
    %p29 = por %p27, %p28
    %p30 = scmp.ne.s32.totalorder %s19, %s22
    %p31 = scmp.eq.s32.totalorder %s14, 1
    %p32 = por %p30, %p31
    %p33 = scmp.ne.s32.totalorder %s22, %s23
    %p34 = scmp.eq.s32.totalorder %s14, 0
    %p35 = por %p33, %p34
    %p36 = scmp.ne.s32.totalorder %s22, %s23
    %p37 = scmp.eq.s32.totalorder %s15, 1
    %p38 = por %p36, %p37
    %p40 = scmp.ne.s32.totalorder %s23, %s39
    %p41 = scmp.eq.s32.totalorder %s15, 0
    %p42 = por %p40, %p41
    %s44 = sadd.s32 %s43, 1
    %p47 = scmp.eq.s32.totalorder %s9, 1
    %p48 = scmp.ne.s32.totalorder %s43, %s45
    %p49 = scmp.eq.s32.totalorder %s9, 0
    %p50 = por %p48, %p49
    %p51 = scmp.ne.s32.totalorder %s43, %s45
    %p52 = scmp.eq.s32.totalorder %s14, 1
    %p53 = por %p51, %p52
    %p54 = scmp.ne.s32.totalorder %s45, %s46
    %p55 = scmp.eq.s32.totalorder %s14, 0
    %p56 = por %p54, %p55
    %p57 = scmp.ne.s32.totalorder %s45, %s46
    %p58 = scmp.eq.s32.totalorder %s15, 1
    %p59 = por %p57, %p58
    %p61 = scmp.ne.s32.totalorder %s46, %s60
    %p62 = scmp.eq.s32.totalorder %s15, 0
    %p63 = por %p61, %p62
    %s65 = sadd.s32 %s64, 1
    %p68 = scmp.eq.s32.totalorder %s9, 1
    %p69 = scmp.ne.s32.totalorder %s64, %s66
    %p70 = scmp.eq.s32.totalorder %s9, 0
    %p71 = por %p69, %p70
    %p72 = scmp.ne.s32.totalorder %s64, %s66
    %p73 = scmp.eq.s32.totalorder %s14, 1
    %p74 = por %p72, %p73
    %p75 = scmp.ne.s32.totalorder %s66, %s67
    %p76 = scmp.eq.s32.totalorder %s14, 0
    %p77 = por %p75, %p76
    %p78 = scmp.ne.s32.totalorder %s66, %s67
    %p79 = scmp.eq.s32.totalorder %s15, 1
    %p80 = por %p78, %p79
    %p82 = scmp.ne.s32.totalorder %s67, %s81
    %p83 = scmp.eq.s32.totalorder %s15, 0
    %p84 = por %p82, %p83
    %s85 = ssub.s32 %s9, %s16
    %p86 = scmp.eq.s32.totalorder %s85, 0
    %s88 = sadd.s32 %s87, 1
    %s89 = scalar_select %p86, %s87, %s88
    %p92 = pneg %p86
    %p93 = scmp.eq.s32.totalorder %s9, 1
    %p94 = por %p92, %p93
    %p95 = scmp.ne.s32.totalorder %s87, %s90
    %p96 = scmp.eq.s32.totalorder %s9, 0
    %p97 = por %p95, %p96
    %p98 = scmp.ne.s32.totalorder %s87, %s90
    %p99 = scmp.eq.s32.totalorder %s14, 1
    %p100 = por %p98, %p99
    %p101 = scmp.ne.s32.totalorder %s90, %s91
    %p102 = scmp.eq.s32.totalorder %s14, 0
    %p103 = por %p101, %p102
    %p104 = scmp.ne.s32.totalorder %s90, %s91
    %p105 = scmp.eq.s32.totalorder %s15, 1
    %p106 = por %p104, %p105
    %p108 = scmp.ne.s32.totalorder %s91, %s107
    %p109 = scmp.eq.s32.totalorder %s15, 0
    %p110 = por %p108, %p109
    %p111 = scmp.le.s32.totalorder 1, %s9
    %p112 = scmp.lt.s32.totalorder %s9, 3
    %p113 = pnand %p111, %p112
    %p114 = pneg %p113
    // Predicated region
    $region9: #{alignment_forward.11} parent=5 // pred_check
      _
    $region10: #{alignment_forward.11} parent=5 // pred_check_branch
      %116 = sbr.rel (%p113) target = $region12
    $region11: #{alignment_forward.11} parent=5 // pred_region
      %s117 = ssub.s32 %s9, 1
      // Predicated region
      $region13: #{alignment_forward.11} parent=11 // pred_check
        %p118 = pneg %p56
      $region14: #{alignment_forward.11} parent=11 // pred_check_branch
        %120 = sbr.rel (%p118) target = $region16
      $region15: #{alignment_forward.11} parent=11 // pred_region
        _
      $region16: #{alignment_forward.11} parent=11 // pred_fallthru
        _
      // Predicated region
      $region17: #{alignment_forward.11} parent=11 // pred_check
        %p121 = pneg %p77
      $region18: #{alignment_forward.11} parent=11 // pred_check_branch
        %123 = sbr.rel (%p121) target = $region20
      $region19: #{alignment_forward.11} parent=11 // pred_region
        _
      $region20: #{alignment_forward.11} parent=11 // pred_fallthru
        _
    $region12: #{alignment_forward.11} parent=5 // pred_fallthru
      _
    %p124 = scmp.lt.s32.totalorder %s9, 2
    // Predicated region
    $region21: #{alignment_forward.11} parent=5 // pred_check
      %p125 = pneg %p124
    $region22: #{alignment_forward.11} parent=5 // pred_check_branch
      %127 = sbr.rel (%p125) target = $region24
    $region23: #{alignment_forward.11} parent=5 // pred_region
      // Predicated region
      $region25: #{alignment_forward.11} parent=23 // pred_check
        %p128 = pneg %p29
      $region26: #{alignment_forward.11} parent=23 // pred_check_branch
        %130 = sbr.rel (%p128) target = $region28
      $region27: #{alignment_forward.11} parent=23 // pred_region
        %p131 = scmp.lt.s32.totalorder %s9, 1
        %s132 = scalar_select %p131, %s9, 1
        %s133 = smul.addr %s132, 2
        %s134 = smul.addr %s133, 8
        %s135 = scalar_lea.vmem %s0, %s134
      $region28: #{alignment_forward.11} parent=23 // pred_fallthru
        _
    $region24: #{alignment_forward.11} parent=5 // pred_fallthru
      _
    %p136 = scmp.le.s32.totalorder 1, %s9
    %p137 = scmp.lt.s32.totalorder %s9, 3
    %p138 = pnand %p136, %p137
    %p139 = pneg %p138
    // Predicated region
    $region29: #{alignment_forward.11} parent=5 // pred_check
      _
    $region30: #{alignment_forward.11} parent=5 // pred_check_branch
      %141 = sbr.rel (%p138) target = $region32
    $region31: #{alignment_forward.11} parent=5 // pred_region
      %s142 = ssub.s32 %s9, 1
      %p143 = scmp.lt.s32.totalorder %s14, 1
      %s144 = scalar_select %p143, %s14, 1
      %s145 = smul.addr %s144, 2
      %s146 = smul.addr %s145, 8
      %s147 = scalar_lea.vmem %s0, %s146
      %p148 = pneg %p35
      %p149 = pneg %p32
      %p150 = pneg %p56
      %p151 = pneg %p53
      %p152 = pneg %p77
      %p153 = pneg %p74
      %p154 = pneg %p103
      %p155 = pneg %p100
      %p156 = scmp.lt.s32.totalorder %s14, 1
      %s157 = scalar_select %p156, %s14, 1
      %s158 = smul.addr %s157, 2
      %s159 = smul.addr %s158, 8
      %s160 = scalar_lea.vmem %s3, %s159
      %p161 = scmp.lt.s32.totalorder %s14, 1
      %s162 = scalar_select %p161, %s14, 1
      %s163 = smul.addr %s162, 2
      %s164 = smul.addr %s163, 8
      %s165 = scalar_lea.vmem %s0, %s164
      %p166 = scmp.lt.s32.totalorder %s14, 1
      %s167 = scalar_select %p166, %s14, 1
      %s168 = smul.addr %s167, 2
      %s169 = smul.addr %s168, 8
      %s170 = scalar_lea.vmem %s3, %s169
      %v171 = vlaneseq
      %v172 = vand.u32 %v171, 127
      %vm173 = vcmp.lt.s32.totalorder %v172, 0
      %v174 = vsub.s32 0, %v172
      %v175 = vsel %vm173, %v174, %v172
      %v176 = vshrl.u32 %v175, 3
      %v177 = vand.u32 %v175, 7
      %v178 = vsub.s32 0, %v177
      %v179 = vsel %vm173, %v178, %v177
      %vm180 = vcmp.ne.s32.totalorder %v179, 0
      %vm181 = vcmp.lt.s32.totalorder %v179, 0
      %vm182 = vmand %vm181, %vm180
      %v183 = vadd.s32 %v179, 8
      %v184 = vsel %vm182, %v183, %v179
      %vm185 = vcmp.ne.s32.totalorder %v184, 0
      %vm186 = vcmp.ne.s32.totalorder %v184, 7
      %v187 = vld [vmem:[%s165] sm:$0xff]
      %v188 = vld [vmem:[%s165 + $0x8] sm:$0xff]
      %v189 = vsel %vm185, 1, 0
      %vm190 = vcmp.eq.s32.totalorder %v189, 1
      %v191 = vsel %vm190, %v187, 0.0
      %v192 = vsel %vm190, %v188, 0.0
      %vm193 = vcmask 523264
      %194 = vst.msk [vmem:[#allocation2] sm:$0xff] %vm193, %v191
      %195 = vst.msk [vmem:[#allocation2 + $0x8] sm:$0xff] %vm193, %v192
      %v196 = vld [vmem:[%s165] sm:$0xff]
      %v197 = vld [vmem:[%s165 + $0x8] sm:$0xff]
      %200 = vrot.lane.b32.xlu0 %v196, 127
      %v201 = vpop.permute.xlu0 %200
      %202 = vrot.lane.b32.xlu0 %v197, 127
      %v203 = vpop.permute.xlu0 %202
      %206 = vst.msk [vmem:[#allocation2 + $0x10] sm:$0xff] %vm193, %v201
      %207 = vst.msk [vmem:[#allocation2 + $0x18] sm:$0xff] %vm193, %v203
      %v208 = vld [vmem:[%s165] sm:$0xff]
      %v209 = vld [vmem:[%s165 + $0x8] sm:$0xff]
      %v210 = vsel %vm186, 1, 0
      %vm211 = vcmp.eq.s32.totalorder %v210, 1
      %214 = vrot.lane.b32.xlu0 %v208, 126
      %v215 = vpop.permute.xlu0 %214
      %216 = vrot.lane.b32.xlu0 %v209, 126
      %v217 = vpop.permute.xlu0 %216
      %v220 = vsel %vm211, %v215, 0.0
      %v221 = vsel %vm211, %v217, 0.0
      %222 = vst.msk [vmem:[#allocation2 + $0x20] sm:$0xff] %vm193, %v220
      %223 = vst.msk [vmem:[#allocation2 + $0x28] sm:$0xff] %vm193, %v221
      %v224 = vld [vmem:[%s165] sm:$0xff]
      %v225 = vld [vmem:[%s165 + $0x8] sm:$0xff]
      %228 = vrot.lane.b32.xlu0 %v224, 120
      %v229 = vpop.permute.xlu0 %228
      %230 = vrot.lane.b32.xlu0 %v225, 120
      %v231 = vpop.permute.xlu0 %230
      %v234 = vsel %vm190, %v229, 0.0
      %v235 = vsel %vm190, %v231, 0.0
      %236 = vst.msk [vmem:[#allocation2 + $0x30] sm:$0xff] %vm193, %v234
      %237 = vst.msk [vmem:[#allocation2 + $0x38] sm:$0xff] %vm193, %v235
      %v238 = vld [vmem:[%s165] sm:$0xff]
      %v239 = vld [vmem:[%s165 + $0x8] sm:$0xff]
      %242 = vrot.lane.b32.xlu0 %v238, 119
      %v243 = vpop.permute.xlu0 %242
      %244 = vrot.lane.b32.xlu0 %v239, 119
      %v245 = vpop.permute.xlu0 %244
      %248 = vst.msk [vmem:[#allocation2 + $0x40] sm:$0xff] %vm193, %v243
      %249 = vst.msk [vmem:[#allocation2 + $0x48] sm:$0xff] %vm193, %v245
      %v250 = vld [vmem:[%s165] sm:$0xff]
      %v251 = vld [vmem:[%s165 + $0x8] sm:$0xff]
      %254 = vrot.lane.b32.xlu0 %v250, 118
      %v255 = vpop.permute.xlu0 %254
      %256 = vrot.lane.b32.xlu0 %v251, 118
      %v257 = vpop.permute.xlu0 %256
      %v260 = vsel %vm211, %v255, 0.0
      %v261 = vsel %vm211, %v257, 0.0
      %262 = vst.msk [vmem:[#allocation2 + $0x50] sm:$0xff] %vm193, %v260
      %263 = vst.msk [vmem:[#allocation2 + $0x58] sm:$0xff] %vm193, %v261
      %v264 = vld [vmem:[%s165] sm:$0xff]
      %v265 = vld [vmem:[%s165 + $0x8] sm:$0xff]
      %268 = vrot.lane.b32.xlu0 %v264, 112
      %v269 = vpop.permute.xlu0 %268
      %270 = vrot.lane.b32.xlu0 %v265, 112
      %v271 = vpop.permute.xlu0 %270
      %v274 = vsel %vm190, %v269, 0.0
      %v275 = vsel %vm190, %v271, 0.0
      %276 = vst.msk [vmem:[#allocation2 + $0x60] sm:$0xff] %vm193, %v274
      %277 = vst.msk [vmem:[#allocation2 + $0x68] sm:$0xff] %vm193, %v275
      %v278 = vld [vmem:[%s165] sm:$0xff]
      %v279 = vld [vmem:[%s165 + $0x8] sm:$0xff]
      %282 = vrot.lane.b32.xlu0 %v278, 111
      %v283 = vpop.permute.xlu0 %282
      %284 = vrot.lane.b32.xlu0 %v279, 111
      %v285 = vpop.permute.xlu0 %284
      %288 = vst.msk [vmem:[#allocation2 + $0x70] sm:$0xff] %vm193, %v283
      %289 = vst.msk [vmem:[#allocation2 + $0x78] sm:$0xff] %vm193, %v285
      %v290 = vld [vmem:[%s165] sm:$0xff]
      %v291 = vld [vmem:[%s165 + $0x8] sm:$0xff]
      %294 = vrot.lane.b32.xlu0 %v290, 110
      %v295 = vpop.permute.xlu0 %294
      %296 = vrot.lane.b32.xlu0 %v291, 110
      %v297 = vpop.permute.xlu0 %296
      %v300 = vsel %vm211, %v295, 0.0
      %v301 = vsel %vm211, %v297, 0.0
      %302 = vst.msk [vmem:[#allocation2 + $0x80] sm:$0xff] %vm193, %v300
      %303 = vst.msk [vmem:[#allocation2 + $0x88] sm:$0xff] %vm193, %v301
      %v304 = vld [vmem:[%s1] sm:$0xff]
      %v305 = vld [vmem:[%s1 + $0x8] sm:$0xff]
      %v306 = vld [vmem:[%s1 + $0x10] sm:$0xff]
      %v307 = vld [vmem:[%s1 + $0x18] sm:$0xff]
      %v308 = vld [vmem:[#allocation2] sm:$0xff]
      %v309 = vld [vmem:[#allocation2 + $0x8] sm:$0xff]
      %v310 = vld [vmem:[#allocation2 + $0x10] sm:$0xff]
      %v311 = vld [vmem:[#allocation2 + $0x18] sm:$0xff]
      %v312 = vld [vmem:[#allocation2 + $0x20] sm:$0xff]
      %v313 = vld [vmem:[#allocation2 + $0x28] sm:$0xff]
      %v314 = vld [vmem:[#allocation2 + $0x30] sm:$0xff]
      %v315 = vld [vmem:[#allocation2 + $0x38] sm:$0xff]
      %v316 = vld [vmem:[#allocation2 + $0x40] sm:$0xff]
      %v317 = vld [vmem:[#allocation2 + $0x48] sm:$0xff]
      %v318 = vld [vmem:[#allocation2 + $0x50] sm:$0xff]
      %v319 = vld [vmem:[#allocation2 + $0x58] sm:$0xff]
      %v320 = vld [vmem:[#allocation2 + $0x60] sm:$0xff]
      %v321 = vld [vmem:[#allocation2 + $0x68] sm:$0xff]
      %v322 = vld [vmem:[#allocation2 + $0x70] sm:$0xff]
      %v323 = vld [vmem:[#allocation2 + $0x78] sm:$0xff]
      %v324 = vld [vmem:[#allocation2 + $0x80] sm:$0xff]
      %v325 = vld [vmem:[#allocation2 + $0x88] sm:$0xff]
      %v326 = vld [vmem:[%s2] sm:$0xff]
      %v327 = vld [vmem:[%s2 + $0x8] sm:$0xff]
      %329 = vset.pattern.permute.xlu0 0
      %330 = vperm.xlu0 %329, %v326
      %v331 = vpop.permute.xlu0 %330
      %334 = vset.pattern.permute.xlu0 0
      %335 = vperm.xlu0 %334, %v327
      %v336 = vpop.permute.xlu0 %335
      %vm338 = vcmask 130048
      %v340 = vsel %vm338, %v305, 0
      %v343 = vsel %vm338, %v307, 0
      %345 = vmatprep.subr.mxu0 0.0
      %346 = vmatpush1.msra.mxu0 %v308
      %347 = vmatprep.subr.mxu0 0.0
      %348 = vmatpush1.msra.mxu0 %v309
      %349 = vmatprep.subr.mxu0 0.0
      %350 = vmatpush1.msra.mxu0 %v310
      %351 = vmatprep.subr.mxu0 0.0
      %352 = vmatpush1.msra.mxu0 %v311
      %353 = vmatprep.subr.mxu0 0.0
      %354 = vmatpush1.msra.mxu0 %v312
      %355 = vmatprep.subr.mxu0 0.0
      %356 = vmatpush1.msra.mxu0 %v313
      %357 = vmatprep.subr.mxu0 0.0
      %358 = vmatpush1.msra.mxu0 %v314
      %359 = vmatprep.subr.mxu0 0.0
      %360 = vmatpush1.msra.mxu0 %v315
      %361 = vmatprep.subr.mxu0 0.0
      %362 = vmatpush1.msra.mxu0 %v316
      %363 = vmatprep.subr.mxu0 0.0
      %364 = vmatpush1.msra.mxu0 %v317
      %365 = vmatprep.subr.mxu0 0.0
      %366 = vmatpush1.msra.mxu0 %v318
      %367 = vmatprep.subr.mxu0 0.0
      %368 = vmatpush1.msra.mxu0 %v319
      %369 = vmatprep.subr.mxu0 0.0
      %370 = vmatpush1.msra.mxu0 %v320
      %371 = vmatprep.subr.mxu0 0.0
      %372 = vmatpush1.msra.mxu0 %v321
      %373 = vmatprep.subr.mxu0 0.0
      %374 = vmatpush1.msra.mxu0 %v322
      %375 = vmatprep.subr.mxu0 0.0
      %376 = vmatpush1.msra.mxu0 %v323
      %377 = vmatprep.subr.mxu0 0.0
      %378 = vmatpush1.msra.mxu0 %v324
      %379 = vmatprep.subr.mxu0 0.0
      %380 = vmatpush1.msra.mxu0 %v325
      %381 = vmatprep.subr.mxu0 0.0
      %382 = vmatpush1.msra.mxu0 0.0
      %383 = vmatprep.subr.mxu0 0.0
      %384 = vmatpush1.msra.mxu0 0.0
      %385 = vmatprep.subr.mxu0 0.0
      %386 = vmatpush1.msra.mxu0 0.0
      %387 = vmatprep.subr.mxu0 0.0
      %388 = vmatpush1.msra.mxu0 0.0
      %389 = vmatprep.subr.mxu0 0.0
      %390 = vmatpush1.msra.mxu0 0.0
      %391 = vmatprep.subr.mxu0 0.0
      %392 = vmatpush1.msra.mxu0 0.0
      %393 = vmatprep.subr.mxu0 0.0
      %394 = vmatpush1.msra.mxu0 0.0
      %395 = vmatprep.subr.mxu0 0.0
      %396 = vmatpush1.msra.mxu0 0.0
      %397 = vmatprep.subr.mxu0 0.0
      %398 = vmatpush1.msra.mxu0 0.0
      %399 = vmatprep.subr.mxu0 0.0
      %400 = vmatpush1.msra.mxu0 0.0
      %401 = vmatprep.subr.mxu0 0.0
      %402 = vmatpush1.msra.mxu0 0.0
      %403 = vmatprep.subr.mxu0 0.0
      %404 = vmatpush1.msra.mxu0 0.0
      %405 = vmatprep.subr.mxu0 0.0
      %406 = vmatpush1.msra.mxu0 0.0
      %407 = vmatprep.subr.mxu0 0.0
      %408 = vmatpush1.msra.mxu0 0.0
      %409 = vmatprep.mubr.f32.mxu0 %v340
      %410 = vmatmul.mubr.f32.gmra.mrb[0].mxu0 %v304
      %v411 = vpop.f32.mrb[0].mxu0
      %v412 = vadd.f32 %v331, %v411
      %v413 = vpop.f32.mrb[0].mxu0
      %414 = vmatprep.mubr.f32.mxu0 %v343
      %415 = vmatmul.mubr.f32.gmra.mrb[0].mxu0 %v306
      %v416 = vpop.f32.mrb[0].mxu0
      %v417 = vadd.f32 %v336, %v416
      %v418 = vpop.f32.mrb[0].mxu0
      %419 = vdwg.mxu0
      %vm420 = vcmp.ge.f32.partialorder %v412, 0.0
      %vm421 = vcmp.ge.f32.partialorder %v417, 0.0
      %v422 = vmul.f32 %v412, 0.1
      %v423 = vmul.f32 %v417, 0.1
      %v424 = vsel %vm420, %v412, %v422
      %v425 = vsel %vm421, %v417, %v423
      %426 = vst.msk [vmem:[%s170] sm:$0xff] %vm193, %v424
      %427 = vst.msk [vmem:[%s170 + $0x8] sm:$0xff] %vm193, %v425
      %p428 = scmp.lt.s32.totalorder %s14, 1
      %s429 = scalar_select %p428, %s14, 1
      %s430 = smul.addr %s429, 2
      %s431 = smul.addr %s430, 8
      %s432 = scalar_lea.vmem %s3, %s431
      // Predicated region
      $region33: #{alignment_forward.11} parent=31 // pred_check
        %p433 = pneg %p100
      $region34: #{alignment_forward.11} parent=31 // pred_check_branch
        %435 = sbr.rel (%p433) target = $region36
      $region35: #{alignment_forward.11} parent=31 // pred_region
        _
      $region36: #{alignment_forward.11} parent=31 // pred_fallthru
        _
    $region32: #{alignment_forward.11} parent=5 // pred_fallthru
      _
    %p436 = scmp.le.s32.totalorder 2, %s9
    // Predicated region
    $region37: #{alignment_forward.11} parent=5 // pred_check
      %p437 = pneg %p436
    $region38: #{alignment_forward.11} parent=5 // pred_check_branch
      %439 = sbr.rel (%p437) target = $region40
    $region39: #{alignment_forward.11} parent=5 // pred_region
      %s440 = ssub.s32 %s9, 2
      // Predicated region
      $region41: #{alignment_forward.11} parent=39 // pred_check
        %p441 = pneg %p106
      $region42: #{alignment_forward.11} parent=39 // pred_check_branch
        %443 = sbr.rel (%p441) target = $region44
      $region43: #{alignment_forward.11} parent=39 // pred_region
        %p444 = scmp.lt.s32.totalorder %s15, 1
        %s445 = scalar_select %p444, %s15, 1
        %s446 = smul.addr %s445, 2
        %s447 = smul.addr %s446, 8
        %s448 = scalar_lea.vmem %s3, %s447
      $region44: #{alignment_forward.11} parent=39 // pred_fallthru
        _
    $region40: #{alignment_forward.11} parent=5 // pred_fallthru
      _
  $region6: #{alignment_forward.11} parent=0 // loop_footer
    %s13 = sadd.s32 1, %s9
  $region7: #{alignment_forward.11} parent=0 // loop_footer_branch
    %8 = sbr.rel target = $region3
  $region8: #{alignment_forward.11} parent=0 // loop_exit
    _

// kernel: alignment_forward.12
$region0: #{alignment_forward.12}
  #allocation0 [shape = 'u32[]', space=smem, size = 0x4, offset = 0x4, fixed_abs, tag = 'smem constant byte address 0x4 - core index']
  #allocation1 [shape = 'u32[144,128]{1,0:T(1,128)}', space=vmem, size = 0x12000, scoped, tag = 'internal scratch']
  #allocation2 [shape = 'f32[144,20]{1,0:T(8,128)}', space=vmem, size = 0x12000, scoped, tag = 'scratch operand']
  %s0 = inlined_call_operand.vmem [shape: f32[2,16,100], index: 0, kind: input, shape index: {}]
  %s1 = inlined_call_operand.vmem [shape: f32[16,144], index: 1, kind: input, shape index: {}]
  %s2 = inlined_call_operand.vmem [shape: f32[16,1], index: 2, kind: input, shape index: {}]
  %s3 = inlined_call_operand.vmem [shape: f32[2,16,20], index: 3, kind: output, shape index: {}]
  %s4 = sld [smem:[#allocation0]]
  $region45: #{alignment_forward.12} parent=0
    _
  %s6 = ssub.s32 1, %s4
  %s7 = scalar_select 0, %s6, %s4
  loop: start=0, step=1, limit=4
  $region2: #{alignment_forward.12} parent=0 // loop_pre_header
    _
  $region3: #{alignment_forward.12} parent=0 // loop_header
    %s9 = sphi 0, %s13
    %p10 = scmp.ge.s32.totalorder %s9, 4
    %s19 = sphi 0, %s21
    %s22 = sphi 0, %s19
    %s23 = sphi 0, %s22
    %s39 = sphi 0, %s23
    %s43 = sphi 0, %s43
    %s45 = sphi 0, %s43
    %s46 = sphi 0, %s45
    %s60 = sphi 0, %s46
    %s64 = sphi 0, %s64
    %s66 = sphi 0, %s64
    %s67 = sphi 0, %s66
    %s81 = sphi 0, %s67
    %s87 = sphi 0, %s89
    %s90 = sphi 0, %s87
    %s91 = sphi 0, %s90
    %s107 = sphi 0, %s91
  $region4: #{alignment_forward.12} parent=0 // loop_header_branch
    %12 = sbr.rel (%p10) target = $region8
  $region5: #{alignment_forward.12} parent=0 // loop_body
    %s14 = ssub.s32 %s9, 1
    %s15 = ssub.s32 %s9, 2
    %s16 = sadd.s32 %s9, 1
    %s17 = ssub.s32 %s9, %s16
    %p18 = scmp.eq.s32.totalorder %s17, 0
    %s20 = sadd.s32 %s19, 1
    %s21 = scalar_select %p18, %s19, %s20
    %p24 = pneg %p18
    %p25 = scmp.eq.s32.totalorder %s9, 1
    %p26 = por %p24, %p25
    %p27 = scmp.ne.s32.totalorder %s19, %s22
    %p28 = scmp.eq.s32.totalorder %s9, 0
    %p29 = por %p27, %p28
    %p30 = scmp.ne.s32.totalorder %s19, %s22
    %p31 = scmp.eq.s32.totalorder %s14, 1
    %p32 = por %p30, %p31
    %p33 = scmp.ne.s32.totalorder %s22, %s23
    %p34 = scmp.eq.s32.totalorder %s14, 0
    %p35 = por %p33, %p34
    %p36 = scmp.ne.s32.totalorder %s22, %s23
    %p37 = scmp.eq.s32.totalorder %s15, 1
    %p38 = por %p36, %p37
    %p40 = scmp.ne.s32.totalorder %s23, %s39
    %p41 = scmp.eq.s32.totalorder %s15, 0
    %p42 = por %p40, %p41
    %s44 = sadd.s32 %s43, 1
    %p47 = scmp.eq.s32.totalorder %s9, 1
    %p48 = scmp.ne.s32.totalorder %s43, %s45
    %p49 = scmp.eq.s32.totalorder %s9, 0
    %p50 = por %p48, %p49
    %p51 = scmp.ne.s32.totalorder %s43, %s45
    %p52 = scmp.eq.s32.totalorder %s14, 1
    %p53 = por %p51, %p52
    %p54 = scmp.ne.s32.totalorder %s45, %s46
    %p55 = scmp.eq.s32.totalorder %s14, 0
    %p56 = por %p54, %p55
    %p57 = scmp.ne.s32.totalorder %s45, %s46
    %p58 = scmp.eq.s32.totalorder %s15, 1
    %p59 = por %p57, %p58
    %p61 = scmp.ne.s32.totalorder %s46, %s60
    %p62 = scmp.eq.s32.totalorder %s15, 0
    %p63 = por %p61, %p62
    %s65 = sadd.s32 %s64, 1
    %p68 = scmp.eq.s32.totalorder %s9, 1
    %p69 = scmp.ne.s32.totalorder %s64, %s66
    %p70 = scmp.eq.s32.totalorder %s9, 0
    %p71 = por %p69, %p70
    %p72 = scmp.ne.s32.totalorder %s64, %s66
    %p73 = scmp.eq.s32.totalorder %s14, 1
    %p74 = por %p72, %p73
    %p75 = scmp.ne.s32.totalorder %s66, %s67
    %p76 = scmp.eq.s32.totalorder %s14, 0
    %p77 = por %p75, %p76
    %p78 = scmp.ne.s32.totalorder %s66, %s67
    %p79 = scmp.eq.s32.totalorder %s15, 1
    %p80 = por %p78, %p79
    %p82 = scmp.ne.s32.totalorder %s67, %s81
    %p83 = scmp.eq.s32.totalorder %s15, 0
    %p84 = por %p82, %p83
    %s85 = ssub.s32 %s9, %s16
    %p86 = scmp.eq.s32.totalorder %s85, 0
    %s88 = sadd.s32 %s87, 1
    %s89 = scalar_select %p86, %s87, %s88
    %p92 = pneg %p86
    %p93 = scmp.eq.s32.totalorder %s9, 1
    %p94 = por %p92, %p93
    %p95 = scmp.ne.s32.totalorder %s87, %s90
    %p96 = scmp.eq.s32.totalorder %s9, 0
    %p97 = por %p95, %p96
    %p98 = scmp.ne.s32.totalorder %s87, %s90
    %p99 = scmp.eq.s32.totalorder %s14, 1
    %p100 = por %p98, %p99
    %p101 = scmp.ne.s32.totalorder %s90, %s91
    %p102 = scmp.eq.s32.totalorder %s14, 0
    %p103 = por %p101, %p102
    %p104 = scmp.ne.s32.totalorder %s90, %s91
    %p105 = scmp.eq.s32.totalorder %s15, 1
    %p106 = por %p104, %p105
    %p108 = scmp.ne.s32.totalorder %s91, %s107
    %p109 = scmp.eq.s32.totalorder %s15, 0
    %p110 = por %p108, %p109
    %p111 = scmp.le.s32.totalorder 1, %s9
    %p112 = scmp.lt.s32.totalorder %s9, 3
    %p113 = pnand %p111, %p112
    %p114 = pneg %p113
    // Predicated region
    $region9: #{alignment_forward.12} parent=5 // pred_check
      _
    $region10: #{alignment_forward.12} parent=5 // pred_check_branch
      %116 = sbr.rel (%p113) target = $region12
    $region11: #{alignment_forward.12} parent=5 // pred_region
      %s117 = ssub.s32 %s9, 1
      // Predicated region
      $region13: #{alignment_forward.12} parent=11 // pred_check
        %p118 = pneg %p56
      $region14: #{alignment_forward.12} parent=11 // pred_check_branch
        %120 = sbr.rel (%p118) target = $region16
      $region15: #{alignment_forward.12} parent=11 // pred_region
        _
      $region16: #{alignment_forward.12} parent=11 // pred_fallthru
        _
      // Predicated region
      $region17: #{alignment_forward.12} parent=11 // pred_check
        %p121 = pneg %p77
      $region18: #{alignment_forward.12} parent=11 // pred_check_branch
        %123 = sbr.rel (%p121) target = $region20
      $region19: #{alignment_forward.12} parent=11 // pred_region
        _
      $region20: #{alignment_forward.12} parent=11 // pred_fallthru
        _
    $region12: #{alignment_forward.12} parent=5 // pred_fallthru
      _
    %p124 = scmp.lt.s32.totalorder %s9, 2
    // Predicated region
    $region21: #{alignment_forward.12} parent=5 // pred_check
      %p125 = pneg %p124
    $region22: #{alignment_forward.12} parent=5 // pred_check_branch
      %127 = sbr.rel (%p125) target = $region24
    $region23: #{alignment_forward.12} parent=5 // pred_region
      // Predicated region
      $region25: #{alignment_forward.12} parent=23 // pred_check
        %p128 = pneg %p29
      $region26: #{alignment_forward.12} parent=23 // pred_check_branch
        %130 = sbr.rel (%p128) target = $region28
      $region27: #{alignment_forward.12} parent=23 // pred_region
        %p131 = scmp.lt.s32.totalorder %s9, 1
        %s132 = scalar_select %p131, %s9, 1
        %s133 = smul.addr %s132, 2
        %s134 = smul.addr %s133, 8
        %s135 = scalar_lea.vmem %s0, %s134
      $region28: #{alignment_forward.12} parent=23 // pred_fallthru
        _
    $region24: #{alignment_forward.12} parent=5 // pred_fallthru
      _
    %p136 = scmp.le.s32.totalorder 1, %s9
    %p137 = scmp.lt.s32.totalorder %s9, 3
    %p138 = pnand %p136, %p137
    %p139 = pneg %p138
    // Predicated region
    $region29: #{alignment_forward.12} parent=5 // pred_check
      _
    $region30: #{alignment_forward.12} parent=5 // pred_check_branch
      %141 = sbr.rel (%p138) target = $region32
    $region31: #{alignment_forward.12} parent=5 // pred_region
      %s142 = ssub.s32 %s9, 1
      %p143 = scmp.lt.s32.totalorder %s14, 1
      %s144 = scalar_select %p143, %s14, 1
      %s145 = smul.addr %s144, 2
      %s146 = smul.addr %s145, 8
      %s147 = scalar_lea.vmem %s0, %s146
      %p148 = pneg %p35
      %p149 = pneg %p32
      %p150 = pneg %p56
      %p151 = pneg %p53
      %p152 = pneg %p77
      %p153 = pneg %p74
      %p154 = pneg %p103
      %p155 = pneg %p100
      %p156 = scmp.lt.s32.totalorder %s14, 1
      %s157 = scalar_select %p156, %s14, 1
      %s158 = smul.addr %s157, 2
      %s159 = smul.addr %s158, 8
      %s160 = scalar_lea.vmem %s3, %s159
      %p161 = scmp.lt.s32.totalorder %s14, 1
      %s162 = scalar_select %p161, %s14, 1
      %s163 = smul.addr %s162, 2
      %s164 = smul.addr %s163, 8
      %s165 = scalar_lea.vmem %s0, %s164
      %p166 = scmp.lt.s32.totalorder %s14, 1
      %s167 = scalar_select %p166, %s14, 1
      %s168 = smul.addr %s167, 2
      %s169 = smul.addr %s168, 8
      %s170 = scalar_lea.vmem %s3, %s169
      %v171 = vld [vmem:[%s165] sm:$0xff]
      %v172 = vld [vmem:[%s165 + $0x8] sm:$0xff]
      %vm173 = vcmask 162816
      %174 = vst.msk [vmem:[#allocation2] sm:$0xff] %vm173, %v171
      %175 = vst.msk [vmem:[#allocation2 + $0x8] sm:$0xff] %vm173, %v172
      %v176 = vld [vmem:[%s165] sm:$0xff]
      %v177 = vld [vmem:[%s165 + $0x8] sm:$0xff]
      %180 = vrot.lane.b32.xlu0 %v176, 103
      %v181 = vpop.permute.xlu0 %180
      %182 = vrot.lane.b32.xlu0 %v177, 103
      %v183 = vpop.permute.xlu0 %182
      %186 = vst.msk [vmem:[#allocation2 + $0x10] sm:$0xff] %vm173, %v181
      %187 = vst.msk [vmem:[#allocation2 + $0x18] sm:$0xff] %vm173, %v183
      %v188 = vld [vmem:[%s165] sm:$0xff]
      %v189 = vld [vmem:[%s165 + $0x8] sm:$0xff]
      %192 = vrot.lane.b32.xlu0 %v188, 127
      %v193 = vpop.permute.xlu0 %192
      %194 = vrot.lane.b32.xlu0 %v189, 127
      %v195 = vpop.permute.xlu0 %194
      %198 = vst.msk [vmem:[#allocation2 + $0x20] sm:$0xff] %vm173, %v193
      %199 = vst.msk [vmem:[#allocation2 + $0x28] sm:$0xff] %vm173, %v195
      %v200 = vld [vmem:[%s165] sm:$0xff]
      %v201 = vld [vmem:[%s165 + $0x8] sm:$0xff]
      %204 = vrot.lane.b32.xlu0 %v200, 78
      %v205 = vpop.permute.xlu0 %204
      %206 = vrot.lane.b32.xlu0 %v201, 78
      %v207 = vpop.permute.xlu0 %206
      %210 = vst.msk [vmem:[#allocation2 + $0x30] sm:$0xff] %vm173, %v205
      %211 = vst.msk [vmem:[#allocation2 + $0x38] sm:$0xff] %vm173, %v207
      %v212 = vld [vmem:[%s165] sm:$0xff]
      %v213 = vld [vmem:[%s165 + $0x8] sm:$0xff]
      %216 = vrot.lane.b32.xlu0 %v212, 53
      %v217 = vpop.permute.xlu0 %216
      %218 = vrot.lane.b32.xlu0 %v213, 53
      %v219 = vpop.permute.xlu0 %218
      %222 = vst.msk [vmem:[#allocation2 + $0x40] sm:$0xff] %vm173, %v217
      %223 = vst.msk [vmem:[#allocation2 + $0x48] sm:$0xff] %vm173, %v219
      %v224 = vld [vmem:[%s165] sm:$0xff]
      %v225 = vld [vmem:[%s165 + $0x8] sm:$0xff]
      %228 = vrot.lane.b32.xlu0 %v224, 77
      %v229 = vpop.permute.xlu0 %228
      %230 = vrot.lane.b32.xlu0 %v225, 77
      %v231 = vpop.permute.xlu0 %230
      %234 = vst.msk [vmem:[#allocation2 + $0x50] sm:$0xff] %vm173, %v229
      %235 = vst.msk [vmem:[#allocation2 + $0x58] sm:$0xff] %vm173, %v231
      %v236 = vld [vmem:[%s165] sm:$0xff]
      %v237 = vld [vmem:[%s165 + $0x8] sm:$0xff]
      %240 = vrot.lane.b32.xlu0 %v236, 123
      %v241 = vpop.permute.xlu0 %240
      %242 = vrot.lane.b32.xlu0 %v237, 123
      %v243 = vpop.permute.xlu0 %242
      %246 = vst.msk [vmem:[#allocation2 + $0x60] sm:$0xff] %vm173, %v241
      %247 = vst.msk [vmem:[#allocation2 + $0x68] sm:$0xff] %vm173, %v243
      %v248 = vld [vmem:[%s165] sm:$0xff]
      %v249 = vld [vmem:[%s165 + $0x8] sm:$0xff]
      %252 = vrot.lane.b32.xlu0 %v248, 98
      %v253 = vpop.permute.xlu0 %252
      %254 = vrot.lane.b32.xlu0 %v249, 98
      %v255 = vpop.permute.xlu0 %254
      %258 = vst.msk [vmem:[#allocation2 + $0x70] sm:$0xff] %vm173, %v253
      %259 = vst.msk [vmem:[#allocation2 + $0x78] sm:$0xff] %vm173, %v255
      %v260 = vld [vmem:[%s165] sm:$0xff]
      %v261 = vld [vmem:[%s165 + $0x8] sm:$0xff]
      %264 = vrot.lane.b32.xlu0 %v260, 122
      %v265 = vpop.permute.xlu0 %264
      %266 = vrot.lane.b32.xlu0 %v261, 122
      %v267 = vpop.permute.xlu0 %266
      %270 = vst.msk [vmem:[#allocation2 + $0x80] sm:$0xff] %vm173, %v265
      %271 = vst.msk [vmem:[#allocation2 + $0x88] sm:$0xff] %vm173, %v267
      %v272 = vld [vmem:[%s1] sm:$0xff]
      %v273 = vld [vmem:[%s1 + $0x8] sm:$0xff]
      %v274 = vld [vmem:[%s1 + $0x10] sm:$0xff]
      %v275 = vld [vmem:[%s1 + $0x18] sm:$0xff]
      %v276 = vld [vmem:[#allocation2] sm:$0xff]
      %v277 = vld [vmem:[#allocation2 + $0x8] sm:$0xff]
      %v278 = vld [vmem:[#allocation2 + $0x10] sm:$0xff]
      %v279 = vld [vmem:[#allocation2 + $0x18] sm:$0xff]
      %v280 = vld [vmem:[#allocation2 + $0x20] sm:$0xff]
      %v281 = vld [vmem:[#allocation2 + $0x28] sm:$0xff]
      %v282 = vld [vmem:[#allocation2 + $0x30] sm:$0xff]
      %v283 = vld [vmem:[#allocation2 + $0x38] sm:$0xff]
      %v284 = vld [vmem:[#allocation2 + $0x40] sm:$0xff]
      %v285 = vld [vmem:[#allocation2 + $0x48] sm:$0xff]
      %v286 = vld [vmem:[#allocation2 + $0x50] sm:$0xff]
      %v287 = vld [vmem:[#allocation2 + $0x58] sm:$0xff]
      %v288 = vld [vmem:[#allocation2 + $0x60] sm:$0xff]
      %v289 = vld [vmem:[#allocation2 + $0x68] sm:$0xff]
      %v290 = vld [vmem:[#allocation2 + $0x70] sm:$0xff]
      %v291 = vld [vmem:[#allocation2 + $0x78] sm:$0xff]
      %v292 = vld [vmem:[#allocation2 + $0x80] sm:$0xff]
      %v293 = vld [vmem:[#allocation2 + $0x88] sm:$0xff]
      %v294 = vld [vmem:[%s2] sm:$0xff]
      %v295 = vld [vmem:[%s2 + $0x8] sm:$0xff]
      %297 = vset.pattern.permute.xlu0 0
      %298 = vperm.xlu0 %297, %v294
      %v299 = vpop.permute.xlu0 %298
      %302 = vset.pattern.permute.xlu0 0
      %303 = vperm.xlu0 %302, %v295
      %v304 = vpop.permute.xlu0 %303
      %vm306 = vcmask 130048
      %v308 = vsel %vm306, %v273, 0
      %v311 = vsel %vm306, %v275, 0
      %313 = vmatprep.subr.mxu0 0.0
      %314 = vmatpush1.msra.mxu0 %v276
      %315 = vmatprep.subr.mxu0 0.0
      %316 = vmatpush1.msra.mxu0 %v277
      %317 = vmatprep.subr.mxu0 0.0
      %318 = vmatpush1.msra.mxu0 %v278
      %319 = vmatprep.subr.mxu0 0.0
      %320 = vmatpush1.msra.mxu0 %v279
      %321 = vmatprep.subr.mxu0 0.0
      %322 = vmatpush1.msra.mxu0 %v280
      %323 = vmatprep.subr.mxu0 0.0
      %324 = vmatpush1.msra.mxu0 %v281
      %325 = vmatprep.subr.mxu0 0.0
      %326 = vmatpush1.msra.mxu0 %v282
      %327 = vmatprep.subr.mxu0 0.0
      %328 = vmatpush1.msra.mxu0 %v283
      %329 = vmatprep.subr.mxu0 0.0
      %330 = vmatpush1.msra.mxu0 %v284
      %331 = vmatprep.subr.mxu0 0.0
      %332 = vmatpush1.msra.mxu0 %v285
      %333 = vmatprep.subr.mxu0 0.0
      %334 = vmatpush1.msra.mxu0 %v286
      %335 = vmatprep.subr.mxu0 0.0
      %336 = vmatpush1.msra.mxu0 %v287
      %337 = vmatprep.subr.mxu0 0.0
      %338 = vmatpush1.msra.mxu0 %v288
      %339 = vmatprep.subr.mxu0 0.0
      %340 = vmatpush1.msra.mxu0 %v289
      %341 = vmatprep.subr.mxu0 0.0
      %342 = vmatpush1.msra.mxu0 %v290
      %343 = vmatprep.subr.mxu0 0.0
      %344 = vmatpush1.msra.mxu0 %v291
      %345 = vmatprep.subr.mxu0 0.0
      %346 = vmatpush1.msra.mxu0 %v292
      %347 = vmatprep.subr.mxu0 0.0
      %348 = vmatpush1.msra.mxu0 %v293
      %349 = vmatprep.subr.mxu0 0.0
      %350 = vmatpush1.msra.mxu0 0.0
      %351 = vmatprep.subr.mxu0 0.0
      %352 = vmatpush1.msra.mxu0 0.0
      %353 = vmatprep.subr.mxu0 0.0
      %354 = vmatpush1.msra.mxu0 0.0
      %355 = vmatprep.subr.mxu0 0.0
      %356 = vmatpush1.msra.mxu0 0.0
      %357 = vmatprep.subr.mxu0 0.0
      %358 = vmatpush1.msra.mxu0 0.0
      %359 = vmatprep.subr.mxu0 0.0
      %360 = vmatpush1.msra.mxu0 0.0
      %361 = vmatprep.subr.mxu0 0.0
      %362 = vmatpush1.msra.mxu0 0.0
      %363 = vmatprep.subr.mxu0 0.0
      %364 = vmatpush1.msra.mxu0 0.0
      %365 = vmatprep.subr.mxu0 0.0
      %366 = vmatpush1.msra.mxu0 0.0
      %367 = vmatprep.subr.mxu0 0.0
      %368 = vmatpush1.msra.mxu0 0.0
      %369 = vmatprep.subr.mxu0 0.0
      %370 = vmatpush1.msra.mxu0 0.0
      %371 = vmatprep.subr.mxu0 0.0
      %372 = vmatpush1.msra.mxu0 0.0
      %373 = vmatprep.subr.mxu0 0.0
      %374 = vmatpush1.msra.mxu0 0.0
      %375 = vmatprep.subr.mxu0 0.0
      %376 = vmatpush1.msra.mxu0 0.0
      %377 = vmatprep.mubr.f32.mxu0 %v308
      %378 = vmatmul.mubr.f32.gmra.mrb[0].mxu0 %v272
      %v379 = vpop.f32.mrb[0].mxu0
      %v380 = vadd.f32 %v299, %v379
      %v381 = vpop.f32.mrb[0].mxu0
      %382 = vmatprep.mubr.f32.mxu0 %v311
      %383 = vmatmul.mubr.f32.gmra.mrb[0].mxu0 %v274
      %v384 = vpop.f32.mrb[0].mxu0
      %v385 = vadd.f32 %v304, %v384
      %v386 = vpop.f32.mrb[0].mxu0
      %387 = vdwg.mxu0
      %vm388 = vcmp.ge.f32.partialorder %v380, 0.0
      %vm389 = vcmp.ge.f32.partialorder %v385, 0.0
      %v390 = vmul.f32 %v380, 0.1
      %v391 = vmul.f32 %v385, 0.1
      %v392 = vsel %vm388, %v380, %v390
      %v393 = vsel %vm389, %v385, %v391
      %394 = vst.msk [vmem:[%s170] sm:$0xff] %vm173, %v392
      %395 = vst.msk [vmem:[%s170 + $0x8] sm:$0xff] %vm173, %v393
      %p396 = scmp.lt.s32.totalorder %s14, 1
      %s397 = scalar_select %p396, %s14, 1
      %s398 = smul.addr %s397, 2
      %s399 = smul.addr %s398, 8
      %s400 = scalar_lea.vmem %s3, %s399
      // Predicated region
      $region33: #{alignment_forward.12} parent=31 // pred_check
        %p401 = pneg %p100
      $region34: #{alignment_forward.12} parent=31 // pred_check_branch
        %403 = sbr.rel (%p401) target = $region36
      $region35: #{alignment_forward.12} parent=31 // pred_region
        _
      $region36: #{alignment_forward.12} parent=31 // pred_fallthru
        _
    $region32: #{alignment_forward.12} parent=5 // pred_fallthru
      _
    %p404 = scmp.le.s32.totalorder 2, %s9
    // Predicated region
    $region37: #{alignment_forward.12} parent=5 // pred_check
      %p405 = pneg %p404
    $region38: #{alignment_forward.12} parent=5 // pred_check_branch
      %407 = sbr.rel (%p405) target = $region40
    $region39: #{alignment_forward.12} parent=5 // pred_region
      %s408 = ssub.s32 %s9, 2
      // Predicated region
      $region41: #{alignment_forward.12} parent=39 // pred_check
        %p409 = pneg %p106
      $region42: #{alignment_forward.12} parent=39 // pred_check_branch
        %411 = sbr.rel (%p409) target = $region44
      $region43: #{alignment_forward.12} parent=39 // pred_region
        %p412 = scmp.lt.s32.totalorder %s15, 1
        %s413 = scalar_select %p412, %s15, 1
        %s414 = smul.addr %s413, 2
        %s415 = smul.addr %s414, 8
        %s416 = scalar_lea.vmem %s3, %s415
      $region44: #{alignment_forward.12} parent=39 // pred_fallthru
        _
    $region40: #{alignment_forward.12} parent=5 // pred_fallthru
      _
  $region6: #{alignment_forward.12} parent=0 // loop_footer
    %s13 = sadd.s32 1, %s9
  $region7: #{alignment_forward.12} parent=0 // loop_footer_branch
    %8 = sbr.rel target = $region3
  $region8: #{alignment_forward.12} parent=0 // loop_exit
    _

// kernel: alignment_forward.13
$region0: #{alignment_forward.13}
  #allocation0 [shape = 'u32[]', space=smem, size = 0x4, offset = 0x4, fixed_abs, tag = 'smem constant byte address 0x4 - core index']
  #allocation1 [shape = 'u32[144,128]{1,0:T(1,128)}', space=vmem, size = 0x12000, scoped, tag = 'internal scratch']
  #allocation2 [shape = 'f32[144,16]{1,0:T(8,128)}', space=vmem, size = 0x12000, scoped, tag = 'scratch operand']
  %s0 = inlined_call_operand.vmem [shape: f32[2,16,26], index: 0, kind: input, shape index: {}]
  %s1 = inlined_call_operand.vmem [shape: f32[16,144], index: 1, kind: input, shape index: {}]
  %s2 = inlined_call_operand.vmem [shape: f32[16,1], index: 2, kind: input, shape index: {}]
  %s3 = inlined_call_operand.vmem [shape: f32[2,16,16], index: 3, kind: output, shape index: {}]
  %s4 = sld [smem:[#allocation0]]
  $region45: #{alignment_forward.13} parent=0
    _
  %s6 = ssub.s32 1, %s4
  %s7 = scalar_select 0, %s6, %s4
  loop: start=0, step=1, limit=4
  $region2: #{alignment_forward.13} parent=0 // loop_pre_header
    _
  $region3: #{alignment_forward.13} parent=0 // loop_header
    %s9 = sphi 0, %s13
    %p10 = scmp.ge.s32.totalorder %s9, 4
    %s19 = sphi 0, %s21
    %s22 = sphi 0, %s19
    %s23 = sphi 0, %s22
    %s39 = sphi 0, %s23
    %s43 = sphi 0, %s43
    %s45 = sphi 0, %s43
    %s46 = sphi 0, %s45
    %s60 = sphi 0, %s46
    %s64 = sphi 0, %s64
    %s66 = sphi 0, %s64
    %s67 = sphi 0, %s66
    %s81 = sphi 0, %s67
    %s87 = sphi 0, %s89
    %s90 = sphi 0, %s87
    %s91 = sphi 0, %s90
    %s107 = sphi 0, %s91
  $region4: #{alignment_forward.13} parent=0 // loop_header_branch
    %12 = sbr.rel (%p10) target = $region8
  $region5: #{alignment_forward.13} parent=0 // loop_body
    %s14 = ssub.s32 %s9, 1
    %s15 = ssub.s32 %s9, 2
    %s16 = sadd.s32 %s9, 1
    %s17 = ssub.s32 %s9, %s16
    %p18 = scmp.eq.s32.totalorder %s17, 0
    %s20 = sadd.s32 %s19, 1
    %s21 = scalar_select %p18, %s19, %s20
    %p24 = pneg %p18
    %p25 = scmp.eq.s32.totalorder %s9, 1
    %p26 = por %p24, %p25
    %p27 = scmp.ne.s32.totalorder %s19, %s22
    %p28 = scmp.eq.s32.totalorder %s9, 0
    %p29 = por %p27, %p28
    %p30 = scmp.ne.s32.totalorder %s19, %s22
    %p31 = scmp.eq.s32.totalorder %s14, 1
    %p32 = por %p30, %p31
    %p33 = scmp.ne.s32.totalorder %s22, %s23
    %p34 = scmp.eq.s32.totalorder %s14, 0
    %p35 = por %p33, %p34
    %p36 = scmp.ne.s32.totalorder %s22, %s23
    %p37 = scmp.eq.s32.totalorder %s15, 1
    %p38 = por %p36, %p37
    %p40 = scmp.ne.s32.totalorder %s23, %s39
    %p41 = scmp.eq.s32.totalorder %s15, 0
    %p42 = por %p40, %p41
    %s44 = sadd.s32 %s43, 1
    %p47 = scmp.eq.s32.totalorder %s9, 1
    %p48 = scmp.ne.s32.totalorder %s43, %s45
    %p49 = scmp.eq.s32.totalorder %s9, 0
    %p50 = por %p48, %p49
    %p51 = scmp.ne.s32.totalorder %s43, %s45
    %p52 = scmp.eq.s32.totalorder %s14, 1
    %p53 = por %p51, %p52
    %p54 = scmp.ne.s32.totalorder %s45, %s46
    %p55 = scmp.eq.s32.totalorder %s14, 0
    %p56 = por %p54, %p55
    %p57 = scmp.ne.s32.totalorder %s45, %s46
    %p58 = scmp.eq.s32.totalorder %s15, 1
    %p59 = por %p57, %p58
    %p61 = scmp.ne.s32.totalorder %s46, %s60
    %p62 = scmp.eq.s32.totalorder %s15, 0
    %p63 = por %p61, %p62
    %s65 = sadd.s32 %s64, 1
    %p68 = scmp.eq.s32.totalorder %s9, 1
    %p69 = scmp.ne.s32.totalorder %s64, %s66
    %p70 = scmp.eq.s32.totalorder %s9, 0
    %p71 = por %p69, %p70
    %p72 = scmp.ne.s32.totalorder %s64, %s66
    %p73 = scmp.eq.s32.totalorder %s14, 1
    %p74 = por %p72, %p73
    %p75 = scmp.ne.s32.totalorder %s66, %s67
    %p76 = scmp.eq.s32.totalorder %s14, 0
    %p77 = por %p75, %p76
    %p78 = scmp.ne.s32.totalorder %s66, %s67
    %p79 = scmp.eq.s32.totalorder %s15, 1
    %p80 = por %p78, %p79
    %p82 = scmp.ne.s32.totalorder %s67, %s81
    %p83 = scmp.eq.s32.totalorder %s15, 0
    %p84 = por %p82, %p83
    %s85 = ssub.s32 %s9, %s16
    %p86 = scmp.eq.s32.totalorder %s85, 0
    %s88 = sadd.s32 %s87, 1
    %s89 = scalar_select %p86, %s87, %s88
    %p92 = pneg %p86
    %p93 = scmp.eq.s32.totalorder %s9, 1
    %p94 = por %p92, %p93
    %p95 = scmp.ne.s32.totalorder %s87, %s90
    %p96 = scmp.eq.s32.totalorder %s9, 0
    %p97 = por %p95, %p96
    %p98 = scmp.ne.s32.totalorder %s87, %s90
    %p99 = scmp.eq.s32.totalorder %s14, 1
    %p100 = por %p98, %p99
    %p101 = scmp.ne.s32.totalorder %s90, %s91
    %p102 = scmp.eq.s32.totalorder %s14, 0
    %p103 = por %p101, %p102
    %p104 = scmp.ne.s32.totalorder %s90, %s91
    %p105 = scmp.eq.s32.totalorder %s15, 1
    %p106 = por %p104, %p105
    %p108 = scmp.ne.s32.totalorder %s91, %s107
    %p109 = scmp.eq.s32.totalorder %s15, 0
    %p110 = por %p108, %p109
    %p111 = scmp.le.s32.totalorder 1, %s9
    %p112 = scmp.lt.s32.totalorder %s9, 3
    %p113 = pnand %p111, %p112
    %p114 = pneg %p113
    // Predicated region
    $region9: #{alignment_forward.13} parent=5 // pred_check
      _
    $region10: #{alignment_forward.13} parent=5 // pred_check_branch
      %116 = sbr.rel (%p113) target = $region12
    $region11: #{alignment_forward.13} parent=5 // pred_region
      %s117 = ssub.s32 %s9, 1
      // Predicated region
      $region13: #{alignment_forward.13} parent=11 // pred_check
        %p118 = pneg %p56
      $region14: #{alignment_forward.13} parent=11 // pred_check_branch
        %120 = sbr.rel (%p118) target = $region16
      $region15: #{alignment_forward.13} parent=11 // pred_region
        _
      $region16: #{alignment_forward.13} parent=11 // pred_fallthru
        _
      // Predicated region
      $region17: #{alignment_forward.13} parent=11 // pred_check
        %p121 = pneg %p77
      $region18: #{alignment_forward.13} parent=11 // pred_check_branch
        %123 = sbr.rel (%p121) target = $region20
      $region19: #{alignment_forward.13} parent=11 // pred_region
        _
      $region20: #{alignment_forward.13} parent=11 // pred_fallthru
        _
    $region12: #{alignment_forward.13} parent=5 // pred_fallthru
      _
    %p124 = scmp.lt.s32.totalorder %s9, 2
    // Predicated region
    $region21: #{alignment_forward.13} parent=5 // pred_check
      %p125 = pneg %p124
    $region22: #{alignment_forward.13} parent=5 // pred_check_branch
      %127 = sbr.rel (%p125) target = $region24
    $region23: #{alignment_forward.13} parent=5 // pred_region
      // Predicated region
      $region25: #{alignment_forward.13} parent=23 // pred_check
        %p128 = pneg %p29
      $region26: #{alignment_forward.13} parent=23 // pred_check_branch
        %130 = sbr.rel (%p128) target = $region28
      $region27: #{alignment_forward.13} parent=23 // pred_region
        %p131 = scmp.lt.s32.totalorder %s9, 1
        %s132 = scalar_select %p131, %s9, 1
        %s133 = smul.addr %s132, 2
        %s134 = smul.addr %s133, 8
        %s135 = scalar_lea.vmem %s0, %s134
      $region28: #{alignment_forward.13} parent=23 // pred_fallthru
        _
    $region24: #{alignment_forward.13} parent=5 // pred_fallthru
      _
    %p136 = scmp.le.s32.totalorder 1, %s9
    %p137 = scmp.lt.s32.totalorder %s9, 3
    %p138 = pnand %p136, %p137
    %p139 = pneg %p138
    // Predicated region
    $region29: #{alignment_forward.13} parent=5 // pred_check
      _
    $region30: #{alignment_forward.13} parent=5 // pred_check_branch
      %141 = sbr.rel (%p138) target = $region32
    $region31: #{alignment_forward.13} parent=5 // pred_region
      %s142 = ssub.s32 %s9, 1
      %p143 = scmp.lt.s32.totalorder %s14, 1
      %s144 = scalar_select %p143, %s14, 1
      %s145 = smul.addr %s144, 2
      %s146 = smul.addr %s145, 8
      %s147 = scalar_lea.vmem %s0, %s146
      %p148 = pneg %p35
      %p149 = pneg %p32
      %p150 = pneg %p56
      %p151 = pneg %p53
      %p152 = pneg %p77
      %p153 = pneg %p74
      %p154 = pneg %p103
      %p155 = pneg %p100
      %p156 = scmp.lt.s32.totalorder %s14, 1
      %s157 = scalar_select %p156, %s14, 1
      %s158 = smul.addr %s157, 2
      %s159 = smul.addr %s158, 8
      %s160 = scalar_lea.vmem %s3, %s159
      %p161 = scmp.lt.s32.totalorder %s14, 1
      %s162 = scalar_select %p161, %s14, 1
      %s163 = smul.addr %s162, 2
      %s164 = smul.addr %s163, 8
      %s165 = scalar_lea.vmem %s0, %s164
      %p166 = scmp.lt.s32.totalorder %s14, 1
      %s167 = scalar_select %p166, %s14, 1
      %s168 = smul.addr %s167, 2
      %s169 = smul.addr %s168, 8
      %s170 = scalar_lea.vmem %s3, %s169
      %v171 = vlaneseq
      %v172 = vand.u32 %v171, 127
      %vm173 = vcmp.lt.s32.totalorder %v172, 0
      %v174 = vsub.s32 0, %v172
      %v175 = vsel %vm173, %v174, %v172
      %v176 = vshrl.u32 %v175, 2
      %v177 = vand.u32 %v175, 3
      %v178 = vsub.s32 0, %v177
      %v179 = vsel %vm173, %v178, %v177
      %vm180 = vcmp.ne.s32.totalorder %v179, 0
      %vm181 = vcmp.lt.s32.totalorder %v179, 0
      %vm182 = vmand %vm181, %vm180
      %v183 = vadd.s32 %v179, 4
      %v184 = vsel %vm182, %v183, %v179
      %vm185 = vcmp.ne.s32.totalorder %v184, 0
      %vm186 = vcmp.ne.s32.totalorder %v184, 3
      %v187 = vld [vmem:[%s165] sm:$0xff]
      %v188 = vld [vmem:[%s165 + $0x8] sm:$0xff]
      %v189 = vsel %vm185, 1, 0
      %vm190 = vcmp.eq.s32.totalorder %v189, 1
      %v191 = vsel %vm190, %v187, 0.0
      %v192 = vsel %vm190, %v188, 0.0
      %vm193 = vcmask 130048
      %194 = vst.msk [vmem:[#allocation2] sm:$0xff] %vm193, %v191
      %195 = vst.msk [vmem:[#allocation2 + $0x8] sm:$0xff] %vm193, %v192
      %v196 = vld [vmem:[%s165] sm:$0xff]
      %v197 = vld [vmem:[%s165 + $0x8] sm:$0xff]
      %200 = vrot.lane.b32.xlu0 %v196, 127
      %v201 = vpop.permute.xlu0 %200
      %202 = vrot.lane.b32.xlu0 %v197, 127
      %v203 = vpop.permute.xlu0 %202
      %206 = vst.msk [vmem:[#allocation2 + $0x10] sm:$0xff] %vm193, %v201
      %207 = vst.msk [vmem:[#allocation2 + $0x18] sm:$0xff] %vm193, %v203
      %v208 = vld [vmem:[%s165] sm:$0xff]
      %v209 = vld [vmem:[%s165 + $0x8] sm:$0xff]
      %v210 = vsel %vm186, 1, 0
      %vm211 = vcmp.eq.s32.totalorder %v210, 1
      %214 = vrot.lane.b32.xlu0 %v208, 126
      %v215 = vpop.permute.xlu0 %214
      %216 = vrot.lane.b32.xlu0 %v209, 126
      %v217 = vpop.permute.xlu0 %216
      %v220 = vsel %vm211, %v215, 0.0
      %v221 = vsel %vm211, %v217, 0.0
      %222 = vst.msk [vmem:[#allocation2 + $0x20] sm:$0xff] %vm193, %v220
      %223 = vst.msk [vmem:[#allocation2 + $0x28] sm:$0xff] %vm193, %v221
      %v224 = vld [vmem:[%s165] sm:$0xff]
      %v225 = vld [vmem:[%s165 + $0x8] sm:$0xff]
      %228 = vrot.lane.b32.xlu0 %v224, 124
      %v229 = vpop.permute.xlu0 %228
      %230 = vrot.lane.b32.xlu0 %v225, 124
      %v231 = vpop.permute.xlu0 %230
      %v234 = vsel %vm190, %v229, 0.0
      %v235 = vsel %vm190, %v231, 0.0
      %236 = vst.msk [vmem:[#allocation2 + $0x30] sm:$0xff] %vm193, %v234
      %237 = vst.msk [vmem:[#allocation2 + $0x38] sm:$0xff] %vm193, %v235
      %v238 = vld [vmem:[%s165] sm:$0xff]
      %v239 = vld [vmem:[%s165 + $0x8] sm:$0xff]
      %242 = vrot.lane.b32.xlu0 %v238, 123
      %v243 = vpop.permute.xlu0 %242
      %244 = vrot.lane.b32.xlu0 %v239, 123
      %v245 = vpop.permute.xlu0 %244
      %248 = vst.msk [vmem:[#allocation2 + $0x40] sm:$0xff] %vm193, %v243
      %249 = vst.msk [vmem:[#allocation2 + $0x48] sm:$0xff] %vm193, %v245
      %v250 = vld [vmem:[%s165] sm:$0xff]
      %v251 = vld [vmem:[%s165 + $0x8] sm:$0xff]
      %254 = vrot.lane.b32.xlu0 %v250, 122
      %v255 = vpop.permute.xlu0 %254
      %256 = vrot.lane.b32.xlu0 %v251, 122
      %v257 = vpop.permute.xlu0 %256
      %v260 = vsel %vm211, %v255, 0.0
      %v261 = vsel %vm211, %v257, 0.0
      %262 = vst.msk [vmem:[#allocation2 + $0x50] sm:$0xff] %vm193, %v260
      %263 = vst.msk [vmem:[#allocation2 + $0x58] sm:$0xff] %vm193, %v261
      %v264 = vld [vmem:[%s165] sm:$0xff]
      %v265 = vld [vmem:[%s165 + $0x8] sm:$0xff]
      %268 = vrot.lane.b32.xlu0 %v264, 120
      %v269 = vpop.permute.xlu0 %268
      %270 = vrot.lane.b32.xlu0 %v265, 120
      %v271 = vpop.permute.xlu0 %270
      %v274 = vsel %vm190, %v269, 0.0
      %v275 = vsel %vm190, %v271, 0.0
      %276 = vst.msk [vmem:[#allocation2 + $0x60] sm:$0xff] %vm193, %v274
      %277 = vst.msk [vmem:[#allocation2 + $0x68] sm:$0xff] %vm193, %v275
      %v278 = vld [vmem:[%s165] sm:$0xff]
      %v279 = vld [vmem:[%s165 + $0x8] sm:$0xff]
      %282 = vrot.lane.b32.xlu0 %v278, 119
      %v283 = vpop.permute.xlu0 %282
      %284 = vrot.lane.b32.xlu0 %v279, 119
      %v285 = vpop.permute.xlu0 %284
      %288 = vst.msk [vmem:[#allocation2 + $0x70] sm:$0xff] %vm193, %v283
      %289 = vst.msk [vmem:[#allocation2 + $0x78] sm:$0xff] %vm193, %v285
      %v290 = vld [vmem:[%s165] sm:$0xff]
      %v291 = vld [vmem:[%s165 + $0x8] sm:$0xff]
      %294 = vrot.lane.b32.xlu0 %v290, 118
      %v295 = vpop.permute.xlu0 %294
      %296 = vrot.lane.b32.xlu0 %v291, 118
      %v297 = vpop.permute.xlu0 %296
      %v300 = vsel %vm211, %v295, 0.0
      %v301 = vsel %vm211, %v297, 0.0
      %302 = vst.msk [vmem:[#allocation2 + $0x80] sm:$0xff] %vm193, %v300
      %303 = vst.msk [vmem:[#allocation2 + $0x88] sm:$0xff] %vm193, %v301
      %v304 = vld [vmem:[%s1] sm:$0xff]
      %v305 = vld [vmem:[%s1 + $0x8] sm:$0xff]
      %v306 = vld [vmem:[%s1 + $0x10] sm:$0xff]
      %v307 = vld [vmem:[%s1 + $0x18] sm:$0xff]
      %v308 = vld [vmem:[#allocation2] sm:$0xff]
      %v309 = vld [vmem:[#allocation2 + $0x8] sm:$0xff]
      %v310 = vld [vmem:[#allocation2 + $0x10] sm:$0xff]
      %v311 = vld [vmem:[#allocation2 + $0x18] sm:$0xff]
      %v312 = vld [vmem:[#allocation2 + $0x20] sm:$0xff]
      %v313 = vld [vmem:[#allocation2 + $0x28] sm:$0xff]
      %v314 = vld [vmem:[#allocation2 + $0x30] sm:$0xff]
      %v315 = vld [vmem:[#allocation2 + $0x38] sm:$0xff]
      %v316 = vld [vmem:[#allocation2 + $0x40] sm:$0xff]
      %v317 = vld [vmem:[#allocation2 + $0x48] sm:$0xff]
      %v318 = vld [vmem:[#allocation2 + $0x50] sm:$0xff]
      %v319 = vld [vmem:[#allocation2 + $0x58] sm:$0xff]
      %v320 = vld [vmem:[#allocation2 + $0x60] sm:$0xff]
      %v321 = vld [vmem:[#allocation2 + $0x68] sm:$0xff]
      %v322 = vld [vmem:[#allocation2 + $0x70] sm:$0xff]
      %v323 = vld [vmem:[#allocation2 + $0x78] sm:$0xff]
      %v324 = vld [vmem:[#allocation2 + $0x80] sm:$0xff]
      %v325 = vld [vmem:[#allocation2 + $0x88] sm:$0xff]
      %v326 = vld [vmem:[%s2] sm:$0xff]
      %v327 = vld [vmem:[%s2 + $0x8] sm:$0xff]
      %329 = vset.pattern.permute.xlu0 0
      %330 = vperm.xlu0 %329, %v326
      %v331 = vpop.permute.xlu0 %330
      %334 = vset.pattern.permute.xlu0 0
      %335 = vperm.xlu0 %334, %v327
      %v336 = vpop.permute.xlu0 %335
      %v339 = vsel %vm193, %v305, 0
      %v342 = vsel %vm193, %v307, 0
      %344 = vmatprep.subr.mxu0 0.0
      %345 = vmatpush1.msra.mxu0 %v308
      %346 = vmatprep.subr.mxu0 0.0
      %347 = vmatpush1.msra.mxu0 %v309
      %348 = vmatprep.subr.mxu0 0.0
      %349 = vmatpush1.msra.mxu0 %v310
      %350 = vmatprep.subr.mxu0 0.0
      %351 = vmatpush1.msra.mxu0 %v311
      %352 = vmatprep.subr.mxu0 0.0
      %353 = vmatpush1.msra.mxu0 %v312
      %354 = vmatprep.subr.mxu0 0.0
      %355 = vmatpush1.msra.mxu0 %v313
      %356 = vmatprep.subr.mxu0 0.0
      %357 = vmatpush1.msra.mxu0 %v314
      %358 = vmatprep.subr.mxu0 0.0
      %359 = vmatpush1.msra.mxu0 %v315
      %360 = vmatprep.subr.mxu0 0.0
      %361 = vmatpush1.msra.mxu0 %v316
      %362 = vmatprep.subr.mxu0 0.0
      %363 = vmatpush1.msra.mxu0 %v317
      %364 = vmatprep.subr.mxu0 0.0
      %365 = vmatpush1.msra.mxu0 %v318
      %366 = vmatprep.subr.mxu0 0.0
      %367 = vmatpush1.msra.mxu0 %v319
      %368 = vmatprep.subr.mxu0 0.0
      %369 = vmatpush1.msra.mxu0 %v320
      %370 = vmatprep.subr.mxu0 0.0
      %371 = vmatpush1.msra.mxu0 %v321
      %372 = vmatprep.subr.mxu0 0.0
      %373 = vmatpush1.msra.mxu0 %v322
      %374 = vmatprep.subr.mxu0 0.0
      %375 = vmatpush1.msra.mxu0 %v323
      %376 = vmatprep.subr.mxu0 0.0
      %377 = vmatpush1.msra.mxu0 %v324
      %378 = vmatprep.subr.mxu0 0.0
      %379 = vmatpush1.msra.mxu0 %v325
      %380 = vmatprep.subr.mxu0 0.0
      %381 = vmatpush1.msra.mxu0 0.0
      %382 = vmatprep.subr.mxu0 0.0
      %383 = vmatpush1.msra.mxu0 0.0
      %384 = vmatprep.subr.mxu0 0.0
      %385 = vmatpush1.msra.mxu0 0.0
      %386 = vmatprep.subr.mxu0 0.0
      %387 = vmatpush1.msra.mxu0 0.0
      %388 = vmatprep.subr.mxu0 0.0
      %389 = vmatpush1.msra.mxu0 0.0
      %390 = vmatprep.subr.mxu0 0.0
      %391 = vmatpush1.msra.mxu0 0.0
      %392 = vmatprep.subr.mxu0 0.0
      %393 = vmatpush1.msra.mxu0 0.0
      %394 = vmatprep.subr.mxu0 0.0
      %395 = vmatpush1.msra.mxu0 0.0
      %396 = vmatprep.subr.mxu0 0.0
      %397 = vmatpush1.msra.mxu0 0.0
      %398 = vmatprep.subr.mxu0 0.0
      %399 = vmatpush1.msra.mxu0 0.0
      %400 = vmatprep.subr.mxu0 0.0
      %401 = vmatpush1.msra.mxu0 0.0
      %402 = vmatprep.subr.mxu0 0.0
      %403 = vmatpush1.msra.mxu0 0.0
      %404 = vmatprep.subr.mxu0 0.0
      %405 = vmatpush1.msra.mxu0 0.0
      %406 = vmatprep.subr.mxu0 0.0
      %407 = vmatpush1.msra.mxu0 0.0
      %408 = vmatprep.mubr.f32.mxu0 %v339
      %409 = vmatmul.mubr.f32.gmra.mrb[0].mxu0 %v304
      %v410 = vpop.f32.mrb[0].mxu0
      %v411 = vadd.f32 %v331, %v410
      %v412 = vpop.f32.mrb[0].mxu0
      %413 = vmatprep.mubr.f32.mxu0 %v342
      %414 = vmatmul.mubr.f32.gmra.mrb[0].mxu0 %v306
      %v415 = vpop.f32.mrb[0].mxu0
      %v416 = vadd.f32 %v336, %v415
      %v417 = vpop.f32.mrb[0].mxu0
      %418 = vdwg.mxu0
      %vm419 = vcmp.ge.f32.partialorder %v411, 0.0
      %vm420 = vcmp.ge.f32.partialorder %v416, 0.0
      %v421 = vmul.f32 %v411, 0.1
      %v422 = vmul.f32 %v416, 0.1
      %v423 = vsel %vm419, %v411, %v421
      %v424 = vsel %vm420, %v416, %v422
      %425 = vst.msk [vmem:[%s170] sm:$0xff] %vm193, %v423
      %426 = vst.msk [vmem:[%s170 + $0x8] sm:$0xff] %vm193, %v424
      %p427 = scmp.lt.s32.totalorder %s14, 1
      %s428 = scalar_select %p427, %s14, 1
      %s429 = smul.addr %s428, 2
      %s430 = smul.addr %s429, 8
      %s431 = scalar_lea.vmem %s3, %s430
      // Predicated region
      $region33: #{alignment_forward.13} parent=31 // pred_check
        %p432 = pneg %p100
      $region34: #{alignment_forward.13} parent=31 // pred_check_branch
        %434 = sbr.rel (%p432) target = $region36
      $region35: #{alignment_forward.13} parent=31 // pred_region
        _
      $region36: #{alignment_forward.13} parent=31 // pred_fallthru
        _
    $region32: #{alignment_forward.13} parent=5 // pred_fallthru
      _
    %p435 = scmp.le.s32.totalorder 2, %s9
    // Predicated region
    $region37: #{alignment_forward.13} parent=5 // pred_check
      %p436 = pneg %p435
    $region38: #{alignment_forward.13} parent=5 // pred_check_branch
      %438 = sbr.rel (%p436) target = $region40
    $region39: #{alignment_forward.13} parent=5 // pred_region
      %s439 = ssub.s32 %s9, 2
      // Predicated region
      $region41: #{alignment_forward.13} parent=39 // pred_check
        %p440 = pneg %p106
      $region42: #{alignment_forward.13} parent=39 // pred_check_branch
        %442 = sbr.rel (%p440) target = $region44
      $region43: #{alignment_forward.13} parent=39 // pred_region
        %p443 = scmp.lt.s32.totalorder %s15, 1
        %s444 = scalar_select %p443, %s15, 1
        %s445 = smul.addr %s444, 2
        %s446 = smul.addr %s445, 8
        %s447 = scalar_lea.vmem %s3, %s446
      $region44: #{alignment_forward.13} parent=39 // pred_fallthru
        _
    $region40: #{alignment_forward.13} parent=5 // pred_fallthru
      _
  $region6: #{alignment_forward.13} parent=0 // loop_footer
    %s13 = sadd.s32 1, %s9
  $region7: #{alignment_forward.13} parent=0 // loop_footer_branch
    %8 = sbr.rel target = $region3
  $region8: #{alignment_forward.13} parent=0 // loop_exit
    _

// kernel: alignment_forward.14
$region0: #{alignment_forward.14}
  #allocation0 [shape = 'u32[]', space=smem, size = 0x4, offset = 0x4, fixed_abs, tag = 'smem constant byte address 0x4 - core index']
  #allocation1 [shape = 'u32[144,128]{1,0:T(1,128)}', space=vmem, size = 0x12000, scoped, tag = 'internal scratch']
  #allocation2 [shape = 'f32[288,64]{1,0:T(8,128)}', space=vmem, size = 0x24000, scoped, tag = 'scratch operand']
  %s0 = inlined_call_operand.vmem [shape: f32[2,16,82], index: 0, kind: input, shape index: {}]
  %s1 = inlined_call_operand.vmem [shape: f32[2,16,82], index: 1, kind: input, shape index: {}]
  %s2 = inlined_call_operand.vmem [shape: f32[16,288], index: 2, kind: input, shape index: {}]
  %s3 = inlined_call_operand.vmem [shape: f32[16,1], index: 3, kind: input, shape index: {}]
  %s4 = inlined_call_operand.vmem [shape: f32[2,16,64], index: 4, kind: output, shape index: {}]
  %s5 = sld [smem:[#allocation0]]
  $region49: #{alignment_forward.14} parent=0
    _
  %s7 = ssub.s32 1, %s5
  %s8 = scalar_select 0, %s7, %s5
  loop: start=0, step=1, limit=4
  $region2: #{alignment_forward.14} parent=0 // loop_pre_header
    _
  $region3: #{alignment_forward.14} parent=0 // loop_header
    %s10 = sphi 0, %s14
    %p11 = scmp.ge.s32.totalorder %s10, 4
    %s20 = sphi 0, %s22
    %s23 = sphi 0, %s20
    %s24 = sphi 0, %s23
    %s40 = sphi 0, %s24
    %s46 = sphi 0, %s48
    %s49 = sphi 0, %s46
    %s50 = sphi 0, %s49
    %s66 = sphi 0, %s50
    %s70 = sphi 0, %s70
    %s72 = sphi 0, %s70
    %s73 = sphi 0, %s72
    %s87 = sphi 0, %s73
    %s91 = sphi 0, %s91
    %s93 = sphi 0, %s91
    %s94 = sphi 0, %s93
    %s108 = sphi 0, %s94
    %s114 = sphi 0, %s116
    %s117 = sphi 0, %s114
    %s118 = sphi 0, %s117
    %s134 = sphi 0, %s118
  $region4: #{alignment_forward.14} parent=0 // loop_header_branch
    %13 = sbr.rel (%p11) target = $region8
  $region5: #{alignment_forward.14} parent=0 // loop_body
    %s15 = ssub.s32 %s10, 1
    %s16 = ssub.s32 %s10, 2
    %s17 = sadd.s32 %s10, 1
    %s18 = ssub.s32 %s10, %s17
    %p19 = scmp.eq.s32.totalorder %s18, 0
    %s21 = sadd.s32 %s20, 1
    %s22 = scalar_select %p19, %s20, %s21
    %p25 = pneg %p19
    %p26 = scmp.eq.s32.totalorder %s10, 1
    %p27 = por %p25, %p26
    %p28 = scmp.ne.s32.totalorder %s20, %s23
    %p29 = scmp.eq.s32.totalorder %s10, 0
    %p30 = por %p28, %p29
    %p31 = scmp.ne.s32.totalorder %s20, %s23
    %p32 = scmp.eq.s32.totalorder %s15, 1
    %p33 = por %p31, %p32
    %p34 = scmp.ne.s32.totalorder %s23, %s24
    %p35 = scmp.eq.s32.totalorder %s15, 0
    %p36 = por %p34, %p35
    %p37 = scmp.ne.s32.totalorder %s23, %s24
    %p38 = scmp.eq.s32.totalorder %s16, 1
    %p39 = por %p37, %p38
    %p41 = scmp.ne.s32.totalorder %s24, %s40
    %p42 = scmp.eq.s32.totalorder %s16, 0
    %p43 = por %p41, %p42
    %s44 = ssub.s32 %s10, %s17
    %p45 = scmp.eq.s32.totalorder %s44, 0
    %s47 = sadd.s32 %s46, 1
    %s48 = scalar_select %p45, %s46, %s47
    %p51 = pneg %p45
    %p52 = scmp.eq.s32.totalorder %s10, 1
    %p53 = por %p51, %p52
    %p54 = scmp.ne.s32.totalorder %s46, %s49
    %p55 = scmp.eq.s32.totalorder %s10, 0
    %p56 = por %p54, %p55
    %p57 = scmp.ne.s32.totalorder %s46, %s49
    %p58 = scmp.eq.s32.totalorder %s15, 1
    %p59 = por %p57, %p58
    %p60 = scmp.ne.s32.totalorder %s49, %s50
    %p61 = scmp.eq.s32.totalorder %s15, 0
    %p62 = por %p60, %p61
    %p63 = scmp.ne.s32.totalorder %s49, %s50
    %p64 = scmp.eq.s32.totalorder %s16, 1
    %p65 = por %p63, %p64
    %p67 = scmp.ne.s32.totalorder %s50, %s66
    %p68 = scmp.eq.s32.totalorder %s16, 0
    %p69 = por %p67, %p68
    %s71 = sadd.s32 %s70, 1
    %p74 = scmp.eq.s32.totalorder %s10, 1
    %p75 = scmp.ne.s32.totalorder %s70, %s72
    %p76 = scmp.eq.s32.totalorder %s10, 0
    %p77 = por %p75, %p76
    %p78 = scmp.ne.s32.totalorder %s70, %s72
    %p79 = scmp.eq.s32.totalorder %s15, 1
    %p80 = por %p78, %p79
    %p81 = scmp.ne.s32.totalorder %s72, %s73
    %p82 = scmp.eq.s32.totalorder %s15, 0
    %p83 = por %p81, %p82
    %p84 = scmp.ne.s32.totalorder %s72, %s73
    %p85 = scmp.eq.s32.totalorder %s16, 1
    %p86 = por %p84, %p85
    %p88 = scmp.ne.s32.totalorder %s73, %s87
    %p89 = scmp.eq.s32.totalorder %s16, 0
    %p90 = por %p88, %p89
    %s92 = sadd.s32 %s91, 1
    %p95 = scmp.eq.s32.totalorder %s10, 1
    %p96 = scmp.ne.s32.totalorder %s91, %s93
    %p97 = scmp.eq.s32.totalorder %s10, 0
    %p98 = por %p96, %p97
    %p99 = scmp.ne.s32.totalorder %s91, %s93
    %p100 = scmp.eq.s32.totalorder %s15, 1
    %p101 = por %p99, %p100
    %p102 = scmp.ne.s32.totalorder %s93, %s94
    %p103 = scmp.eq.s32.totalorder %s15, 0
    %p104 = por %p102, %p103
    %p105 = scmp.ne.s32.totalorder %s93, %s94
    %p106 = scmp.eq.s32.totalorder %s16, 1
    %p107 = por %p105, %p106
    %p109 = scmp.ne.s32.totalorder %s94, %s108
    %p110 = scmp.eq.s32.totalorder %s16, 0
    %p111 = por %p109, %p110
    %s112 = ssub.s32 %s10, %s17
    %p113 = scmp.eq.s32.totalorder %s112, 0
    %s115 = sadd.s32 %s114, 1
    %s116 = scalar_select %p113, %s114, %s115
    %p119 = pneg %p113
    %p120 = scmp.eq.s32.totalorder %s10, 1
    %p121 = por %p119, %p120
    %p122 = scmp.ne.s32.totalorder %s114, %s117
    %p123 = scmp.eq.s32.totalorder %s10, 0
    %p124 = por %p122, %p123
    %p125 = scmp.ne.s32.totalorder %s114, %s117
    %p126 = scmp.eq.s32.totalorder %s15, 1
    %p127 = por %p125, %p126
    %p128 = scmp.ne.s32.totalorder %s117, %s118
    %p129 = scmp.eq.s32.totalorder %s15, 0
    %p130 = por %p128, %p129
    %p131 = scmp.ne.s32.totalorder %s117, %s118
    %p132 = scmp.eq.s32.totalorder %s16, 1
    %p133 = por %p131, %p132
    %p135 = scmp.ne.s32.totalorder %s118, %s134
    %p136 = scmp.eq.s32.totalorder %s16, 0
    %p137 = por %p135, %p136
    %p138 = scmp.le.s32.totalorder 1, %s10
    %p139 = scmp.lt.s32.totalorder %s10, 3
    %p140 = pnand %p138, %p139
    %p141 = pneg %p140
    // Predicated region
    $region9: #{alignment_forward.14} parent=5 // pred_check
      _
    $region10: #{alignment_forward.14} parent=5 // pred_check_branch
      %143 = sbr.rel (%p140) target = $region12
    $region11: #{alignment_forward.14} parent=5 // pred_region
      %s144 = ssub.s32 %s10, 1
      // Predicated region
      $region13: #{alignment_forward.14} parent=11 // pred_check
        %p145 = pneg %p83
      $region14: #{alignment_forward.14} parent=11 // pred_check_branch
        %147 = sbr.rel (%p145) target = $region16
      $region15: #{alignment_forward.14} parent=11 // pred_region
        _
      $region16: #{alignment_forward.14} parent=11 // pred_fallthru
        _
      // Predicated region
      $region17: #{alignment_forward.14} parent=11 // pred_check
        %p148 = pneg %p104
      $region18: #{alignment_forward.14} parent=11 // pred_check_branch
        %150 = sbr.rel (%p148) target = $region20
      $region19: #{alignment_forward.14} parent=11 // pred_region
        _
      $region20: #{alignment_forward.14} parent=11 // pred_fallthru
        _
    $region12: #{alignment_forward.14} parent=5 // pred_fallthru
      _
    %p151 = scmp.lt.s32.totalorder %s10, 2
    // Predicated region
    $region21: #{alignment_forward.14} parent=5 // pred_check
      %p152 = pneg %p151
    $region22: #{alignment_forward.14} parent=5 // pred_check_branch
      %154 = sbr.rel (%p152) target = $region24
    $region23: #{alignment_forward.14} parent=5 // pred_region
      // Predicated region
      $region25: #{alignment_forward.14} parent=23 // pred_check
        %p155 = pneg %p30
      $region26: #{alignment_forward.14} parent=23 // pred_check_branch
        %157 = sbr.rel (%p155) target = $region28
      $region27: #{alignment_forward.14} parent=23 // pred_region
        %p158 = scmp.lt.s32.totalorder %s10, 1
        %s159 = scalar_select %p158, %s10, 1
        %s160 = smul.addr %s159, 2
        %s161 = smul.addr %s160, 8
        %s162 = scalar_lea.vmem %s0, %s161
      $region28: #{alignment_forward.14} parent=23 // pred_fallthru
        _
      // Predicated region
      $region29: #{alignment_forward.14} parent=23 // pred_check
        %p163 = pneg %p56
      $region30: #{alignment_forward.14} parent=23 // pred_check_branch
        %165 = sbr.rel (%p163) target = $region32
      $region31: #{alignment_forward.14} parent=23 // pred_region
        %p166 = scmp.lt.s32.totalorder %s10, 1
        %s167 = scalar_select %p166, %s10, 1
        %s168 = smul.addr %s167, 2
        %s169 = smul.addr %s168, 8
        %s170 = scalar_lea.vmem %s1, %s169
      $region32: #{alignment_forward.14} parent=23 // pred_fallthru
        _
    $region24: #{alignment_forward.14} parent=5 // pred_fallthru
      _
    %p171 = scmp.le.s32.totalorder 1, %s10
    %p172 = scmp.lt.s32.totalorder %s10, 3
    %p173 = pnand %p171, %p172
    %p174 = pneg %p173
    // Predicated region
    $region33: #{alignment_forward.14} parent=5 // pred_check
      _
    $region34: #{alignment_forward.14} parent=5 // pred_check_branch
      %176 = sbr.rel (%p173) target = $region36
    $region35: #{alignment_forward.14} parent=5 // pred_region
      %s177 = ssub.s32 %s10, 1
      %p178 = scmp.lt.s32.totalorder %s15, 1
      %s179 = scalar_select %p178, %s15, 1
      %s180 = smul.addr %s179, 2
      %s181 = smul.addr %s180, 8
      %s182 = scalar_lea.vmem %s0, %s181
      %p183 = pneg %p36
      %p184 = pneg %p33
      %p185 = scmp.lt.s32.totalorder %s15, 1
      %s186 = scalar_select %p185, %s15, 1
      %s187 = smul.addr %s186, 2
      %s188 = smul.addr %s187, 8
      %s189 = scalar_lea.vmem %s1, %s188
      %p190 = pneg %p62
      %p191 = pneg %p59
      %p192 = pneg %p83
      %p193 = pneg %p80
      %p194 = pneg %p104
      %p195 = pneg %p101
      %p196 = pneg %p130
      %p197 = pneg %p127
      %p198 = scmp.lt.s32.totalorder %s15, 1
      %s199 = scalar_select %p198, %s15, 1
      %s200 = smul.addr %s199, 2
      %s201 = smul.addr %s200, 8
      %s202 = scalar_lea.vmem %s4, %s201
      %p203 = scmp.lt.s32.totalorder %s15, 1
      %s204 = scalar_select %p203, %s15, 1
      %s205 = smul.addr %s204, 2
      %s206 = smul.addr %s205, 8
      %s207 = scalar_lea.vmem %s0, %s206
      %p208 = scmp.lt.s32.totalorder %s15, 1
      %s209 = scalar_select %p208, %s15, 1
      %s210 = smul.addr %s209, 2
      %s211 = smul.addr %s210, 8
      %s212 = scalar_lea.vmem %s1, %s211
      %p213 = scmp.lt.s32.totalorder %s15, 1
      %s214 = scalar_select %p213, %s15, 1
      %s215 = smul.addr %s214, 2
      %s216 = smul.addr %s215, 8
      %s217 = scalar_lea.vmem %s4, %s216
      %v218 = vlaneseq
      %v219 = vand.u32 %v218, 127
      %vm220 = vcmp.lt.s32.totalorder %v219, 0
      %v221 = vsub.s32 0, %v219
      %v222 = vsel %vm220, %v221, %v219
      %v223 = vshrl.u32 %v222, 3
      %v224 = vand.u32 %v222, 7
      %v225 = vsub.s32 0, %v224
      %v226 = vsel %vm220, %v225, %v224
      %vm227 = vcmp.ne.s32.totalorder %v226, 0
      %vm228 = vcmp.lt.s32.totalorder %v226, 0
      %vm229 = vmand %vm228, %vm227
      %v230 = vadd.s32 %v226, 8
      %v231 = vsel %vm229, %v230, %v226
      %vm232 = vcmp.ne.s32.totalorder %v231, 0
      %vm233 = vcmp.ne.s32.totalorder %v231, 7
      %v234 = vld [vmem:[%s207] sm:$0xff]
      %v235 = vld [vmem:[%s207 + $0x8] sm:$0xff]
      %v236 = vsel %vm232, 1, 0
      %vm237 = vcmp.eq.s32.totalorder %v236, 1
      %v238 = vsel %vm237, %v234, 0.0
      %v239 = vsel %vm237, %v235, 0.0
      %vm240 = vcmask 523264
      %241 = vst.msk [vmem:[#allocation2] sm:$0xff] %vm240, %v238
      %242 = vst.msk [vmem:[#allocation2 + $0x8] sm:$0xff] %vm240, %v239
      %v243 = vld [vmem:[%s207] sm:$0xff]
      %v244 = vld [vmem:[%s207 + $0x8] sm:$0xff]
      %247 = vrot.lane.b32.xlu0 %v243, 127
      %v248 = vpop.permute.xlu0 %247
      %249 = vrot.lane.b32.xlu0 %v244, 127
      %v250 = vpop.permute.xlu0 %249
      %253 = vst.msk [vmem:[#allocation2 + $0x10] sm:$0xff] %vm240, %v248
      %254 = vst.msk [vmem:[#allocation2 + $0x18] sm:$0xff] %vm240, %v250
      %v255 = vld [vmem:[%s207] sm:$0xff]
      %v256 = vld [vmem:[%s207 + $0x8] sm:$0xff]
      %v257 = vsel %vm233, 1, 0
      %vm258 = vcmp.eq.s32.totalorder %v257, 1
      %261 = vrot.lane.b32.xlu0 %v255, 126
      %v262 = vpop.permute.xlu0 %261
      %263 = vrot.lane.b32.xlu0 %v256, 126
      %v264 = vpop.permute.xlu0 %263
      %v267 = vsel %vm258, %v262, 0.0
      %v268 = vsel %vm258, %v264, 0.0
      %269 = vst.msk [vmem:[#allocation2 + $0x20] sm:$0xff] %vm240, %v267
      %270 = vst.msk [vmem:[#allocation2 + $0x28] sm:$0xff] %vm240, %v268
      %v271 = vld [vmem:[%s207] sm:$0xff]
      %v272 = vld [vmem:[%s207 + $0x8] sm:$0xff]
      %275 = vrot.lane.b32.xlu0 %v271, 120
      %v276 = vpop.permute.xlu0 %275
      %277 = vrot.lane.b32.xlu0 %v272, 120
      %v278 = vpop.permute.xlu0 %277
      %v281 = vsel %vm237, %v276, 0.0
      %v282 = vsel %vm237, %v278, 0.0
      %283 = vst.msk [vmem:[#allocation2 + $0x30] sm:$0xff] %vm240, %v281
      %284 = vst.msk [vmem:[#allocation2 + $0x38] sm:$0xff] %vm240, %v282
      %v285 = vld [vmem:[%s207] sm:$0xff]
      %v286 = vld [vmem:[%s207 + $0x8] sm:$0xff]
      %289 = vrot.lane.b32.xlu0 %v285, 119
      %v290 = vpop.permute.xlu0 %289
      %291 = vrot.lane.b32.xlu0 %v286, 119
      %v292 = vpop.permute.xlu0 %291
      %295 = vst.msk [vmem:[#allocation2 + $0x40] sm:$0xff] %vm240, %v290
      %296 = vst.msk [vmem:[#allocation2 + $0x48] sm:$0xff] %vm240, %v292
      %v297 = vld [vmem:[%s207] sm:$0xff]
      %v298 = vld [vmem:[%s207 + $0x8] sm:$0xff]
      %301 = vrot.lane.b32.xlu0 %v297, 118
      %v302 = vpop.permute.xlu0 %301
      %303 = vrot.lane.b32.xlu0 %v298, 118
      %v304 = vpop.permute.xlu0 %303
      %v307 = vsel %vm258, %v302, 0.0
      %v308 = vsel %vm258, %v304, 0.0
      %309 = vst.msk [vmem:[#allocation2 + $0x50] sm:$0xff] %vm240, %v307
      %310 = vst.msk [vmem:[#allocation2 + $0x58] sm:$0xff] %vm240, %v308
      %v311 = vld [vmem:[%s207] sm:$0xff]
      %v312 = vld [vmem:[%s207 + $0x8] sm:$0xff]
      %315 = vrot.lane.b32.xlu0 %v311, 112
      %v316 = vpop.permute.xlu0 %315
      %317 = vrot.lane.b32.xlu0 %v312, 112
      %v318 = vpop.permute.xlu0 %317
      %v321 = vsel %vm237, %v316, 0.0
      %v322 = vsel %vm237, %v318, 0.0
      %323 = vst.msk [vmem:[#allocation2 + $0x60] sm:$0xff] %vm240, %v321
      %324 = vst.msk [vmem:[#allocation2 + $0x68] sm:$0xff] %vm240, %v322
      %v325 = vld [vmem:[%s207] sm:$0xff]
      %v326 = vld [vmem:[%s207 + $0x8] sm:$0xff]
      %329 = vrot.lane.b32.xlu0 %v325, 111
      %v330 = vpop.permute.xlu0 %329
      %331 = vrot.lane.b32.xlu0 %v326, 111
      %v332 = vpop.permute.xlu0 %331
      %335 = vst.msk [vmem:[#allocation2 + $0x70] sm:$0xff] %vm240, %v330
      %336 = vst.msk [vmem:[#allocation2 + $0x78] sm:$0xff] %vm240, %v332
      %v337 = vld [vmem:[%s207] sm:$0xff]
      %v338 = vld [vmem:[%s207 + $0x8] sm:$0xff]
      %341 = vrot.lane.b32.xlu0 %v337, 110
      %v342 = vpop.permute.xlu0 %341
      %343 = vrot.lane.b32.xlu0 %v338, 110
      %v344 = vpop.permute.xlu0 %343
      %v347 = vsel %vm258, %v342, 0.0
      %v348 = vsel %vm258, %v344, 0.0
      %349 = vst.msk [vmem:[#allocation2 + $0x80] sm:$0xff] %vm240, %v347
      %350 = vst.msk [vmem:[#allocation2 + $0x88] sm:$0xff] %vm240, %v348
      %v351 = vld [vmem:[%s212] sm:$0xff]
      %v352 = vld [vmem:[%s212 + $0x8] sm:$0xff]
      %v353 = vsel %vm237, %v351, 0.0
      %v354 = vsel %vm237, %v352, 0.0
      %355 = vst.msk [vmem:[#allocation2 + $0x90] sm:$0xff] %vm240, %v353
      %356 = vst.msk [vmem:[#allocation2 + $0x98] sm:$0xff] %vm240, %v354
      %v357 = vld [vmem:[%s212] sm:$0xff]
      %v358 = vld [vmem:[%s212 + $0x8] sm:$0xff]
      %361 = vrot.lane.b32.xlu0 %v357, 127
      %v362 = vpop.permute.xlu0 %361
      %363 = vrot.lane.b32.xlu0 %v358, 127
      %v364 = vpop.permute.xlu0 %363
      %367 = vst.msk [vmem:[#allocation2 + $0xa0] sm:$0xff] %vm240, %v362
      %368 = vst.msk [vmem:[#allocation2 + $0xa8] sm:$0xff] %vm240, %v364
      %v369 = vld [vmem:[%s212] sm:$0xff]
      %v370 = vld [vmem:[%s212 + $0x8] sm:$0xff]
      %373 = vrot.lane.b32.xlu0 %v369, 126
      %v374 = vpop.permute.xlu0 %373
      %375 = vrot.lane.b32.xlu0 %v370, 126
      %v376 = vpop.permute.xlu0 %375
      %v379 = vsel %vm258, %v374, 0.0
      %v380 = vsel %vm258, %v376, 0.0
      %381 = vst.msk [vmem:[#allocation2 + $0xb0] sm:$0xff] %vm240, %v379
      %382 = vst.msk [vmem:[#allocation2 + $0xb8] sm:$0xff] %vm240, %v380
      %v383 = vld [vmem:[%s212] sm:$0xff]
      %v384 = vld [vmem:[%s212 + $0x8] sm:$0xff]
      %387 = vrot.lane.b32.xlu0 %v383, 120
      %v388 = vpop.permute.xlu0 %387
      %389 = vrot.lane.b32.xlu0 %v384, 120
      %v390 = vpop.permute.xlu0 %389
      %v393 = vsel %vm237, %v388, 0.0
      %v394 = vsel %vm237, %v390, 0.0
      %395 = vst.msk [vmem:[#allocation2 + $0xc0] sm:$0xff] %vm240, %v393
      %396 = vst.msk [vmem:[#allocation2 + $0xc8] sm:$0xff] %vm240, %v394
      %v397 = vld [vmem:[%s212] sm:$0xff]
      %v398 = vld [vmem:[%s212 + $0x8] sm:$0xff]
      %401 = vrot.lane.b32.xlu0 %v397, 119
      %v402 = vpop.permute.xlu0 %401
      %403 = vrot.lane.b32.xlu0 %v398, 119
      %v404 = vpop.permute.xlu0 %403
      %407 = vst.msk [vmem:[#allocation2 + $0xd0] sm:$0xff] %vm240, %v402
      %408 = vst.msk [vmem:[#allocation2 + $0xd8] sm:$0xff] %vm240, %v404
      %v409 = vld [vmem:[%s212] sm:$0xff]
      %v410 = vld [vmem:[%s212 + $0x8] sm:$0xff]
      %413 = vrot.lane.b32.xlu0 %v409, 118
      %v414 = vpop.permute.xlu0 %413
      %415 = vrot.lane.b32.xlu0 %v410, 118
      %v416 = vpop.permute.xlu0 %415
      %v419 = vsel %vm258, %v414, 0.0
      %v420 = vsel %vm258, %v416, 0.0
      %421 = vst.msk [vmem:[#allocation2 + $0xe0] sm:$0xff] %vm240, %v419
      %422 = vst.msk [vmem:[#allocation2 + $0xe8] sm:$0xff] %vm240, %v420
      %v423 = vld [vmem:[%s212] sm:$0xff]
      %v424 = vld [vmem:[%s212 + $0x8] sm:$0xff]
      %427 = vrot.lane.b32.xlu0 %v423, 112
      %v428 = vpop.permute.xlu0 %427
      %429 = vrot.lane.b32.xlu0 %v424, 112
      %v430 = vpop.permute.xlu0 %429
      %v433 = vsel %vm237, %v428, 0.0
      %v434 = vsel %vm237, %v430, 0.0
      %435 = vst.msk [vmem:[#allocation2 + $0xf0] sm:$0xff] %vm240, %v433
      %436 = vst.msk [vmem:[#allocation2 + $0xf8] sm:$0xff] %vm240, %v434
      %v437 = vld [vmem:[%s212] sm:$0xff]
      %v438 = vld [vmem:[%s212 + $0x8] sm:$0xff]
      %441 = vrot.lane.b32.xlu0 %v437, 111
      %v442 = vpop.permute.xlu0 %441
      %443 = vrot.lane.b32.xlu0 %v438, 111
      %v444 = vpop.permute.xlu0 %443
      %447 = vst.msk [vmem:[#allocation2 + $0x100] sm:$0xff] %vm240, %v442
      %448 = vst.msk [vmem:[#allocation2 + $0x108] sm:$0xff] %vm240, %v444
      %v449 = vld [vmem:[%s212] sm:$0xff]
      %v450 = vld [vmem:[%s212 + $0x8] sm:$0xff]
      %453 = vrot.lane.b32.xlu0 %v449, 110
      %v454 = vpop.permute.xlu0 %453
      %455 = vrot.lane.b32.xlu0 %v450, 110
      %v456 = vpop.permute.xlu0 %455
      %v459 = vsel %vm258, %v454, 0.0
      %v460 = vsel %vm258, %v456, 0.0
      %461 = vst.msk [vmem:[#allocation2 + $0x110] sm:$0xff] %vm240, %v459
      %462 = vst.msk [vmem:[#allocation2 + $0x118] sm:$0xff] %vm240, %v460
      %v463 = vld [vmem:[%s2] sm:$0xff]
      %v464 = vld [vmem:[%s2 + $0x8] sm:$0xff]
      %v465 = vld [vmem:[%s2 + $0x10] sm:$0xff]
      %v466 = vld [vmem:[%s2 + $0x18] sm:$0xff]
      %v467 = vld [vmem:[%s2 + $0x20] sm:$0xff]
      %v468 = vld [vmem:[%s2 + $0x28] sm:$0xff]
      %v469 = vld [vmem:[#allocation2] sm:$0xff]
      %v470 = vld [vmem:[#allocation2 + $0x8] sm:$0xff]
      %v471 = vld [vmem:[#allocation2 + $0x10] sm:$0xff]
      %v472 = vld [vmem:[#allocation2 + $0x18] sm:$0xff]
      %v473 = vld [vmem:[#allocation2 + $0x20] sm:$0xff]
      %v474 = vld [vmem:[#allocation2 + $0x28] sm:$0xff]
      %v475 = vld [vmem:[#allocation2 + $0x30] sm:$0xff]
      %v476 = vld [vmem:[#allocation2 + $0x38] sm:$0xff]
      %v477 = vld [vmem:[#allocation2 + $0x40] sm:$0xff]
      %v478 = vld [vmem:[#allocation2 + $0x48] sm:$0xff]
      %v479 = vld [vmem:[#allocation2 + $0x50] sm:$0xff]
      %v480 = vld [vmem:[#allocation2 + $0x58] sm:$0xff]
      %v481 = vld [vmem:[#allocation2 + $0x60] sm:$0xff]
      %v482 = vld [vmem:[#allocation2 + $0x68] sm:$0xff]
      %v483 = vld [vmem:[#allocation2 + $0x70] sm:$0xff]
      %v484 = vld [vmem:[#allocation2 + $0x78] sm:$0xff]
      %v485 = vld [vmem:[#allocation2 + $0x80] sm:$0xff]
      %v486 = vld [vmem:[#allocation2 + $0x88] sm:$0xff]
      %v487 = vld [vmem:[#allocation2 + $0x90] sm:$0xff]
      %v488 = vld [vmem:[#allocation2 + $0x98] sm:$0xff]
      %v489 = vld [vmem:[#allocation2 + $0xa0] sm:$0xff]
      %v490 = vld [vmem:[#allocation2 + $0xa8] sm:$0xff]
      %v491 = vld [vmem:[#allocation2 + $0xb0] sm:$0xff]
      %v492 = vld [vmem:[#allocation2 + $0xb8] sm:$0xff]
      %v493 = vld [vmem:[#allocation2 + $0xc0] sm:$0xff]
      %v494 = vld [vmem:[#allocation2 + $0xc8] sm:$0xff]
      %v495 = vld [vmem:[#allocation2 + $0xd0] sm:$0xff]
      %v496 = vld [vmem:[#allocation2 + $0xd8] sm:$0xff]
      %v497 = vld [vmem:[#allocation2 + $0xe0] sm:$0xff]
      %v498 = vld [vmem:[#allocation2 + $0xe8] sm:$0xff]
      %v499 = vld [vmem:[#allocation2 + $0xf0] sm:$0xff]
      %v500 = vld [vmem:[#allocation2 + $0xf8] sm:$0xff]
      %v501 = vld [vmem:[#allocation2 + $0x100] sm:$0xff]
      %v502 = vld [vmem:[#allocation2 + $0x108] sm:$0xff]
      %v503 = vld [vmem:[#allocation2 + $0x110] sm:$0xff]
      %v504 = vld [vmem:[#allocation2 + $0x118] sm:$0xff]
      %v505 = vld [vmem:[%s3] sm:$0xff]
      %v506 = vld [vmem:[%s3 + $0x8] sm:$0xff]
      %508 = vset.pattern.permute.xlu0 0
      %509 = vperm.xlu0 %508, %v505
      %v510 = vpop.permute.xlu0 %509
      %513 = vset.pattern.permute.xlu0 0
      %514 = vperm.xlu0 %513, %v506
      %v515 = vpop.permute.xlu0 %514
      %vm517 = vcmask 261120
      %v519 = vsel %vm517, %v465, 0
      %v522 = vsel %vm517, %v468, 0
      %524 = vmatprep.subr.mxu0 0.0
      %525 = vmatpush1.msra.mxu0 %v469
      %526 = vmatprep.subr.mxu0 0.0
      %527 = vmatpush1.msra.mxu0 %v470
      %528 = vmatprep.subr.mxu0 0.0
      %529 = vmatpush1.msra.mxu0 %v471
      %530 = vmatprep.subr.mxu0 0.0
      %531 = vmatpush1.msra.mxu0 %v472
      %532 = vmatprep.subr.mxu0 0.0
      %533 = vmatpush1.msra.mxu0 %v473
      %534 = vmatprep.subr.mxu0 0.0
      %535 = vmatpush1.msra.mxu0 %v474
      %536 = vmatprep.subr.mxu0 0.0
      %537 = vmatpush1.msra.mxu0 %v475
      %538 = vmatprep.subr.mxu0 0.0
      %539 = vmatpush1.msra.mxu0 %v476
      %540 = vmatprep.subr.mxu0 0.0
      %541 = vmatpush1.msra.mxu0 %v477
      %542 = vmatprep.subr.mxu0 0.0
      %543 = vmatpush1.msra.mxu0 %v478
      %544 = vmatprep.subr.mxu0 0.0
      %545 = vmatpush1.msra.mxu0 %v479
      %546 = vmatprep.subr.mxu0 0.0
      %547 = vmatpush1.msra.mxu0 %v480
      %548 = vmatprep.subr.mxu0 0.0
      %549 = vmatpush1.msra.mxu0 %v481
      %550 = vmatprep.subr.mxu0 0.0
      %551 = vmatpush1.msra.mxu0 %v482
      %552 = vmatprep.subr.mxu0 0.0
      %553 = vmatpush1.msra.mxu0 %v483
      %554 = vmatprep.subr.mxu0 0.0
      %555 = vmatpush1.msra.mxu0 %v484
      %556 = vmatprep.subr.mxu0 0.0
      %557 = vmatpush1.msra.mxu0 %v485
      %558 = vmatprep.subr.mxu0 0.0
      %559 = vmatpush1.msra.mxu0 %v486
      %560 = vmatprep.subr.mxu0 0.0
      %561 = vmatpush1.msra.mxu0 %v487
      %562 = vmatprep.subr.mxu0 0.0
      %563 = vmatpush1.msra.mxu0 %v488
      %564 = vmatprep.subr.mxu0 0.0
      %565 = vmatpush1.msra.mxu0 %v489
      %566 = vmatprep.subr.mxu0 0.0
      %567 = vmatpush1.msra.mxu0 %v490
      %568 = vmatprep.subr.mxu0 0.0
      %569 = vmatpush1.msra.mxu0 %v491
      %570 = vmatprep.subr.mxu0 0.0
      %571 = vmatpush1.msra.mxu0 %v492
      %572 = vmatprep.subr.mxu0 0.0
      %573 = vmatpush1.msra.mxu0 %v493
      %574 = vmatprep.subr.mxu0 0.0
      %575 = vmatpush1.msra.mxu0 %v494
      %576 = vmatprep.subr.mxu0 0.0
      %577 = vmatpush1.msra.mxu0 %v495
      %578 = vmatprep.subr.mxu0 0.0
      %579 = vmatpush1.msra.mxu0 %v496
      %580 = vmatprep.subr.mxu0 0.0
      %581 = vmatpush1.msra.mxu0 %v497
      %582 = vmatprep.subr.mxu0 0.0
      %583 = vmatpush1.msra.mxu0 %v498
      %584 = vmatprep.subr.mxu0 0.0
      %585 = vmatpush1.msra.mxu0 %v499
      %586 = vmatprep.subr.mxu0 0.0
      %587 = vmatpush1.msra.mxu0 %v500
      %588 = vmatprep.mubr.f32.mxu0 %v464
      %589 = vmatmul.mubr.f32.gmra.mrb[0].mxu0 %v463
      %v590 = vpop.f32.mrb[0].mxu0
      %v591 = vadd.f32 %v510, %v590
      %v592 = vpop.f32.mrb[0].mxu0
      %593 = vmatprep.mubr.f32.mxu0 %v467
      %594 = vmatmul.mubr.f32.gmra.mrb[0].mxu0 %v466
      %v595 = vpop.f32.mrb[0].mxu0
      %v596 = vadd.f32 %v515, %v595
      %v597 = vpop.f32.mrb[0].mxu0
      %598 = vdwg.mxu0
      %599 = vmatprep.subr.mxu0 0.0
      %600 = vmatpush1.msra.mxu0 %v501
      %601 = vmatprep.subr.mxu0 0.0
      %602 = vmatpush1.msra.mxu0 %v502
      %603 = vmatprep.subr.mxu0 0.0
      %604 = vmatpush1.msra.mxu0 %v503
      %605 = vmatprep.subr.mxu0 0.0
      %606 = vmatpush1.msra.mxu0 %v504
      %607 = vmatprep.subr.mxu0 0.0
      %608 = vmatpush1.msra.mxu0 0.0
      %609 = vmatprep.subr.mxu0 0.0
      %610 = vmatpush1.msra.mxu0 0.0
      %611 = vmatprep.subr.mxu0 0.0
      %612 = vmatpush1.msra.mxu0 0.0
      %613 = vmatprep.subr.mxu0 0.0
      %614 = vmatpush1.msra.mxu0 0.0
      %615 = vmatprep.subr.mxu0 0.0
      %616 = vmatpush1.msra.mxu0 0.0
      %617 = vmatprep.subr.mxu0 0.0
      %618 = vmatpush1.msra.mxu0 0.0
      %619 = vmatprep.subr.mxu0 0.0
      %620 = vmatpush1.msra.mxu0 0.0
      %621 = vmatprep.subr.mxu0 0.0
      %622 = vmatpush1.msra.mxu0 0.0
      %623 = vmatprep.subr.mxu0 0.0
      %624 = vmatpush1.msra.mxu0 0.0
      %625 = vmatprep.subr.mxu0 0.0
      %626 = vmatpush1.msra.mxu0 0.0
      %627 = vmatprep.subr.mxu0 0.0
      %628 = vmatpush1.msra.mxu0 0.0
      %629 = vmatprep.subr.mxu0 0.0
      %630 = vmatpush1.msra.mxu0 0.0
      %631 = vmatprep.subr.mxu0 0.0
      %632 = vmatpush1.msra.mxu0 0.0
      %633 = vmatprep.subr.mxu0 0.0
      %634 = vmatpush1.msra.mxu0 0.0
      %635 = vmatprep.subr.mxu0 0.0
      %636 = vmatpush1.msra.mxu0 0.0
      %637 = vmatprep.subr.mxu0 0.0
      %638 = vmatpush1.msra.mxu0 0.0
      %639 = vmatprep.subr.mxu0 0.0
      %640 = vmatpush1.msra.mxu0 0.0
      %641 = vmatprep.subr.mxu0 0.0
      %642 = vmatpush1.msra.mxu0 0.0
      %643 = vmatprep.subr.mxu0 0.0
      %644 = vmatpush1.msra.mxu0 0.0
      %645 = vmatprep.subr.mxu0 0.0
      %646 = vmatpush1.msra.mxu0 0.0
      %647 = vmatprep.subr.mxu0 0.0
      %648 = vmatpush1.msra.mxu0 0.0
      %649 = vmatprep.subr.mxu0 0.0
      %650 = vmatpush1.msra.mxu0 0.0
      %651 = vmatprep.subr.mxu0 0.0
      %652 = vmatpush1.msra.mxu0 0.0
      %653 = vmatprep.subr.mxu0 0.0
      %654 = vmatpush1.msra.mxu0 0.0
      %655 = vmatprep.subr.mxu0 0.0
      %656 = vmatpush1.msra.mxu0 0.0
      %657 = vmatprep.subr.mxu0 0.0
      %658 = vmatpush1.msra.mxu0 0.0
      %659 = vmatprep.subr.mxu0 0.0
      %660 = vmatpush1.msra.mxu0 0.0
      %661 = vmatprep.subr.mxu0 0.0
      %662 = vmatpush1.msra.mxu0 0.0
      %663 = vmatprep.mubr.f32.mxu0 0.0
      %664 = vmatmul.mubr.f32.gmra.mrb[0].mxu0 %v519
      %v665 = vpop.f32.mrb[0].mxu0
      %v666 = vadd.f32 %v591, %v665
      %v667 = vpop.f32.mrb[0].mxu0
      %668 = vmatprep.mubr.f32.mxu0 0.0
      %669 = vmatmul.mubr.f32.gmra.mrb[0].mxu0 %v522
      %v670 = vpop.f32.mrb[0].mxu0
      %v671 = vadd.f32 %v596, %v670
      %v672 = vpop.f32.mrb[0].mxu0
      %673 = vdwg.mxu0
      %vm674 = vcmp.ge.f32.partialorder %v666, 0.0
      %vm675 = vcmp.ge.f32.partialorder %v671, 0.0
      %v676 = vmul.f32 %v666, 0.1
      %v677 = vmul.f32 %v671, 0.1
      %v678 = vsel %vm674, %v666, %v676
      %v679 = vsel %vm675, %v671, %v677
      %680 = vst.msk [vmem:[%s217] sm:$0xff] %vm240, %v678
      %681 = vst.msk [vmem:[%s217 + $0x8] sm:$0xff] %vm240, %v679
      %p682 = scmp.lt.s32.totalorder %s15, 1
      %s683 = scalar_select %p682, %s15, 1
      %s684 = smul.addr %s683, 2
      %s685 = smul.addr %s684, 8
      %s686 = scalar_lea.vmem %s4, %s685
      // Predicated region
      $region37: #{alignment_forward.14} parent=35 // pred_check
        %p687 = pneg %p127
      $region38: #{alignment_forward.14} parent=35 // pred_check_branch
        %689 = sbr.rel (%p687) target = $region40
      $region39: #{alignment_forward.14} parent=35 // pred_region
        _
      $region40: #{alignment_forward.14} parent=35 // pred_fallthru
        _
    $region36: #{alignment_forward.14} parent=5 // pred_fallthru
      _
    %p690 = scmp.le.s32.totalorder 2, %s10
    // Predicated region
    $region41: #{alignment_forward.14} parent=5 // pred_check
      %p691 = pneg %p690
    $region42: #{alignment_forward.14} parent=5 // pred_check_branch
      %693 = sbr.rel (%p691) target = $region44
    $region43: #{alignment_forward.14} parent=5 // pred_region
      %s694 = ssub.s32 %s10, 2
      // Predicated region
      $region45: #{alignment_forward.14} parent=43 // pred_check
        %p695 = pneg %p133
      $region46: #{alignment_forward.14} parent=43 // pred_check_branch
        %697 = sbr.rel (%p695) target = $region48
      $region47: #{alignment_forward.14} parent=43 // pred_region
        %p698 = scmp.lt.s32.totalorder %s16, 1
        %s699 = scalar_select %p698, %s16, 1
        %s700 = smul.addr %s699, 2
        %s701 = smul.addr %s700, 8
        %s702 = scalar_lea.vmem %s4, %s701
      $region48: #{alignment_forward.14} parent=43 // pred_fallthru
        _
    $region44: #{alignment_forward.14} parent=5 // pred_fallthru
      _
  $region6: #{alignment_forward.14} parent=0 // loop_footer
    %s14 = sadd.s32 1, %s10
  $region7: #{alignment_forward.14} parent=0 // loop_footer_branch
    %9 = sbr.rel target = $region3
  $region8: #{alignment_forward.14} parent=0 // loop_exit
    _

// kernel: alignment_forward.16
$region0: #{alignment_forward.16}
  #allocation0 [shape = 'u32[]', space=smem, size = 0x4, offset = 0x4, fixed_abs, tag = 'smem constant byte address 0x4 - core index']
  #allocation1 [shape = 'u32[144,128]{1,0:T(1,128)}', space=vmem, size = 0x12000, scoped, tag = 'internal scratch']
  #allocation2 [shape = 'f32[144,256]{1,0:T(8,128)}', space=vmem, size = 0x24000, scoped, tag = 'scratch operand']
  %s0 = inlined_call_operand.vmem [shape: f32[2,16,290], index: 0, kind: input, shape index: {}]
  %s1 = inlined_call_operand.vmem [shape: f32[216,144], index: 1, kind: input, shape index: {}]
  %s2 = inlined_call_operand.vmem [shape: f32[216,1], index: 2, kind: input, shape index: {}]
  %s3 = inlined_call_operand.vmem [shape: f32[2,216,256], index: 3, kind: output, shape index: {}]
  %s4 = sld [smem:[#allocation0]]
  $region45: #{alignment_forward.16} parent=0
    _
  %s6 = ssub.s32 1, %s4
  %s7 = scalar_select 0, %s6, %s4
  loop: start=0, step=1, limit=4
  $region2: #{alignment_forward.16} parent=0 // loop_pre_header
    _
  $region3: #{alignment_forward.16} parent=0 // loop_header
    %s9 = sphi 0, %s13
    %p10 = scmp.ge.s32.totalorder %s9, 4
    %s19 = sphi 0, %s21
    %s22 = sphi 0, %s19
    %s23 = sphi 0, %s22
    %s39 = sphi 0, %s23
    %s43 = sphi 0, %s43
    %s45 = sphi 0, %s43
    %s46 = sphi 0, %s45
    %s60 = sphi 0, %s46
    %s64 = sphi 0, %s64
    %s66 = sphi 0, %s64
    %s67 = sphi 0, %s66
    %s81 = sphi 0, %s67
    %s87 = sphi 0, %s89
    %s90 = sphi 0, %s87
    %s91 = sphi 0, %s90
    %s107 = sphi 0, %s91
  $region4: #{alignment_forward.16} parent=0 // loop_header_branch
    %12 = sbr.rel (%p10) target = $region8
  $region5: #{alignment_forward.16} parent=0 // loop_body
    %s14 = ssub.s32 %s9, 1
    %s15 = ssub.s32 %s9, 2
    %s16 = sadd.s32 %s9, 1
    %s17 = ssub.s32 %s9, %s16
    %p18 = scmp.eq.s32.totalorder %s17, 0
    %s20 = sadd.s32 %s19, 1
    %s21 = scalar_select %p18, %s19, %s20
    %p24 = pneg %p18
    %p25 = scmp.eq.s32.totalorder %s9, 1
    %p26 = por %p24, %p25
    %p27 = scmp.ne.s32.totalorder %s19, %s22
    %p28 = scmp.eq.s32.totalorder %s9, 0
    %p29 = por %p27, %p28
    %p30 = scmp.ne.s32.totalorder %s19, %s22
    %p31 = scmp.eq.s32.totalorder %s14, 1
    %p32 = por %p30, %p31
    %p33 = scmp.ne.s32.totalorder %s22, %s23
    %p34 = scmp.eq.s32.totalorder %s14, 0
    %p35 = por %p33, %p34
    %p36 = scmp.ne.s32.totalorder %s22, %s23
    %p37 = scmp.eq.s32.totalorder %s15, 1
    %p38 = por %p36, %p37
    %p40 = scmp.ne.s32.totalorder %s23, %s39
    %p41 = scmp.eq.s32.totalorder %s15, 0
    %p42 = por %p40, %p41
    %s44 = sadd.s32 %s43, 1
    %p47 = scmp.eq.s32.totalorder %s9, 1
    %p48 = scmp.ne.s32.totalorder %s43, %s45
    %p49 = scmp.eq.s32.totalorder %s9, 0
    %p50 = por %p48, %p49
    %p51 = scmp.ne.s32.totalorder %s43, %s45
    %p52 = scmp.eq.s32.totalorder %s14, 1
    %p53 = por %p51, %p52
    %p54 = scmp.ne.s32.totalorder %s45, %s46
    %p55 = scmp.eq.s32.totalorder %s14, 0
    %p56 = por %p54, %p55
    %p57 = scmp.ne.s32.totalorder %s45, %s46
    %p58 = scmp.eq.s32.totalorder %s15, 1
    %p59 = por %p57, %p58
    %p61 = scmp.ne.s32.totalorder %s46, %s60
    %p62 = scmp.eq.s32.totalorder %s15, 0
    %p63 = por %p61, %p62
    %s65 = sadd.s32 %s64, 1
    %p68 = scmp.eq.s32.totalorder %s9, 1
    %p69 = scmp.ne.s32.totalorder %s64, %s66
    %p70 = scmp.eq.s32.totalorder %s9, 0
    %p71 = por %p69, %p70
    %p72 = scmp.ne.s32.totalorder %s64, %s66
    %p73 = scmp.eq.s32.totalorder %s14, 1
    %p74 = por %p72, %p73
    %p75 = scmp.ne.s32.totalorder %s66, %s67
    %p76 = scmp.eq.s32.totalorder %s14, 0
    %p77 = por %p75, %p76
    %p78 = scmp.ne.s32.totalorder %s66, %s67
    %p79 = scmp.eq.s32.totalorder %s15, 1
    %p80 = por %p78, %p79
    %p82 = scmp.ne.s32.totalorder %s67, %s81
    %p83 = scmp.eq.s32.totalorder %s15, 0
    %p84 = por %p82, %p83
    %s85 = ssub.s32 %s9, %s16
    %p86 = scmp.eq.s32.totalorder %s85, 0
    %s88 = sadd.s32 %s87, 1
    %s89 = scalar_select %p86, %s87, %s88
    %p92 = pneg %p86
    %p93 = scmp.eq.s32.totalorder %s9, 1
    %p94 = por %p92, %p93
    %p95 = scmp.ne.s32.totalorder %s87, %s90
    %p96 = scmp.eq.s32.totalorder %s9, 0
    %p97 = por %p95, %p96
    %p98 = scmp.ne.s32.totalorder %s87, %s90
    %p99 = scmp.eq.s32.totalorder %s14, 1
    %p100 = por %p98, %p99
    %p101 = scmp.ne.s32.totalorder %s90, %s91
    %p102 = scmp.eq.s32.totalorder %s14, 0
    %p103 = por %p101, %p102
    %p104 = scmp.ne.s32.totalorder %s90, %s91
    %p105 = scmp.eq.s32.totalorder %s15, 1
    %p106 = por %p104, %p105
    %p108 = scmp.ne.s32.totalorder %s91, %s107
    %p109 = scmp.eq.s32.totalorder %s15, 0
    %p110 = por %p108, %p109
    %p111 = scmp.le.s32.totalorder 1, %s9
    %p112 = scmp.lt.s32.totalorder %s9, 3
    %p113 = pnand %p111, %p112
    %p114 = pneg %p113
    // Predicated region
    $region9: #{alignment_forward.16} parent=5 // pred_check
      _
    $region10: #{alignment_forward.16} parent=5 // pred_check_branch
      %116 = sbr.rel (%p113) target = $region12
    $region11: #{alignment_forward.16} parent=5 // pred_region
      %s117 = ssub.s32 %s9, 1
      // Predicated region
      $region13: #{alignment_forward.16} parent=11 // pred_check
        %p118 = pneg %p56
      $region14: #{alignment_forward.16} parent=11 // pred_check_branch
        %120 = sbr.rel (%p118) target = $region16
      $region15: #{alignment_forward.16} parent=11 // pred_region
        _
      $region16: #{alignment_forward.16} parent=11 // pred_fallthru
        _
      // Predicated region
      $region17: #{alignment_forward.16} parent=11 // pred_check
        %p121 = pneg %p77
      $region18: #{alignment_forward.16} parent=11 // pred_check_branch
        %123 = sbr.rel (%p121) target = $region20
      $region19: #{alignment_forward.16} parent=11 // pred_region
        _
      $region20: #{alignment_forward.16} parent=11 // pred_fallthru
        _
    $region12: #{alignment_forward.16} parent=5 // pred_fallthru
      _
    %p124 = scmp.lt.s32.totalorder %s9, 2
    // Predicated region
    $region21: #{alignment_forward.16} parent=5 // pred_check
      %p125 = pneg %p124
    $region22: #{alignment_forward.16} parent=5 // pred_check_branch
      %127 = sbr.rel (%p125) target = $region24
    $region23: #{alignment_forward.16} parent=5 // pred_region
      // Predicated region
      $region25: #{alignment_forward.16} parent=23 // pred_check
        %p128 = pneg %p29
      $region26: #{alignment_forward.16} parent=23 // pred_check_branch
        %130 = sbr.rel (%p128) target = $region28
      $region27: #{alignment_forward.16} parent=23 // pred_region
        %p131 = scmp.lt.s32.totalorder %s9, 1
        %s132 = scalar_select %p131, %s9, 1
        %s133 = smul.addr %s132, 6
        %s134 = smul.addr %s133, 8
        %s135 = scalar_lea.vmem %s0, %s134
      $region28: #{alignment_forward.16} parent=23 // pred_fallthru
        _
    $region24: #{alignment_forward.16} parent=5 // pred_fallthru
      _
    %p136 = scmp.le.s32.totalorder 1, %s9
    %p137 = scmp.lt.s32.totalorder %s9, 3
    %p138 = pnand %p136, %p137
    %p139 = pneg %p138
    // Predicated region
    $region29: #{alignment_forward.16} parent=5 // pred_check
      _
    $region30: #{alignment_forward.16} parent=5 // pred_check_branch
      %141 = sbr.rel (%p138) target = $region32
    $region31: #{alignment_forward.16} parent=5 // pred_region
      %s142 = ssub.s32 %s9, 1
      %p143 = scmp.lt.s32.totalorder %s14, 1
      %s144 = scalar_select %p143, %s14, 1
      %s145 = smul.addr %s144, 6
      %s146 = smul.addr %s145, 8
      %s147 = scalar_lea.vmem %s0, %s146
      %p148 = pneg %p35
      %p149 = pneg %p32
      %p150 = pneg %p56
      %p151 = pneg %p53
      %p152 = pneg %p77
      %p153 = pneg %p74
      %p154 = pneg %p103
      %p155 = pneg %p100
      %p156 = scmp.lt.s32.totalorder %s14, 1
      %s157 = scalar_select %p156, %s14, 1
      %s158 = smul.addr %s157, 54
      %s159 = smul.addr %s158, 8
      %s160 = scalar_lea.vmem %s3, %s159
      %p161 = scmp.lt.s32.totalorder %s14, 1
      %s162 = scalar_select %p161, %s14, 1
      %s163 = smul.addr %s162, 6
      %s164 = smul.addr %s163, 8
      %s165 = scalar_lea.vmem %s0, %s164
      %p166 = scmp.lt.s32.totalorder %s14, 1
      %s167 = scalar_select %p166, %s14, 1
      %s168 = smul.addr %s167, 54
      %s169 = smul.addr %s168, 8
      %s170 = scalar_lea.vmem %s3, %s169
      %v171 = vlaneseq
      %v172 = vand.u32 %v171, 127
      %v173 = vadd.s32 %v172, 128
      %vm174 = vcmp.lt.s32.totalorder %v172, 0
      %v175 = vsub.s32 0, %v172
      %v176 = vsel %vm174, %v175, %v172
      %v177 = vshrl.u32 %v176, 4
      %v178 = vand.u32 %v176, 15
      %v179 = vsub.s32 0, %v178
      %v180 = vsel %vm174, %v179, %v178
      %vm181 = vcmp.lt.s32.totalorder %v173, 0
      %v182 = vsub.s32 0, %v173
      %v183 = vsel %vm181, %v182, %v173
      %v184 = vshrl.u32 %v183, 4
      %v185 = vand.u32 %v183, 15
      %v186 = vsub.s32 0, %v185
      %v187 = vsel %vm181, %v186, %v185
      %vm188 = vcmp.ne.s32.totalorder %v180, 0
      %vm189 = vcmp.ne.s32.totalorder %v187, 0
      %vm190 = vcmp.lt.s32.totalorder %v180, 0
      %vm191 = vcmp.lt.s32.totalorder %v187, 0
      %vm192 = vmand %vm190, %vm188
      %vm193 = vmand %vm191, %vm189
      %v194 = vadd.s32 %v180, 16
      %v195 = vadd.s32 %v187, 16
      %v196 = vsel %vm192, %v194, %v180
      %v197 = vsel %vm193, %v195, %v187
      %vm198 = vcmp.ne.s32.totalorder %v196, 0
      %vm199 = vcmp.ne.s32.totalorder %v197, 0
      %vm200 = vcmp.ne.s32.totalorder %v196, 15
      %vm201 = vcmp.ne.s32.totalorder %v197, 15
      %v202 = vld [vmem:[%s165] sm:$0xff]
      %v203 = vld [vmem:[%s165 + $0x8] sm:$0xff]
      %v204 = vld [vmem:[%s165 + $0x18] sm:$0xff]
      %v205 = vld [vmem:[%s165 + $0x20] sm:$0xff]
      %v206 = vsel %vm198, 1, 0
      %v207 = vsel %vm199, 1, 0
      %vm208 = vcmp.eq.s32.totalorder %v206, 1
      %vm209 = vcmp.eq.s32.totalorder %v207, 1
      %v210 = vsel %vm208, %v202, 0.0
      %v211 = vsel %vm209, %v203, 0.0
      %v212 = vsel %vm208, %v204, 0.0
      %v213 = vsel %vm209, %v205, 0.0
      %214 = vst [vmem:[#allocation2] sm:$0xff] %v210
      %215 = vst [vmem:[#allocation2 + $0x8] sm:$0xff] %v211
      %216 = vst [vmem:[#allocation2 + $0x10] sm:$0xff] %v212
      %217 = vst [vmem:[#allocation2 + $0x18] sm:$0xff] %v213
      %v218 = vld [vmem:[%s165] sm:$0xff]
      %v219 = vld [vmem:[%s165 + $0x8] sm:$0xff]
      %v220 = vld [vmem:[%s165 + $0x10] sm:$0xff]
      %v221 = vld [vmem:[%s165 + $0x18] sm:$0xff]
      %v222 = vld [vmem:[%s165 + $0x20] sm:$0xff]
      %v223 = vld [vmem:[%s165 + $0x28] sm:$0xff]
      %230 = vrot.lane.b32.xlu0 %v218, 127
      %v231 = vpop.permute.xlu0 %230
      %232 = vrot.lane.b32.xlu0 %v219, 127
      %v233 = vpop.permute.xlu0 %232
      %234 = vrot.lane.b32.xlu0 %v220, 127
      %v235 = vpop.permute.xlu0 %234
      %236 = vrot.lane.b32.xlu0 %v221, 127
      %v237 = vpop.permute.xlu0 %236
      %238 = vrot.lane.b32.xlu0 %v222, 127
      %v239 = vpop.permute.xlu0 %238
      %240 = vrot.lane.b32.xlu0 %v223, 127
      %v241 = vpop.permute.xlu0 %240
      %vm242 = vcmask 1039360
      %v243 = vsel %vm242, %v231, %v233
      %v244 = vsel %vm242, %v233, %v235
      %v245 = vsel %vm242, %v237, %v239
      %v246 = vsel %vm242, %v239, %v241
      %251 = vst [vmem:[#allocation2 + $0x20] sm:$0xff] %v243
      %252 = vst [vmem:[#allocation2 + $0x28] sm:$0xff] %v244
      %253 = vst [vmem:[#allocation2 + $0x30] sm:$0xff] %v245
      %254 = vst [vmem:[#allocation2 + $0x38] sm:$0xff] %v246
      %v255 = vld [vmem:[%s165] sm:$0xff]
      %v256 = vld [vmem:[%s165 + $0x8] sm:$0xff]
      %v257 = vld [vmem:[%s165 + $0x10] sm:$0xff]
      %v258 = vld [vmem:[%s165 + $0x18] sm:$0xff]
      %v259 = vld [vmem:[%s165 + $0x20] sm:$0xff]
      %v260 = vld [vmem:[%s165 + $0x28] sm:$0xff]
      %v261 = vsel %vm200, 1, 0
      %v262 = vsel %vm201, 1, 0
      %vm263 = vcmp.eq.s32.totalorder %v261, 1
      %vm264 = vcmp.eq.s32.totalorder %v262, 1
      %271 = vrot.lane.b32.xlu0 %v255, 126
      %v272 = vpop.permute.xlu0 %271
      %273 = vrot.lane.b32.xlu0 %v256, 126
      %v274 = vpop.permute.xlu0 %273
      %275 = vrot.lane.b32.xlu0 %v257, 126
      %v276 = vpop.permute.xlu0 %275
      %277 = vrot.lane.b32.xlu0 %v258, 126
      %v278 = vpop.permute.xlu0 %277
      %279 = vrot.lane.b32.xlu0 %v259, 126
      %v280 = vpop.permute.xlu0 %279
      %281 = vrot.lane.b32.xlu0 %v260, 126
      %v282 = vpop.permute.xlu0 %281
      %vm283 = vcmask 1031168
      %v284 = vsel %vm283, %v272, %v274
      %v285 = vsel %vm283, %v274, %v276
      %v286 = vsel %vm283, %v278, %v280
      %v287 = vsel %vm283, %v280, %v282
      %v292 = vsel %vm263, %v284, 0.0
      %v293 = vsel %vm264, %v285, 0.0
      %v294 = vsel %vm263, %v286, 0.0
      %v295 = vsel %vm264, %v287, 0.0
      %296 = vst [vmem:[#allocation2 + $0x40] sm:$0xff] %v292
      %297 = vst [vmem:[#allocation2 + $0x48] sm:$0xff] %v293
      %298 = vst [vmem:[#allocation2 + $0x50] sm:$0xff] %v294
      %299 = vst [vmem:[#allocation2 + $0x58] sm:$0xff] %v295
      %v300 = vld [vmem:[%s165] sm:$0xff]
      %v301 = vld [vmem:[%s165 + $0x8] sm:$0xff]
      %v302 = vld [vmem:[%s165 + $0x10] sm:$0xff]
      %v303 = vld [vmem:[%s165 + $0x18] sm:$0xff]
      %v304 = vld [vmem:[%s165 + $0x20] sm:$0xff]
      %v305 = vld [vmem:[%s165 + $0x28] sm:$0xff]
      %312 = vrot.lane.b32.xlu0 %v300, 112
      %v313 = vpop.permute.xlu0 %312
      %314 = vrot.lane.b32.xlu0 %v301, 112
      %v315 = vpop.permute.xlu0 %314
      %316 = vrot.lane.b32.xlu0 %v302, 112
      %v317 = vpop.permute.xlu0 %316
      %318 = vrot.lane.b32.xlu0 %v303, 112
      %v319 = vpop.permute.xlu0 %318
      %320 = vrot.lane.b32.xlu0 %v304, 112
      %v321 = vpop.permute.xlu0 %320
      %322 = vrot.lane.b32.xlu0 %v305, 112
      %v323 = vpop.permute.xlu0 %322
      %vm324 = vcmask 916480
      %v325 = vsel %vm324, %v313, %v315
      %v326 = vsel %vm324, %v315, %v317
      %v327 = vsel %vm324, %v319, %v321
      %v328 = vsel %vm324, %v321, %v323
      %v333 = vsel %vm208, %v325, 0.0
      %v334 = vsel %vm209, %v326, 0.0
      %v335 = vsel %vm208, %v327, 0.0
      %v336 = vsel %vm209, %v328, 0.0
      %337 = vst [vmem:[#allocation2 + $0x60] sm:$0xff] %v333
      %338 = vst [vmem:[#allocation2 + $0x68] sm:$0xff] %v334
      %339 = vst [vmem:[#allocation2 + $0x70] sm:$0xff] %v335
      %340 = vst [vmem:[#allocation2 + $0x78] sm:$0xff] %v336
      %v341 = vld [vmem:[%s165] sm:$0xff]
      %v342 = vld [vmem:[%s165 + $0x8] sm:$0xff]
      %v343 = vld [vmem:[%s165 + $0x10] sm:$0xff]
      %v344 = vld [vmem:[%s165 + $0x18] sm:$0xff]
      %v345 = vld [vmem:[%s165 + $0x20] sm:$0xff]
      %v346 = vld [vmem:[%s165 + $0x28] sm:$0xff]
      %353 = vrot.lane.b32.xlu0 %v341, 111
      %v354 = vpop.permute.xlu0 %353
      %355 = vrot.lane.b32.xlu0 %v342, 111
      %v356 = vpop.permute.xlu0 %355
      %357 = vrot.lane.b32.xlu0 %v343, 111
      %v358 = vpop.permute.xlu0 %357
      %359 = vrot.lane.b32.xlu0 %v344, 111
      %v360 = vpop.permute.xlu0 %359
      %361 = vrot.lane.b32.xlu0 %v345, 111
      %v362 = vpop.permute.xlu0 %361
      %363 = vrot.lane.b32.xlu0 %v346, 111
      %v364 = vpop.permute.xlu0 %363
      %vm365 = vcmask 908288
      %v366 = vsel %vm365, %v354, %v356
      %v367 = vsel %vm365, %v356, %v358
      %v368 = vsel %vm365, %v360, %v362
      %v369 = vsel %vm365, %v362, %v364
      %374 = vst [vmem:[#allocation2 + $0x80] sm:$0xff] %v366
      %375 = vst [vmem:[#allocation2 + $0x88] sm:$0xff] %v367
      %376 = vst [vmem:[#allocation2 + $0x90] sm:$0xff] %v368
      %377 = vst [vmem:[#allocation2 + $0x98] sm:$0xff] %v369
      %v378 = vld [vmem:[%s165] sm:$0xff]
      %v379 = vld [vmem:[%s165 + $0x8] sm:$0xff]
      %v380 = vld [vmem:[%s165 + $0x10] sm:$0xff]
      %v381 = vld [vmem:[%s165 + $0x18] sm:$0xff]
      %v382 = vld [vmem:[%s165 + $0x20] sm:$0xff]
      %v383 = vld [vmem:[%s165 + $0x28] sm:$0xff]
      %390 = vrot.lane.b32.xlu0 %v378, 110
      %v391 = vpop.permute.xlu0 %390
      %392 = vrot.lane.b32.xlu0 %v379, 110
      %v393 = vpop.permute.xlu0 %392
      %394 = vrot.lane.b32.xlu0 %v380, 110
      %v395 = vpop.permute.xlu0 %394
      %396 = vrot.lane.b32.xlu0 %v381, 110
      %v397 = vpop.permute.xlu0 %396
      %398 = vrot.lane.b32.xlu0 %v382, 110
      %v399 = vpop.permute.xlu0 %398
      %400 = vrot.lane.b32.xlu0 %v383, 110
      %v401 = vpop.permute.xlu0 %400
      %vm402 = vcmask 900096
      %v403 = vsel %vm402, %v391, %v393
      %v404 = vsel %vm402, %v393, %v395
      %v405 = vsel %vm402, %v397, %v399
      %v406 = vsel %vm402, %v399, %v401
      %v411 = vsel %vm263, %v403, 0.0
      %v412 = vsel %vm264, %v404, 0.0
      %v413 = vsel %vm263, %v405, 0.0
      %v414 = vsel %vm264, %v406, 0.0
      %415 = vst [vmem:[#allocation2 + $0xa0] sm:$0xff] %v411
      %416 = vst [vmem:[#allocation2 + $0xa8] sm:$0xff] %v412
      %417 = vst [vmem:[#allocation2 + $0xb0] sm:$0xff] %v413
      %418 = vst [vmem:[#allocation2 + $0xb8] sm:$0xff] %v414
      %v419 = vld [vmem:[%s165] sm:$0xff]
      %v420 = vld [vmem:[%s165 + $0x8] sm:$0xff]
      %v421 = vld [vmem:[%s165 + $0x10] sm:$0xff]
      %v422 = vld [vmem:[%s165 + $0x18] sm:$0xff]
      %v423 = vld [vmem:[%s165 + $0x20] sm:$0xff]
      %v424 = vld [vmem:[%s165 + $0x28] sm:$0xff]
      %431 = vrot.lane.b32.xlu0 %v419, 96
      %v432 = vpop.permute.xlu0 %431
      %433 = vrot.lane.b32.xlu0 %v420, 96
      %v434 = vpop.permute.xlu0 %433
      %435 = vrot.lane.b32.xlu0 %v421, 96
      %v436 = vpop.permute.xlu0 %435
      %437 = vrot.lane.b32.xlu0 %v422, 96
      %v438 = vpop.permute.xlu0 %437
      %439 = vrot.lane.b32.xlu0 %v423, 96
      %v440 = vpop.permute.xlu0 %439
      %441 = vrot.lane.b32.xlu0 %v424, 96
      %v442 = vpop.permute.xlu0 %441
      %vm443 = vcmask 785408
      %v444 = vsel %vm443, %v432, %v434
      %v445 = vsel %vm443, %v434, %v436
      %v446 = vsel %vm443, %v438, %v440
      %v447 = vsel %vm443, %v440, %v442
      %v452 = vsel %vm208, %v444, 0.0
      %v453 = vsel %vm209, %v445, 0.0
      %v454 = vsel %vm208, %v446, 0.0
      %v455 = vsel %vm209, %v447, 0.0
      %456 = vst [vmem:[#allocation2 + $0xc0] sm:$0xff] %v452
      %457 = vst [vmem:[#allocation2 + $0xc8] sm:$0xff] %v453
      %458 = vst [vmem:[#allocation2 + $0xd0] sm:$0xff] %v454
      %459 = vst [vmem:[#allocation2 + $0xd8] sm:$0xff] %v455
      %v460 = vld [vmem:[%s165] sm:$0xff]
      %v461 = vld [vmem:[%s165 + $0x8] sm:$0xff]
      %v462 = vld [vmem:[%s165 + $0x10] sm:$0xff]
      %v463 = vld [vmem:[%s165 + $0x18] sm:$0xff]
      %v464 = vld [vmem:[%s165 + $0x20] sm:$0xff]
      %v465 = vld [vmem:[%s165 + $0x28] sm:$0xff]
      %472 = vrot.lane.b32.xlu0 %v460, 95
      %v473 = vpop.permute.xlu0 %472
      %474 = vrot.lane.b32.xlu0 %v461, 95
      %v475 = vpop.permute.xlu0 %474
      %476 = vrot.lane.b32.xlu0 %v462, 95
      %v477 = vpop.permute.xlu0 %476
      %478 = vrot.lane.b32.xlu0 %v463, 95
      %v479 = vpop.permute.xlu0 %478
      %480 = vrot.lane.b32.xlu0 %v464, 95
      %v481 = vpop.permute.xlu0 %480
      %482 = vrot.lane.b32.xlu0 %v465, 95
      %v483 = vpop.permute.xlu0 %482
      %vm484 = vcmask 777216
      %v485 = vsel %vm484, %v473, %v475
      %v486 = vsel %vm484, %v475, %v477
      %v487 = vsel %vm484, %v479, %v481
      %v488 = vsel %vm484, %v481, %v483
      %493 = vst [vmem:[#allocation2 + $0xe0] sm:$0xff] %v485
      %494 = vst [vmem:[#allocation2 + $0xe8] sm:$0xff] %v486
      %495 = vst [vmem:[#allocation2 + $0xf0] sm:$0xff] %v487
      %496 = vst [vmem:[#allocation2 + $0xf8] sm:$0xff] %v488
      %v497 = vld [vmem:[%s165] sm:$0xff]
      %v498 = vld [vmem:[%s165 + $0x8] sm:$0xff]
      %v499 = vld [vmem:[%s165 + $0x10] sm:$0xff]
      %v500 = vld [vmem:[%s165 + $0x18] sm:$0xff]
      %v501 = vld [vmem:[%s165 + $0x20] sm:$0xff]
      %v502 = vld [vmem:[%s165 + $0x28] sm:$0xff]
      %509 = vrot.lane.b32.xlu0 %v497, 94
      %v510 = vpop.permute.xlu0 %509
      %511 = vrot.lane.b32.xlu0 %v498, 94
      %v512 = vpop.permute.xlu0 %511
      %513 = vrot.lane.b32.xlu0 %v499, 94
      %v514 = vpop.permute.xlu0 %513
      %515 = vrot.lane.b32.xlu0 %v500, 94
      %v516 = vpop.permute.xlu0 %515
      %517 = vrot.lane.b32.xlu0 %v501, 94
      %v518 = vpop.permute.xlu0 %517
      %519 = vrot.lane.b32.xlu0 %v502, 94
      %v520 = vpop.permute.xlu0 %519
      %vm521 = vcmask 769024
      %v522 = vsel %vm521, %v510, %v512
      %v523 = vsel %vm521, %v512, %v514
      %v524 = vsel %vm521, %v516, %v518
      %v525 = vsel %vm521, %v518, %v520
      %v530 = vsel %vm263, %v522, 0.0
      %v531 = vsel %vm264, %v523, 0.0
      %v532 = vsel %vm263, %v524, 0.0
      %v533 = vsel %vm264, %v525, 0.0
      %534 = vst [vmem:[#allocation2 + $0x100] sm:$0xff] %v530
      %535 = vst [vmem:[#allocation2 + $0x108] sm:$0xff] %v531
      %536 = vst [vmem:[#allocation2 + $0x110] sm:$0xff] %v532
      %537 = vst [vmem:[#allocation2 + $0x118] sm:$0xff] %v533
      %v538 = vld [vmem:[%s1] sm:$0xff]
      %v539 = vld [vmem:[%s1 + $0x8] sm:$0xff]
      %v540 = vld [vmem:[%s1 + $0x10] sm:$0xff]
      %v541 = vld [vmem:[%s1 + $0x18] sm:$0xff]
      %v542 = vld [vmem:[%s1 + $0x20] sm:$0xff]
      %v543 = vld [vmem:[%s1 + $0x28] sm:$0xff]
      %v544 = vld [vmem:[%s1 + $0x30] sm:$0xff]
      %v545 = vld [vmem:[%s1 + $0x38] sm:$0xff]
      %v546 = vld [vmem:[%s1 + $0x40] sm:$0xff]
      %v547 = vld [vmem:[%s1 + $0x48] sm:$0xff]
      %v548 = vld [vmem:[%s1 + $0x50] sm:$0xff]
      %v549 = vld [vmem:[%s1 + $0x58] sm:$0xff]
      %v550 = vld [vmem:[%s1 + $0x60] sm:$0xff]
      %v551 = vld [vmem:[%s1 + $0x68] sm:$0xff]
      %v552 = vld [vmem:[%s1 + $0x70] sm:$0xff]
      %v553 = vld [vmem:[%s1 + $0x78] sm:$0xff]
      %v554 = vld [vmem:[%s1 + $0x80] sm:$0xff]
      %v555 = vld [vmem:[%s1 + $0x88] sm:$0xff]
      %v556 = vld [vmem:[%s1 + $0x90] sm:$0xff]
      %v557 = vld [vmem:[%s1 + $0x98] sm:$0xff]
      %v558 = vld [vmem:[%s1 + $0xa0] sm:$0xff]
      %v559 = vld [vmem:[%s1 + $0xa8] sm:$0xff]
      %v560 = vld [vmem:[%s1 + $0xb0] sm:$0xff]
      %v561 = vld [vmem:[%s1 + $0xb8] sm:$0xff]
      %v562 = vld [vmem:[%s1 + $0xc0] sm:$0xff]
      %v563 = vld [vmem:[%s1 + $0xc8] sm:$0xff]
      %v564 = vld [vmem:[%s1 + $0xd0] sm:$0xff]
      %v565 = vld [vmem:[%s1 + $0xd8] sm:$0xff]
      %v566 = vld [vmem:[%s1 + $0xe0] sm:$0xff]
      %v567 = vld [vmem:[%s1 + $0xe8] sm:$0xff]
      %v568 = vld [vmem:[%s1 + $0xf0] sm:$0xff]
      %v569 = vld [vmem:[%s1 + $0xf8] sm:$0xff]
      %v570 = vld [vmem:[%s1 + $0x100] sm:$0xff]
      %v571 = vld [vmem:[%s1 + $0x108] sm:$0xff]
      %v572 = vld [vmem:[%s1 + $0x110] sm:$0xff]
      %v573 = vld [vmem:[%s1 + $0x118] sm:$0xff]
      %v574 = vld [vmem:[%s1 + $0x120] sm:$0xff]
      %v575 = vld [vmem:[%s1 + $0x128] sm:$0xff]
      %v576 = vld [vmem:[%s1 + $0x130] sm:$0xff]
      %v577 = vld [vmem:[%s1 + $0x138] sm:$0xff]
      %v578 = vld [vmem:[%s1 + $0x140] sm:$0xff]
      %v579 = vld [vmem:[%s1 + $0x148] sm:$0xff]
      %v580 = vld [vmem:[%s1 + $0x150] sm:$0xff]
      %v581 = vld [vmem:[%s1 + $0x158] sm:$0xff]
      %v582 = vld [vmem:[%s1 + $0x160] sm:$0xff]
      %v583 = vld [vmem:[%s1 + $0x168] sm:$0xff]
      %v584 = vld [vmem:[%s1 + $0x170] sm:$0xff]
      %v585 = vld [vmem:[%s1 + $0x178] sm:$0xff]
      %v586 = vld [vmem:[%s1 + $0x180] sm:$0xff]
      %v587 = vld [vmem:[%s1 + $0x188] sm:$0xff]
      %v588 = vld [vmem:[%s1 + $0x190] sm:$0xff]
      %v589 = vld [vmem:[%s1 + $0x198] sm:$0xff]
      %v590 = vld [vmem:[%s1 + $0x1a0] sm:$0xff]
      %v591 = vld [vmem:[%s1 + $0x1a8] sm:$0xff]
      %v592 = vld [vmem:[#allocation2] sm:$0xff]
      %v593 = vld [vmem:[#allocation2 + $0x8] sm:$0xff]
      %v594 = vld [vmem:[#allocation2 + $0x10] sm:$0xff]
      %v595 = vld [vmem:[#allocation2 + $0x18] sm:$0xff]
      %v596 = vld [vmem:[#allocation2 + $0x20] sm:$0xff]
      %v597 = vld [vmem:[#allocation2 + $0x28] sm:$0xff]
      %v598 = vld [vmem:[#allocation2 + $0x30] sm:$0xff]
      %v599 = vld [vmem:[#allocation2 + $0x38] sm:$0xff]
      %v600 = vld [vmem:[#allocation2 + $0x40] sm:$0xff]
      %v601 = vld [vmem:[#allocation2 + $0x48] sm:$0xff]
      %v602 = vld [vmem:[#allocation2 + $0x50] sm:$0xff]
      %v603 = vld [vmem:[#allocation2 + $0x58] sm:$0xff]
      %v604 = vld [vmem:[#allocation2 + $0x60] sm:$0xff]
      %v605 = vld [vmem:[#allocation2 + $0x68] sm:$0xff]
      %v606 = vld [vmem:[#allocation2 + $0x70] sm:$0xff]
      %v607 = vld [vmem:[#allocation2 + $0x78] sm:$0xff]
      %v608 = vld [vmem:[#allocation2 + $0x80] sm:$0xff]
      %v609 = vld [vmem:[#allocation2 + $0x88] sm:$0xff]
      %v610 = vld [vmem:[#allocation2 + $0x90] sm:$0xff]
      %v611 = vld [vmem:[#allocation2 + $0x98] sm:$0xff]
      %v612 = vld [vmem:[#allocation2 + $0xa0] sm:$0xff]
      %v613 = vld [vmem:[#allocation2 + $0xa8] sm:$0xff]
      %v614 = vld [vmem:[#allocation2 + $0xb0] sm:$0xff]
      %v615 = vld [vmem:[#allocation2 + $0xb8] sm:$0xff]
      %v616 = vld [vmem:[#allocation2 + $0xc0] sm:$0xff]
      %v617 = vld [vmem:[#allocation2 + $0xc8] sm:$0xff]
      %v618 = vld [vmem:[#allocation2 + $0xd0] sm:$0xff]
      %v619 = vld [vmem:[#allocation2 + $0xd8] sm:$0xff]
      %v620 = vld [vmem:[#allocation2 + $0xe0] sm:$0xff]
      %v621 = vld [vmem:[#allocation2 + $0xe8] sm:$0xff]
      %v622 = vld [vmem:[#allocation2 + $0xf0] sm:$0xff]
      %v623 = vld [vmem:[#allocation2 + $0xf8] sm:$0xff]
      %v624 = vld [vmem:[#allocation2 + $0x100] sm:$0xff]
      %v625 = vld [vmem:[#allocation2 + $0x108] sm:$0xff]
      %v626 = vld [vmem:[#allocation2 + $0x110] sm:$0xff]
      %v627 = vld [vmem:[#allocation2 + $0x118] sm:$0xff]
      %v628 = vld [vmem:[%s2] sm:$0xff]
      %v629 = vld [vmem:[%s2 + $0x8] sm:$0xff]
      %v630 = vld [vmem:[%s2 + $0x10] sm:$0xff]
      %v631 = vld [vmem:[%s2 + $0x18] sm:$0xff]
      %v632 = vld [vmem:[%s2 + $0x20] sm:$0xff]
      %v633 = vld [vmem:[%s2 + $0x28] sm:$0xff]
      %v634 = vld [vmem:[%s2 + $0x30] sm:$0xff]
      %v635 = vld [vmem:[%s2 + $0x38] sm:$0xff]
      %v636 = vld [vmem:[%s2 + $0x40] sm:$0xff]
      %v637 = vld [vmem:[%s2 + $0x48] sm:$0xff]
      %v638 = vld [vmem:[%s2 + $0x50] sm:$0xff]
      %v639 = vld [vmem:[%s2 + $0x58] sm:$0xff]
      %v640 = vld [vmem:[%s2 + $0x60] sm:$0xff]
      %v641 = vld [vmem:[%s2 + $0x68] sm:$0xff]
      %v642 = vld [vmem:[%s2 + $0x70] sm:$0xff]
      %v643 = vld [vmem:[%s2 + $0x78] sm:$0xff]
      %v644 = vld [vmem:[%s2 + $0x80] sm:$0xff]
      %v645 = vld [vmem:[%s2 + $0x88] sm:$0xff]
      %v646 = vld [vmem:[%s2 + $0x90] sm:$0xff]
      %v647 = vld [vmem:[%s2 + $0x98] sm:$0xff]
      %v648 = vld [vmem:[%s2 + $0xa0] sm:$0xff]
      %v649 = vld [vmem:[%s2 + $0xa8] sm:$0xff]
      %v650 = vld [vmem:[%s2 + $0xb0] sm:$0xff]
      %v651 = vld [vmem:[%s2 + $0xb8] sm:$0xff]
      %v652 = vld [vmem:[%s2 + $0xc0] sm:$0xff]
      %v653 = vld [vmem:[%s2 + $0xc8] sm:$0xff]
      %v654 = vld [vmem:[%s2 + $0xd0] sm:$0xff]
      %656 = vset.pattern.permute.xlu0 0
      %657 = vperm.xlu0 %656, %v628
      %v658 = vpop.permute.xlu0 %657
      %661 = vset.pattern.permute.xlu0 0
      %662 = vperm.xlu0 %661, %v629
      %v663 = vpop.permute.xlu0 %662
      %666 = vset.pattern.permute.xlu0 0
      %667 = vperm.xlu0 %666, %v630
      %v668 = vpop.permute.xlu0 %667
      %671 = vset.pattern.permute.xlu0 0
      %672 = vperm.xlu0 %671, %v631
      %v673 = vpop.permute.xlu0 %672
      %676 = vset.pattern.permute.xlu0 0
      %677 = vperm.xlu0 %676, %v632
      %v678 = vpop.permute.xlu0 %677
      %681 = vset.pattern.permute.xlu0 0
      %682 = vperm.xlu0 %681, %v633
      %v683 = vpop.permute.xlu0 %682
      %686 = vset.pattern.permute.xlu0 0
      %687 = vperm.xlu0 %686, %v634
      %v688 = vpop.permute.xlu0 %687
      %691 = vset.pattern.permute.xlu0 0
      %692 = vperm.xlu0 %691, %v635
      %v693 = vpop.permute.xlu0 %692
      %696 = vset.pattern.permute.xlu0 0
      %697 = vperm.xlu0 %696, %v636
      %v698 = vpop.permute.xlu0 %697
      %701 = vset.pattern.permute.xlu0 0
      %702 = vperm.xlu0 %701, %v637
      %v703 = vpop.permute.xlu0 %702
      %706 = vset.pattern.permute.xlu0 0
      %707 = vperm.xlu0 %706, %v638
      %v708 = vpop.permute.xlu0 %707
      %711 = vset.pattern.permute.xlu0 0
      %712 = vperm.xlu0 %711, %v639
      %v713 = vpop.permute.xlu0 %712
      %716 = vset.pattern.permute.xlu0 0
      %717 = vperm.xlu0 %716, %v640
      %v718 = vpop.permute.xlu0 %717
      %721 = vset.pattern.permute.xlu0 0
      %722 = vperm.xlu0 %721, %v641
      %v723 = vpop.permute.xlu0 %722
      %726 = vset.pattern.permute.xlu0 0
      %727 = vperm.xlu0 %726, %v642
      %v728 = vpop.permute.xlu0 %727
      %731 = vset.pattern.permute.xlu0 0
      %732 = vperm.xlu0 %731, %v643
      %v733 = vpop.permute.xlu0 %732
      %736 = vset.pattern.permute.xlu0 0
      %737 = vperm.xlu0 %736, %v644
      %v738 = vpop.permute.xlu0 %737
      %741 = vset.pattern.permute.xlu0 0
      %742 = vperm.xlu0 %741, %v645
      %v743 = vpop.permute.xlu0 %742
      %746 = vset.pattern.permute.xlu0 0
      %747 = vperm.xlu0 %746, %v646
      %v748 = vpop.permute.xlu0 %747
      %751 = vset.pattern.permute.xlu0 0
      %752 = vperm.xlu0 %751, %v647
      %v753 = vpop.permute.xlu0 %752
      %756 = vset.pattern.permute.xlu0 0
      %757 = vperm.xlu0 %756, %v648
      %v758 = vpop.permute.xlu0 %757
      %761 = vset.pattern.permute.xlu0 0
      %762 = vperm.xlu0 %761, %v649
      %v763 = vpop.permute.xlu0 %762
      %766 = vset.pattern.permute.xlu0 0
      %767 = vperm.xlu0 %766, %v650
      %v768 = vpop.permute.xlu0 %767
      %771 = vset.pattern.permute.xlu0 0
      %772 = vperm.xlu0 %771, %v651
      %v773 = vpop.permute.xlu0 %772
      %776 = vset.pattern.permute.xlu0 0
      %777 = vperm.xlu0 %776, %v652
      %v778 = vpop.permute.xlu0 %777
      %781 = vset.pattern.permute.xlu0 0
      %782 = vperm.xlu0 %781, %v653
      %v783 = vpop.permute.xlu0 %782
      %786 = vset.pattern.permute.xlu0 0
      %787 = vperm.xlu0 %786, %v654
      %v788 = vpop.permute.xlu0 %787
      %vm790 = vcmask 130048
      %v792 = vsel %vm790, %v539, 0
      %v795 = vsel %vm790, %v541, 0
      %v798 = vsel %vm790, %v543, 0
      %v801 = vsel %vm790, %v545, 0
      %v804 = vsel %vm790, %v547, 0
      %v807 = vsel %vm790, %v549, 0
      %v810 = vsel %vm790, %v551, 0
      %v813 = vsel %vm790, %v553, 0
      %v816 = vsel %vm790, %v555, 0
      %v819 = vsel %vm790, %v557, 0
      %v822 = vsel %vm790, %v559, 0
      %v825 = vsel %vm790, %v561, 0
      %v828 = vsel %vm790, %v563, 0
      %v831 = vsel %vm790, %v565, 0
      %v834 = vsel %vm790, %v567, 0
      %v837 = vsel %vm790, %v569, 0
      %v840 = vsel %vm790, %v571, 0
      %v843 = vsel %vm790, %v573, 0
      %v846 = vsel %vm790, %v575, 0
      %v849 = vsel %vm790, %v577, 0
      %v852 = vsel %vm790, %v579, 0
      %v855 = vsel %vm790, %v581, 0
      %v858 = vsel %vm790, %v583, 0
      %v861 = vsel %vm790, %v585, 0
      %v864 = vsel %vm790, %v587, 0
      %v867 = vsel %vm790, %v589, 0
      %v870 = vsel %vm790, %v591, 0
      %872 = vmatprep.subr.mxu0 %v593
      %873 = vmatpush1.msra.mxu0 %v592
      %874 = vmatprep.subr.mxu0 %v595
      %875 = vmatpush1.msra.mxu0 %v594
      %876 = vmatprep.subr.mxu0 %v597
      %877 = vmatpush1.msra.mxu0 %v596
      %878 = vmatprep.subr.mxu0 %v599
      %879 = vmatpush1.msra.mxu0 %v598
      %880 = vmatprep.subr.mxu0 %v601
      %881 = vmatpush1.msra.mxu0 %v600
      %882 = vmatprep.subr.mxu0 %v603
      %883 = vmatpush1.msra.mxu0 %v602
      %884 = vmatprep.subr.mxu0 %v605
      %885 = vmatpush1.msra.mxu0 %v604
      %886 = vmatprep.subr.mxu0 %v607
      %887 = vmatpush1.msra.mxu0 %v606
      %888 = vmatprep.subr.mxu0 %v609
      %889 = vmatpush1.msra.mxu0 %v608
      %890 = vmatprep.subr.mxu0 %v611
      %891 = vmatpush1.msra.mxu0 %v610
      %892 = vmatprep.subr.mxu0 %v613
      %893 = vmatpush1.msra.mxu0 %v612
      %894 = vmatprep.subr.mxu0 %v615
      %895 = vmatpush1.msra.mxu0 %v614
      %896 = vmatprep.subr.mxu0 %v617
      %897 = vmatpush1.msra.mxu0 %v616
      %898 = vmatprep.subr.mxu0 %v619
      %899 = vmatpush1.msra.mxu0 %v618
      %900 = vmatprep.subr.mxu0 %v621
      %901 = vmatpush1.msra.mxu0 %v620
      %902 = vmatprep.subr.mxu0 %v623
      %903 = vmatpush1.msra.mxu0 %v622
      %904 = vmatprep.subr.mxu0 %v625
      %905 = vmatpush1.msra.mxu0 %v624
      %906 = vmatprep.subr.mxu0 %v627
      %907 = vmatpush1.msra.mxu0 %v626
      %908 = vmatprep.subr.mxu0 0.0
      %909 = vmatpush1.msra.mxu0 0.0
      %910 = vmatprep.subr.mxu0 0.0
      %911 = vmatpush1.msra.mxu0 0.0
      %912 = vmatprep.subr.mxu0 0.0
      %913 = vmatpush1.msra.mxu0 0.0
      %914 = vmatprep.subr.mxu0 0.0
      %915 = vmatpush1.msra.mxu0 0.0
      %916 = vmatprep.subr.mxu0 0.0
      %917 = vmatpush1.msra.mxu0 0.0
      %918 = vmatprep.subr.mxu0 0.0
      %919 = vmatpush1.msra.mxu0 0.0
      %920 = vmatprep.subr.mxu0 0.0
      %921 = vmatpush1.msra.mxu0 0.0
      %922 = vmatprep.subr.mxu0 0.0
      %923 = vmatpush1.msra.mxu0 0.0
      %924 = vmatprep.subr.mxu0 0.0
      %925 = vmatpush1.msra.mxu0 0.0
      %926 = vmatprep.subr.mxu0 0.0
      %927 = vmatpush1.msra.mxu0 0.0
      %928 = vmatprep.subr.mxu0 0.0
      %929 = vmatpush1.msra.mxu0 0.0
      %930 = vmatprep.subr.mxu0 0.0
      %931 = vmatpush1.msra.mxu0 0.0
      %932 = vmatprep.subr.mxu0 0.0
      %933 = vmatpush1.msra.mxu0 0.0
      %934 = vmatprep.subr.mxu0 0.0
      %935 = vmatpush1.msra.mxu0 0.0
      %936 = vmatprep.mubr.f32.mxu0 %v792
      %937 = vmatmul.mubr.f32.gmra.mrb[0].mxu0 %v538
      %v938 = vpop.f32.mrb[0].mxu0
      %v939 = vadd.f32 %v658, %v938
      %v940 = vpop.f32.mrb[0].mxu0
      %v941 = vadd.f32 %v658, %v940
      %942 = vmatprep.mubr.f32.mxu0 %v795
      %943 = vmatmul.mubr.f32.gmra.mrb[0].mxu0 %v540
      %v944 = vpop.f32.mrb[0].mxu0
      %v945 = vadd.f32 %v663, %v944
      %v946 = vpop.f32.mrb[0].mxu0
      %v947 = vadd.f32 %v663, %v946
      %948 = vmatprep.mubr.f32.mxu0 %v798
      %949 = vmatmul.mubr.f32.gmra.mrb[0].mxu0 %v542
      %v950 = vpop.f32.mrb[0].mxu0
      %v951 = vadd.f32 %v668, %v950
      %v952 = vpop.f32.mrb[0].mxu0
      %v953 = vadd.f32 %v668, %v952
      %954 = vmatprep.mubr.f32.mxu0 %v801
      %955 = vmatmul.mubr.f32.gmra.mrb[0].mxu0 %v544
      %v956 = vpop.f32.mrb[0].mxu0
      %v957 = vadd.f32 %v673, %v956
      %v958 = vpop.f32.mrb[0].mxu0
      %v959 = vadd.f32 %v673, %v958
      %960 = vmatprep.mubr.f32.mxu0 %v804
      %961 = vmatmul.mubr.f32.gmra.mrb[0].mxu0 %v546
      %v962 = vpop.f32.mrb[0].mxu0
      %v963 = vadd.f32 %v678, %v962
      %v964 = vpop.f32.mrb[0].mxu0
      %v965 = vadd.f32 %v678, %v964
      %966 = vmatprep.mubr.f32.mxu0 %v807
      %967 = vmatmul.mubr.f32.gmra.mrb[0].mxu0 %v548
      %v968 = vpop.f32.mrb[0].mxu0
      %v969 = vadd.f32 %v683, %v968
      %v970 = vpop.f32.mrb[0].mxu0
      %v971 = vadd.f32 %v683, %v970
      %972 = vmatprep.mubr.f32.mxu0 %v810
      %973 = vmatmul.mubr.f32.gmra.mrb[0].mxu0 %v550
      %v974 = vpop.f32.mrb[0].mxu0
      %v975 = vadd.f32 %v688, %v974
      %v976 = vpop.f32.mrb[0].mxu0
      %v977 = vadd.f32 %v688, %v976
      %978 = vmatprep.mubr.f32.mxu0 %v813
      %979 = vmatmul.mubr.f32.gmra.mrb[0].mxu0 %v552
      %v980 = vpop.f32.mrb[0].mxu0
      %v981 = vadd.f32 %v693, %v980
      %v982 = vpop.f32.mrb[0].mxu0
      %v983 = vadd.f32 %v693, %v982
      %984 = vmatprep.mubr.f32.mxu0 %v816
      %985 = vmatmul.mubr.f32.gmra.mrb[0].mxu0 %v554
      %v986 = vpop.f32.mrb[0].mxu0
      %v987 = vadd.f32 %v698, %v986
      %v988 = vpop.f32.mrb[0].mxu0
      %v989 = vadd.f32 %v698, %v988
      %990 = vmatprep.mubr.f32.mxu0 %v819
      %991 = vmatmul.mubr.f32.gmra.mrb[0].mxu0 %v556
      %v992 = vpop.f32.mrb[0].mxu0
      %v993 = vadd.f32 %v703, %v992
      %v994 = vpop.f32.mrb[0].mxu0
      %v995 = vadd.f32 %v703, %v994
      %996 = vmatprep.mubr.f32.mxu0 %v822
      %997 = vmatmul.mubr.f32.gmra.mrb[0].mxu0 %v558
      %v998 = vpop.f32.mrb[0].mxu0
      %v999 = vadd.f32 %v708, %v998
      %v1000 = vpop.f32.mrb[0].mxu0
      %v1001 = vadd.f32 %v708, %v1000
      %1002 = vmatprep.mubr.f32.mxu0 %v825
      %1003 = vmatmul.mubr.f32.gmra.mrb[0].mxu0 %v560
      %v1004 = vpop.f32.mrb[0].mxu0
      %v1005 = vadd.f32 %v713, %v1004
      %v1006 = vpop.f32.mrb[0].mxu0
      %v1007 = vadd.f32 %v713, %v1006
      %1008 = vmatprep.mubr.f32.mxu0 %v828
      %1009 = vmatmul.mubr.f32.gmra.mrb[0].mxu0 %v562
      %v1010 = vpop.f32.mrb[0].mxu0
      %v1011 = vadd.f32 %v718, %v1010
      %v1012 = vpop.f32.mrb[0].mxu0
      %v1013 = vadd.f32 %v718, %v1012
      %1014 = vmatprep.mubr.f32.mxu0 %v831
      %1015 = vmatmul.mubr.f32.gmra.mrb[0].mxu0 %v564
      %v1016 = vpop.f32.mrb[0].mxu0
      %v1017 = vadd.f32 %v723, %v1016
      %v1018 = vpop.f32.mrb[0].mxu0
      %v1019 = vadd.f32 %v723, %v1018
      %1020 = vmatprep.mubr.f32.mxu0 %v834
      %1021 = vmatmul.mubr.f32.gmra.mrb[0].mxu0 %v566
      %v1022 = vpop.f32.mrb[0].mxu0
      %v1023 = vadd.f32 %v728, %v1022
      %v1024 = vpop.f32.mrb[0].mxu0
      %v1025 = vadd.f32 %v728, %v1024
      %1026 = vmatprep.mubr.f32.mxu0 %v837
      %1027 = vmatmul.mubr.f32.gmra.mrb[0].mxu0 %v568
      %v1028 = vpop.f32.mrb[0].mxu0
      %v1029 = vadd.f32 %v733, %v1028
      %v1030 = vpop.f32.mrb[0].mxu0
      %v1031 = vadd.f32 %v733, %v1030
      %1032 = vmatprep.mubr.f32.mxu0 %v840
      %1033 = vmatmul.mubr.f32.gmra.mrb[0].mxu0 %v570
      %v1034 = vpop.f32.mrb[0].mxu0
      %v1035 = vadd.f32 %v738, %v1034
      %v1036 = vpop.f32.mrb[0].mxu0
      %v1037 = vadd.f32 %v738, %v1036
      %1038 = vmatprep.mubr.f32.mxu0 %v843
      %1039 = vmatmul.mubr.f32.gmra.mrb[0].mxu0 %v572
      %v1040 = vpop.f32.mrb[0].mxu0
      %v1041 = vadd.f32 %v743, %v1040
      %v1042 = vpop.f32.mrb[0].mxu0
      %v1043 = vadd.f32 %v743, %v1042
      %1044 = vmatprep.mubr.f32.mxu0 %v846
      %1045 = vmatmul.mubr.f32.gmra.mrb[0].mxu0 %v574
      %v1046 = vpop.f32.mrb[0].mxu0
      %v1047 = vadd.f32 %v748, %v1046
      %v1048 = vpop.f32.mrb[0].mxu0
      %v1049 = vadd.f32 %v748, %v1048
      %1050 = vmatprep.mubr.f32.mxu0 %v849
      %1051 = vmatmul.mubr.f32.gmra.mrb[0].mxu0 %v576
      %v1052 = vpop.f32.mrb[0].mxu0
      %v1053 = vadd.f32 %v753, %v1052
      %v1054 = vpop.f32.mrb[0].mxu0
      %v1055 = vadd.f32 %v753, %v1054
      %1056 = vmatprep.mubr.f32.mxu0 %v852
      %1057 = vmatmul.mubr.f32.gmra.mrb[0].mxu0 %v578
      %v1058 = vpop.f32.mrb[0].mxu0
      %v1059 = vadd.f32 %v758, %v1058
      %v1060 = vpop.f32.mrb[0].mxu0
      %v1061 = vadd.f32 %v758, %v1060
      %1062 = vmatprep.mubr.f32.mxu0 %v855
      %1063 = vmatmul.mubr.f32.gmra.mrb[0].mxu0 %v580
      %v1064 = vpop.f32.mrb[0].mxu0
      %v1065 = vadd.f32 %v763, %v1064
      %v1066 = vpop.f32.mrb[0].mxu0
      %v1067 = vadd.f32 %v763, %v1066
      %1068 = vmatprep.mubr.f32.mxu0 %v858
      %1069 = vmatmul.mubr.f32.gmra.mrb[0].mxu0 %v582
      %v1070 = vpop.f32.mrb[0].mxu0
      %v1071 = vadd.f32 %v768, %v1070
      %v1072 = vpop.f32.mrb[0].mxu0
      %v1073 = vadd.f32 %v768, %v1072
      %1074 = vmatprep.mubr.f32.mxu0 %v861
      %1075 = vmatmul.mubr.f32.gmra.mrb[0].mxu0 %v584
      %v1076 = vpop.f32.mrb[0].mxu0
      %v1077 = vadd.f32 %v773, %v1076
      %v1078 = vpop.f32.mrb[0].mxu0
      %v1079 = vadd.f32 %v773, %v1078
      %1080 = vmatprep.mubr.f32.mxu0 %v864
      %1081 = vmatmul.mubr.f32.gmra.mrb[0].mxu0 %v586
      %v1082 = vpop.f32.mrb[0].mxu0
      %v1083 = vadd.f32 %v778, %v1082
      %v1084 = vpop.f32.mrb[0].mxu0
      %v1085 = vadd.f32 %v778, %v1084
      %1086 = vmatprep.mubr.f32.mxu0 %v867
      %1087 = vmatmul.mubr.f32.gmra.mrb[0].mxu0 %v588
      %v1088 = vpop.f32.mrb[0].mxu0
      %v1089 = vadd.f32 %v783, %v1088
      %v1090 = vpop.f32.mrb[0].mxu0
      %v1091 = vadd.f32 %v783, %v1090
      %1092 = vmatprep.mubr.f32.mxu0 %v870
      %1093 = vmatmul.mubr.f32.gmra.mrb[0].mxu0 %v590
      %v1094 = vpop.f32.mrb[0].mxu0
      %v1095 = vadd.f32 %v788, %v1094
      %v1096 = vpop.f32.mrb[0].mxu0
      %v1097 = vadd.f32 %v788, %v1096
      %1098 = vdwg.mxu0
      %1099 = vst [vmem:[%s170] sm:$0xff] %v939
      %1100 = vst [vmem:[%s170 + $0x8] sm:$0xff] %v941
      %1101 = vst [vmem:[%s170 + $0x10] sm:$0xff] %v945
      %1102 = vst [vmem:[%s170 + $0x18] sm:$0xff] %v947
      %1103 = vst [vmem:[%s170 + $0x20] sm:$0xff] %v951
      %1104 = vst [vmem:[%s170 + $0x28] sm:$0xff] %v953
      %1105 = vst [vmem:[%s170 + $0x30] sm:$0xff] %v957
      %1106 = vst [vmem:[%s170 + $0x38] sm:$0xff] %v959
      %1107 = vst [vmem:[%s170 + $0x40] sm:$0xff] %v963
      %1108 = vst [vmem:[%s170 + $0x48] sm:$0xff] %v965
      %1109 = vst [vmem:[%s170 + $0x50] sm:$0xff] %v969
      %1110 = vst [vmem:[%s170 + $0x58] sm:$0xff] %v971
      %1111 = vst [vmem:[%s170 + $0x60] sm:$0xff] %v975
      %1112 = vst [vmem:[%s170 + $0x68] sm:$0xff] %v977
      %1113 = vst [vmem:[%s170 + $0x70] sm:$0xff] %v981
      %1114 = vst [vmem:[%s170 + $0x78] sm:$0xff] %v983
      %1115 = vst [vmem:[%s170 + $0x80] sm:$0xff] %v987
      %1116 = vst [vmem:[%s170 + $0x88] sm:$0xff] %v989
      %1117 = vst [vmem:[%s170 + $0x90] sm:$0xff] %v993
      %1118 = vst [vmem:[%s170 + $0x98] sm:$0xff] %v995
      %1119 = vst [vmem:[%s170 + $0xa0] sm:$0xff] %v999
      %1120 = vst [vmem:[%s170 + $0xa8] sm:$0xff] %v1001
      %1121 = vst [vmem:[%s170 + $0xb0] sm:$0xff] %v1005
      %1122 = vst [vmem:[%s170 + $0xb8] sm:$0xff] %v1007
      %1123 = vst [vmem:[%s170 + $0xc0] sm:$0xff] %v1011
      %1124 = vst [vmem:[%s170 + $0xc8] sm:$0xff] %v1013
      %1125 = vst [vmem:[%s170 + $0xd0] sm:$0xff] %v1017
      %1126 = vst [vmem:[%s170 + $0xd8] sm:$0xff] %v1019
      %1127 = vst [vmem:[%s170 + $0xe0] sm:$0xff] %v1023
      %1128 = vst [vmem:[%s170 + $0xe8] sm:$0xff] %v1025
      %1129 = vst [vmem:[%s170 + $0xf0] sm:$0xff] %v1029
      %1130 = vst [vmem:[%s170 + $0xf8] sm:$0xff] %v1031
      %1131 = vst [vmem:[%s170 + $0x100] sm:$0xff] %v1035
      %1132 = vst [vmem:[%s170 + $0x108] sm:$0xff] %v1037
      %1133 = vst [vmem:[%s170 + $0x110] sm:$0xff] %v1041
      %1134 = vst [vmem:[%s170 + $0x118] sm:$0xff] %v1043
      %v1135 = vxor.u32 %v1047, 2147483648
      %v1136 = vxor.u32 %v1049, 2147483648
      %v1137 = vxor.u32 %v1053, 2147483648
      %v1138 = vxor.u32 %v1055, 2147483648
      %v1139 = vxor.u32 %v1059, 2147483648
      %v1140 = vxor.u32 %v1061, 2147483648
      %v1141 = vxor.u32 %v1065, 2147483648
      %v1142 = vxor.u32 %v1067, 2147483648
      %v1143 = vxor.u32 %v1071, 2147483648
      %v1144 = vxor.u32 %v1073, 2147483648
      %v1145 = vxor.u32 %v1077, 2147483648
      %v1146 = vxor.u32 %v1079, 2147483648
      %v1147 = vxor.u32 %v1083, 2147483648
      %v1148 = vxor.u32 %v1085, 2147483648
      %v1149 = vxor.u32 %v1089, 2147483648
      %v1150 = vxor.u32 %v1091, 2147483648
      %v1151 = vxor.u32 %v1095, 2147483648
      %v1152 = vxor.u32 %v1097, 2147483648
      %v1153 = vmul.f32 %v1135, 1.442695
      %v1154 = vpow.pop %v1153
      %v1155 = vmul.f32 %v1136, 1.442695
      %v1156 = vpow.pop %v1155
      %v1157 = vmul.f32 %v1137, 1.442695
      %v1158 = vpow.pop %v1157
      %v1159 = vmul.f32 %v1138, 1.442695
      %v1160 = vpow.pop %v1159
      %v1161 = vmul.f32 %v1139, 1.442695
      %v1162 = vpow.pop %v1161
      %v1163 = vmul.f32 %v1140, 1.442695
      %v1164 = vpow.pop %v1163
      %v1165 = vmul.f32 %v1141, 1.442695
      %v1166 = vpow.pop %v1165
      %v1167 = vmul.f32 %v1142, 1.442695
      %v1168 = vpow.pop %v1167
      %v1169 = vmul.f32 %v1143, 1.442695
      %v1170 = vpow.pop %v1169
      %v1171 = vmul.f32 %v1144, 1.442695
      %v1172 = vpow.pop %v1171
      %v1173 = vmul.f32 %v1145, 1.442695
      %v1174 = vpow.pop %v1173
      %v1175 = vmul.f32 %v1146, 1.442695
      %v1176 = vpow.pop %v1175
      %v1177 = vmul.f32 %v1147, 1.442695
      %v1178 = vpow.pop %v1177
      %v1179 = vmul.f32 %v1148, 1.442695
      %v1180 = vpow.pop %v1179
      %v1181 = vmul.f32 %v1149, 1.442695
      %v1182 = vpow.pop %v1181
      %v1183 = vmul.f32 %v1150, 1.442695
      %v1184 = vpow.pop %v1183
      %v1185 = vmul.f32 %v1151, 1.442695
      %v1186 = vpow.pop %v1185
      %v1187 = vmul.f32 %v1152, 1.442695
      %v1188 = vpow.pop %v1187
      %v1189 = vadd.f32 %v1154, 1.0
      %v1190 = vadd.f32 %v1156, 1.0
      %v1191 = vadd.f32 %v1158, 1.0
      %v1192 = vadd.f32 %v1160, 1.0
      %v1193 = vadd.f32 %v1162, 1.0
      %v1194 = vadd.f32 %v1164, 1.0
      %v1195 = vadd.f32 %v1166, 1.0
      %v1196 = vadd.f32 %v1168, 1.0
      %v1197 = vadd.f32 %v1170, 1.0
      %v1198 = vadd.f32 %v1172, 1.0
      %v1199 = vadd.f32 %v1174, 1.0
      %v1200 = vadd.f32 %v1176, 1.0
      %v1201 = vadd.f32 %v1178, 1.0
      %v1202 = vadd.f32 %v1180, 1.0
      %v1203 = vadd.f32 %v1182, 1.0
      %v1204 = vadd.f32 %v1184, 1.0
      %v1205 = vadd.f32 %v1186, 1.0
      %v1206 = vadd.f32 %v1188, 1.0
      %v1207 = vrcp.pop %v1189
      %v1208 = vmul.f32 1.0, %v1207
      %v1209 = vrcp.pop %v1190
      %v1210 = vmul.f32 1.0, %v1209
      %v1211 = vrcp.pop %v1191
      %v1212 = vmul.f32 1.0, %v1211
      %v1213 = vrcp.pop %v1192
      %v1214 = vmul.f32 1.0, %v1213
      %v1215 = vrcp.pop %v1193
      %v1216 = vmul.f32 1.0, %v1215
      %v1217 = vrcp.pop %v1194
      %v1218 = vmul.f32 1.0, %v1217
      %v1219 = vrcp.pop %v1195
      %v1220 = vmul.f32 1.0, %v1219
      %v1221 = vrcp.pop %v1196
      %v1222 = vmul.f32 1.0, %v1221
      %v1223 = vrcp.pop %v1197
      %v1224 = vmul.f32 1.0, %v1223
      %v1225 = vrcp.pop %v1198
      %v1226 = vmul.f32 1.0, %v1225
      %v1227 = vrcp.pop %v1199
      %v1228 = vmul.f32 1.0, %v1227
      %v1229 = vrcp.pop %v1200
      %v1230 = vmul.f32 1.0, %v1229
      %v1231 = vrcp.pop %v1201
      %v1232 = vmul.f32 1.0, %v1231
      %v1233 = vrcp.pop %v1202
      %v1234 = vmul.f32 1.0, %v1233
      %v1235 = vrcp.pop %v1203
      %v1236 = vmul.f32 1.0, %v1235
      %v1237 = vrcp.pop %v1204
      %v1238 = vmul.f32 1.0, %v1237
      %v1239 = vrcp.pop %v1205
      %v1240 = vmul.f32 1.0, %v1239
      %v1241 = vrcp.pop %v1206
      %v1242 = vmul.f32 1.0, %v1241
      %1243 = vst [vmem:[%s170 + $0x120] sm:$0xff] %v1208
      %1244 = vst [vmem:[%s170 + $0x128] sm:$0xff] %v1210
      %1245 = vst [vmem:[%s170 + $0x130] sm:$0xff] %v1212
      %1246 = vst [vmem:[%s170 + $0x138] sm:$0xff] %v1214
      %1247 = vst [vmem:[%s170 + $0x140] sm:$0xff] %v1216
      %1248 = vst [vmem:[%s170 + $0x148] sm:$0xff] %v1218
      %1249 = vst [vmem:[%s170 + $0x150] sm:$0xff] %v1220
      %1250 = vst [vmem:[%s170 + $0x158] sm:$0xff] %v1222
      %1251 = vst [vmem:[%s170 + $0x160] sm:$0xff] %v1224
      %1252 = vst [vmem:[%s170 + $0x168] sm:$0xff] %v1226
      %1253 = vst [vmem:[%s170 + $0x170] sm:$0xff] %v1228
      %1254 = vst [vmem:[%s170 + $0x178] sm:$0xff] %v1230
      %1255 = vst [vmem:[%s170 + $0x180] sm:$0xff] %v1232
      %1256 = vst [vmem:[%s170 + $0x188] sm:$0xff] %v1234
      %1257 = vst [vmem:[%s170 + $0x190] sm:$0xff] %v1236
      %1258 = vst [vmem:[%s170 + $0x198] sm:$0xff] %v1238
      %1259 = vst [vmem:[%s170 + $0x1a0] sm:$0xff] %v1240
      %1260 = vst [vmem:[%s170 + $0x1a8] sm:$0xff] %v1242
      %p1261 = scmp.lt.s32.totalorder %s14, 1
      %s1262 = scalar_select %p1261, %s14, 1
      %s1263 = smul.addr %s1262, 54
      %s1264 = smul.addr %s1263, 8
      %s1265 = scalar_lea.vmem %s3, %s1264
      // Predicated region
      $region33: #{alignment_forward.16} parent=31 // pred_check
        %p1266 = pneg %p100
      $region34: #{alignment_forward.16} parent=31 // pred_check_branch
        %1268 = sbr.rel (%p1266) target = $region36
      $region35: #{alignment_forward.16} parent=31 // pred_region
        _
      $region36: #{alignment_forward.16} parent=31 // pred_fallthru
        _
    $region32: #{alignment_forward.16} parent=5 // pred_fallthru
      _
    %p1269 = scmp.le.s32.totalorder 2, %s9
    // Predicated region
    $region37: #{alignment_forward.16} parent=5 // pred_check
      %p1270 = pneg %p1269
    $region38: #{alignment_forward.16} parent=5 // pred_check_branch
      %1272 = sbr.rel (%p1270) target = $region40
    $region39: #{alignment_forward.16} parent=5 // pred_region
      %s1273 = ssub.s32 %s9, 2
      // Predicated region
      $region41: #{alignment_forward.16} parent=39 // pred_check
        %p1274 = pneg %p106
      $region42: #{alignment_forward.16} parent=39 // pred_check_branch
        %1276 = sbr.rel (%p1274) target = $region44
      $region43: #{alignment_forward.16} parent=39 // pred_region
        %p1277 = scmp.lt.s32.totalorder %s15, 1
        %s1278 = scalar_select %p1277, %s15, 1
        %s1279 = smul.addr %s1278, 54
        %s1280 = smul.addr %s1279, 8
        %s1281 = scalar_lea.vmem %s3, %s1280
      $region44: #{alignment_forward.16} parent=39 // pred_fallthru
        _
    $region40: #{alignment_forward.16} parent=5 // pred_fallthru
      _
  $region6: #{alignment_forward.16} parent=0 // loop_footer
    %s13 = sadd.s32 1, %s9
  $region7: #{alignment_forward.16} parent=0 // loop_footer_branch
    %8 = sbr.rel target = $region3
  $region8: #{alignment_forward.16} parent=0 // loop_exit
    _

// kernel: alignment_forward.17
$region0: #{alignment_forward.17}
  #allocation0 [shape = 'u32[]', space=smem, size = 0x4, offset = 0x4, fixed_abs, tag = 'smem constant byte address 0x4 - core index']
  #allocation1 [shape = 'u32[144,128]{1,0:T(1,128)}', space=vmem, size = 0x12000, scoped, tag = 'internal scratch']
  %s0 = inlined_call_operand.vmem [shape: f32[2,144,256], index: 0, kind: input, shape index: {}]
  %s1 = inlined_call_operand.vmem [shape: f32[16,144], index: 1, kind: input, shape index: {}]
  %s2 = inlined_call_operand.vmem [shape: f32[16,1], index: 2, kind: input, shape index: {}]
  %s3 = inlined_call_operand.vmem [shape: f32[2,16,256], index: 3, kind: output, shape index: {}]
  %s4 = sld [smem:[#allocation0]]
  $region45: #{alignment_forward.17} parent=0
    _
  %s6 = ssub.s32 1, %s4
  %s7 = scalar_select 0, %s6, %s4
  loop: start=0, step=1, limit=4
  $region2: #{alignment_forward.17} parent=0 // loop_pre_header
    _
  $region3: #{alignment_forward.17} parent=0 // loop_header
    %s9 = sphi 0, %s13
    %p10 = scmp.ge.s32.totalorder %s9, 4
    %s19 = sphi 0, %s21
    %s22 = sphi 0, %s19
    %s23 = sphi 0, %s22
    %s39 = sphi 0, %s23
    %s43 = sphi 0, %s43
    %s45 = sphi 0, %s43
    %s46 = sphi 0, %s45
    %s60 = sphi 0, %s46
    %s64 = sphi 0, %s64
    %s66 = sphi 0, %s64
    %s67 = sphi 0, %s66
    %s81 = sphi 0, %s67
    %s87 = sphi 0, %s89
    %s90 = sphi 0, %s87
    %s91 = sphi 0, %s90
    %s107 = sphi 0, %s91
  $region4: #{alignment_forward.17} parent=0 // loop_header_branch
    %12 = sbr.rel (%p10) target = $region8
  $region5: #{alignment_forward.17} parent=0 // loop_body
    %s14 = ssub.s32 %s9, 1
    %s15 = ssub.s32 %s9, 2
    %s16 = sadd.s32 %s9, 1
    %s17 = ssub.s32 %s9, %s16
    %p18 = scmp.eq.s32.totalorder %s17, 0
    %s20 = sadd.s32 %s19, 1
    %s21 = scalar_select %p18, %s19, %s20
    %p24 = pneg %p18
    %p25 = scmp.eq.s32.totalorder %s9, 1
    %p26 = por %p24, %p25
    %p27 = scmp.ne.s32.totalorder %s19, %s22
    %p28 = scmp.eq.s32.totalorder %s9, 0
    %p29 = por %p27, %p28
    %p30 = scmp.ne.s32.totalorder %s19, %s22
    %p31 = scmp.eq.s32.totalorder %s14, 1
    %p32 = por %p30, %p31
    %p33 = scmp.ne.s32.totalorder %s22, %s23
    %p34 = scmp.eq.s32.totalorder %s14, 0
    %p35 = por %p33, %p34
    %p36 = scmp.ne.s32.totalorder %s22, %s23
    %p37 = scmp.eq.s32.totalorder %s15, 1
    %p38 = por %p36, %p37
    %p40 = scmp.ne.s32.totalorder %s23, %s39
    %p41 = scmp.eq.s32.totalorder %s15, 0
    %p42 = por %p40, %p41
    %s44 = sadd.s32 %s43, 1
    %p47 = scmp.eq.s32.totalorder %s9, 1
    %p48 = scmp.ne.s32.totalorder %s43, %s45
    %p49 = scmp.eq.s32.totalorder %s9, 0
    %p50 = por %p48, %p49
    %p51 = scmp.ne.s32.totalorder %s43, %s45
    %p52 = scmp.eq.s32.totalorder %s14, 1
    %p53 = por %p51, %p52
    %p54 = scmp.ne.s32.totalorder %s45, %s46
    %p55 = scmp.eq.s32.totalorder %s14, 0
    %p56 = por %p54, %p55
    %p57 = scmp.ne.s32.totalorder %s45, %s46
    %p58 = scmp.eq.s32.totalorder %s15, 1
    %p59 = por %p57, %p58
    %p61 = scmp.ne.s32.totalorder %s46, %s60
    %p62 = scmp.eq.s32.totalorder %s15, 0
    %p63 = por %p61, %p62
    %s65 = sadd.s32 %s64, 1
    %p68 = scmp.eq.s32.totalorder %s9, 1
    %p69 = scmp.ne.s32.totalorder %s64, %s66
    %p70 = scmp.eq.s32.totalorder %s9, 0
    %p71 = por %p69, %p70
    %p72 = scmp.ne.s32.totalorder %s64, %s66
    %p73 = scmp.eq.s32.totalorder %s14, 1
    %p74 = por %p72, %p73
    %p75 = scmp.ne.s32.totalorder %s66, %s67
    %p76 = scmp.eq.s32.totalorder %s14, 0
    %p77 = por %p75, %p76
    %p78 = scmp.ne.s32.totalorder %s66, %s67
    %p79 = scmp.eq.s32.totalorder %s15, 1
    %p80 = por %p78, %p79
    %p82 = scmp.ne.s32.totalorder %s67, %s81
    %p83 = scmp.eq.s32.totalorder %s15, 0
    %p84 = por %p82, %p83
    %s85 = ssub.s32 %s9, %s16
    %p86 = scmp.eq.s32.totalorder %s85, 0
    %s88 = sadd.s32 %s87, 1
    %s89 = scalar_select %p86, %s87, %s88
    %p92 = pneg %p86
    %p93 = scmp.eq.s32.totalorder %s9, 1
    %p94 = por %p92, %p93
    %p95 = scmp.ne.s32.totalorder %s87, %s90
    %p96 = scmp.eq.s32.totalorder %s9, 0
    %p97 = por %p95, %p96
    %p98 = scmp.ne.s32.totalorder %s87, %s90
    %p99 = scmp.eq.s32.totalorder %s14, 1
    %p100 = por %p98, %p99
    %p101 = scmp.ne.s32.totalorder %s90, %s91
    %p102 = scmp.eq.s32.totalorder %s14, 0
    %p103 = por %p101, %p102
    %p104 = scmp.ne.s32.totalorder %s90, %s91
    %p105 = scmp.eq.s32.totalorder %s15, 1
    %p106 = por %p104, %p105
    %p108 = scmp.ne.s32.totalorder %s91, %s107
    %p109 = scmp.eq.s32.totalorder %s15, 0
    %p110 = por %p108, %p109
    %p111 = scmp.le.s32.totalorder 1, %s9
    %p112 = scmp.lt.s32.totalorder %s9, 3
    %p113 = pnand %p111, %p112
    %p114 = pneg %p113
    // Predicated region
    $region9: #{alignment_forward.17} parent=5 // pred_check
      _
    $region10: #{alignment_forward.17} parent=5 // pred_check_branch
      %116 = sbr.rel (%p113) target = $region12
    $region11: #{alignment_forward.17} parent=5 // pred_region
      %s117 = ssub.s32 %s9, 1
      // Predicated region
      $region13: #{alignment_forward.17} parent=11 // pred_check
        %p118 = pneg %p56
      $region14: #{alignment_forward.17} parent=11 // pred_check_branch
        %120 = sbr.rel (%p118) target = $region16
      $region15: #{alignment_forward.17} parent=11 // pred_region
        _
      $region16: #{alignment_forward.17} parent=11 // pred_fallthru
        _
      // Predicated region
      $region17: #{alignment_forward.17} parent=11 // pred_check
        %p121 = pneg %p77
      $region18: #{alignment_forward.17} parent=11 // pred_check_branch
        %123 = sbr.rel (%p121) target = $region20
      $region19: #{alignment_forward.17} parent=11 // pred_region
        _
      $region20: #{alignment_forward.17} parent=11 // pred_fallthru
        _
    $region12: #{alignment_forward.17} parent=5 // pred_fallthru
      _
    %p124 = scmp.lt.s32.totalorder %s9, 2
    // Predicated region
    $region21: #{alignment_forward.17} parent=5 // pred_check
      %p125 = pneg %p124
    $region22: #{alignment_forward.17} parent=5 // pred_check_branch
      %127 = sbr.rel (%p125) target = $region24
    $region23: #{alignment_forward.17} parent=5 // pred_region
      // Predicated region
      $region25: #{alignment_forward.17} parent=23 // pred_check
        %p128 = pneg %p29
      $region26: #{alignment_forward.17} parent=23 // pred_check_branch
        %130 = sbr.rel (%p128) target = $region28
      $region27: #{alignment_forward.17} parent=23 // pred_region
        %p131 = scmp.lt.s32.totalorder %s9, 1
        %s132 = scalar_select %p131, %s9, 1
        %s133 = smul.addr %s132, 36
        %s134 = smul.addr %s133, 8
        %s135 = scalar_lea.vmem %s0, %s134
      $region28: #{alignment_forward.17} parent=23 // pred_fallthru
        _
    $region24: #{alignment_forward.17} parent=5 // pred_fallthru
      _
    %p136 = scmp.le.s32.totalorder 1, %s9
    %p137 = scmp.lt.s32.totalorder %s9, 3
    %p138 = pnand %p136, %p137
    %p139 = pneg %p138
    // Predicated region
    $region29: #{alignment_forward.17} parent=5 // pred_check
      _
    $region30: #{alignment_forward.17} parent=5 // pred_check_branch
      %141 = sbr.rel (%p138) target = $region32
    $region31: #{alignment_forward.17} parent=5 // pred_region
      %s142 = ssub.s32 %s9, 1
      %p143 = scmp.lt.s32.totalorder %s14, 1
      %s144 = scalar_select %p143, %s14, 1
      %s145 = smul.addr %s144, 36
      %s146 = smul.addr %s145, 8
      %s147 = scalar_lea.vmem %s0, %s146
      %p148 = pneg %p35
      %p149 = pneg %p32
      %p150 = pneg %p56
      %p151 = pneg %p53
      %p152 = pneg %p77
      %p153 = pneg %p74
      %p154 = pneg %p103
      %p155 = pneg %p100
      %p156 = scmp.lt.s32.totalorder %s14, 1
      %s157 = scalar_select %p156, %s14, 1
      %s158 = smul.addr %s157, 4
      %s159 = smul.addr %s158, 8
      %s160 = scalar_lea.vmem %s3, %s159
      %p161 = scmp.lt.s32.totalorder %s14, 1
      %s162 = scalar_select %p161, %s14, 1
      %s163 = smul.addr %s162, 36
      %s164 = smul.addr %s163, 8
      %s165 = scalar_lea.vmem %s0, %s164
      %p166 = scmp.lt.s32.totalorder %s14, 1
      %s167 = scalar_select %p166, %s14, 1
      %s168 = smul.addr %s167, 4
      %s169 = smul.addr %s168, 8
      %s170 = scalar_lea.vmem %s3, %s169
      %v171 = vld [vmem:[%s1] sm:$0xff]
      %v172 = vld [vmem:[%s1 + $0x8] sm:$0xff]
      %v173 = vld [vmem:[%s1 + $0x10] sm:$0xff]
      %v174 = vld [vmem:[%s1 + $0x18] sm:$0xff]
      %v175 = vld [vmem:[%s165] sm:$0xff]
      %v176 = vld [vmem:[%s165 + $0x8] sm:$0xff]
      %v177 = vld [vmem:[%s165 + $0x10] sm:$0xff]
      %v178 = vld [vmem:[%s165 + $0x18] sm:$0xff]
      %v179 = vld [vmem:[%s165 + $0x20] sm:$0xff]
      %v180 = vld [vmem:[%s165 + $0x28] sm:$0xff]
      %v181 = vld [vmem:[%s165 + $0x30] sm:$0xff]
      %v182 = vld [vmem:[%s165 + $0x38] sm:$0xff]
      %v183 = vld [vmem:[%s165 + $0x40] sm:$0xff]
      %v184 = vld [vmem:[%s165 + $0x48] sm:$0xff]
      %v185 = vld [vmem:[%s165 + $0x50] sm:$0xff]
      %v186 = vld [vmem:[%s165 + $0x58] sm:$0xff]
      %v187 = vld [vmem:[%s165 + $0x60] sm:$0xff]
      %v188 = vld [vmem:[%s165 + $0x68] sm:$0xff]
      %v189 = vld [vmem:[%s165 + $0x70] sm:$0xff]
      %v190 = vld [vmem:[%s165 + $0x78] sm:$0xff]
      %v191 = vld [vmem:[%s165 + $0x80] sm:$0xff]
      %v192 = vld [vmem:[%s165 + $0x88] sm:$0xff]
      %v193 = vld [vmem:[%s165 + $0x90] sm:$0xff]
      %v194 = vld [vmem:[%s165 + $0x98] sm:$0xff]
      %v195 = vld [vmem:[%s165 + $0xa0] sm:$0xff]
      %v196 = vld [vmem:[%s165 + $0xa8] sm:$0xff]
      %v197 = vld [vmem:[%s165 + $0xb0] sm:$0xff]
      %v198 = vld [vmem:[%s165 + $0xb8] sm:$0xff]
      %v199 = vld [vmem:[%s165 + $0xc0] sm:$0xff]
      %v200 = vld [vmem:[%s165 + $0xc8] sm:$0xff]
      %v201 = vld [vmem:[%s165 + $0xd0] sm:$0xff]
      %v202 = vld [vmem:[%s165 + $0xd8] sm:$0xff]
      %v203 = vld [vmem:[%s165 + $0xe0] sm:$0xff]
      %v204 = vld [vmem:[%s165 + $0xe8] sm:$0xff]
      %v205 = vld [vmem:[%s165 + $0xf0] sm:$0xff]
      %v206 = vld [vmem:[%s165 + $0xf8] sm:$0xff]
      %v207 = vld [vmem:[%s165 + $0x100] sm:$0xff]
      %v208 = vld [vmem:[%s165 + $0x108] sm:$0xff]
      %v209 = vld [vmem:[%s165 + $0x110] sm:$0xff]
      %v210 = vld [vmem:[%s165 + $0x118] sm:$0xff]
      %v211 = vld [vmem:[%s2] sm:$0xff]
      %v212 = vld [vmem:[%s2 + $0x8] sm:$0xff]
      %214 = vset.pattern.permute.xlu0 0
      %215 = vperm.xlu0 %214, %v211
      %v216 = vpop.permute.xlu0 %215
      %219 = vset.pattern.permute.xlu0 0
      %220 = vperm.xlu0 %219, %v212
      %v221 = vpop.permute.xlu0 %220
      %vm223 = vcmask 130048
      %v225 = vsel %vm223, %v172, 0
      %v228 = vsel %vm223, %v174, 0
      %230 = vmatprep.subr.mxu0 %v176
      %231 = vmatpush1.msra.mxu0 %v175
      %232 = vmatprep.subr.mxu0 %v178
      %233 = vmatpush1.msra.mxu0 %v177
      %234 = vmatprep.subr.mxu0 %v180
      %235 = vmatpush1.msra.mxu0 %v179
      %236 = vmatprep.subr.mxu0 %v182
      %237 = vmatpush1.msra.mxu0 %v181
      %238 = vmatprep.subr.mxu0 %v184
      %239 = vmatpush1.msra.mxu0 %v183
      %240 = vmatprep.subr.mxu0 %v186
      %241 = vmatpush1.msra.mxu0 %v185
      %242 = vmatprep.subr.mxu0 %v188
      %243 = vmatpush1.msra.mxu0 %v187
      %244 = vmatprep.subr.mxu0 %v190
      %245 = vmatpush1.msra.mxu0 %v189
      %246 = vmatprep.subr.mxu0 %v192
      %247 = vmatpush1.msra.mxu0 %v191
      %248 = vmatprep.subr.mxu0 %v194
      %249 = vmatpush1.msra.mxu0 %v193
      %250 = vmatprep.subr.mxu0 %v196
      %251 = vmatpush1.msra.mxu0 %v195
      %252 = vmatprep.subr.mxu0 %v198
      %253 = vmatpush1.msra.mxu0 %v197
      %254 = vmatprep.subr.mxu0 %v200
      %255 = vmatpush1.msra.mxu0 %v199
      %256 = vmatprep.subr.mxu0 %v202
      %257 = vmatpush1.msra.mxu0 %v201
      %258 = vmatprep.subr.mxu0 %v204
      %259 = vmatpush1.msra.mxu0 %v203
      %260 = vmatprep.subr.mxu0 %v206
      %261 = vmatpush1.msra.mxu0 %v205
      %262 = vmatprep.subr.mxu0 %v208
      %263 = vmatpush1.msra.mxu0 %v207
      %264 = vmatprep.subr.mxu0 %v210
      %265 = vmatpush1.msra.mxu0 %v209
      %266 = vmatprep.subr.mxu0 0.0
      %267 = vmatpush1.msra.mxu0 0.0
      %268 = vmatprep.subr.mxu0 0.0
      %269 = vmatpush1.msra.mxu0 0.0
      %270 = vmatprep.subr.mxu0 0.0
      %271 = vmatpush1.msra.mxu0 0.0
      %272 = vmatprep.subr.mxu0 0.0
      %273 = vmatpush1.msra.mxu0 0.0
      %274 = vmatprep.subr.mxu0 0.0
      %275 = vmatpush1.msra.mxu0 0.0
      %276 = vmatprep.subr.mxu0 0.0
      %277 = vmatpush1.msra.mxu0 0.0
      %278 = vmatprep.subr.mxu0 0.0
      %279 = vmatpush1.msra.mxu0 0.0
      %280 = vmatprep.subr.mxu0 0.0
      %281 = vmatpush1.msra.mxu0 0.0
      %282 = vmatprep.subr.mxu0 0.0
      %283 = vmatpush1.msra.mxu0 0.0
      %284 = vmatprep.subr.mxu0 0.0
      %285 = vmatpush1.msra.mxu0 0.0
      %286 = vmatprep.subr.mxu0 0.0
      %287 = vmatpush1.msra.mxu0 0.0
      %288 = vmatprep.subr.mxu0 0.0
      %289 = vmatpush1.msra.mxu0 0.0
      %290 = vmatprep.subr.mxu0 0.0
      %291 = vmatpush1.msra.mxu0 0.0
      %292 = vmatprep.subr.mxu0 0.0
      %293 = vmatpush1.msra.mxu0 0.0
      %294 = vmatprep.mubr.f32.mxu0 %v225
      %295 = vmatmul.mubr.f32.gmra.mrb[0].mxu0 %v171
      %v296 = vpop.f32.mrb[0].mxu0
      %v297 = vadd.f32 %v216, %v296
      %v298 = vpop.f32.mrb[0].mxu0
      %v299 = vadd.f32 %v216, %v298
      %300 = vmatprep.mubr.f32.mxu0 %v228
      %301 = vmatmul.mubr.f32.gmra.mrb[0].mxu0 %v173
      %v302 = vpop.f32.mrb[0].mxu0
      %v303 = vadd.f32 %v221, %v302
      %v304 = vpop.f32.mrb[0].mxu0
      %v305 = vadd.f32 %v221, %v304
      %306 = vdwg.mxu0
      %vm307 = vcmp.ge.f32.partialorder %v297, 0.0
      %vm308 = vcmp.ge.f32.partialorder %v299, 0.0
      %vm309 = vcmp.ge.f32.partialorder %v303, 0.0
      %vm310 = vcmp.ge.f32.partialorder %v305, 0.0
      %v311 = vmul.f32 %v297, 0.1
      %v312 = vmul.f32 %v299, 0.1
      %v313 = vmul.f32 %v303, 0.1
      %v314 = vmul.f32 %v305, 0.1
      %v315 = vsel %vm307, %v297, %v311
      %v316 = vsel %vm308, %v299, %v312
      %v317 = vsel %vm309, %v303, %v313
      %v318 = vsel %vm310, %v305, %v314
      %319 = vst [vmem:[%s170] sm:$0xff] %v315
      %320 = vst [vmem:[%s170 + $0x8] sm:$0xff] %v316
      %321 = vst [vmem:[%s170 + $0x10] sm:$0xff] %v317
      %322 = vst [vmem:[%s170 + $0x18] sm:$0xff] %v318
      %p323 = scmp.lt.s32.totalorder %s14, 1
      %s324 = scalar_select %p323, %s14, 1
      %s325 = smul.addr %s324, 4
      %s326 = smul.addr %s325, 8
      %s327 = scalar_lea.vmem %s3, %s326
      // Predicated region
      $region33: #{alignment_forward.17} parent=31 // pred_check
        %p328 = pneg %p100
      $region34: #{alignment_forward.17} parent=31 // pred_check_branch
        %330 = sbr.rel (%p328) target = $region36
      $region35: #{alignment_forward.17} parent=31 // pred_region
        _
      $region36: #{alignment_forward.17} parent=31 // pred_fallthru
        _
    $region32: #{alignment_forward.17} parent=5 // pred_fallthru
      _
    %p331 = scmp.le.s32.totalorder 2, %s9
    // Predicated region
    $region37: #{alignment_forward.17} parent=5 // pred_check
      %p332 = pneg %p331
    $region38: #{alignment_forward.17} parent=5 // pred_check_branch
      %334 = sbr.rel (%p332) target = $region40
    $region39: #{alignment_forward.17} parent=5 // pred_region
      %s335 = ssub.s32 %s9, 2
      // Predicated region
      $region41: #{alignment_forward.17} parent=39 // pred_check
        %p336 = pneg %p106
      $region42: #{alignment_forward.17} parent=39 // pred_check_branch
        %338 = sbr.rel (%p336) target = $region44
      $region43: #{alignment_forward.17} parent=39 // pred_region
        %p339 = scmp.lt.s32.totalorder %s15, 1
        %s340 = scalar_select %p339, %s15, 1
        %s341 = smul.addr %s340, 4
        %s342 = smul.addr %s341, 8
        %s343 = scalar_lea.vmem %s3, %s342
      $region44: #{alignment_forward.17} parent=39 // pred_fallthru
        _
    $region40: #{alignment_forward.17} parent=5 // pred_fallthru
      _
  $region6: #{alignment_forward.17} parent=0 // loop_footer
    %s13 = sadd.s32 1, %s9
  $region7: #{alignment_forward.17} parent=0 // loop_footer_branch
    %8 = sbr.rel target = $region3
  $region8: #{alignment_forward.17} parent=0 // loop_exit
    _

</llo_original>
